<compile_context>
chip_gen: v5e
topology: v5e:2x2
jax: 0.10.0
libtpu: 0.0.40
codegen_flags: <defaults>
</compile_context>

<pallas_src>
import jax
import jax.numpy as jnp
from jax.experimental import pallas as pl
from jax.experimental.pallas import tpu as pltpu

D_IN = 64 * 64   # 4096
D_H = 400
D_Z = 20


# ---------------------------------------------------------------------------
# Fully-fused VAE forward kernel (single invocation, everything VMEM-resident)
# ---------------------------------------------------------------------------
def _vae_fused_kernel(
    x_ref,
    w_enc_ref, b_enc_ref,
    w_mu_ref, b_mu_ref,
    w_lv_ref, b_lv_ref,
    w_d1_ref, b_d1_ref,
    w_d2_ref, b_d2_ref,
    eps_ref,
    recon_ref, mu_ref, logvar_ref,
):
    x = x_ref[...]                                                   # (B, 4096)

    # encoder: h = relu(x @ W_enc + b_enc)
    h = jnp.dot(x, w_enc_ref[...], preferred_element_type=jnp.float32)
    h = jnp.maximum(h + b_enc_ref[...], 0.0)                         # (B, 400)

    # latent heads
    mu = jnp.dot(h, w_mu_ref[...], preferred_element_type=jnp.float32) + b_mu_ref[...]
    logvar = jnp.dot(h, w_lv_ref[...], preferred_element_type=jnp.float32) + b_lv_ref[...]

    # reparameterization: z = mu + eps * exp(0.5 * logvar)
    z = mu + eps_ref[...] * jnp.exp(0.5 * logvar)                    # (B, 20)

    # decoder
    h2 = jnp.dot(z, w_d1_ref[...], preferred_element_type=jnp.float32)
    h2 = jnp.maximum(h2 + b_d1_ref[...], 0.0)                        # (B, 400)

    recon = jnp.dot(h2, w_d2_ref[...], preferred_element_type=jnp.float32)
    recon = jax.nn.sigmoid(recon + b_d2_ref[...])                    # (B, 4096)

    recon_ref[...] = recon.astype(recon_ref.dtype)
    mu_ref[...] = mu.astype(mu_ref.dtype)
    logvar_ref[...] = logvar.astype(logvar_ref.dtype)


def vae_forward(x, params, eps):
    """Pallas VAE forward: returns (recon, mu, logvar)."""
    B = x.shape[0]
    xf = x.reshape(B, D_IN)                                          # view(-1, 4096)

    w_enc, b_enc = params["enc_fc"]
    w_mu, b_mu = params["mu_fc"]
    w_lv, b_lv = params["logvar_fc"]
    w_d1, b_d1 = params["dec_fc1"]
    w_d2, b_d2 = params["dec_fc2"]

    out_shapes = (
        jax.ShapeDtypeStruct((B, D_IN), jnp.float32),                # recon
        jax.ShapeDtypeStruct((B, D_Z), jnp.float32),                 # mu
        jax.ShapeDtypeStruct((B, D_Z), jnp.float32),                 # logvar
    )

    # Advisory cost for XLA's scheduler around the custom call.
    n_weight_elems = D_IN * D_H + D_H * D_Z * 2 + D_Z * D_H + D_H * D_IN
    n_bias_elems = D_H + D_Z * 2 + D_H + D_IN
    n_io_elems = B * (D_IN + D_Z) + B * (D_IN + 2 * D_Z)             # x+eps, outputs
    cost = pl.CostEstimate(
        flops=2 * B * n_weight_elems,
        transcendentals=B * (D_Z + D_IN),                            # exp + sigmoid
        bytes_accessed=4 * (n_weight_elems + n_bias_elems + n_io_elems),
    )

    # No grid: single invocation, every operand gets a whole-array VMEM block
    # (no runtime padding, no per-step pipeline overhead, one launch total).
    return pl.pallas_call(
        _vae_fused_kernel,
        out_shape=out_shapes,
        cost_estimate=cost,
        compiler_params=pltpu.CompilerParams(
            # ~13.3 MB resident + headroom; comfortably inside v7x's 64 MiB.
            vmem_limit_bytes=48 * 1024 * 1024,
        ),
    )(
        xf,
        w_enc, b_enc,
        w_mu, b_mu,
        w_lv, b_lv,
        w_d1, b_d1,
        w_d2, b_d2,
        eps,
    )


# ---------------------------------------------------------------------------
# Parameter init (deterministic, PyTorch nn.Linear-style uniform init).
# Weights stored (in, out); biases stored (1, out) for lane-dense broadcast.
# ---------------------------------------------------------------------------
def init_linear(key, fan_in, fan_out):
    kw, kb = jax.random.split(key)
    bound = 1.0 / jnp.sqrt(float(fan_in))
    w = jax.random.uniform(kw, (fan_in, fan_out), jnp.float32, minval=-bound, maxval=bound)
    b = jax.random.uniform(kb, (1, fan_out), jnp.float32, minval=-bound, maxval=bound)
    return w, b


def init_vae_params(key):
    keys = jax.random.split(key, 5)
    return {
        "enc_fc": init_linear(keys[0], D_IN, D_H),
        "mu_fc": init_linear(keys[1], D_H, D_Z),
        "logvar_fc": init_linear(keys[2], D_H, D_Z),
        "dec_fc1": init_linear(keys[3], D_Z, D_H),
        "dec_fc2": init_linear(keys[4], D_H, D_IN),
    }


# ---------------------------------------------------------------------------
# Plain-JAX reference for correctness checking.
# ---------------------------------------------------------------------------
def vae_forward_ref(x, params, eps):
    xf = x.reshape(-1, D_IN)
    h = jax.nn.relu(xf @ params["enc_fc"][0] + params["enc_fc"][1])
    mu = h @ params["mu_fc"][0] + params["mu_fc"][1]
    logvar = h @ params["logvar_fc"][0] + params["logvar_fc"][1]
    z = mu + eps * jnp.exp(0.5 * logvar)
    h2 = jax.nn.relu(z @ params["dec_fc1"][0] + params["dec_fc1"][1])
    recon = jax.nn.sigmoid(h2 @ params["dec_fc2"][0] + params["dec_fc2"][1])
    return recon, mu, logvar


if __name__ == "__main__":
    key = jax.random.PRNGKey(0)
    k_x, k_params, k_eps = jax.random.split(key, 3)

    B = 2
    x = jax.random.normal(k_x, (B, 1, 64, 64), jnp.float32)   # NCHW input
    params = init_vae_params(k_params)
    # TODO(synk): torch draws eps internally via randn_like; eps is passed in
    # explicitly here so the forward is deterministic and verifiable.
    eps = jax.random.normal(k_eps, (B, D_Z), jnp.float32)

    recon, mu, logvar = jax.jit(vae_forward)(x, params, eps)
    jax.block_until_ready((recon, mu, logvar))

    assert recon.shape == (B, D_IN)
    assert mu.shape == (B, D_Z) and logvar.shape == (B, D_Z)

    r_ref, m_ref, lv_ref = vae_forward_ref(x, params, eps)
    assert jnp.allclose(recon, r_ref, atol=1e-5, rtol=1e-5)
    assert jnp.allclose(mu, m_ref, atol=1e-5, rtol=1e-5)
    assert jnp.allclose(logvar, lv_ref, atol=1e-5, rtol=1e-5)

    print("KERNEL_OK")
</pallas_src>

<mosaic_0001>
module attributes {stable_mosaic.version = 11 : i64} {
  func.func @_vae_fused_kernel(%arg0: memref<2x4096xf32, #tpu.memory_space<vmem>>, %arg1: memref<4096x400xf32, #tpu.memory_space<vmem>>, %arg2: memref<1x400xf32, #tpu.memory_space<vmem>>, %arg3: memref<400x20xf32, #tpu.memory_space<vmem>>, %arg4: memref<1x20xf32, #tpu.memory_space<vmem>>, %arg5: memref<400x20xf32, #tpu.memory_space<vmem>>, %arg6: memref<1x20xf32, #tpu.memory_space<vmem>>, %arg7: memref<20x400xf32, #tpu.memory_space<vmem>>, %arg8: memref<1x400xf32, #tpu.memory_space<vmem>>, %arg9: memref<400x4096xf32, #tpu.memory_space<vmem>>, %arg10: memref<1x4096xf32, #tpu.memory_space<vmem>>, %arg11: memref<2x20xf32, #tpu.memory_space<vmem>>, %arg12: memref<2x4096xf32, #tpu.memory_space<vmem>>, %arg13: memref<2x20xf32, #tpu.memory_space<vmem>>, %arg14: memref<2x20xf32, #tpu.memory_space<vmem>>) attributes {dimension_semantics = [], scalar_prefetch = 0 : i64, scratch_operands = 0 : i64, tpu.core_type = #tpu.core_type<tc>} {
    %c0 = arith.constant 0 : index
    %c0_0 = arith.constant 0 : index
    %0 = vector.load %arg0[%c0, %c0_0] : memref<2x4096xf32, #tpu.memory_space<vmem>>, vector<2x4096xf32>
    %c0_1 = arith.constant 0 : index
    %c0_2 = arith.constant 0 : index
    %1 = vector.load %arg1[%c0_1, %c0_2] : memref<4096x400xf32, #tpu.memory_space<vmem>>, vector<4096x400xf32>
    %cst = arith.constant dense<0.000000e+00> : vector<2x400xf32>
    %2 = tpu.matmul %0, %1, %cst {dimension_numbers = #tpu.dot_dimension_numbers<[1], [0], [0], [1], [0, 0, 1, 1], [], []>} : vector<2x4096xf32>, vector<4096x400xf32>, vector<2x400xf32> -> vector<2x400xf32>
    %c0_3 = arith.constant 0 : index
    %c0_4 = arith.constant 0 : index
    %3 = vector.load %arg2[%c0_3, %c0_4] : memref<1x400xf32, #tpu.memory_space<vmem>>, vector<1x400xf32>
    %4 = vector.broadcast %3 : vector<1x400xf32> to vector<2x400xf32>
    %5 = arith.addf %2, %4 : vector<2x400xf32>
    %cst_5 = arith.constant 0.000000e+00 : f32
    %6 = vector.broadcast %cst_5 : f32 to vector<2x400xf32>
    %7 = arith.maximumf %5, %6 : vector<2x400xf32>
    %c0_6 = arith.constant 0 : index
    %c0_7 = arith.constant 0 : index
    %8 = vector.load %arg3[%c0_6, %c0_7] : memref<400x20xf32, #tpu.memory_space<vmem>>, vector<400x20xf32>
    %cst_8 = arith.constant dense<0.000000e+00> : vector<2x20xf32>
    %9 = tpu.matmul %7, %8, %cst_8 {dimension_numbers = #tpu.dot_dimension_numbers<[1], [0], [0], [1], [0, 0, 1, 1], [], []>} : vector<2x400xf32>, vector<400x20xf32>, vector<2x20xf32> -> vector<2x20xf32>
    %c0_9 = arith.constant 0 : index
    %c0_10 = arith.constant 0 : index
    %10 = vector.load %arg4[%c0_9, %c0_10] : memref<1x20xf32, #tpu.memory_space<vmem>>, vector<1x20xf32>
    %11 = vector.broadcast %10 : vector<1x20xf32> to vector<2x20xf32>
    %12 = arith.addf %9, %11 : vector<2x20xf32>
    %c0_11 = arith.constant 0 : index
    %c0_12 = arith.constant 0 : index
    %13 = vector.load %arg5[%c0_11, %c0_12] : memref<400x20xf32, #tpu.memory_space<vmem>>, vector<400x20xf32>
    %cst_13 = arith.constant dense<0.000000e+00> : vector<2x20xf32>
    %14 = tpu.matmul %7, %13, %cst_13 {dimension_numbers = #tpu.dot_dimension_numbers<[1], [0], [0], [1], [0, 0, 1, 1], [], []>} : vector<2x400xf32>, vector<400x20xf32>, vector<2x20xf32> -> vector<2x20xf32>
    %c0_14 = arith.constant 0 : index
    %c0_15 = arith.constant 0 : index
    %15 = vector.load %arg6[%c0_14, %c0_15] : memref<1x20xf32, #tpu.memory_space<vmem>>, vector<1x20xf32>
    %16 = vector.broadcast %15 : vector<1x20xf32> to vector<2x20xf32>
    %17 = arith.addf %14, %16 : vector<2x20xf32>
    %c0_16 = arith.constant 0 : index
    %c0_17 = arith.constant 0 : index
    %18 = vector.load %arg11[%c0_16, %c0_17] : memref<2x20xf32, #tpu.memory_space<vmem>>, vector<2x20xf32>
    %cst_18 = arith.constant 5.000000e-01 : f32
    %19 = vector.broadcast %cst_18 : f32 to vector<2x20xf32>
    %20 = arith.mulf %19, %17 : vector<2x20xf32>
    %21 = math.exp %20 : vector<2x20xf32>
    %22 = arith.mulf %18, %21 : vector<2x20xf32>
    %23 = arith.addf %12, %22 : vector<2x20xf32>
    %c0_19 = arith.constant 0 : index
    %c0_20 = arith.constant 0 : index
    %24 = vector.load %arg7[%c0_19, %c0_20] : memref<20x400xf32, #tpu.memory_space<vmem>>, vector<20x400xf32>
    %cst_21 = arith.constant dense<0.000000e+00> : vector<2x400xf32>
    %25 = tpu.matmul %23, %24, %cst_21 {dimension_numbers = #tpu.dot_dimension_numbers<[1], [0], [0], [1], [0, 0, 1, 1], [], []>} : vector<2x20xf32>, vector<20x400xf32>, vector<2x400xf32> -> vector<2x400xf32>
    %c0_22 = arith.constant 0 : index
    %c0_23 = arith.constant 0 : index
    %26 = vector.load %arg8[%c0_22, %c0_23] : memref<1x400xf32, #tpu.memory_space<vmem>>, vector<1x400xf32>
    %27 = vector.broadcast %26 : vector<1x400xf32> to vector<2x400xf32>
    %28 = arith.addf %25, %27 : vector<2x400xf32>
    %cst_24 = arith.constant 0.000000e+00 : f32
    %29 = vector.broadcast %cst_24 : f32 to vector<2x400xf32>
    %30 = arith.maximumf %28, %29 : vector<2x400xf32>
    %c0_25 = arith.constant 0 : index
    %c0_26 = arith.constant 0 : index
    %31 = vector.load %arg9[%c0_25, %c0_26] : memref<400x4096xf32, #tpu.memory_space<vmem>>, vector<400x4096xf32>
    %cst_27 = arith.constant dense<0.000000e+00> : vector<2x4096xf32>
    %32 = tpu.matmul %30, %31, %cst_27 {dimension_numbers = #tpu.dot_dimension_numbers<[1], [0], [0], [1], [0, 0, 1, 1], [], []>} : vector<2x400xf32>, vector<400x4096xf32>, vector<2x4096xf32> -> vector<2x4096xf32>
    %c0_28 = arith.constant 0 : index
    %c0_29 = arith.constant 0 : index
    %33 = vector.load %arg10[%c0_28, %c0_29] : memref<1x4096xf32, #tpu.memory_space<vmem>>, vector<1x4096xf32>
    %34 = vector.broadcast %33 : vector<1x4096xf32> to vector<2x4096xf32>
    %35 = arith.addf %32, %34 : vector<2x4096xf32>
    %36 = arith.negf %35 : vector<2x4096xf32>
    %37 = math.exp %36 : vector<2x4096xf32>
    %cst_30 = arith.constant 1.000000e+00 : f32
    %38 = vector.broadcast %cst_30 : f32 to vector<2x4096xf32>
    %39 = arith.addf %38, %37 : vector<2x4096xf32>
    %40 = arith.divf %38, %39 : vector<2x4096xf32>
    %c0_31 = arith.constant 0 : index
    %c0_32 = arith.constant 0 : index
    %41 = vector.load %arg12[%c0_31, %c0_32] : memref<2x4096xf32, #tpu.memory_space<vmem>>, vector<2x4096xf32>
    tpu.vector_store %arg12[%c0_31, %c0_32], %40 {strides = array<i32>} : memref<2x4096xf32, #tpu.memory_space<vmem>>, vector<2x4096xf32>,
    %c0_33 = arith.constant 0 : index
    %c0_34 = arith.constant 0 : index
    %42 = vector.load %arg13[%c0_33, %c0_34] : memref<2x20xf32, #tpu.memory_space<vmem>>, vector<2x20xf32>
    tpu.vector_store %arg13[%c0_33, %c0_34], %12 {strides = array<i32>} : memref<2x20xf32, #tpu.memory_space<vmem>>, vector<2x20xf32>,
    %c0_35 = arith.constant 0 : index
    %c0_36 = arith.constant 0 : index
    %43 = vector.load %arg14[%c0_35, %c0_36] : memref<2x20xf32, #tpu.memory_space<vmem>>, vector<2x20xf32>
    tpu.vector_store %arg14[%c0_35, %c0_36], %17 {strides = array<i32>} : memref<2x20xf32, #tpu.memory_space<vmem>>, vector<2x20xf32>,
    return
  }
}

</mosaic_0001>

<llo_original>
// kernel: vae_forward.1
$region0: #{vae_forward.1}
  #allocation0 [shape = 'u32[]', space=smem, size = 0x4, offset = 0x4, fixed_abs, tag = 'smem constant byte address 0x4 - core index']
  #allocation1 [shape = 'u32[72,128]{1,0:T(1,128)}', space=vmem, size = 0x9000, scoped, tag = 'internal scratch']
  %s0 = inlined_call_operand.vmem [shape: f32[2,4096], index: 0, kind: input, shape index: {}]
  %s1 = inlined_call_operand.vmem [shape: f32[4096,400], index: 1, kind: input, shape index: {}]
  %s2 = inlined_call_operand.vmem [shape: f32[1,400], index: 2, kind: input, shape index: {}]
  %s3 = inlined_call_operand.vmem [shape: f32[400,20], index: 3, kind: input, shape index: {}]
  %s4 = inlined_call_operand.vmem [shape: f32[1,20], index: 4, kind: input, shape index: {}]
  %s5 = inlined_call_operand.vmem [shape: f32[400,20], index: 5, kind: input, shape index: {}]
  %s6 = inlined_call_operand.vmem [shape: f32[1,20], index: 6, kind: input, shape index: {}]
  %s7 = inlined_call_operand.vmem [shape: f32[20,400], index: 7, kind: input, shape index: {}]
  %s8 = inlined_call_operand.vmem [shape: f32[1,400], index: 8, kind: input, shape index: {}]
  %s9 = inlined_call_operand.vmem [shape: f32[400,4096], index: 9, kind: input, shape index: {}]
  %s10 = inlined_call_operand.vmem [shape: f32[1,4096], index: 10, kind: input, shape index: {}]
  %s11 = inlined_call_operand.vmem [shape: f32[2,20], index: 11, kind: input, shape index: {}]
  %s12 = inlined_call_operand.hbm [shape: f32[2,4096], index: 12, kind: output, shape index: {0}]
  %s13 = inlined_call_operand.hbm [shape: f32[2,20], index: 13, kind: output, shape index: {1}]
  %s14 = inlined_call_operand.hbm [shape: f32[2,20], index: 14, kind: output, shape index: {2}]
  %15 = xla_tuple %s12, %s13, %s14
  %s16 = sld [smem:[#allocation0]]
  $region74: #{vae_forward.1} parent=0
    _
  %s18 = ssub.s32 1, %s16
  %s19 = scalar_select 0, %s18, %s16
  $region1: #{vae_forward.1} parent=0
    #allocation2 [shape = 'u8[32768]{0}', space=vmem, size = 0x8000, scoped, tag = 'output window, operand 0, single buffered']
    #allocation3 [shape = 's32[1]{0}', space=sflag, size = 0x4, scoped, tag = 'scoped memory for vae_forward.1']
    #allocation4 [shape = 'u8[1024]{0}', space=vmem, size = 0x400, scoped, tag = 'output window, operand 1, single buffered']
    #allocation5 [shape = 's32[1]{0}', space=sflag, size = 0x4, scoped, tag = 'scoped memory for vae_forward.1']
    #allocation6 [shape = 'u8[1024]{0}', space=vmem, size = 0x400, scoped, tag = 'output window, operand 2, single buffered']
    %20 = vsyncpa [#allocation3], 0
    %21 = vsyncpa [#allocation5], 0
    // Predicated region
    $region2: #{vae_forward.1} parent=1 // pred_check
      _
    $region3: #{vae_forward.1} parent=1 // pred_check_branch
      %23 = sbr.rel (0) target = $region5
    $region4: #{vae_forward.1} parent=1 // pred_region
      _
    $region5: #{vae_forward.1} parent=1 // pred_fallthru
      _
    // Predicated region
    $region6: #{vae_forward.1} parent=1 // pred_check
      _
    $region7: #{vae_forward.1} parent=1 // pred_check_branch
      %25 = sbr.rel (0) target = $region9
    $region8: #{vae_forward.1} parent=1 // pred_region
      _
    $region9: #{vae_forward.1} parent=1 // pred_fallthru
      _
    // Predicated region
    $region10: #{vae_forward.1} parent=1 // pred_check
      _
    $region11: #{vae_forward.1} parent=1 // pred_check_branch
      %27 = sbr.rel (0) target = $region13
    $region12: #{vae_forward.1} parent=1 // pred_region
      _
    $region13: #{vae_forward.1} parent=1 // pred_fallthru
      _
    // Predicated region
    $region14: #{vae_forward.1} parent=1 // pred_check
      _
    $region15: #{vae_forward.1} parent=1 // pred_check_branch
      %29 = sbr.rel (0) target = $region17
    $region16: #{vae_forward.1} parent=1 // pred_region
      _
    $region17: #{vae_forward.1} parent=1 // pred_fallthru
      _
    // Predicated region
    $region18: #{vae_forward.1} parent=1 // pred_check
      _
    $region19: #{vae_forward.1} parent=1 // pred_check_branch
      %31 = sbr.rel (0) target = $region21
    $region20: #{vae_forward.1} parent=1 // pred_region
      _
    $region21: #{vae_forward.1} parent=1 // pred_fallthru
      _
    // Predicated region
    $region22: #{vae_forward.1} parent=1 // pred_check
      _
    $region23: #{vae_forward.1} parent=1 // pred_check_branch
      %33 = sbr.rel (0) target = $region25
    $region24: #{vae_forward.1} parent=1 // pred_region
      _
    $region25: #{vae_forward.1} parent=1 // pred_fallthru
      _
    // Predicated region
    $region26: #{vae_forward.1} parent=1 // pred_check
      _
    $region27: #{vae_forward.1} parent=1 // pred_check_branch
      %35 = sbr.rel (0) target = $region29
    $region28: #{vae_forward.1} parent=1 // pred_region
      _
    $region29: #{vae_forward.1} parent=1 // pred_fallthru
      _
    // Predicated region
    $region30: #{vae_forward.1} parent=1 // pred_check
      _
    $region31: #{vae_forward.1} parent=1 // pred_check_branch
      %37 = sbr.rel (0) target = $region33
    $region32: #{vae_forward.1} parent=1 // pred_region
      _
    $region33: #{vae_forward.1} parent=1 // pred_fallthru
      _
    // Predicated region
    $region34: #{vae_forward.1} parent=1 // pred_check
      _
    $region35: #{vae_forward.1} parent=1 // pred_check_branch
      %39 = sbr.rel (0) target = $region37
    $region36: #{vae_forward.1} parent=1 // pred_region
      _
    $region37: #{vae_forward.1} parent=1 // pred_fallthru
      _
    // Predicated region
    $region38: #{vae_forward.1} parent=1 // pred_check
      _
    $region39: #{vae_forward.1} parent=1 // pred_check_branch
      %41 = sbr.rel (0) target = $region41
    $region40: #{vae_forward.1} parent=1 // pred_region
      _
    $region41: #{vae_forward.1} parent=1 // pred_fallthru
      _
    // Predicated region
    $region42: #{vae_forward.1} parent=1 // pred_check
      _
    $region43: #{vae_forward.1} parent=1 // pred_check_branch
      %43 = sbr.rel (0) target = $region45
    $region44: #{vae_forward.1} parent=1 // pred_region
      _
    $region45: #{vae_forward.1} parent=1 // pred_fallthru
      _
    // Predicated region
    $region46: #{vae_forward.1} parent=1 // pred_check
      _
    $region47: #{vae_forward.1} parent=1 // pred_check_branch
      %45 = sbr.rel (0) target = $region49
    $region48: #{vae_forward.1} parent=1 // pred_region
      _
    $region49: #{vae_forward.1} parent=1 // pred_fallthru
      _
    %v46 = vld [vmem:[%s0] sm:$0xff]
    %v47 = vld [vmem:[%s0 + $0x8] sm:$0xff]
    %v48 = vld [vmem:[%s0 + $0x10] sm:$0xff]
    %v49 = vld [vmem:[%s0 + $0x18] sm:$0xff]
    %v50 = vld [vmem:[%s0 + $0x20] sm:$0xff]
    %v51 = vld [vmem:[%s0 + $0x28] sm:$0xff]
    %v52 = vld [vmem:[%s0 + $0x30] sm:$0xff]
    %v53 = vld [vmem:[%s0 + $0x38] sm:$0xff]
    %v54 = vld [vmem:[%s1] sm:$0xff]
    %v55 = vld [vmem:[%s1 + $0x8] sm:$0xff]
    %v56 = vld [vmem:[%s1 + $0x10] sm:$0xff]
    %v57 = vld [vmem:[%s1 + $0x18] sm:$0xff]
    %v58 = vld [vmem:[%s1 + $0x20] sm:$0xff]
    %v59 = vld [vmem:[%s1 + $0x28] sm:$0xff]
    %v60 = vld [vmem:[%s1 + $0x30] sm:$0xff]
    %v61 = vld [vmem:[%s1 + $0x38] sm:$0xff]
    %v62 = vld [vmem:[%s1 + $0x40] sm:$0xff]
    %v63 = vld [vmem:[%s1 + $0x48] sm:$0xff]
    %v64 = vld [vmem:[%s1 + $0x50] sm:$0xff]
    %v65 = vld [vmem:[%s1 + $0x58] sm:$0xff]
    %v66 = vld [vmem:[%s1 + $0x60] sm:$0xff]
    %v67 = vld [vmem:[%s1 + $0x68] sm:$0xff]
    %v68 = vld [vmem:[%s1 + $0x70] sm:$0xff]
    %v69 = vld [vmem:[%s1 + $0x78] sm:$0xff]
    %v70 = vld [vmem:[%s1 + $0x80] sm:$0xff]
    %v71 = vld [vmem:[%s1 + $0x88] sm:$0xff]
    %v72 = vld [vmem:[%s1 + $0x90] sm:$0xff]
    %v73 = vld [vmem:[%s1 + $0x98] sm:$0xff]
    %v74 = vld [vmem:[%s1 + $0xa0] sm:$0xff]
    %v75 = vld [vmem:[%s1 + $0xa8] sm:$0xff]
    %v76 = vld [vmem:[%s1 + $0xb0] sm:$0xff]
    %v77 = vld [vmem:[%s1 + $0xb8] sm:$0xff]
    %v78 = vld [vmem:[%s1 + $0xc0] sm:$0xff]
    %v79 = vld [vmem:[%s1 + $0xc8] sm:$0xff]
    %v80 = vld [vmem:[%s1 + $0xd0] sm:$0xff]
    %v81 = vld [vmem:[%s1 + $0xd8] sm:$0xff]
    %v82 = vld [vmem:[%s1 + $0xe0] sm:$0xff]
    %v83 = vld [vmem:[%s1 + $0xe8] sm:$0xff]
    %v84 = vld [vmem:[%s1 + $0xf0] sm:$0xff]
    %v85 = vld [vmem:[%s1 + $0xf8] sm:$0xff]
    %v86 = vld [vmem:[%s1 + $0x100] sm:$0xff]
    %v87 = vld [vmem:[%s1 + $0x108] sm:$0xff]
    %v88 = vld [vmem:[%s1 + $0x110] sm:$0xff]
    %v89 = vld [vmem:[%s1 + $0x118] sm:$0xff]
    %v90 = vld [vmem:[%s1 + $0x120] sm:$0xff]
    %v91 = vld [vmem:[%s1 + $0x128] sm:$0xff]
    %v92 = vld [vmem:[%s1 + $0x130] sm:$0xff]
    %v93 = vld [vmem:[%s1 + $0x138] sm:$0xff]
    %v94 = vld [vmem:[%s1 + $0x140] sm:$0xff]
    %v95 = vld [vmem:[%s1 + $0x148] sm:$0xff]
    %v96 = vld [vmem:[%s1 + $0x150] sm:$0xff]
    %v97 = vld [vmem:[%s1 + $0x158] sm:$0xff]
    %v98 = vld [vmem:[%s1 + $0x160] sm:$0xff]
    %v99 = vld [vmem:[%s1 + $0x168] sm:$0xff]
    %v100 = vld [vmem:[%s1 + $0x170] sm:$0xff]
    %v101 = vld [vmem:[%s1 + $0x178] sm:$0xff]
    %v102 = vld [vmem:[%s1 + $0x180] sm:$0xff]
    %v103 = vld [vmem:[%s1 + $0x188] sm:$0xff]
    %v104 = vld [vmem:[%s1 + $0x190] sm:$0xff]
    %v105 = vld [vmem:[%s1 + $0x198] sm:$0xff]
    %v106 = vld [vmem:[%s1 + $0x1a0] sm:$0xff]
    %v107 = vld [vmem:[%s1 + $0x1a8] sm:$0xff]
    %v108 = vld [vmem:[%s1 + $0x1b0] sm:$0xff]
    %v109 = vld [vmem:[%s1 + $0x1b8] sm:$0xff]
    %v110 = vld [vmem:[%s1 + $0x1c0] sm:$0xff]
    %v111 = vld [vmem:[%s1 + $0x1c8] sm:$0xff]
    %v112 = vld [vmem:[%s1 + $0x1d0] sm:$0xff]
    %v113 = vld [vmem:[%s1 + $0x1d8] sm:$0xff]
    %v114 = vld [vmem:[%s1 + $0x1e0] sm:$0xff]
    %v115 = vld [vmem:[%s1 + $0x1e8] sm:$0xff]
    %v116 = vld [vmem:[%s1 + $0x1f0] sm:$0xff]
    %v117 = vld [vmem:[%s1 + $0x1f8] sm:$0xff]
    %v118 = vld [vmem:[%s1 + $0x200] sm:$0xff]
    %v119 = vld [vmem:[%s1 + $0x208] sm:$0xff]
    %v120 = vld [vmem:[%s1 + $0x210] sm:$0xff]
    %v121 = vld [vmem:[%s1 + $0x218] sm:$0xff]
    %v122 = vld [vmem:[%s1 + $0x220] sm:$0xff]
    %v123 = vld [vmem:[%s1 + $0x228] sm:$0xff]
    %v124 = vld [vmem:[%s1 + $0x230] sm:$0xff]
    %v125 = vld [vmem:[%s1 + $0x238] sm:$0xff]
    %v126 = vld [vmem:[%s1 + $0x240] sm:$0xff]
    %v127 = vld [vmem:[%s1 + $0x248] sm:$0xff]
    %v128 = vld [vmem:[%s1 + $0x250] sm:$0xff]
    %v129 = vld [vmem:[%s1 + $0x258] sm:$0xff]
    %v130 = vld [vmem:[%s1 + $0x260] sm:$0xff]
    %v131 = vld [vmem:[%s1 + $0x268] sm:$0xff]
    %v132 = vld [vmem:[%s1 + $0x270] sm:$0xff]
    %v133 = vld [vmem:[%s1 + $0x278] sm:$0xff]
    %v134 = vld [vmem:[%s1 + $0x280] sm:$0xff]
    %v135 = vld [vmem:[%s1 + $0x288] sm:$0xff]
    %v136 = vld [vmem:[%s1 + $0x290] sm:$0xff]
    %v137 = vld [vmem:[%s1 + $0x298] sm:$0xff]
    %v138 = vld [vmem:[%s1 + $0x2a0] sm:$0xff]
    %v139 = vld [vmem:[%s1 + $0x2a8] sm:$0xff]
    %v140 = vld [vmem:[%s1 + $0x2b0] sm:$0xff]
    %v141 = vld [vmem:[%s1 + $0x2b8] sm:$0xff]
    %v142 = vld [vmem:[%s1 + $0x2c0] sm:$0xff]
    %v143 = vld [vmem:[%s1 + $0x2c8] sm:$0xff]
    %v144 = vld [vmem:[%s1 + $0x2d0] sm:$0xff]
    %v145 = vld [vmem:[%s1 + $0x2d8] sm:$0xff]
    %v146 = vld [vmem:[%s1 + $0x2e0] sm:$0xff]
    %v147 = vld [vmem:[%s1 + $0x2e8] sm:$0xff]
    %v148 = vld [vmem:[%s1 + $0x2f0] sm:$0xff]
    %v149 = vld [vmem:[%s1 + $0x2f8] sm:$0xff]
    %v150 = vld [vmem:[%s1 + $0x300] sm:$0xff]
    %v151 = vld [vmem:[%s1 + $0x308] sm:$0xff]
    %v152 = vld [vmem:[%s1 + $0x310] sm:$0xff]
    %v153 = vld [vmem:[%s1 + $0x318] sm:$0xff]
    %v154 = vld [vmem:[%s1 + $0x320] sm:$0xff]
    %v155 = vld [vmem:[%s1 + $0x328] sm:$0xff]
    %v156 = vld [vmem:[%s1 + $0x330] sm:$0xff]
    %v157 = vld [vmem:[%s1 + $0x338] sm:$0xff]
    %v158 = vld [vmem:[%s1 + $0x340] sm:$0xff]
    %v159 = vld [vmem:[%s1 + $0x348] sm:$0xff]
    %v160 = vld [vmem:[%s1 + $0x350] sm:$0xff]
    %v161 = vld [vmem:[%s1 + $0x358] sm:$0xff]
    %v162 = vld [vmem:[%s1 + $0x360] sm:$0xff]
    %v163 = vld [vmem:[%s1 + $0x368] sm:$0xff]
    %v164 = vld [vmem:[%s1 + $0x370] sm:$0xff]
    %v165 = vld [vmem:[%s1 + $0x378] sm:$0xff]
    %v166 = vld [vmem:[%s1 + $0x380] sm:$0xff]
    %v167 = vld [vmem:[%s1 + $0x388] sm:$0xff]
    %v168 = vld [vmem:[%s1 + $0x390] sm:$0xff]
    %v169 = vld [vmem:[%s1 + $0x398] sm:$0xff]
    %v170 = vld [vmem:[%s1 + $0x3a0] sm:$0xff]
    %v171 = vld [vmem:[%s1 + $0x3a8] sm:$0xff]
    %v172 = vld [vmem:[%s1 + $0x3b0] sm:$0xff]
    %v173 = vld [vmem:[%s1 + $0x3b8] sm:$0xff]
    %v174 = vld [vmem:[%s1 + $0x3c0] sm:$0xff]
    %v175 = vld [vmem:[%s1 + $0x3c8] sm:$0xff]
    %v176 = vld [vmem:[%s1 + $0x3d0] sm:$0xff]
    %v177 = vld [vmem:[%s1 + $0x3d8] sm:$0xff]
    %v178 = vld [vmem:[%s1 + $0x3e0] sm:$0xff]
    %v179 = vld [vmem:[%s1 + $0x3e8] sm:$0xff]
    %v180 = vld [vmem:[%s1 + $0x3f0] sm:$0xff]
    %v181 = vld [vmem:[%s1 + $0x3f8] sm:$0xff]
    %v182 = vld [vmem:[%s1 + $0x400] sm:$0xff]
    %v183 = vld [vmem:[%s1 + $0x408] sm:$0xff]
    %v184 = vld [vmem:[%s1 + $0x410] sm:$0xff]
    %v185 = vld [vmem:[%s1 + $0x418] sm:$0xff]
    %v186 = vld [vmem:[%s1 + $0x420] sm:$0xff]
    %v187 = vld [vmem:[%s1 + $0x428] sm:$0xff]
    %v188 = vld [vmem:[%s1 + $0x430] sm:$0xff]
    %v189 = vld [vmem:[%s1 + $0x438] sm:$0xff]
    %v190 = vld [vmem:[%s1 + $0x440] sm:$0xff]
    %v191 = vld [vmem:[%s1 + $0x448] sm:$0xff]
    %v192 = vld [vmem:[%s1 + $0x450] sm:$0xff]
    %v193 = vld [vmem:[%s1 + $0x458] sm:$0xff]
    %v194 = vld [vmem:[%s1 + $0x460] sm:$0xff]
    %v195 = vld [vmem:[%s1 + $0x468] sm:$0xff]
    %v196 = vld [vmem:[%s1 + $0x470] sm:$0xff]
    %v197 = vld [vmem:[%s1 + $0x478] sm:$0xff]
    %v198 = vld [vmem:[%s1 + $0x480] sm:$0xff]
    %v199 = vld [vmem:[%s1 + $0x488] sm:$0xff]
    %v200 = vld [vmem:[%s1 + $0x490] sm:$0xff]
    %v201 = vld [vmem:[%s1 + $0x498] sm:$0xff]
    %v202 = vld [vmem:[%s1 + $0x4a0] sm:$0xff]
    %v203 = vld [vmem:[%s1 + $0x4a8] sm:$0xff]
    %v204 = vld [vmem:[%s1 + $0x4b0] sm:$0xff]
    %v205 = vld [vmem:[%s1 + $0x4b8] sm:$0xff]
    %v206 = vld [vmem:[%s1 + $0x4c0] sm:$0xff]
    %v207 = vld [vmem:[%s1 + $0x4c8] sm:$0xff]
    %v208 = vld [vmem:[%s1 + $0x4d0] sm:$0xff]
    %v209 = vld [vmem:[%s1 + $0x4d8] sm:$0xff]
    %v210 = vld [vmem:[%s1 + $0x4e0] sm:$0xff]
    %v211 = vld [vmem:[%s1 + $0x4e8] sm:$0xff]
    %v212 = vld [vmem:[%s1 + $0x4f0] sm:$0xff]
    %v213 = vld [vmem:[%s1 + $0x4f8] sm:$0xff]
    %v214 = vld [vmem:[%s1 + $0x500] sm:$0xff]
    %v215 = vld [vmem:[%s1 + $0x508] sm:$0xff]
    %v216 = vld [vmem:[%s1 + $0x510] sm:$0xff]
    %v217 = vld [vmem:[%s1 + $0x518] sm:$0xff]
    %v218 = vld [vmem:[%s1 + $0x520] sm:$0xff]
    %v219 = vld [vmem:[%s1 + $0x528] sm:$0xff]
    %v220 = vld [vmem:[%s1 + $0x530] sm:$0xff]
    %v221 = vld [vmem:[%s1 + $0x538] sm:$0xff]
    %v222 = vld [vmem:[%s1 + $0x540] sm:$0xff]
    %v223 = vld [vmem:[%s1 + $0x548] sm:$0xff]
    %v224 = vld [vmem:[%s1 + $0x550] sm:$0xff]
    %v225 = vld [vmem:[%s1 + $0x558] sm:$0xff]
    %v226 = vld [vmem:[%s1 + $0x560] sm:$0xff]
    %v227 = vld [vmem:[%s1 + $0x568] sm:$0xff]
    %v228 = vld [vmem:[%s1 + $0x570] sm:$0xff]
    %v229 = vld [vmem:[%s1 + $0x578] sm:$0xff]
    %v230 = vld [vmem:[%s1 + $0x580] sm:$0xff]
    %v231 = vld [vmem:[%s1 + $0x588] sm:$0xff]
    %v232 = vld [vmem:[%s1 + $0x590] sm:$0xff]
    %v233 = vld [vmem:[%s1 + $0x598] sm:$0xff]
    %v234 = vld [vmem:[%s1 + $0x5a0] sm:$0xff]
    %v235 = vld [vmem:[%s1 + $0x5a8] sm:$0xff]
    %v236 = vld [vmem:[%s1 + $0x5b0] sm:$0xff]
    %v237 = vld [vmem:[%s1 + $0x5b8] sm:$0xff]
    %v238 = vld [vmem:[%s1 + $0x5c0] sm:$0xff]
    %v239 = vld [vmem:[%s1 + $0x5c8] sm:$0xff]
    %v240 = vld [vmem:[%s1 + $0x5d0] sm:$0xff]
    %v241 = vld [vmem:[%s1 + $0x5d8] sm:$0xff]
    %v242 = vld [vmem:[%s1 + $0x5e0] sm:$0xff]
    %v243 = vld [vmem:[%s1 + $0x5e8] sm:$0xff]
    %v244 = vld [vmem:[%s1 + $0x5f0] sm:$0xff]
    %v245 = vld [vmem:[%s1 + $0x5f8] sm:$0xff]
    %v246 = vld [vmem:[%s1 + $0x600] sm:$0xff]
    %v247 = vld [vmem:[%s1 + $0x608] sm:$0xff]
    %v248 = vld [vmem:[%s1 + $0x610] sm:$0xff]
    %v249 = vld [vmem:[%s1 + $0x618] sm:$0xff]
    %v250 = vld [vmem:[%s1 + $0x620] sm:$0xff]
    %v251 = vld [vmem:[%s1 + $0x628] sm:$0xff]
    %v252 = vld [vmem:[%s1 + $0x630] sm:$0xff]
    %v253 = vld [vmem:[%s1 + $0x638] sm:$0xff]
    %v254 = vld [vmem:[%s1 + $0x640] sm:$0xff]
    %v255 = vld [vmem:[%s1 + $0x648] sm:$0xff]
    %v256 = vld [vmem:[%s1 + $0x650] sm:$0xff]
    %v257 = vld [vmem:[%s1 + $0x658] sm:$0xff]
    %v258 = vld [vmem:[%s1 + $0x660] sm:$0xff]
    %v259 = vld [vmem:[%s1 + $0x668] sm:$0xff]
    %v260 = vld [vmem:[%s1 + $0x670] sm:$0xff]
    %v261 = vld [vmem:[%s1 + $0x678] sm:$0xff]
    %v262 = vld [vmem:[%s1 + $0x680] sm:$0xff]
    %v263 = vld [vmem:[%s1 + $0x688] sm:$0xff]
    %v264 = vld [vmem:[%s1 + $0x690] sm:$0xff]
    %v265 = vld [vmem:[%s1 + $0x698] sm:$0xff]
    %v266 = vld [vmem:[%s1 + $0x6a0] sm:$0xff]
    %v267 = vld [vmem:[%s1 + $0x6a8] sm:$0xff]
    %v268 = vld [vmem:[%s1 + $0x6b0] sm:$0xff]
    %v269 = vld [vmem:[%s1 + $0x6b8] sm:$0xff]
    %v270 = vld [vmem:[%s1 + $0x6c0] sm:$0xff]
    %v271 = vld [vmem:[%s1 + $0x6c8] sm:$0xff]
    %v272 = vld [vmem:[%s1 + $0x6d0] sm:$0xff]
    %v273 = vld [vmem:[%s1 + $0x6d8] sm:$0xff]
    %v274 = vld [vmem:[%s1 + $0x6e0] sm:$0xff]
    %v275 = vld [vmem:[%s1 + $0x6e8] sm:$0xff]
    %v276 = vld [vmem:[%s1 + $0x6f0] sm:$0xff]
    %v277 = vld [vmem:[%s1 + $0x6f8] sm:$0xff]
    %v278 = vld [vmem:[%s1 + $0x700] sm:$0xff]
    %v279 = vld [vmem:[%s1 + $0x708] sm:$0xff]
    %v280 = vld [vmem:[%s1 + $0x710] sm:$0xff]
    %v281 = vld [vmem:[%s1 + $0x718] sm:$0xff]
    %v282 = vld [vmem:[%s1 + $0x720] sm:$0xff]
    %v283 = vld [vmem:[%s1 + $0x728] sm:$0xff]
    %v284 = vld [vmem:[%s1 + $0x730] sm:$0xff]
    %v285 = vld [vmem:[%s1 + $0x738] sm:$0xff]
    %v286 = vld [vmem:[%s1 + $0x740] sm:$0xff]
    %v287 = vld [vmem:[%s1 + $0x748] sm:$0xff]
    %v288 = vld [vmem:[%s1 + $0x750] sm:$0xff]
    %v289 = vld [vmem:[%s1 + $0x758] sm:$0xff]
    %v290 = vld [vmem:[%s1 + $0x760] sm:$0xff]
    %v291 = vld [vmem:[%s1 + $0x768] sm:$0xff]
    %v292 = vld [vmem:[%s1 + $0x770] sm:$0xff]
    %v293 = vld [vmem:[%s1 + $0x778] sm:$0xff]
    %v294 = vld [vmem:[%s1 + $0x780] sm:$0xff]
    %v295 = vld [vmem:[%s1 + $0x788] sm:$0xff]
    %v296 = vld [vmem:[%s1 + $0x790] sm:$0xff]
    %v297 = vld [vmem:[%s1 + $0x798] sm:$0xff]
    %v298 = vld [vmem:[%s1 + $0x7a0] sm:$0xff]
    %v299 = vld [vmem:[%s1 + $0x7a8] sm:$0xff]
    %v300 = vld [vmem:[%s1 + $0x7b0] sm:$0xff]
    %v301 = vld [vmem:[%s1 + $0x7b8] sm:$0xff]
    %v302 = vld [vmem:[%s1 + $0x7c0] sm:$0xff]
    %v303 = vld [vmem:[%s1 + $0x7c8] sm:$0xff]
    %v304 = vld [vmem:[%s1 + $0x7d0] sm:$0xff]
    %v305 = vld [vmem:[%s1 + $0x7d8] sm:$0xff]
    %v306 = vld [vmem:[%s1 + $0x7e0] sm:$0xff]
    %v307 = vld [vmem:[%s1 + $0x7e8] sm:$0xff]
    %v308 = vld [vmem:[%s1 + $0x7f0] sm:$0xff]
    %v309 = vld [vmem:[%s1 + $0x7f8] sm:$0xff]
    %v310 = vld [vmem:[%s1 + $0x800] sm:$0xff]
    %v311 = vld [vmem:[%s1 + $0x808] sm:$0xff]
    %v312 = vld [vmem:[%s1 + $0x810] sm:$0xff]
    %v313 = vld [vmem:[%s1 + $0x818] sm:$0xff]
    %v314 = vld [vmem:[%s1 + $0x820] sm:$0xff]
    %v315 = vld [vmem:[%s1 + $0x828] sm:$0xff]
    %v316 = vld [vmem:[%s1 + $0x830] sm:$0xff]
    %v317 = vld [vmem:[%s1 + $0x838] sm:$0xff]
    %v318 = vld [vmem:[%s1 + $0x840] sm:$0xff]
    %v319 = vld [vmem:[%s1 + $0x848] sm:$0xff]
    %v320 = vld [vmem:[%s1 + $0x850] sm:$0xff]
    %v321 = vld [vmem:[%s1 + $0x858] sm:$0xff]
    %v322 = vld [vmem:[%s1 + $0x860] sm:$0xff]
    %v323 = vld [vmem:[%s1 + $0x868] sm:$0xff]
    %v324 = vld [vmem:[%s1 + $0x870] sm:$0xff]
    %v325 = vld [vmem:[%s1 + $0x878] sm:$0xff]
    %v326 = vld [vmem:[%s1 + $0x880] sm:$0xff]
    %v327 = vld [vmem:[%s1 + $0x888] sm:$0xff]
    %v328 = vld [vmem:[%s1 + $0x890] sm:$0xff]
    %v329 = vld [vmem:[%s1 + $0x898] sm:$0xff]
    %v330 = vld [vmem:[%s1 + $0x8a0] sm:$0xff]
    %v331 = vld [vmem:[%s1 + $0x8a8] sm:$0xff]
    %v332 = vld [vmem:[%s1 + $0x8b0] sm:$0xff]
    %v333 = vld [vmem:[%s1 + $0x8b8] sm:$0xff]
    %v334 = vld [vmem:[%s1 + $0x8c0] sm:$0xff]
    %v335 = vld [vmem:[%s1 + $0x8c8] sm:$0xff]
    %v336 = vld [vmem:[%s1 + $0x8d0] sm:$0xff]
    %v337 = vld [vmem:[%s1 + $0x8d8] sm:$0xff]
    %v338 = vld [vmem:[%s1 + $0x8e0] sm:$0xff]
    %v339 = vld [vmem:[%s1 + $0x8e8] sm:$0xff]
    %v340 = vld [vmem:[%s1 + $0x8f0] sm:$0xff]
    %v341 = vld [vmem:[%s1 + $0x8f8] sm:$0xff]
    %v342 = vld [vmem:[%s1 + $0x900] sm:$0xff]
    %v343 = vld [vmem:[%s1 + $0x908] sm:$0xff]
    %v344 = vld [vmem:[%s1 + $0x910] sm:$0xff]
    %v345 = vld [vmem:[%s1 + $0x918] sm:$0xff]
    %v346 = vld [vmem:[%s1 + $0x920] sm:$0xff]
    %v347 = vld [vmem:[%s1 + $0x928] sm:$0xff]
    %v348 = vld [vmem:[%s1 + $0x930] sm:$0xff]
    %v349 = vld [vmem:[%s1 + $0x938] sm:$0xff]
    %v350 = vld [vmem:[%s1 + $0x940] sm:$0xff]
    %v351 = vld [vmem:[%s1 + $0x948] sm:$0xff]
    %v352 = vld [vmem:[%s1 + $0x950] sm:$0xff]
    %v353 = vld [vmem:[%s1 + $0x958] sm:$0xff]
    %v354 = vld [vmem:[%s1 + $0x960] sm:$0xff]
    %v355 = vld [vmem:[%s1 + $0x968] sm:$0xff]
    %v356 = vld [vmem:[%s1 + $0x970] sm:$0xff]
    %v357 = vld [vmem:[%s1 + $0x978] sm:$0xff]
    %v358 = vld [vmem:[%s1 + $0x980] sm:$0xff]
    %v359 = vld [vmem:[%s1 + $0x988] sm:$0xff]
    %v360 = vld [vmem:[%s1 + $0x990] sm:$0xff]
    %v361 = vld [vmem:[%s1 + $0x998] sm:$0xff]
    %v362 = vld [vmem:[%s1 + $0x9a0] sm:$0xff]
    %v363 = vld [vmem:[%s1 + $0x9a8] sm:$0xff]
    %v364 = vld [vmem:[%s1 + $0x9b0] sm:$0xff]
    %v365 = vld [vmem:[%s1 + $0x9b8] sm:$0xff]
    %v366 = vld [vmem:[%s1 + $0x9c0] sm:$0xff]
    %v367 = vld [vmem:[%s1 + $0x9c8] sm:$0xff]
    %v368 = vld [vmem:[%s1 + $0x9d0] sm:$0xff]
    %v369 = vld [vmem:[%s1 + $0x9d8] sm:$0xff]
    %v370 = vld [vmem:[%s1 + $0x9e0] sm:$0xff]
    %v371 = vld [vmem:[%s1 + $0x9e8] sm:$0xff]
    %v372 = vld [vmem:[%s1 + $0x9f0] sm:$0xff]
    %v373 = vld [vmem:[%s1 + $0x9f8] sm:$0xff]
    %v374 = vld [vmem:[%s1 + $0xa00] sm:$0xff]
    %v375 = vld [vmem:[%s1 + $0xa08] sm:$0xff]
    %v376 = vld [vmem:[%s1 + $0xa10] sm:$0xff]
    %v377 = vld [vmem:[%s1 + $0xa18] sm:$0xff]
    %v378 = vld [vmem:[%s1 + $0xa20] sm:$0xff]
    %v379 = vld [vmem:[%s1 + $0xa28] sm:$0xff]
    %v380 = vld [vmem:[%s1 + $0xa30] sm:$0xff]
    %v381 = vld [vmem:[%s1 + $0xa38] sm:$0xff]
    %v382 = vld [vmem:[%s1 + $0xa40] sm:$0xff]
    %v383 = vld [vmem:[%s1 + $0xa48] sm:$0xff]
    %v384 = vld [vmem:[%s1 + $0xa50] sm:$0xff]
    %v385 = vld [vmem:[%s1 + $0xa58] sm:$0xff]
    %v386 = vld [vmem:[%s1 + $0xa60] sm:$0xff]
    %v387 = vld [vmem:[%s1 + $0xa68] sm:$0xff]
    %v388 = vld [vmem:[%s1 + $0xa70] sm:$0xff]
    %v389 = vld [vmem:[%s1 + $0xa78] sm:$0xff]
    %v390 = vld [vmem:[%s1 + $0xa80] sm:$0xff]
    %v391 = vld [vmem:[%s1 + $0xa88] sm:$0xff]
    %v392 = vld [vmem:[%s1 + $0xa90] sm:$0xff]
    %v393 = vld [vmem:[%s1 + $0xa98] sm:$0xff]
    %v394 = vld [vmem:[%s1 + $0xaa0] sm:$0xff]
    %v395 = vld [vmem:[%s1 + $0xaa8] sm:$0xff]
    %v396 = vld [vmem:[%s1 + $0xab0] sm:$0xff]
    %v397 = vld [vmem:[%s1 + $0xab8] sm:$0xff]
    %v398 = vld [vmem:[%s1 + $0xac0] sm:$0xff]
    %v399 = vld [vmem:[%s1 + $0xac8] sm:$0xff]
    %v400 = vld [vmem:[%s1 + $0xad0] sm:$0xff]
    %v401 = vld [vmem:[%s1 + $0xad8] sm:$0xff]
    %v402 = vld [vmem:[%s1 + $0xae0] sm:$0xff]
    %v403 = vld [vmem:[%s1 + $0xae8] sm:$0xff]
    %v404 = vld [vmem:[%s1 + $0xaf0] sm:$0xff]
    %v405 = vld [vmem:[%s1 + $0xaf8] sm:$0xff]
    %v406 = vld [vmem:[%s1 + $0xb00] sm:$0xff]
    %v407 = vld [vmem:[%s1 + $0xb08] sm:$0xff]
    %v408 = vld [vmem:[%s1 + $0xb10] sm:$0xff]
    %v409 = vld [vmem:[%s1 + $0xb18] sm:$0xff]
    %v410 = vld [vmem:[%s1 + $0xb20] sm:$0xff]
    %v411 = vld [vmem:[%s1 + $0xb28] sm:$0xff]
    %v412 = vld [vmem:[%s1 + $0xb30] sm:$0xff]
    %v413 = vld [vmem:[%s1 + $0xb38] sm:$0xff]
    %v414 = vld [vmem:[%s1 + $0xb40] sm:$0xff]
    %v415 = vld [vmem:[%s1 + $0xb48] sm:$0xff]
    %v416 = vld [vmem:[%s1 + $0xb50] sm:$0xff]
    %v417 = vld [vmem:[%s1 + $0xb58] sm:$0xff]
    %v418 = vld [vmem:[%s1 + $0xb60] sm:$0xff]
    %v419 = vld [vmem:[%s1 + $0xb68] sm:$0xff]
    %v420 = vld [vmem:[%s1 + $0xb70] sm:$0xff]
    %v421 = vld [vmem:[%s1 + $0xb78] sm:$0xff]
    %v422 = vld [vmem:[%s1 + $0xb80] sm:$0xff]
    %v423 = vld [vmem:[%s1 + $0xb88] sm:$0xff]
    %v424 = vld [vmem:[%s1 + $0xb90] sm:$0xff]
    %v425 = vld [vmem:[%s1 + $0xb98] sm:$0xff]
    %v426 = vld [vmem:[%s1 + $0xba0] sm:$0xff]
    %v427 = vld [vmem:[%s1 + $0xba8] sm:$0xff]
    %v428 = vld [vmem:[%s1 + $0xbb0] sm:$0xff]
    %v429 = vld [vmem:[%s1 + $0xbb8] sm:$0xff]
    %v430 = vld [vmem:[%s1 + $0xbc0] sm:$0xff]
    %v431 = vld [vmem:[%s1 + $0xbc8] sm:$0xff]
    %v432 = vld [vmem:[%s1 + $0xbd0] sm:$0xff]
    %v433 = vld [vmem:[%s1 + $0xbd8] sm:$0xff]
    %v434 = vld [vmem:[%s1 + $0xbe0] sm:$0xff]
    %v435 = vld [vmem:[%s1 + $0xbe8] sm:$0xff]
    %v436 = vld [vmem:[%s1 + $0xbf0] sm:$0xff]
    %v437 = vld [vmem:[%s1 + $0xbf8] sm:$0xff]
    %v438 = vld [vmem:[%s1 + $0xc00] sm:$0xff]
    %v439 = vld [vmem:[%s1 + $0xc08] sm:$0xff]
    %v440 = vld [vmem:[%s1 + $0xc10] sm:$0xff]
    %v441 = vld [vmem:[%s1 + $0xc18] sm:$0xff]
    %v442 = vld [vmem:[%s1 + $0xc20] sm:$0xff]
    %v443 = vld [vmem:[%s1 + $0xc28] sm:$0xff]
    %v444 = vld [vmem:[%s1 + $0xc30] sm:$0xff]
    %v445 = vld [vmem:[%s1 + $0xc38] sm:$0xff]
    %v446 = vld [vmem:[%s1 + $0xc40] sm:$0xff]
    %v447 = vld [vmem:[%s1 + $0xc48] sm:$0xff]
    %v448 = vld [vmem:[%s1 + $0xc50] sm:$0xff]
    %v449 = vld [vmem:[%s1 + $0xc58] sm:$0xff]
    %v450 = vld [vmem:[%s1 + $0xc60] sm:$0xff]
    %v451 = vld [vmem:[%s1 + $0xc68] sm:$0xff]
    %v452 = vld [vmem:[%s1 + $0xc70] sm:$0xff]
    %v453 = vld [vmem:[%s1 + $0xc78] sm:$0xff]
    %v454 = vld [vmem:[%s1 + $0xc80] sm:$0xff]
    %v455 = vld [vmem:[%s1 + $0xc88] sm:$0xff]
    %v456 = vld [vmem:[%s1 + $0xc90] sm:$0xff]
    %v457 = vld [vmem:[%s1 + $0xc98] sm:$0xff]
    %v458 = vld [vmem:[%s1 + $0xca0] sm:$0xff]
    %v459 = vld [vmem:[%s1 + $0xca8] sm:$0xff]
    %v460 = vld [vmem:[%s1 + $0xcb0] sm:$0xff]
    %v461 = vld [vmem:[%s1 + $0xcb8] sm:$0xff]
    %v462 = vld [vmem:[%s1 + $0xcc0] sm:$0xff]
    %v463 = vld [vmem:[%s1 + $0xcc8] sm:$0xff]
    %v464 = vld [vmem:[%s1 + $0xcd0] sm:$0xff]
    %v465 = vld [vmem:[%s1 + $0xcd8] sm:$0xff]
    %v466 = vld [vmem:[%s1 + $0xce0] sm:$0xff]
    %v467 = vld [vmem:[%s1 + $0xce8] sm:$0xff]
    %v468 = vld [vmem:[%s1 + $0xcf0] sm:$0xff]
    %v469 = vld [vmem:[%s1 + $0xcf8] sm:$0xff]
    %v470 = vld [vmem:[%s1 + $0xd00] sm:$0xff]
    %v471 = vld [vmem:[%s1 + $0xd08] sm:$0xff]
    %v472 = vld [vmem:[%s1 + $0xd10] sm:$0xff]
    %v473 = vld [vmem:[%s1 + $0xd18] sm:$0xff]
    %v474 = vld [vmem:[%s1 + $0xd20] sm:$0xff]
    %v475 = vld [vmem:[%s1 + $0xd28] sm:$0xff]
    %v476 = vld [vmem:[%s1 + $0xd30] sm:$0xff]
    %v477 = vld [vmem:[%s1 + $0xd38] sm:$0xff]
    %v478 = vld [vmem:[%s1 + $0xd40] sm:$0xff]
    %v479 = vld [vmem:[%s1 + $0xd48] sm:$0xff]
    %v480 = vld [vmem:[%s1 + $0xd50] sm:$0xff]
    %v481 = vld [vmem:[%s1 + $0xd58] sm:$0xff]
    %v482 = vld [vmem:[%s1 + $0xd60] sm:$0xff]
    %v483 = vld [vmem:[%s1 + $0xd68] sm:$0xff]
    %v484 = vld [vmem:[%s1 + $0xd70] sm:$0xff]
    %v485 = vld [vmem:[%s1 + $0xd78] sm:$0xff]
    %v486 = vld [vmem:[%s1 + $0xd80] sm:$0xff]
    %v487 = vld [vmem:[%s1 + $0xd88] sm:$0xff]
    %v488 = vld [vmem:[%s1 + $0xd90] sm:$0xff]
    %v489 = vld [vmem:[%s1 + $0xd98] sm:$0xff]
    %v490 = vld [vmem:[%s1 + $0xda0] sm:$0xff]
    %v491 = vld [vmem:[%s1 + $0xda8] sm:$0xff]
    %v492 = vld [vmem:[%s1 + $0xdb0] sm:$0xff]
    %v493 = vld [vmem:[%s1 + $0xdb8] sm:$0xff]
    %v494 = vld [vmem:[%s1 + $0xdc0] sm:$0xff]
    %v495 = vld [vmem:[%s1 + $0xdc8] sm:$0xff]
    %v496 = vld [vmem:[%s1 + $0xdd0] sm:$0xff]
    %v497 = vld [vmem:[%s1 + $0xdd8] sm:$0xff]
    %v498 = vld [vmem:[%s1 + $0xde0] sm:$0xff]
    %v499 = vld [vmem:[%s1 + $0xde8] sm:$0xff]
    %v500 = vld [vmem:[%s1 + $0xdf0] sm:$0xff]
    %v501 = vld [vmem:[%s1 + $0xdf8] sm:$0xff]
    %v502 = vld [vmem:[%s1 + $0xe00] sm:$0xff]
    %v503 = vld [vmem:[%s1 + $0xe08] sm:$0xff]
    %v504 = vld [vmem:[%s1 + $0xe10] sm:$0xff]
    %v505 = vld [vmem:[%s1 + $0xe18] sm:$0xff]
    %v506 = vld [vmem:[%s1 + $0xe20] sm:$0xff]
    %v507 = vld [vmem:[%s1 + $0xe28] sm:$0xff]
    %v508 = vld [vmem:[%s1 + $0xe30] sm:$0xff]
    %v509 = vld [vmem:[%s1 + $0xe38] sm:$0xff]
    %v510 = vld [vmem:[%s1 + $0xe40] sm:$0xff]
    %v511 = vld [vmem:[%s1 + $0xe48] sm:$0xff]
    %v512 = vld [vmem:[%s1 + $0xe50] sm:$0xff]
    %v513 = vld [vmem:[%s1 + $0xe58] sm:$0xff]
    %v514 = vld [vmem:[%s1 + $0xe60] sm:$0xff]
    %v515 = vld [vmem:[%s1 + $0xe68] sm:$0xff]
    %v516 = vld [vmem:[%s1 + $0xe70] sm:$0xff]
    %v517 = vld [vmem:[%s1 + $0xe78] sm:$0xff]
    %v518 = vld [vmem:[%s1 + $0xe80] sm:$0xff]
    %v519 = vld [vmem:[%s1 + $0xe88] sm:$0xff]
    %v520 = vld [vmem:[%s1 + $0xe90] sm:$0xff]
    %v521 = vld [vmem:[%s1 + $0xe98] sm:$0xff]
    %v522 = vld [vmem:[%s1 + $0xea0] sm:$0xff]
    %v523 = vld [vmem:[%s1 + $0xea8] sm:$0xff]
    %v524 = vld [vmem:[%s1 + $0xeb0] sm:$0xff]
    %v525 = vld [vmem:[%s1 + $0xeb8] sm:$0xff]
    %v526 = vld [vmem:[%s1 + $0xec0] sm:$0xff]
    %v527 = vld [vmem:[%s1 + $0xec8] sm:$0xff]
    %v528 = vld [vmem:[%s1 + $0xed0] sm:$0xff]
    %v529 = vld [vmem:[%s1 + $0xed8] sm:$0xff]
    %v530 = vld [vmem:[%s1 + $0xee0] sm:$0xff]
    %v531 = vld [vmem:[%s1 + $0xee8] sm:$0xff]
    %v532 = vld [vmem:[%s1 + $0xef0] sm:$0xff]
    %v533 = vld [vmem:[%s1 + $0xef8] sm:$0xff]
    %v534 = vld [vmem:[%s1 + $0xf00] sm:$0xff]
    %v535 = vld [vmem:[%s1 + $0xf08] sm:$0xff]
    %v536 = vld [vmem:[%s1 + $0xf10] sm:$0xff]
    %v537 = vld [vmem:[%s1 + $0xf18] sm:$0xff]
    %v538 = vld [vmem:[%s1 + $0xf20] sm:$0xff]
    %v539 = vld [vmem:[%s1 + $0xf28] sm:$0xff]
    %v540 = vld [vmem:[%s1 + $0xf30] sm:$0xff]
    %v541 = vld [vmem:[%s1 + $0xf38] sm:$0xff]
    %v542 = vld [vmem:[%s1 + $0xf40] sm:$0xff]
    %v543 = vld [vmem:[%s1 + $0xf48] sm:$0xff]
    %v544 = vld [vmem:[%s1 + $0xf50] sm:$0xff]
    %v545 = vld [vmem:[%s1 + $0xf58] sm:$0xff]
    %v546 = vld [vmem:[%s1 + $0xf60] sm:$0xff]
    %v547 = vld [vmem:[%s1 + $0xf68] sm:$0xff]
    %v548 = vld [vmem:[%s1 + $0xf70] sm:$0xff]
    %v549 = vld [vmem:[%s1 + $0xf78] sm:$0xff]
    %v550 = vld [vmem:[%s1 + $0xf80] sm:$0xff]
    %v551 = vld [vmem:[%s1 + $0xf88] sm:$0xff]
    %v552 = vld [vmem:[%s1 + $0xf90] sm:$0xff]
    %v553 = vld [vmem:[%s1 + $0xf98] sm:$0xff]
    %v554 = vld [vmem:[%s1 + $0xfa0] sm:$0xff]
    %v555 = vld [vmem:[%s1 + $0xfa8] sm:$0xff]
    %v556 = vld [vmem:[%s1 + $0xfb0] sm:$0xff]
    %v557 = vld [vmem:[%s1 + $0xfb8] sm:$0xff]
    %v558 = vld [vmem:[%s1 + $0xfc0] sm:$0xff]
    %v559 = vld [vmem:[%s1 + $0xfc8] sm:$0xff]
    %v560 = vld [vmem:[%s1 + $0xfd0] sm:$0xff]
    %v561 = vld [vmem:[%s1 + $0xfd8] sm:$0xff]
    %v562 = vld [vmem:[%s1 + $0xfe0] sm:$0xff]
    %v563 = vld [vmem:[%s1 + $0xfe8] sm:$0xff]
    %v564 = vld [vmem:[%s1 + $0xff0] sm:$0xff]
    %v565 = vld [vmem:[%s1 + $0xff8] sm:$0xff]
    %v566 = vld [vmem:[%s1 + $0x1000] sm:$0xff]
    %v567 = vld [vmem:[%s1 + $0x1008] sm:$0xff]
    %v568 = vld [vmem:[%s1 + $0x1010] sm:$0xff]
    %v569 = vld [vmem:[%s1 + $0x1018] sm:$0xff]
    %v570 = vld [vmem:[%s1 + $0x1020] sm:$0xff]
    %v571 = vld [vmem:[%s1 + $0x1028] sm:$0xff]
    %v572 = vld [vmem:[%s1 + $0x1030] sm:$0xff]
    %v573 = vld [vmem:[%s1 + $0x1038] sm:$0xff]
    %v574 = vld [vmem:[%s1 + $0x1040] sm:$0xff]
    %v575 = vld [vmem:[%s1 + $0x1048] sm:$0xff]
    %v576 = vld [vmem:[%s1 + $0x1050] sm:$0xff]
    %v577 = vld [vmem:[%s1 + $0x1058] sm:$0xff]
    %v578 = vld [vmem:[%s1 + $0x1060] sm:$0xff]
    %v579 = vld [vmem:[%s1 + $0x1068] sm:$0xff]
    %v580 = vld [vmem:[%s1 + $0x1070] sm:$0xff]
    %v581 = vld [vmem:[%s1 + $0x1078] sm:$0xff]
    %v582 = vld [vmem:[%s1 + $0x1080] sm:$0xff]
    %v583 = vld [vmem:[%s1 + $0x1088] sm:$0xff]
    %v584 = vld [vmem:[%s1 + $0x1090] sm:$0xff]
    %v585 = vld [vmem:[%s1 + $0x1098] sm:$0xff]
    %v586 = vld [vmem:[%s1 + $0x10a0] sm:$0xff]
    %v587 = vld [vmem:[%s1 + $0x10a8] sm:$0xff]
    %v588 = vld [vmem:[%s1 + $0x10b0] sm:$0xff]
    %v589 = vld [vmem:[%s1 + $0x10b8] sm:$0xff]
    %v590 = vld [vmem:[%s1 + $0x10c0] sm:$0xff]
    %v591 = vld [vmem:[%s1 + $0x10c8] sm:$0xff]
    %v592 = vld [vmem:[%s1 + $0x10d0] sm:$0xff]
    %v593 = vld [vmem:[%s1 + $0x10d8] sm:$0xff]
    %v594 = vld [vmem:[%s1 + $0x10e0] sm:$0xff]
    %v595 = vld [vmem:[%s1 + $0x10e8] sm:$0xff]
    %v596 = vld [vmem:[%s1 + $0x10f0] sm:$0xff]
    %v597 = vld [vmem:[%s1 + $0x10f8] sm:$0xff]
    %v598 = vld [vmem:[%s1 + $0x1100] sm:$0xff]
    %v599 = vld [vmem:[%s1 + $0x1108] sm:$0xff]
    %v600 = vld [vmem:[%s1 + $0x1110] sm:$0xff]
    %v601 = vld [vmem:[%s1 + $0x1118] sm:$0xff]
    %v602 = vld [vmem:[%s1 + $0x1120] sm:$0xff]
    %v603 = vld [vmem:[%s1 + $0x1128] sm:$0xff]
    %v604 = vld [vmem:[%s1 + $0x1130] sm:$0xff]
    %v605 = vld [vmem:[%s1 + $0x1138] sm:$0xff]
    %v606 = vld [vmem:[%s1 + $0x1140] sm:$0xff]
    %v607 = vld [vmem:[%s1 + $0x1148] sm:$0xff]
    %v608 = vld [vmem:[%s1 + $0x1150] sm:$0xff]
    %v609 = vld [vmem:[%s1 + $0x1158] sm:$0xff]
    %v610 = vld [vmem:[%s1 + $0x1160] sm:$0xff]
    %v611 = vld [vmem:[%s1 + $0x1168] sm:$0xff]
    %v612 = vld [vmem:[%s1 + $0x1170] sm:$0xff]
    %v613 = vld [vmem:[%s1 + $0x1178] sm:$0xff]
    %v614 = vld [vmem:[%s1 + $0x1180] sm:$0xff]
    %v615 = vld [vmem:[%s1 + $0x1188] sm:$0xff]
    %v616 = vld [vmem:[%s1 + $0x1190] sm:$0xff]
    %v617 = vld [vmem:[%s1 + $0x1198] sm:$0xff]
    %v618 = vld [vmem:[%s1 + $0x11a0] sm:$0xff]
    %v619 = vld [vmem:[%s1 + $0x11a8] sm:$0xff]
    %v620 = vld [vmem:[%s1 + $0x11b0] sm:$0xff]
    %v621 = vld [vmem:[%s1 + $0x11b8] sm:$0xff]
    %v622 = vld [vmem:[%s1 + $0x11c0] sm:$0xff]
    %v623 = vld [vmem:[%s1 + $0x11c8] sm:$0xff]
    %v624 = vld [vmem:[%s1 + $0x11d0] sm:$0xff]
    %v625 = vld [vmem:[%s1 + $0x11d8] sm:$0xff]
    %v626 = vld [vmem:[%s1 + $0x11e0] sm:$0xff]
    %v627 = vld [vmem:[%s1 + $0x11e8] sm:$0xff]
    %v628 = vld [vmem:[%s1 + $0x11f0] sm:$0xff]
    %v629 = vld [vmem:[%s1 + $0x11f8] sm:$0xff]
    %v630 = vld [vmem:[%s1 + $0x1200] sm:$0xff]
    %v631 = vld [vmem:[%s1 + $0x1208] sm:$0xff]
    %v632 = vld [vmem:[%s1 + $0x1210] sm:$0xff]
    %v633 = vld [vmem:[%s1 + $0x1218] sm:$0xff]
    %v634 = vld [vmem:[%s1 + $0x1220] sm:$0xff]
    %v635 = vld [vmem:[%s1 + $0x1228] sm:$0xff]
    %v636 = vld [vmem:[%s1 + $0x1230] sm:$0xff]
    %v637 = vld [vmem:[%s1 + $0x1238] sm:$0xff]
    %v638 = vld [vmem:[%s1 + $0x1240] sm:$0xff]
    %v639 = vld [vmem:[%s1 + $0x1248] sm:$0xff]
    %v640 = vld [vmem:[%s1 + $0x1250] sm:$0xff]
    %v641 = vld [vmem:[%s1 + $0x1258] sm:$0xff]
    %v642 = vld [vmem:[%s1 + $0x1260] sm:$0xff]
    %v643 = vld [vmem:[%s1 + $0x1268] sm:$0xff]
    %v644 = vld [vmem:[%s1 + $0x1270] sm:$0xff]
    %v645 = vld [vmem:[%s1 + $0x1278] sm:$0xff]
    %v646 = vld [vmem:[%s1 + $0x1280] sm:$0xff]
    %v647 = vld [vmem:[%s1 + $0x1288] sm:$0xff]
    %v648 = vld [vmem:[%s1 + $0x1290] sm:$0xff]
    %v649 = vld [vmem:[%s1 + $0x1298] sm:$0xff]
    %v650 = vld [vmem:[%s1 + $0x12a0] sm:$0xff]
    %v651 = vld [vmem:[%s1 + $0x12a8] sm:$0xff]
    %v652 = vld [vmem:[%s1 + $0x12b0] sm:$0xff]
    %v653 = vld [vmem:[%s1 + $0x12b8] sm:$0xff]
    %v654 = vld [vmem:[%s1 + $0x12c0] sm:$0xff]
    %v655 = vld [vmem:[%s1 + $0x12c8] sm:$0xff]
    %v656 = vld [vmem:[%s1 + $0x12d0] sm:$0xff]
    %v657 = vld [vmem:[%s1 + $0x12d8] sm:$0xff]
    %v658 = vld [vmem:[%s1 + $0x12e0] sm:$0xff]
    %v659 = vld [vmem:[%s1 + $0x12e8] sm:$0xff]
    %v660 = vld [vmem:[%s1 + $0x12f0] sm:$0xff]
    %v661 = vld [vmem:[%s1 + $0x12f8] sm:$0xff]
    %v662 = vld [vmem:[%s1 + $0x1300] sm:$0xff]
    %v663 = vld [vmem:[%s1 + $0x1308] sm:$0xff]
    %v664 = vld [vmem:[%s1 + $0x1310] sm:$0xff]
    %v665 = vld [vmem:[%s1 + $0x1318] sm:$0xff]
    %v666 = vld [vmem:[%s1 + $0x1320] sm:$0xff]
    %v667 = vld [vmem:[%s1 + $0x1328] sm:$0xff]
    %v668 = vld [vmem:[%s1 + $0x1330] sm:$0xff]
    %v669 = vld [vmem:[%s1 + $0x1338] sm:$0xff]
    %v670 = vld [vmem:[%s1 + $0x1340] sm:$0xff]
    %v671 = vld [vmem:[%s1 + $0x1348] sm:$0xff]
    %v672 = vld [vmem:[%s1 + $0x1350] sm:$0xff]
    %v673 = vld [vmem:[%s1 + $0x1358] sm:$0xff]
    %v674 = vld [vmem:[%s1 + $0x1360] sm:$0xff]
    %v675 = vld [vmem:[%s1 + $0x1368] sm:$0xff]
    %v676 = vld [vmem:[%s1 + $0x1370] sm:$0xff]
    %v677 = vld [vmem:[%s1 + $0x1378] sm:$0xff]
    %v678 = vld [vmem:[%s1 + $0x1380] sm:$0xff]
    %v679 = vld [vmem:[%s1 + $0x1388] sm:$0xff]
    %v680 = vld [vmem:[%s1 + $0x1390] sm:$0xff]
    %v681 = vld [vmem:[%s1 + $0x1398] sm:$0xff]
    %v682 = vld [vmem:[%s1 + $0x13a0] sm:$0xff]
    %v683 = vld [vmem:[%s1 + $0x13a8] sm:$0xff]
    %v684 = vld [vmem:[%s1 + $0x13b0] sm:$0xff]
    %v685 = vld [vmem:[%s1 + $0x13b8] sm:$0xff]
    %v686 = vld [vmem:[%s1 + $0x13c0] sm:$0xff]
    %v687 = vld [vmem:[%s1 + $0x13c8] sm:$0xff]
    %v688 = vld [vmem:[%s1 + $0x13d0] sm:$0xff]
    %v689 = vld [vmem:[%s1 + $0x13d8] sm:$0xff]
    %v690 = vld [vmem:[%s1 + $0x13e0] sm:$0xff]
    %v691 = vld [vmem:[%s1 + $0x13e8] sm:$0xff]
    %v692 = vld [vmem:[%s1 + $0x13f0] sm:$0xff]
    %v693 = vld [vmem:[%s1 + $0x13f8] sm:$0xff]
    %v694 = vld [vmem:[%s1 + $0x1400] sm:$0xff]
    %v695 = vld [vmem:[%s1 + $0x1408] sm:$0xff]
    %v696 = vld [vmem:[%s1 + $0x1410] sm:$0xff]
    %v697 = vld [vmem:[%s1 + $0x1418] sm:$0xff]
    %v698 = vld [vmem:[%s1 + $0x1420] sm:$0xff]
    %v699 = vld [vmem:[%s1 + $0x1428] sm:$0xff]
    %v700 = vld [vmem:[%s1 + $0x1430] sm:$0xff]
    %v701 = vld [vmem:[%s1 + $0x1438] sm:$0xff]
    %v702 = vld [vmem:[%s1 + $0x1440] sm:$0xff]
    %v703 = vld [vmem:[%s1 + $0x1448] sm:$0xff]
    %v704 = vld [vmem:[%s1 + $0x1450] sm:$0xff]
    %v705 = vld [vmem:[%s1 + $0x1458] sm:$0xff]
    %v706 = vld [vmem:[%s1 + $0x1460] sm:$0xff]
    %v707 = vld [vmem:[%s1 + $0x1468] sm:$0xff]
    %v708 = vld [vmem:[%s1 + $0x1470] sm:$0xff]
    %v709 = vld [vmem:[%s1 + $0x1478] sm:$0xff]
    %v710 = vld [vmem:[%s1 + $0x1480] sm:$0xff]
    %v711 = vld [vmem:[%s1 + $0x1488] sm:$0xff]
    %v712 = vld [vmem:[%s1 + $0x1490] sm:$0xff]
    %v713 = vld [vmem:[%s1 + $0x1498] sm:$0xff]
    %v714 = vld [vmem:[%s1 + $0x14a0] sm:$0xff]
    %v715 = vld [vmem:[%s1 + $0x14a8] sm:$0xff]
    %v716 = vld [vmem:[%s1 + $0x14b0] sm:$0xff]
    %v717 = vld [vmem:[%s1 + $0x14b8] sm:$0xff]
    %v718 = vld [vmem:[%s1 + $0x14c0] sm:$0xff]
    %v719 = vld [vmem:[%s1 + $0x14c8] sm:$0xff]
    %v720 = vld [vmem:[%s1 + $0x14d0] sm:$0xff]
    %v721 = vld [vmem:[%s1 + $0x14d8] sm:$0xff]
    %v722 = vld [vmem:[%s1 + $0x14e0] sm:$0xff]
    %v723 = vld [vmem:[%s1 + $0x14e8] sm:$0xff]
    %v724 = vld [vmem:[%s1 + $0x14f0] sm:$0xff]
    %v725 = vld [vmem:[%s1 + $0x14f8] sm:$0xff]
    %v726 = vld [vmem:[%s1 + $0x1500] sm:$0xff]
    %v727 = vld [vmem:[%s1 + $0x1508] sm:$0xff]
    %v728 = vld [vmem:[%s1 + $0x1510] sm:$0xff]
    %v729 = vld [vmem:[%s1 + $0x1518] sm:$0xff]
    %v730 = vld [vmem:[%s1 + $0x1520] sm:$0xff]
    %v731 = vld [vmem:[%s1 + $0x1528] sm:$0xff]
    %v732 = vld [vmem:[%s1 + $0x1530] sm:$0xff]
    %v733 = vld [vmem:[%s1 + $0x1538] sm:$0xff]
    %v734 = vld [vmem:[%s1 + $0x1540] sm:$0xff]
    %v735 = vld [vmem:[%s1 + $0x1548] sm:$0xff]
    %v736 = vld [vmem:[%s1 + $0x1550] sm:$0xff]
    %v737 = vld [vmem:[%s1 + $0x1558] sm:$0xff]
    %v738 = vld [vmem:[%s1 + $0x1560] sm:$0xff]
    %v739 = vld [vmem:[%s1 + $0x1568] sm:$0xff]
    %v740 = vld [vmem:[%s1 + $0x1570] sm:$0xff]
    %v741 = vld [vmem:[%s1 + $0x1578] sm:$0xff]
    %v742 = vld [vmem:[%s1 + $0x1580] sm:$0xff]
    %v743 = vld [vmem:[%s1 + $0x1588] sm:$0xff]
    %v744 = vld [vmem:[%s1 + $0x1590] sm:$0xff]
    %v745 = vld [vmem:[%s1 + $0x1598] sm:$0xff]
    %v746 = vld [vmem:[%s1 + $0x15a0] sm:$0xff]
    %v747 = vld [vmem:[%s1 + $0x15a8] sm:$0xff]
    %v748 = vld [vmem:[%s1 + $0x15b0] sm:$0xff]
    %v749 = vld [vmem:[%s1 + $0x15b8] sm:$0xff]
    %v750 = vld [vmem:[%s1 + $0x15c0] sm:$0xff]
    %v751 = vld [vmem:[%s1 + $0x15c8] sm:$0xff]
    %v752 = vld [vmem:[%s1 + $0x15d0] sm:$0xff]
    %v753 = vld [vmem:[%s1 + $0x15d8] sm:$0xff]
    %v754 = vld [vmem:[%s1 + $0x15e0] sm:$0xff]
    %v755 = vld [vmem:[%s1 + $0x15e8] sm:$0xff]
    %v756 = vld [vmem:[%s1 + $0x15f0] sm:$0xff]
    %v757 = vld [vmem:[%s1 + $0x15f8] sm:$0xff]
    %v758 = vld [vmem:[%s1 + $0x1600] sm:$0xff]
    %v759 = vld [vmem:[%s1 + $0x1608] sm:$0xff]
    %v760 = vld [vmem:[%s1 + $0x1610] sm:$0xff]
    %v761 = vld [vmem:[%s1 + $0x1618] sm:$0xff]
    %v762 = vld [vmem:[%s1 + $0x1620] sm:$0xff]
    %v763 = vld [vmem:[%s1 + $0x1628] sm:$0xff]
    %v764 = vld [vmem:[%s1 + $0x1630] sm:$0xff]
    %v765 = vld [vmem:[%s1 + $0x1638] sm:$0xff]
    %v766 = vld [vmem:[%s1 + $0x1640] sm:$0xff]
    %v767 = vld [vmem:[%s1 + $0x1648] sm:$0xff]
    %v768 = vld [vmem:[%s1 + $0x1650] sm:$0xff]
    %v769 = vld [vmem:[%s1 + $0x1658] sm:$0xff]
    %v770 = vld [vmem:[%s1 + $0x1660] sm:$0xff]
    %v771 = vld [vmem:[%s1 + $0x1668] sm:$0xff]
    %v772 = vld [vmem:[%s1 + $0x1670] sm:$0xff]
    %v773 = vld [vmem:[%s1 + $0x1678] sm:$0xff]
    %v774 = vld [vmem:[%s1 + $0x1680] sm:$0xff]
    %v775 = vld [vmem:[%s1 + $0x1688] sm:$0xff]
    %v776 = vld [vmem:[%s1 + $0x1690] sm:$0xff]
    %v777 = vld [vmem:[%s1 + $0x1698] sm:$0xff]
    %v778 = vld [vmem:[%s1 + $0x16a0] sm:$0xff]
    %v779 = vld [vmem:[%s1 + $0x16a8] sm:$0xff]
    %v780 = vld [vmem:[%s1 + $0x16b0] sm:$0xff]
    %v781 = vld [vmem:[%s1 + $0x16b8] sm:$0xff]
    %v782 = vld [vmem:[%s1 + $0x16c0] sm:$0xff]
    %v783 = vld [vmem:[%s1 + $0x16c8] sm:$0xff]
    %v784 = vld [vmem:[%s1 + $0x16d0] sm:$0xff]
    %v785 = vld [vmem:[%s1 + $0x16d8] sm:$0xff]
    %v786 = vld [vmem:[%s1 + $0x16e0] sm:$0xff]
    %v787 = vld [vmem:[%s1 + $0x16e8] sm:$0xff]
    %v788 = vld [vmem:[%s1 + $0x16f0] sm:$0xff]
    %v789 = vld [vmem:[%s1 + $0x16f8] sm:$0xff]
    %v790 = vld [vmem:[%s1 + $0x1700] sm:$0xff]
    %v791 = vld [vmem:[%s1 + $0x1708] sm:$0xff]
    %v792 = vld [vmem:[%s1 + $0x1710] sm:$0xff]
    %v793 = vld [vmem:[%s1 + $0x1718] sm:$0xff]
    %v794 = vld [vmem:[%s1 + $0x1720] sm:$0xff]
    %v795 = vld [vmem:[%s1 + $0x1728] sm:$0xff]
    %v796 = vld [vmem:[%s1 + $0x1730] sm:$0xff]
    %v797 = vld [vmem:[%s1 + $0x1738] sm:$0xff]
    %v798 = vld [vmem:[%s1 + $0x1740] sm:$0xff]
    %v799 = vld [vmem:[%s1 + $0x1748] sm:$0xff]
    %v800 = vld [vmem:[%s1 + $0x1750] sm:$0xff]
    %v801 = vld [vmem:[%s1 + $0x1758] sm:$0xff]
    %v802 = vld [vmem:[%s1 + $0x1760] sm:$0xff]
    %v803 = vld [vmem:[%s1 + $0x1768] sm:$0xff]
    %v804 = vld [vmem:[%s1 + $0x1770] sm:$0xff]
    %v805 = vld [vmem:[%s1 + $0x1778] sm:$0xff]
    %v806 = vld [vmem:[%s1 + $0x1780] sm:$0xff]
    %v807 = vld [vmem:[%s1 + $0x1788] sm:$0xff]
    %v808 = vld [vmem:[%s1 + $0x1790] sm:$0xff]
    %v809 = vld [vmem:[%s1 + $0x1798] sm:$0xff]
    %v810 = vld [vmem:[%s1 + $0x17a0] sm:$0xff]
    %v811 = vld [vmem:[%s1 + $0x17a8] sm:$0xff]
    %v812 = vld [vmem:[%s1 + $0x17b0] sm:$0xff]
    %v813 = vld [vmem:[%s1 + $0x17b8] sm:$0xff]
    %v814 = vld [vmem:[%s1 + $0x17c0] sm:$0xff]
    %v815 = vld [vmem:[%s1 + $0x17c8] sm:$0xff]
    %v816 = vld [vmem:[%s1 + $0x17d0] sm:$0xff]
    %v817 = vld [vmem:[%s1 + $0x17d8] sm:$0xff]
    %v818 = vld [vmem:[%s1 + $0x17e0] sm:$0xff]
    %v819 = vld [vmem:[%s1 + $0x17e8] sm:$0xff]
    %v820 = vld [vmem:[%s1 + $0x17f0] sm:$0xff]
    %v821 = vld [vmem:[%s1 + $0x17f8] sm:$0xff]
    %v822 = vld [vmem:[%s1 + $0x1800] sm:$0xff]
    %v823 = vld [vmem:[%s1 + $0x1808] sm:$0xff]
    %v824 = vld [vmem:[%s1 + $0x1810] sm:$0xff]
    %v825 = vld [vmem:[%s1 + $0x1818] sm:$0xff]
    %v826 = vld [vmem:[%s1 + $0x1820] sm:$0xff]
    %v827 = vld [vmem:[%s1 + $0x1828] sm:$0xff]
    %v828 = vld [vmem:[%s1 + $0x1830] sm:$0xff]
    %v829 = vld [vmem:[%s1 + $0x1838] sm:$0xff]
    %v830 = vld [vmem:[%s1 + $0x1840] sm:$0xff]
    %v831 = vld [vmem:[%s1 + $0x1848] sm:$0xff]
    %v832 = vld [vmem:[%s1 + $0x1850] sm:$0xff]
    %v833 = vld [vmem:[%s1 + $0x1858] sm:$0xff]
    %v834 = vld [vmem:[%s1 + $0x1860] sm:$0xff]
    %v835 = vld [vmem:[%s1 + $0x1868] sm:$0xff]
    %v836 = vld [vmem:[%s1 + $0x1870] sm:$0xff]
    %v837 = vld [vmem:[%s1 + $0x1878] sm:$0xff]
    %v838 = vld [vmem:[%s1 + $0x1880] sm:$0xff]
    %v839 = vld [vmem:[%s1 + $0x1888] sm:$0xff]
    %v840 = vld [vmem:[%s1 + $0x1890] sm:$0xff]
    %v841 = vld [vmem:[%s1 + $0x1898] sm:$0xff]
    %v842 = vld [vmem:[%s1 + $0x18a0] sm:$0xff]
    %v843 = vld [vmem:[%s1 + $0x18a8] sm:$0xff]
    %v844 = vld [vmem:[%s1 + $0x18b0] sm:$0xff]
    %v845 = vld [vmem:[%s1 + $0x18b8] sm:$0xff]
    %v846 = vld [vmem:[%s1 + $0x18c0] sm:$0xff]
    %v847 = vld [vmem:[%s1 + $0x18c8] sm:$0xff]
    %v848 = vld [vmem:[%s1 + $0x18d0] sm:$0xff]
    %v849 = vld [vmem:[%s1 + $0x18d8] sm:$0xff]
    %v850 = vld [vmem:[%s1 + $0x18e0] sm:$0xff]
    %v851 = vld [vmem:[%s1 + $0x18e8] sm:$0xff]
    %v852 = vld [vmem:[%s1 + $0x18f0] sm:$0xff]
    %v853 = vld [vmem:[%s1 + $0x18f8] sm:$0xff]
    %v854 = vld [vmem:[%s1 + $0x1900] sm:$0xff]
    %v855 = vld [vmem:[%s1 + $0x1908] sm:$0xff]
    %v856 = vld [vmem:[%s1 + $0x1910] sm:$0xff]
    %v857 = vld [vmem:[%s1 + $0x1918] sm:$0xff]
    %v858 = vld [vmem:[%s1 + $0x1920] sm:$0xff]
    %v859 = vld [vmem:[%s1 + $0x1928] sm:$0xff]
    %v860 = vld [vmem:[%s1 + $0x1930] sm:$0xff]
    %v861 = vld [vmem:[%s1 + $0x1938] sm:$0xff]
    %v862 = vld [vmem:[%s1 + $0x1940] sm:$0xff]
    %v863 = vld [vmem:[%s1 + $0x1948] sm:$0xff]
    %v864 = vld [vmem:[%s1 + $0x1950] sm:$0xff]
    %v865 = vld [vmem:[%s1 + $0x1958] sm:$0xff]
    %v866 = vld [vmem:[%s1 + $0x1960] sm:$0xff]
    %v867 = vld [vmem:[%s1 + $0x1968] sm:$0xff]
    %v868 = vld [vmem:[%s1 + $0x1970] sm:$0xff]
    %v869 = vld [vmem:[%s1 + $0x1978] sm:$0xff]
    %v870 = vld [vmem:[%s1 + $0x1980] sm:$0xff]
    %v871 = vld [vmem:[%s1 + $0x1988] sm:$0xff]
    %v872 = vld [vmem:[%s1 + $0x1990] sm:$0xff]
    %v873 = vld [vmem:[%s1 + $0x1998] sm:$0xff]
    %v874 = vld [vmem:[%s1 + $0x19a0] sm:$0xff]
    %v875 = vld [vmem:[%s1 + $0x19a8] sm:$0xff]
    %v876 = vld [vmem:[%s1 + $0x19b0] sm:$0xff]
    %v877 = vld [vmem:[%s1 + $0x19b8] sm:$0xff]
    %v878 = vld [vmem:[%s1 + $0x19c0] sm:$0xff]
    %v879 = vld [vmem:[%s1 + $0x19c8] sm:$0xff]
    %v880 = vld [vmem:[%s1 + $0x19d0] sm:$0xff]
    %v881 = vld [vmem:[%s1 + $0x19d8] sm:$0xff]
    %v882 = vld [vmem:[%s1 + $0x19e0] sm:$0xff]
    %v883 = vld [vmem:[%s1 + $0x19e8] sm:$0xff]
    %v884 = vld [vmem:[%s1 + $0x19f0] sm:$0xff]
    %v885 = vld [vmem:[%s1 + $0x19f8] sm:$0xff]
    %v886 = vld [vmem:[%s1 + $0x1a00] sm:$0xff]
    %v887 = vld [vmem:[%s1 + $0x1a08] sm:$0xff]
    %v888 = vld [vmem:[%s1 + $0x1a10] sm:$0xff]
    %v889 = vld [vmem:[%s1 + $0x1a18] sm:$0xff]
    %v890 = vld [vmem:[%s1 + $0x1a20] sm:$0xff]
    %v891 = vld [vmem:[%s1 + $0x1a28] sm:$0xff]
    %v892 = vld [vmem:[%s1 + $0x1a30] sm:$0xff]
    %v893 = vld [vmem:[%s1 + $0x1a38] sm:$0xff]
    %v894 = vld [vmem:[%s1 + $0x1a40] sm:$0xff]
    %v895 = vld [vmem:[%s1 + $0x1a48] sm:$0xff]
    %v896 = vld [vmem:[%s1 + $0x1a50] sm:$0xff]
    %v897 = vld [vmem:[%s1 + $0x1a58] sm:$0xff]
    %v898 = vld [vmem:[%s1 + $0x1a60] sm:$0xff]
    %v899 = vld [vmem:[%s1 + $0x1a68] sm:$0xff]
    %v900 = vld [vmem:[%s1 + $0x1a70] sm:$0xff]
    %v901 = vld [vmem:[%s1 + $0x1a78] sm:$0xff]
    %v902 = vld [vmem:[%s1 + $0x1a80] sm:$0xff]
    %v903 = vld [vmem:[%s1 + $0x1a88] sm:$0xff]
    %v904 = vld [vmem:[%s1 + $0x1a90] sm:$0xff]
    %v905 = vld [vmem:[%s1 + $0x1a98] sm:$0xff]
    %v906 = vld [vmem:[%s1 + $0x1aa0] sm:$0xff]
    %v907 = vld [vmem:[%s1 + $0x1aa8] sm:$0xff]
    %v908 = vld [vmem:[%s1 + $0x1ab0] sm:$0xff]
    %v909 = vld [vmem:[%s1 + $0x1ab8] sm:$0xff]
    %v910 = vld [vmem:[%s1 + $0x1ac0] sm:$0xff]
    %v911 = vld [vmem:[%s1 + $0x1ac8] sm:$0xff]
    %v912 = vld [vmem:[%s1 + $0x1ad0] sm:$0xff]
    %v913 = vld [vmem:[%s1 + $0x1ad8] sm:$0xff]
    %v914 = vld [vmem:[%s1 + $0x1ae0] sm:$0xff]
    %v915 = vld [vmem:[%s1 + $0x1ae8] sm:$0xff]
    %v916 = vld [vmem:[%s1 + $0x1af0] sm:$0xff]
    %v917 = vld [vmem:[%s1 + $0x1af8] sm:$0xff]
    %v918 = vld [vmem:[%s1 + $0x1b00] sm:$0xff]
    %v919 = vld [vmem:[%s1 + $0x1b08] sm:$0xff]
    %v920 = vld [vmem:[%s1 + $0x1b10] sm:$0xff]
    %v921 = vld [vmem:[%s1 + $0x1b18] sm:$0xff]
    %v922 = vld [vmem:[%s1 + $0x1b20] sm:$0xff]
    %v923 = vld [vmem:[%s1 + $0x1b28] sm:$0xff]
    %v924 = vld [vmem:[%s1 + $0x1b30] sm:$0xff]
    %v925 = vld [vmem:[%s1 + $0x1b38] sm:$0xff]
    %v926 = vld [vmem:[%s1 + $0x1b40] sm:$0xff]
    %v927 = vld [vmem:[%s1 + $0x1b48] sm:$0xff]
    %v928 = vld [vmem:[%s1 + $0x1b50] sm:$0xff]
    %v929 = vld [vmem:[%s1 + $0x1b58] sm:$0xff]
    %v930 = vld [vmem:[%s1 + $0x1b60] sm:$0xff]
    %v931 = vld [vmem:[%s1 + $0x1b68] sm:$0xff]
    %v932 = vld [vmem:[%s1 + $0x1b70] sm:$0xff]
    %v933 = vld [vmem:[%s1 + $0x1b78] sm:$0xff]
    %v934 = vld [vmem:[%s1 + $0x1b80] sm:$0xff]
    %v935 = vld [vmem:[%s1 + $0x1b88] sm:$0xff]
    %v936 = vld [vmem:[%s1 + $0x1b90] sm:$0xff]
    %v937 = vld [vmem:[%s1 + $0x1b98] sm:$0xff]
    %v938 = vld [vmem:[%s1 + $0x1ba0] sm:$0xff]
    %v939 = vld [vmem:[%s1 + $0x1ba8] sm:$0xff]
    %v940 = vld [vmem:[%s1 + $0x1bb0] sm:$0xff]
    %v941 = vld [vmem:[%s1 + $0x1bb8] sm:$0xff]
    %v942 = vld [vmem:[%s1 + $0x1bc0] sm:$0xff]
    %v943 = vld [vmem:[%s1 + $0x1bc8] sm:$0xff]
    %v944 = vld [vmem:[%s1 + $0x1bd0] sm:$0xff]
    %v945 = vld [vmem:[%s1 + $0x1bd8] sm:$0xff]
    %v946 = vld [vmem:[%s1 + $0x1be0] sm:$0xff]
    %v947 = vld [vmem:[%s1 + $0x1be8] sm:$0xff]
    %v948 = vld [vmem:[%s1 + $0x1bf0] sm:$0xff]
    %v949 = vld [vmem:[%s1 + $0x1bf8] sm:$0xff]
    %v950 = vld [vmem:[%s1 + $0x1c00] sm:$0xff]
    %v951 = vld [vmem:[%s1 + $0x1c08] sm:$0xff]
    %v952 = vld [vmem:[%s1 + $0x1c10] sm:$0xff]
    %v953 = vld [vmem:[%s1 + $0x1c18] sm:$0xff]
    %v954 = vld [vmem:[%s1 + $0x1c20] sm:$0xff]
    %v955 = vld [vmem:[%s1 + $0x1c28] sm:$0xff]
    %v956 = vld [vmem:[%s1 + $0x1c30] sm:$0xff]
    %v957 = vld [vmem:[%s1 + $0x1c38] sm:$0xff]
    %v958 = vld [vmem:[%s1 + $0x1c40] sm:$0xff]
    %v959 = vld [vmem:[%s1 + $0x1c48] sm:$0xff]
    %v960 = vld [vmem:[%s1 + $0x1c50] sm:$0xff]
    %v961 = vld [vmem:[%s1 + $0x1c58] sm:$0xff]
    %v962 = vld [vmem:[%s1 + $0x1c60] sm:$0xff]
    %v963 = vld [vmem:[%s1 + $0x1c68] sm:$0xff]
    %v964 = vld [vmem:[%s1 + $0x1c70] sm:$0xff]
    %v965 = vld [vmem:[%s1 + $0x1c78] sm:$0xff]
    %v966 = vld [vmem:[%s1 + $0x1c80] sm:$0xff]
    %v967 = vld [vmem:[%s1 + $0x1c88] sm:$0xff]
    %v968 = vld [vmem:[%s1 + $0x1c90] sm:$0xff]
    %v969 = vld [vmem:[%s1 + $0x1c98] sm:$0xff]
    %v970 = vld [vmem:[%s1 + $0x1ca0] sm:$0xff]
    %v971 = vld [vmem:[%s1 + $0x1ca8] sm:$0xff]
    %v972 = vld [vmem:[%s1 + $0x1cb0] sm:$0xff]
    %v973 = vld [vmem:[%s1 + $0x1cb8] sm:$0xff]
    %v974 = vld [vmem:[%s1 + $0x1cc0] sm:$0xff]
    %v975 = vld [vmem:[%s1 + $0x1cc8] sm:$0xff]
    %v976 = vld [vmem:[%s1 + $0x1cd0] sm:$0xff]
    %v977 = vld [vmem:[%s1 + $0x1cd8] sm:$0xff]
    %v978 = vld [vmem:[%s1 + $0x1ce0] sm:$0xff]
    %v979 = vld [vmem:[%s1 + $0x1ce8] sm:$0xff]
    %v980 = vld [vmem:[%s1 + $0x1cf0] sm:$0xff]
    %v981 = vld [vmem:[%s1 + $0x1cf8] sm:$0xff]
    %v982 = vld [vmem:[%s1 + $0x1d00] sm:$0xff]
    %v983 = vld [vmem:[%s1 + $0x1d08] sm:$0xff]
    %v984 = vld [vmem:[%s1 + $0x1d10] sm:$0xff]
    %v985 = vld [vmem:[%s1 + $0x1d18] sm:$0xff]
    %v986 = vld [vmem:[%s1 + $0x1d20] sm:$0xff]
    %v987 = vld [vmem:[%s1 + $0x1d28] sm:$0xff]
    %v988 = vld [vmem:[%s1 + $0x1d30] sm:$0xff]
    %v989 = vld [vmem:[%s1 + $0x1d38] sm:$0xff]
    %v990 = vld [vmem:[%s1 + $0x1d40] sm:$0xff]
    %v991 = vld [vmem:[%s1 + $0x1d48] sm:$0xff]
    %v992 = vld [vmem:[%s1 + $0x1d50] sm:$0xff]
    %v993 = vld [vmem:[%s1 + $0x1d58] sm:$0xff]
    %v994 = vld [vmem:[%s1 + $0x1d60] sm:$0xff]
    %v995 = vld [vmem:[%s1 + $0x1d68] sm:$0xff]
    %v996 = vld [vmem:[%s1 + $0x1d70] sm:$0xff]
    %v997 = vld [vmem:[%s1 + $0x1d78] sm:$0xff]
    %v998 = vld [vmem:[%s1 + $0x1d80] sm:$0xff]
    %v999 = vld [vmem:[%s1 + $0x1d88] sm:$0xff]
    %v1000 = vld [vmem:[%s1 + $0x1d90] sm:$0xff]
    %v1001 = vld [vmem:[%s1 + $0x1d98] sm:$0xff]
    %v1002 = vld [vmem:[%s1 + $0x1da0] sm:$0xff]
    %v1003 = vld [vmem:[%s1 + $0x1da8] sm:$0xff]
    %v1004 = vld [vmem:[%s1 + $0x1db0] sm:$0xff]
    %v1005 = vld [vmem:[%s1 + $0x1db8] sm:$0xff]
    %v1006 = vld [vmem:[%s1 + $0x1dc0] sm:$0xff]
    %v1007 = vld [vmem:[%s1 + $0x1dc8] sm:$0xff]
    %v1008 = vld [vmem:[%s1 + $0x1dd0] sm:$0xff]
    %v1009 = vld [vmem:[%s1 + $0x1dd8] sm:$0xff]
    %v1010 = vld [vmem:[%s1 + $0x1de0] sm:$0xff]
    %v1011 = vld [vmem:[%s1 + $0x1de8] sm:$0xff]
    %v1012 = vld [vmem:[%s1 + $0x1df0] sm:$0xff]
    %v1013 = vld [vmem:[%s1 + $0x1df8] sm:$0xff]
    %v1014 = vld [vmem:[%s1 + $0x1e00] sm:$0xff]
    %v1015 = vld [vmem:[%s1 + $0x1e08] sm:$0xff]
    %v1016 = vld [vmem:[%s1 + $0x1e10] sm:$0xff]
    %v1017 = vld [vmem:[%s1 + $0x1e18] sm:$0xff]
    %v1018 = vld [vmem:[%s1 + $0x1e20] sm:$0xff]
    %v1019 = vld [vmem:[%s1 + $0x1e28] sm:$0xff]
    %v1020 = vld [vmem:[%s1 + $0x1e30] sm:$0xff]
    %v1021 = vld [vmem:[%s1 + $0x1e38] sm:$0xff]
    %v1022 = vld [vmem:[%s1 + $0x1e40] sm:$0xff]
    %v1023 = vld [vmem:[%s1 + $0x1e48] sm:$0xff]
    %v1024 = vld [vmem:[%s1 + $0x1e50] sm:$0xff]
    %v1025 = vld [vmem:[%s1 + $0x1e58] sm:$0xff]
    %v1026 = vld [vmem:[%s1 + $0x1e60] sm:$0xff]
    %v1027 = vld [vmem:[%s1 + $0x1e68] sm:$0xff]
    %v1028 = vld [vmem:[%s1 + $0x1e70] sm:$0xff]
    %v1029 = vld [vmem:[%s1 + $0x1e78] sm:$0xff]
    %v1030 = vld [vmem:[%s1 + $0x1e80] sm:$0xff]
    %v1031 = vld [vmem:[%s1 + $0x1e88] sm:$0xff]
    %v1032 = vld [vmem:[%s1 + $0x1e90] sm:$0xff]
    %v1033 = vld [vmem:[%s1 + $0x1e98] sm:$0xff]
    %v1034 = vld [vmem:[%s1 + $0x1ea0] sm:$0xff]
    %v1035 = vld [vmem:[%s1 + $0x1ea8] sm:$0xff]
    %v1036 = vld [vmem:[%s1 + $0x1eb0] sm:$0xff]
    %v1037 = vld [vmem:[%s1 + $0x1eb8] sm:$0xff]
    %v1038 = vld [vmem:[%s1 + $0x1ec0] sm:$0xff]
    %v1039 = vld [vmem:[%s1 + $0x1ec8] sm:$0xff]
    %v1040 = vld [vmem:[%s1 + $0x1ed0] sm:$0xff]
    %v1041 = vld [vmem:[%s1 + $0x1ed8] sm:$0xff]
    %v1042 = vld [vmem:[%s1 + $0x1ee0] sm:$0xff]
    %v1043 = vld [vmem:[%s1 + $0x1ee8] sm:$0xff]
    %v1044 = vld [vmem:[%s1 + $0x1ef0] sm:$0xff]
    %v1045 = vld [vmem:[%s1 + $0x1ef8] sm:$0xff]
    %v1046 = vld [vmem:[%s1 + $0x1f00] sm:$0xff]
    %v1047 = vld [vmem:[%s1 + $0x1f08] sm:$0xff]
    %v1048 = vld [vmem:[%s1 + $0x1f10] sm:$0xff]
    %v1049 = vld [vmem:[%s1 + $0x1f18] sm:$0xff]
    %v1050 = vld [vmem:[%s1 + $0x1f20] sm:$0xff]
    %v1051 = vld [vmem:[%s1 + $0x1f28] sm:$0xff]
    %v1052 = vld [vmem:[%s1 + $0x1f30] sm:$0xff]
    %v1053 = vld [vmem:[%s1 + $0x1f38] sm:$0xff]
    %v1054 = vld [vmem:[%s1 + $0x1f40] sm:$0xff]
    %v1055 = vld [vmem:[%s1 + $0x1f48] sm:$0xff]
    %v1056 = vld [vmem:[%s1 + $0x1f50] sm:$0xff]
    %v1057 = vld [vmem:[%s1 + $0x1f58] sm:$0xff]
    %v1058 = vld [vmem:[%s1 + $0x1f60] sm:$0xff]
    %v1059 = vld [vmem:[%s1 + $0x1f68] sm:$0xff]
    %v1060 = vld [vmem:[%s1 + $0x1f70] sm:$0xff]
    %v1061 = vld [vmem:[%s1 + $0x1f78] sm:$0xff]
    %v1062 = vld [vmem:[%s1 + $0x1f80] sm:$0xff]
    %v1063 = vld [vmem:[%s1 + $0x1f88] sm:$0xff]
    %v1064 = vld [vmem:[%s1 + $0x1f90] sm:$0xff]
    %v1065 = vld [vmem:[%s1 + $0x1f98] sm:$0xff]
    %v1066 = vld [vmem:[%s1 + $0x1fa0] sm:$0xff]
    %v1067 = vld [vmem:[%s1 + $0x1fa8] sm:$0xff]
    %v1068 = vld [vmem:[%s1 + $0x1fb0] sm:$0xff]
    %v1069 = vld [vmem:[%s1 + $0x1fb8] sm:$0xff]
    %v1070 = vld [vmem:[%s1 + $0x1fc0] sm:$0xff]
    %v1071 = vld [vmem:[%s1 + $0x1fc8] sm:$0xff]
    %v1072 = vld [vmem:[%s1 + $0x1fd0] sm:$0xff]
    %v1073 = vld [vmem:[%s1 + $0x1fd8] sm:$0xff]
    %v1074 = vld [vmem:[%s1 + $0x1fe0] sm:$0xff]
    %v1075 = vld [vmem:[%s1 + $0x1fe8] sm:$0xff]
    %v1076 = vld [vmem:[%s1 + $0x1ff0] sm:$0xff]
    %v1077 = vld [vmem:[%s1 + $0x1ff8] sm:$0xff]
    %v1078 = vld [vmem:[%s1 + $0x2000] sm:$0xff]
    %v1079 = vld [vmem:[%s1 + $0x2008] sm:$0xff]
    %v1080 = vld [vmem:[%s1 + $0x2010] sm:$0xff]
    %v1081 = vld [vmem:[%s1 + $0x2018] sm:$0xff]
    %v1082 = vld [vmem:[%s1 + $0x2020] sm:$0xff]
    %v1083 = vld [vmem:[%s1 + $0x2028] sm:$0xff]
    %v1084 = vld [vmem:[%s1 + $0x2030] sm:$0xff]
    %v1085 = vld [vmem:[%s1 + $0x2038] sm:$0xff]
    %v1086 = vld [vmem:[%s1 + $0x2040] sm:$0xff]
    %v1087 = vld [vmem:[%s1 + $0x2048] sm:$0xff]
    %v1088 = vld [vmem:[%s1 + $0x2050] sm:$0xff]
    %v1089 = vld [vmem:[%s1 + $0x2058] sm:$0xff]
    %v1090 = vld [vmem:[%s1 + $0x2060] sm:$0xff]
    %v1091 = vld [vmem:[%s1 + $0x2068] sm:$0xff]
    %v1092 = vld [vmem:[%s1 + $0x2070] sm:$0xff]
    %v1093 = vld [vmem:[%s1 + $0x2078] sm:$0xff]
    %v1094 = vld [vmem:[%s1 + $0x2080] sm:$0xff]
    %v1095 = vld [vmem:[%s1 + $0x2088] sm:$0xff]
    %v1096 = vld [vmem:[%s1 + $0x2090] sm:$0xff]
    %v1097 = vld [vmem:[%s1 + $0x2098] sm:$0xff]
    %v1098 = vld [vmem:[%s1 + $0x20a0] sm:$0xff]
    %v1099 = vld [vmem:[%s1 + $0x20a8] sm:$0xff]
    %v1100 = vld [vmem:[%s1 + $0x20b0] sm:$0xff]
    %v1101 = vld [vmem:[%s1 + $0x20b8] sm:$0xff]
    %v1102 = vld [vmem:[%s1 + $0x20c0] sm:$0xff]
    %v1103 = vld [vmem:[%s1 + $0x20c8] sm:$0xff]
    %v1104 = vld [vmem:[%s1 + $0x20d0] sm:$0xff]
    %v1105 = vld [vmem:[%s1 + $0x20d8] sm:$0xff]
    %v1106 = vld [vmem:[%s1 + $0x20e0] sm:$0xff]
    %v1107 = vld [vmem:[%s1 + $0x20e8] sm:$0xff]
    %v1108 = vld [vmem:[%s1 + $0x20f0] sm:$0xff]
    %v1109 = vld [vmem:[%s1 + $0x20f8] sm:$0xff]
    %v1110 = vld [vmem:[%s1 + $0x2100] sm:$0xff]
    %v1111 = vld [vmem:[%s1 + $0x2108] sm:$0xff]
    %v1112 = vld [vmem:[%s1 + $0x2110] sm:$0xff]
    %v1113 = vld [vmem:[%s1 + $0x2118] sm:$0xff]
    %v1114 = vld [vmem:[%s1 + $0x2120] sm:$0xff]
    %v1115 = vld [vmem:[%s1 + $0x2128] sm:$0xff]
    %v1116 = vld [vmem:[%s1 + $0x2130] sm:$0xff]
    %v1117 = vld [vmem:[%s1 + $0x2138] sm:$0xff]
    %v1118 = vld [vmem:[%s1 + $0x2140] sm:$0xff]
    %v1119 = vld [vmem:[%s1 + $0x2148] sm:$0xff]
    %v1120 = vld [vmem:[%s1 + $0x2150] sm:$0xff]
    %v1121 = vld [vmem:[%s1 + $0x2158] sm:$0xff]
    %v1122 = vld [vmem:[%s1 + $0x2160] sm:$0xff]
    %v1123 = vld [vmem:[%s1 + $0x2168] sm:$0xff]
    %v1124 = vld [vmem:[%s1 + $0x2170] sm:$0xff]
    %v1125 = vld [vmem:[%s1 + $0x2178] sm:$0xff]
    %v1126 = vld [vmem:[%s1 + $0x2180] sm:$0xff]
    %v1127 = vld [vmem:[%s1 + $0x2188] sm:$0xff]
    %v1128 = vld [vmem:[%s1 + $0x2190] sm:$0xff]
    %v1129 = vld [vmem:[%s1 + $0x2198] sm:$0xff]
    %v1130 = vld [vmem:[%s1 + $0x21a0] sm:$0xff]
    %v1131 = vld [vmem:[%s1 + $0x21a8] sm:$0xff]
    %v1132 = vld [vmem:[%s1 + $0x21b0] sm:$0xff]
    %v1133 = vld [vmem:[%s1 + $0x21b8] sm:$0xff]
    %v1134 = vld [vmem:[%s1 + $0x21c0] sm:$0xff]
    %v1135 = vld [vmem:[%s1 + $0x21c8] sm:$0xff]
    %v1136 = vld [vmem:[%s1 + $0x21d0] sm:$0xff]
    %v1137 = vld [vmem:[%s1 + $0x21d8] sm:$0xff]
    %v1138 = vld [vmem:[%s1 + $0x21e0] sm:$0xff]
    %v1139 = vld [vmem:[%s1 + $0x21e8] sm:$0xff]
    %v1140 = vld [vmem:[%s1 + $0x21f0] sm:$0xff]
    %v1141 = vld [vmem:[%s1 + $0x21f8] sm:$0xff]
    %v1142 = vld [vmem:[%s1 + $0x2200] sm:$0xff]
    %v1143 = vld [vmem:[%s1 + $0x2208] sm:$0xff]
    %v1144 = vld [vmem:[%s1 + $0x2210] sm:$0xff]
    %v1145 = vld [vmem:[%s1 + $0x2218] sm:$0xff]
    %v1146 = vld [vmem:[%s1 + $0x2220] sm:$0xff]
    %v1147 = vld [vmem:[%s1 + $0x2228] sm:$0xff]
    %v1148 = vld [vmem:[%s1 + $0x2230] sm:$0xff]
    %v1149 = vld [vmem:[%s1 + $0x2238] sm:$0xff]
    %v1150 = vld [vmem:[%s1 + $0x2240] sm:$0xff]
    %v1151 = vld [vmem:[%s1 + $0x2248] sm:$0xff]
    %v1152 = vld [vmem:[%s1 + $0x2250] sm:$0xff]
    %v1153 = vld [vmem:[%s1 + $0x2258] sm:$0xff]
    %v1154 = vld [vmem:[%s1 + $0x2260] sm:$0xff]
    %v1155 = vld [vmem:[%s1 + $0x2268] sm:$0xff]
    %v1156 = vld [vmem:[%s1 + $0x2270] sm:$0xff]
    %v1157 = vld [vmem:[%s1 + $0x2278] sm:$0xff]
    %v1158 = vld [vmem:[%s1 + $0x2280] sm:$0xff]
    %v1159 = vld [vmem:[%s1 + $0x2288] sm:$0xff]
    %v1160 = vld [vmem:[%s1 + $0x2290] sm:$0xff]
    %v1161 = vld [vmem:[%s1 + $0x2298] sm:$0xff]
    %v1162 = vld [vmem:[%s1 + $0x22a0] sm:$0xff]
    %v1163 = vld [vmem:[%s1 + $0x22a8] sm:$0xff]
    %v1164 = vld [vmem:[%s1 + $0x22b0] sm:$0xff]
    %v1165 = vld [vmem:[%s1 + $0x22b8] sm:$0xff]
    %v1166 = vld [vmem:[%s1 + $0x22c0] sm:$0xff]
    %v1167 = vld [vmem:[%s1 + $0x22c8] sm:$0xff]
    %v1168 = vld [vmem:[%s1 + $0x22d0] sm:$0xff]
    %v1169 = vld [vmem:[%s1 + $0x22d8] sm:$0xff]
    %v1170 = vld [vmem:[%s1 + $0x22e0] sm:$0xff]
    %v1171 = vld [vmem:[%s1 + $0x22e8] sm:$0xff]
    %v1172 = vld [vmem:[%s1 + $0x22f0] sm:$0xff]
    %v1173 = vld [vmem:[%s1 + $0x22f8] sm:$0xff]
    %v1174 = vld [vmem:[%s1 + $0x2300] sm:$0xff]
    %v1175 = vld [vmem:[%s1 + $0x2308] sm:$0xff]
    %v1176 = vld [vmem:[%s1 + $0x2310] sm:$0xff]
    %v1177 = vld [vmem:[%s1 + $0x2318] sm:$0xff]
    %v1178 = vld [vmem:[%s1 + $0x2320] sm:$0xff]
    %v1179 = vld [vmem:[%s1 + $0x2328] sm:$0xff]
    %v1180 = vld [vmem:[%s1 + $0x2330] sm:$0xff]
    %v1181 = vld [vmem:[%s1 + $0x2338] sm:$0xff]
    %v1182 = vld [vmem:[%s1 + $0x2340] sm:$0xff]
    %v1183 = vld [vmem:[%s1 + $0x2348] sm:$0xff]
    %v1184 = vld [vmem:[%s1 + $0x2350] sm:$0xff]
    %v1185 = vld [vmem:[%s1 + $0x2358] sm:$0xff]
    %v1186 = vld [vmem:[%s1 + $0x2360] sm:$0xff]
    %v1187 = vld [vmem:[%s1 + $0x2368] sm:$0xff]
    %v1188 = vld [vmem:[%s1 + $0x2370] sm:$0xff]
    %v1189 = vld [vmem:[%s1 + $0x2378] sm:$0xff]
    %v1190 = vld [vmem:[%s1 + $0x2380] sm:$0xff]
    %v1191 = vld [vmem:[%s1 + $0x2388] sm:$0xff]
    %v1192 = vld [vmem:[%s1 + $0x2390] sm:$0xff]
    %v1193 = vld [vmem:[%s1 + $0x2398] sm:$0xff]
    %v1194 = vld [vmem:[%s1 + $0x23a0] sm:$0xff]
    %v1195 = vld [vmem:[%s1 + $0x23a8] sm:$0xff]
    %v1196 = vld [vmem:[%s1 + $0x23b0] sm:$0xff]
    %v1197 = vld [vmem:[%s1 + $0x23b8] sm:$0xff]
    %v1198 = vld [vmem:[%s1 + $0x23c0] sm:$0xff]
    %v1199 = vld [vmem:[%s1 + $0x23c8] sm:$0xff]
    %v1200 = vld [vmem:[%s1 + $0x23d0] sm:$0xff]
    %v1201 = vld [vmem:[%s1 + $0x23d8] sm:$0xff]
    %v1202 = vld [vmem:[%s1 + $0x23e0] sm:$0xff]
    %v1203 = vld [vmem:[%s1 + $0x23e8] sm:$0xff]
    %v1204 = vld [vmem:[%s1 + $0x23f0] sm:$0xff]
    %v1205 = vld [vmem:[%s1 + $0x23f8] sm:$0xff]
    %v1206 = vld [vmem:[%s1 + $0x2400] sm:$0xff]
    %v1207 = vld [vmem:[%s1 + $0x2408] sm:$0xff]
    %v1208 = vld [vmem:[%s1 + $0x2410] sm:$0xff]
    %v1209 = vld [vmem:[%s1 + $0x2418] sm:$0xff]
    %v1210 = vld [vmem:[%s1 + $0x2420] sm:$0xff]
    %v1211 = vld [vmem:[%s1 + $0x2428] sm:$0xff]
    %v1212 = vld [vmem:[%s1 + $0x2430] sm:$0xff]
    %v1213 = vld [vmem:[%s1 + $0x2438] sm:$0xff]
    %v1214 = vld [vmem:[%s1 + $0x2440] sm:$0xff]
    %v1215 = vld [vmem:[%s1 + $0x2448] sm:$0xff]
    %v1216 = vld [vmem:[%s1 + $0x2450] sm:$0xff]
    %v1217 = vld [vmem:[%s1 + $0x2458] sm:$0xff]
    %v1218 = vld [vmem:[%s1 + $0x2460] sm:$0xff]
    %v1219 = vld [vmem:[%s1 + $0x2468] sm:$0xff]
    %v1220 = vld [vmem:[%s1 + $0x2470] sm:$0xff]
    %v1221 = vld [vmem:[%s1 + $0x2478] sm:$0xff]
    %v1222 = vld [vmem:[%s1 + $0x2480] sm:$0xff]
    %v1223 = vld [vmem:[%s1 + $0x2488] sm:$0xff]
    %v1224 = vld [vmem:[%s1 + $0x2490] sm:$0xff]
    %v1225 = vld [vmem:[%s1 + $0x2498] sm:$0xff]
    %v1226 = vld [vmem:[%s1 + $0x24a0] sm:$0xff]
    %v1227 = vld [vmem:[%s1 + $0x24a8] sm:$0xff]
    %v1228 = vld [vmem:[%s1 + $0x24b0] sm:$0xff]
    %v1229 = vld [vmem:[%s1 + $0x24b8] sm:$0xff]
    %v1230 = vld [vmem:[%s1 + $0x24c0] sm:$0xff]
    %v1231 = vld [vmem:[%s1 + $0x24c8] sm:$0xff]
    %v1232 = vld [vmem:[%s1 + $0x24d0] sm:$0xff]
    %v1233 = vld [vmem:[%s1 + $0x24d8] sm:$0xff]
    %v1234 = vld [vmem:[%s1 + $0x24e0] sm:$0xff]
    %v1235 = vld [vmem:[%s1 + $0x24e8] sm:$0xff]
    %v1236 = vld [vmem:[%s1 + $0x24f0] sm:$0xff]
    %v1237 = vld [vmem:[%s1 + $0x24f8] sm:$0xff]
    %v1238 = vld [vmem:[%s1 + $0x2500] sm:$0xff]
    %v1239 = vld [vmem:[%s1 + $0x2508] sm:$0xff]
    %v1240 = vld [vmem:[%s1 + $0x2510] sm:$0xff]
    %v1241 = vld [vmem:[%s1 + $0x2518] sm:$0xff]
    %v1242 = vld [vmem:[%s1 + $0x2520] sm:$0xff]
    %v1243 = vld [vmem:[%s1 + $0x2528] sm:$0xff]
    %v1244 = vld [vmem:[%s1 + $0x2530] sm:$0xff]
    %v1245 = vld [vmem:[%s1 + $0x2538] sm:$0xff]
    %v1246 = vld [vmem:[%s1 + $0x2540] sm:$0xff]
    %v1247 = vld [vmem:[%s1 + $0x2548] sm:$0xff]
    %v1248 = vld [vmem:[%s1 + $0x2550] sm:$0xff]
    %v1249 = vld [vmem:[%s1 + $0x2558] sm:$0xff]
    %v1250 = vld [vmem:[%s1 + $0x2560] sm:$0xff]
    %v1251 = vld [vmem:[%s1 + $0x2568] sm:$0xff]
    %v1252 = vld [vmem:[%s1 + $0x2570] sm:$0xff]
    %v1253 = vld [vmem:[%s1 + $0x2578] sm:$0xff]
    %v1254 = vld [vmem:[%s1 + $0x2580] sm:$0xff]
    %v1255 = vld [vmem:[%s1 + $0x2588] sm:$0xff]
    %v1256 = vld [vmem:[%s1 + $0x2590] sm:$0xff]
    %v1257 = vld [vmem:[%s1 + $0x2598] sm:$0xff]
    %v1258 = vld [vmem:[%s1 + $0x25a0] sm:$0xff]
    %v1259 = vld [vmem:[%s1 + $0x25a8] sm:$0xff]
    %v1260 = vld [vmem:[%s1 + $0x25b0] sm:$0xff]
    %v1261 = vld [vmem:[%s1 + $0x25b8] sm:$0xff]
    %v1262 = vld [vmem:[%s1 + $0x25c0] sm:$0xff]
    %v1263 = vld [vmem:[%s1 + $0x25c8] sm:$0xff]
    %v1264 = vld [vmem:[%s1 + $0x25d0] sm:$0xff]
    %v1265 = vld [vmem:[%s1 + $0x25d8] sm:$0xff]
    %v1266 = vld [vmem:[%s1 + $0x25e0] sm:$0xff]
    %v1267 = vld [vmem:[%s1 + $0x25e8] sm:$0xff]
    %v1268 = vld [vmem:[%s1 + $0x25f0] sm:$0xff]
    %v1269 = vld [vmem:[%s1 + $0x25f8] sm:$0xff]
    %v1270 = vld [vmem:[%s1 + $0x2600] sm:$0xff]
    %v1271 = vld [vmem:[%s1 + $0x2608] sm:$0xff]
    %v1272 = vld [vmem:[%s1 + $0x2610] sm:$0xff]
    %v1273 = vld [vmem:[%s1 + $0x2618] sm:$0xff]
    %v1274 = vld [vmem:[%s1 + $0x2620] sm:$0xff]
    %v1275 = vld [vmem:[%s1 + $0x2628] sm:$0xff]
    %v1276 = vld [vmem:[%s1 + $0x2630] sm:$0xff]
    %v1277 = vld [vmem:[%s1 + $0x2638] sm:$0xff]
    %v1278 = vld [vmem:[%s1 + $0x2640] sm:$0xff]
    %v1279 = vld [vmem:[%s1 + $0x2648] sm:$0xff]
    %v1280 = vld [vmem:[%s1 + $0x2650] sm:$0xff]
    %v1281 = vld [vmem:[%s1 + $0x2658] sm:$0xff]
    %v1282 = vld [vmem:[%s1 + $0x2660] sm:$0xff]
    %v1283 = vld [vmem:[%s1 + $0x2668] sm:$0xff]
    %v1284 = vld [vmem:[%s1 + $0x2670] sm:$0xff]
    %v1285 = vld [vmem:[%s1 + $0x2678] sm:$0xff]
    %v1286 = vld [vmem:[%s1 + $0x2680] sm:$0xff]
    %v1287 = vld [vmem:[%s1 + $0x2688] sm:$0xff]
    %v1288 = vld [vmem:[%s1 + $0x2690] sm:$0xff]
    %v1289 = vld [vmem:[%s1 + $0x2698] sm:$0xff]
    %v1290 = vld [vmem:[%s1 + $0x26a0] sm:$0xff]
    %v1291 = vld [vmem:[%s1 + $0x26a8] sm:$0xff]
    %v1292 = vld [vmem:[%s1 + $0x26b0] sm:$0xff]
    %v1293 = vld [vmem:[%s1 + $0x26b8] sm:$0xff]
    %v1294 = vld [vmem:[%s1 + $0x26c0] sm:$0xff]
    %v1295 = vld [vmem:[%s1 + $0x26c8] sm:$0xff]
    %v1296 = vld [vmem:[%s1 + $0x26d0] sm:$0xff]
    %v1297 = vld [vmem:[%s1 + $0x26d8] sm:$0xff]
    %v1298 = vld [vmem:[%s1 + $0x26e0] sm:$0xff]
    %v1299 = vld [vmem:[%s1 + $0x26e8] sm:$0xff]
    %v1300 = vld [vmem:[%s1 + $0x26f0] sm:$0xff]
    %v1301 = vld [vmem:[%s1 + $0x26f8] sm:$0xff]
    %v1302 = vld [vmem:[%s1 + $0x2700] sm:$0xff]
    %v1303 = vld [vmem:[%s1 + $0x2708] sm:$0xff]
    %v1304 = vld [vmem:[%s1 + $0x2710] sm:$0xff]
    %v1305 = vld [vmem:[%s1 + $0x2718] sm:$0xff]
    %v1306 = vld [vmem:[%s1 + $0x2720] sm:$0xff]
    %v1307 = vld [vmem:[%s1 + $0x2728] sm:$0xff]
    %v1308 = vld [vmem:[%s1 + $0x2730] sm:$0xff]
    %v1309 = vld [vmem:[%s1 + $0x2738] sm:$0xff]
    %v1310 = vld [vmem:[%s1 + $0x2740] sm:$0xff]
    %v1311 = vld [vmem:[%s1 + $0x2748] sm:$0xff]
    %v1312 = vld [vmem:[%s1 + $0x2750] sm:$0xff]
    %v1313 = vld [vmem:[%s1 + $0x2758] sm:$0xff]
    %v1314 = vld [vmem:[%s1 + $0x2760] sm:$0xff]
    %v1315 = vld [vmem:[%s1 + $0x2768] sm:$0xff]
    %v1316 = vld [vmem:[%s1 + $0x2770] sm:$0xff]
    %v1317 = vld [vmem:[%s1 + $0x2778] sm:$0xff]
    %v1318 = vld [vmem:[%s1 + $0x2780] sm:$0xff]
    %v1319 = vld [vmem:[%s1 + $0x2788] sm:$0xff]
    %v1320 = vld [vmem:[%s1 + $0x2790] sm:$0xff]
    %v1321 = vld [vmem:[%s1 + $0x2798] sm:$0xff]
    %v1322 = vld [vmem:[%s1 + $0x27a0] sm:$0xff]
    %v1323 = vld [vmem:[%s1 + $0x27a8] sm:$0xff]
    %v1324 = vld [vmem:[%s1 + $0x27b0] sm:$0xff]
    %v1325 = vld [vmem:[%s1 + $0x27b8] sm:$0xff]
    %v1326 = vld [vmem:[%s1 + $0x27c0] sm:$0xff]
    %v1327 = vld [vmem:[%s1 + $0x27c8] sm:$0xff]
    %v1328 = vld [vmem:[%s1 + $0x27d0] sm:$0xff]
    %v1329 = vld [vmem:[%s1 + $0x27d8] sm:$0xff]
    %v1330 = vld [vmem:[%s1 + $0x27e0] sm:$0xff]
    %v1331 = vld [vmem:[%s1 + $0x27e8] sm:$0xff]
    %v1332 = vld [vmem:[%s1 + $0x27f0] sm:$0xff]
    %v1333 = vld [vmem:[%s1 + $0x27f8] sm:$0xff]
    %v1334 = vld [vmem:[%s1 + $0x2800] sm:$0xff]
    %v1335 = vld [vmem:[%s1 + $0x2808] sm:$0xff]
    %v1336 = vld [vmem:[%s1 + $0x2810] sm:$0xff]
    %v1337 = vld [vmem:[%s1 + $0x2818] sm:$0xff]
    %v1338 = vld [vmem:[%s1 + $0x2820] sm:$0xff]
    %v1339 = vld [vmem:[%s1 + $0x2828] sm:$0xff]
    %v1340 = vld [vmem:[%s1 + $0x2830] sm:$0xff]
    %v1341 = vld [vmem:[%s1 + $0x2838] sm:$0xff]
    %v1342 = vld [vmem:[%s1 + $0x2840] sm:$0xff]
    %v1343 = vld [vmem:[%s1 + $0x2848] sm:$0xff]
    %v1344 = vld [vmem:[%s1 + $0x2850] sm:$0xff]
    %v1345 = vld [vmem:[%s1 + $0x2858] sm:$0xff]
    %v1346 = vld [vmem:[%s1 + $0x2860] sm:$0xff]
    %v1347 = vld [vmem:[%s1 + $0x2868] sm:$0xff]
    %v1348 = vld [vmem:[%s1 + $0x2870] sm:$0xff]
    %v1349 = vld [vmem:[%s1 + $0x2878] sm:$0xff]
    %v1350 = vld [vmem:[%s1 + $0x2880] sm:$0xff]
    %v1351 = vld [vmem:[%s1 + $0x2888] sm:$0xff]
    %v1352 = vld [vmem:[%s1 + $0x2890] sm:$0xff]
    %v1353 = vld [vmem:[%s1 + $0x2898] sm:$0xff]
    %v1354 = vld [vmem:[%s1 + $0x28a0] sm:$0xff]
    %v1355 = vld [vmem:[%s1 + $0x28a8] sm:$0xff]
    %v1356 = vld [vmem:[%s1 + $0x28b0] sm:$0xff]
    %v1357 = vld [vmem:[%s1 + $0x28b8] sm:$0xff]
    %v1358 = vld [vmem:[%s1 + $0x28c0] sm:$0xff]
    %v1359 = vld [vmem:[%s1 + $0x28c8] sm:$0xff]
    %v1360 = vld [vmem:[%s1 + $0x28d0] sm:$0xff]
    %v1361 = vld [vmem:[%s1 + $0x28d8] sm:$0xff]
    %v1362 = vld [vmem:[%s1 + $0x28e0] sm:$0xff]
    %v1363 = vld [vmem:[%s1 + $0x28e8] sm:$0xff]
    %v1364 = vld [vmem:[%s1 + $0x28f0] sm:$0xff]
    %v1365 = vld [vmem:[%s1 + $0x28f8] sm:$0xff]
    %v1366 = vld [vmem:[%s1 + $0x2900] sm:$0xff]
    %v1367 = vld [vmem:[%s1 + $0x2908] sm:$0xff]
    %v1368 = vld [vmem:[%s1 + $0x2910] sm:$0xff]
    %v1369 = vld [vmem:[%s1 + $0x2918] sm:$0xff]
    %v1370 = vld [vmem:[%s1 + $0x2920] sm:$0xff]
    %v1371 = vld [vmem:[%s1 + $0x2928] sm:$0xff]
    %v1372 = vld [vmem:[%s1 + $0x2930] sm:$0xff]
    %v1373 = vld [vmem:[%s1 + $0x2938] sm:$0xff]
    %v1374 = vld [vmem:[%s1 + $0x2940] sm:$0xff]
    %v1375 = vld [vmem:[%s1 + $0x2948] sm:$0xff]
    %v1376 = vld [vmem:[%s1 + $0x2950] sm:$0xff]
    %v1377 = vld [vmem:[%s1 + $0x2958] sm:$0xff]
    %v1378 = vld [vmem:[%s1 + $0x2960] sm:$0xff]
    %v1379 = vld [vmem:[%s1 + $0x2968] sm:$0xff]
    %v1380 = vld [vmem:[%s1 + $0x2970] sm:$0xff]
    %v1381 = vld [vmem:[%s1 + $0x2978] sm:$0xff]
    %v1382 = vld [vmem:[%s1 + $0x2980] sm:$0xff]
    %v1383 = vld [vmem:[%s1 + $0x2988] sm:$0xff]
    %v1384 = vld [vmem:[%s1 + $0x2990] sm:$0xff]
    %v1385 = vld [vmem:[%s1 + $0x2998] sm:$0xff]
    %v1386 = vld [vmem:[%s1 + $0x29a0] sm:$0xff]
    %v1387 = vld [vmem:[%s1 + $0x29a8] sm:$0xff]
    %v1388 = vld [vmem:[%s1 + $0x29b0] sm:$0xff]
    %v1389 = vld [vmem:[%s1 + $0x29b8] sm:$0xff]
    %v1390 = vld [vmem:[%s1 + $0x29c0] sm:$0xff]
    %v1391 = vld [vmem:[%s1 + $0x29c8] sm:$0xff]
    %v1392 = vld [vmem:[%s1 + $0x29d0] sm:$0xff]
    %v1393 = vld [vmem:[%s1 + $0x29d8] sm:$0xff]
    %v1394 = vld [vmem:[%s1 + $0x29e0] sm:$0xff]
    %v1395 = vld [vmem:[%s1 + $0x29e8] sm:$0xff]
    %v1396 = vld [vmem:[%s1 + $0x29f0] sm:$0xff]
    %v1397 = vld [vmem:[%s1 + $0x29f8] sm:$0xff]
    %v1398 = vld [vmem:[%s1 + $0x2a00] sm:$0xff]
    %v1399 = vld [vmem:[%s1 + $0x2a08] sm:$0xff]
    %v1400 = vld [vmem:[%s1 + $0x2a10] sm:$0xff]
    %v1401 = vld [vmem:[%s1 + $0x2a18] sm:$0xff]
    %v1402 = vld [vmem:[%s1 + $0x2a20] sm:$0xff]
    %v1403 = vld [vmem:[%s1 + $0x2a28] sm:$0xff]
    %v1404 = vld [vmem:[%s1 + $0x2a30] sm:$0xff]
    %v1405 = vld [vmem:[%s1 + $0x2a38] sm:$0xff]
    %v1406 = vld [vmem:[%s1 + $0x2a40] sm:$0xff]
    %v1407 = vld [vmem:[%s1 + $0x2a48] sm:$0xff]
    %v1408 = vld [vmem:[%s1 + $0x2a50] sm:$0xff]
    %v1409 = vld [vmem:[%s1 + $0x2a58] sm:$0xff]
    %v1410 = vld [vmem:[%s1 + $0x2a60] sm:$0xff]
    %v1411 = vld [vmem:[%s1 + $0x2a68] sm:$0xff]
    %v1412 = vld [vmem:[%s1 + $0x2a70] sm:$0xff]
    %v1413 = vld [vmem:[%s1 + $0x2a78] sm:$0xff]
    %v1414 = vld [vmem:[%s1 + $0x2a80] sm:$0xff]
    %v1415 = vld [vmem:[%s1 + $0x2a88] sm:$0xff]
    %v1416 = vld [vmem:[%s1 + $0x2a90] sm:$0xff]
    %v1417 = vld [vmem:[%s1 + $0x2a98] sm:$0xff]
    %v1418 = vld [vmem:[%s1 + $0x2aa0] sm:$0xff]
    %v1419 = vld [vmem:[%s1 + $0x2aa8] sm:$0xff]
    %v1420 = vld [vmem:[%s1 + $0x2ab0] sm:$0xff]
    %v1421 = vld [vmem:[%s1 + $0x2ab8] sm:$0xff]
    %v1422 = vld [vmem:[%s1 + $0x2ac0] sm:$0xff]
    %v1423 = vld [vmem:[%s1 + $0x2ac8] sm:$0xff]
    %v1424 = vld [vmem:[%s1 + $0x2ad0] sm:$0xff]
    %v1425 = vld [vmem:[%s1 + $0x2ad8] sm:$0xff]
    %v1426 = vld [vmem:[%s1 + $0x2ae0] sm:$0xff]
    %v1427 = vld [vmem:[%s1 + $0x2ae8] sm:$0xff]
    %v1428 = vld [vmem:[%s1 + $0x2af0] sm:$0xff]
    %v1429 = vld [vmem:[%s1 + $0x2af8] sm:$0xff]
    %v1430 = vld [vmem:[%s1 + $0x2b00] sm:$0xff]
    %v1431 = vld [vmem:[%s1 + $0x2b08] sm:$0xff]
    %v1432 = vld [vmem:[%s1 + $0x2b10] sm:$0xff]
    %v1433 = vld [vmem:[%s1 + $0x2b18] sm:$0xff]
    %v1434 = vld [vmem:[%s1 + $0x2b20] sm:$0xff]
    %v1435 = vld [vmem:[%s1 + $0x2b28] sm:$0xff]
    %v1436 = vld [vmem:[%s1 + $0x2b30] sm:$0xff]
    %v1437 = vld [vmem:[%s1 + $0x2b38] sm:$0xff]
    %v1438 = vld [vmem:[%s1 + $0x2b40] sm:$0xff]
    %v1439 = vld [vmem:[%s1 + $0x2b48] sm:$0xff]
    %v1440 = vld [vmem:[%s1 + $0x2b50] sm:$0xff]
    %v1441 = vld [vmem:[%s1 + $0x2b58] sm:$0xff]
    %v1442 = vld [vmem:[%s1 + $0x2b60] sm:$0xff]
    %v1443 = vld [vmem:[%s1 + $0x2b68] sm:$0xff]
    %v1444 = vld [vmem:[%s1 + $0x2b70] sm:$0xff]
    %v1445 = vld [vmem:[%s1 + $0x2b78] sm:$0xff]
    %v1446 = vld [vmem:[%s1 + $0x2b80] sm:$0xff]
    %v1447 = vld [vmem:[%s1 + $0x2b88] sm:$0xff]
    %v1448 = vld [vmem:[%s1 + $0x2b90] sm:$0xff]
    %v1449 = vld [vmem:[%s1 + $0x2b98] sm:$0xff]
    %v1450 = vld [vmem:[%s1 + $0x2ba0] sm:$0xff]
    %v1451 = vld [vmem:[%s1 + $0x2ba8] sm:$0xff]
    %v1452 = vld [vmem:[%s1 + $0x2bb0] sm:$0xff]
    %v1453 = vld [vmem:[%s1 + $0x2bb8] sm:$0xff]
    %v1454 = vld [vmem:[%s1 + $0x2bc0] sm:$0xff]
    %v1455 = vld [vmem:[%s1 + $0x2bc8] sm:$0xff]
    %v1456 = vld [vmem:[%s1 + $0x2bd0] sm:$0xff]
    %v1457 = vld [vmem:[%s1 + $0x2bd8] sm:$0xff]
    %v1458 = vld [vmem:[%s1 + $0x2be0] sm:$0xff]
    %v1459 = vld [vmem:[%s1 + $0x2be8] sm:$0xff]
    %v1460 = vld [vmem:[%s1 + $0x2bf0] sm:$0xff]
    %v1461 = vld [vmem:[%s1 + $0x2bf8] sm:$0xff]
    %v1462 = vld [vmem:[%s1 + $0x2c00] sm:$0xff]
    %v1463 = vld [vmem:[%s1 + $0x2c08] sm:$0xff]
    %v1464 = vld [vmem:[%s1 + $0x2c10] sm:$0xff]
    %v1465 = vld [vmem:[%s1 + $0x2c18] sm:$0xff]
    %v1466 = vld [vmem:[%s1 + $0x2c20] sm:$0xff]
    %v1467 = vld [vmem:[%s1 + $0x2c28] sm:$0xff]
    %v1468 = vld [vmem:[%s1 + $0x2c30] sm:$0xff]
    %v1469 = vld [vmem:[%s1 + $0x2c38] sm:$0xff]
    %v1470 = vld [vmem:[%s1 + $0x2c40] sm:$0xff]
    %v1471 = vld [vmem:[%s1 + $0x2c48] sm:$0xff]
    %v1472 = vld [vmem:[%s1 + $0x2c50] sm:$0xff]
    %v1473 = vld [vmem:[%s1 + $0x2c58] sm:$0xff]
    %v1474 = vld [vmem:[%s1 + $0x2c60] sm:$0xff]
    %v1475 = vld [vmem:[%s1 + $0x2c68] sm:$0xff]
    %v1476 = vld [vmem:[%s1 + $0x2c70] sm:$0xff]
    %v1477 = vld [vmem:[%s1 + $0x2c78] sm:$0xff]
    %v1478 = vld [vmem:[%s1 + $0x2c80] sm:$0xff]
    %v1479 = vld [vmem:[%s1 + $0x2c88] sm:$0xff]
    %v1480 = vld [vmem:[%s1 + $0x2c90] sm:$0xff]
    %v1481 = vld [vmem:[%s1 + $0x2c98] sm:$0xff]
    %v1482 = vld [vmem:[%s1 + $0x2ca0] sm:$0xff]
    %v1483 = vld [vmem:[%s1 + $0x2ca8] sm:$0xff]
    %v1484 = vld [vmem:[%s1 + $0x2cb0] sm:$0xff]
    %v1485 = vld [vmem:[%s1 + $0x2cb8] sm:$0xff]
    %v1486 = vld [vmem:[%s1 + $0x2cc0] sm:$0xff]
    %v1487 = vld [vmem:[%s1 + $0x2cc8] sm:$0xff]
    %v1488 = vld [vmem:[%s1 + $0x2cd0] sm:$0xff]
    %v1489 = vld [vmem:[%s1 + $0x2cd8] sm:$0xff]
    %v1490 = vld [vmem:[%s1 + $0x2ce0] sm:$0xff]
    %v1491 = vld [vmem:[%s1 + $0x2ce8] sm:$0xff]
    %v1492 = vld [vmem:[%s1 + $0x2cf0] sm:$0xff]
    %v1493 = vld [vmem:[%s1 + $0x2cf8] sm:$0xff]
    %v1494 = vld [vmem:[%s1 + $0x2d00] sm:$0xff]
    %v1495 = vld [vmem:[%s1 + $0x2d08] sm:$0xff]
    %v1496 = vld [vmem:[%s1 + $0x2d10] sm:$0xff]
    %v1497 = vld [vmem:[%s1 + $0x2d18] sm:$0xff]
    %v1498 = vld [vmem:[%s1 + $0x2d20] sm:$0xff]
    %v1499 = vld [vmem:[%s1 + $0x2d28] sm:$0xff]
    %v1500 = vld [vmem:[%s1 + $0x2d30] sm:$0xff]
    %v1501 = vld [vmem:[%s1 + $0x2d38] sm:$0xff]
    %v1502 = vld [vmem:[%s1 + $0x2d40] sm:$0xff]
    %v1503 = vld [vmem:[%s1 + $0x2d48] sm:$0xff]
    %v1504 = vld [vmem:[%s1 + $0x2d50] sm:$0xff]
    %v1505 = vld [vmem:[%s1 + $0x2d58] sm:$0xff]
    %v1506 = vld [vmem:[%s1 + $0x2d60] sm:$0xff]
    %v1507 = vld [vmem:[%s1 + $0x2d68] sm:$0xff]
    %v1508 = vld [vmem:[%s1 + $0x2d70] sm:$0xff]
    %v1509 = vld [vmem:[%s1 + $0x2d78] sm:$0xff]
    %v1510 = vld [vmem:[%s1 + $0x2d80] sm:$0xff]
    %v1511 = vld [vmem:[%s1 + $0x2d88] sm:$0xff]
    %v1512 = vld [vmem:[%s1 + $0x2d90] sm:$0xff]
    %v1513 = vld [vmem:[%s1 + $0x2d98] sm:$0xff]
    %v1514 = vld [vmem:[%s1 + $0x2da0] sm:$0xff]
    %v1515 = vld [vmem:[%s1 + $0x2da8] sm:$0xff]
    %v1516 = vld [vmem:[%s1 + $0x2db0] sm:$0xff]
    %v1517 = vld [vmem:[%s1 + $0x2db8] sm:$0xff]
    %v1518 = vld [vmem:[%s1 + $0x2dc0] sm:$0xff]
    %v1519 = vld [vmem:[%s1 + $0x2dc8] sm:$0xff]
    %v1520 = vld [vmem:[%s1 + $0x2dd0] sm:$0xff]
    %v1521 = vld [vmem:[%s1 + $0x2dd8] sm:$0xff]
    %v1522 = vld [vmem:[%s1 + $0x2de0] sm:$0xff]
    %v1523 = vld [vmem:[%s1 + $0x2de8] sm:$0xff]
    %v1524 = vld [vmem:[%s1 + $0x2df0] sm:$0xff]
    %v1525 = vld [vmem:[%s1 + $0x2df8] sm:$0xff]
    %v1526 = vld [vmem:[%s1 + $0x2e00] sm:$0xff]
    %v1527 = vld [vmem:[%s1 + $0x2e08] sm:$0xff]
    %v1528 = vld [vmem:[%s1 + $0x2e10] sm:$0xff]
    %v1529 = vld [vmem:[%s1 + $0x2e18] sm:$0xff]
    %v1530 = vld [vmem:[%s1 + $0x2e20] sm:$0xff]
    %v1531 = vld [vmem:[%s1 + $0x2e28] sm:$0xff]
    %v1532 = vld [vmem:[%s1 + $0x2e30] sm:$0xff]
    %v1533 = vld [vmem:[%s1 + $0x2e38] sm:$0xff]
    %v1534 = vld [vmem:[%s1 + $0x2e40] sm:$0xff]
    %v1535 = vld [vmem:[%s1 + $0x2e48] sm:$0xff]
    %v1536 = vld [vmem:[%s1 + $0x2e50] sm:$0xff]
    %v1537 = vld [vmem:[%s1 + $0x2e58] sm:$0xff]
    %v1538 = vld [vmem:[%s1 + $0x2e60] sm:$0xff]
    %v1539 = vld [vmem:[%s1 + $0x2e68] sm:$0xff]
    %v1540 = vld [vmem:[%s1 + $0x2e70] sm:$0xff]
    %v1541 = vld [vmem:[%s1 + $0x2e78] sm:$0xff]
    %v1542 = vld [vmem:[%s1 + $0x2e80] sm:$0xff]
    %v1543 = vld [vmem:[%s1 + $0x2e88] sm:$0xff]
    %v1544 = vld [vmem:[%s1 + $0x2e90] sm:$0xff]
    %v1545 = vld [vmem:[%s1 + $0x2e98] sm:$0xff]
    %v1546 = vld [vmem:[%s1 + $0x2ea0] sm:$0xff]
    %v1547 = vld [vmem:[%s1 + $0x2ea8] sm:$0xff]
    %v1548 = vld [vmem:[%s1 + $0x2eb0] sm:$0xff]
    %v1549 = vld [vmem:[%s1 + $0x2eb8] sm:$0xff]
    %v1550 = vld [vmem:[%s1 + $0x2ec0] sm:$0xff]
    %v1551 = vld [vmem:[%s1 + $0x2ec8] sm:$0xff]
    %v1552 = vld [vmem:[%s1 + $0x2ed0] sm:$0xff]
    %v1553 = vld [vmem:[%s1 + $0x2ed8] sm:$0xff]
    %v1554 = vld [vmem:[%s1 + $0x2ee0] sm:$0xff]
    %v1555 = vld [vmem:[%s1 + $0x2ee8] sm:$0xff]
    %v1556 = vld [vmem:[%s1 + $0x2ef0] sm:$0xff]
    %v1557 = vld [vmem:[%s1 + $0x2ef8] sm:$0xff]
    %v1558 = vld [vmem:[%s1 + $0x2f00] sm:$0xff]
    %v1559 = vld [vmem:[%s1 + $0x2f08] sm:$0xff]
    %v1560 = vld [vmem:[%s1 + $0x2f10] sm:$0xff]
    %v1561 = vld [vmem:[%s1 + $0x2f18] sm:$0xff]
    %v1562 = vld [vmem:[%s1 + $0x2f20] sm:$0xff]
    %v1563 = vld [vmem:[%s1 + $0x2f28] sm:$0xff]
    %v1564 = vld [vmem:[%s1 + $0x2f30] sm:$0xff]
    %v1565 = vld [vmem:[%s1 + $0x2f38] sm:$0xff]
    %v1566 = vld [vmem:[%s1 + $0x2f40] sm:$0xff]
    %v1567 = vld [vmem:[%s1 + $0x2f48] sm:$0xff]
    %v1568 = vld [vmem:[%s1 + $0x2f50] sm:$0xff]
    %v1569 = vld [vmem:[%s1 + $0x2f58] sm:$0xff]
    %v1570 = vld [vmem:[%s1 + $0x2f60] sm:$0xff]
    %v1571 = vld [vmem:[%s1 + $0x2f68] sm:$0xff]
    %v1572 = vld [vmem:[%s1 + $0x2f70] sm:$0xff]
    %v1573 = vld [vmem:[%s1 + $0x2f78] sm:$0xff]
    %v1574 = vld [vmem:[%s1 + $0x2f80] sm:$0xff]
    %v1575 = vld [vmem:[%s1 + $0x2f88] sm:$0xff]
    %v1576 = vld [vmem:[%s1 + $0x2f90] sm:$0xff]
    %v1577 = vld [vmem:[%s1 + $0x2f98] sm:$0xff]
    %v1578 = vld [vmem:[%s1 + $0x2fa0] sm:$0xff]
    %v1579 = vld [vmem:[%s1 + $0x2fa8] sm:$0xff]
    %v1580 = vld [vmem:[%s1 + $0x2fb0] sm:$0xff]
    %v1581 = vld [vmem:[%s1 + $0x2fb8] sm:$0xff]
    %v1582 = vld [vmem:[%s1 + $0x2fc0] sm:$0xff]
    %v1583 = vld [vmem:[%s1 + $0x2fc8] sm:$0xff]
    %v1584 = vld [vmem:[%s1 + $0x2fd0] sm:$0xff]
    %v1585 = vld [vmem:[%s1 + $0x2fd8] sm:$0xff]
    %v1586 = vld [vmem:[%s1 + $0x2fe0] sm:$0xff]
    %v1587 = vld [vmem:[%s1 + $0x2fe8] sm:$0xff]
    %v1588 = vld [vmem:[%s1 + $0x2ff0] sm:$0xff]
    %v1589 = vld [vmem:[%s1 + $0x2ff8] sm:$0xff]
    %v1590 = vld [vmem:[%s1 + $0x3000] sm:$0xff]
    %v1591 = vld [vmem:[%s1 + $0x3008] sm:$0xff]
    %v1592 = vld [vmem:[%s1 + $0x3010] sm:$0xff]
    %v1593 = vld [vmem:[%s1 + $0x3018] sm:$0xff]
    %v1594 = vld [vmem:[%s1 + $0x3020] sm:$0xff]
    %v1595 = vld [vmem:[%s1 + $0x3028] sm:$0xff]
    %v1596 = vld [vmem:[%s1 + $0x3030] sm:$0xff]
    %v1597 = vld [vmem:[%s1 + $0x3038] sm:$0xff]
    %v1598 = vld [vmem:[%s1 + $0x3040] sm:$0xff]
    %v1599 = vld [vmem:[%s1 + $0x3048] sm:$0xff]
    %v1600 = vld [vmem:[%s1 + $0x3050] sm:$0xff]
    %v1601 = vld [vmem:[%s1 + $0x3058] sm:$0xff]
    %v1602 = vld [vmem:[%s1 + $0x3060] sm:$0xff]
    %v1603 = vld [vmem:[%s1 + $0x3068] sm:$0xff]
    %v1604 = vld [vmem:[%s1 + $0x3070] sm:$0xff]
    %v1605 = vld [vmem:[%s1 + $0x3078] sm:$0xff]
    %v1606 = vld [vmem:[%s1 + $0x3080] sm:$0xff]
    %v1607 = vld [vmem:[%s1 + $0x3088] sm:$0xff]
    %v1608 = vld [vmem:[%s1 + $0x3090] sm:$0xff]
    %v1609 = vld [vmem:[%s1 + $0x3098] sm:$0xff]
    %v1610 = vld [vmem:[%s1 + $0x30a0] sm:$0xff]
    %v1611 = vld [vmem:[%s1 + $0x30a8] sm:$0xff]
    %v1612 = vld [vmem:[%s1 + $0x30b0] sm:$0xff]
    %v1613 = vld [vmem:[%s1 + $0x30b8] sm:$0xff]
    %v1614 = vld [vmem:[%s1 + $0x30c0] sm:$0xff]
    %v1615 = vld [vmem:[%s1 + $0x30c8] sm:$0xff]
    %v1616 = vld [vmem:[%s1 + $0x30d0] sm:$0xff]
    %v1617 = vld [vmem:[%s1 + $0x30d8] sm:$0xff]
    %v1618 = vld [vmem:[%s1 + $0x30e0] sm:$0xff]
    %v1619 = vld [vmem:[%s1 + $0x30e8] sm:$0xff]
    %v1620 = vld [vmem:[%s1 + $0x30f0] sm:$0xff]
    %v1621 = vld [vmem:[%s1 + $0x30f8] sm:$0xff]
    %v1622 = vld [vmem:[%s1 + $0x3100] sm:$0xff]
    %v1623 = vld [vmem:[%s1 + $0x3108] sm:$0xff]
    %v1624 = vld [vmem:[%s1 + $0x3110] sm:$0xff]
    %v1625 = vld [vmem:[%s1 + $0x3118] sm:$0xff]
    %v1626 = vld [vmem:[%s1 + $0x3120] sm:$0xff]
    %v1627 = vld [vmem:[%s1 + $0x3128] sm:$0xff]
    %v1628 = vld [vmem:[%s1 + $0x3130] sm:$0xff]
    %v1629 = vld [vmem:[%s1 + $0x3138] sm:$0xff]
    %v1630 = vld [vmem:[%s1 + $0x3140] sm:$0xff]
    %v1631 = vld [vmem:[%s1 + $0x3148] sm:$0xff]
    %v1632 = vld [vmem:[%s1 + $0x3150] sm:$0xff]
    %v1633 = vld [vmem:[%s1 + $0x3158] sm:$0xff]
    %v1634 = vld [vmem:[%s1 + $0x3160] sm:$0xff]
    %v1635 = vld [vmem:[%s1 + $0x3168] sm:$0xff]
    %v1636 = vld [vmem:[%s1 + $0x3170] sm:$0xff]
    %v1637 = vld [vmem:[%s1 + $0x3178] sm:$0xff]
    %v1638 = vld [vmem:[%s1 + $0x3180] sm:$0xff]
    %v1639 = vld [vmem:[%s1 + $0x3188] sm:$0xff]
    %v1640 = vld [vmem:[%s1 + $0x3190] sm:$0xff]
    %v1641 = vld [vmem:[%s1 + $0x3198] sm:$0xff]
    %v1642 = vld [vmem:[%s1 + $0x31a0] sm:$0xff]
    %v1643 = vld [vmem:[%s1 + $0x31a8] sm:$0xff]
    %v1644 = vld [vmem:[%s1 + $0x31b0] sm:$0xff]
    %v1645 = vld [vmem:[%s1 + $0x31b8] sm:$0xff]
    %v1646 = vld [vmem:[%s1 + $0x31c0] sm:$0xff]
    %v1647 = vld [vmem:[%s1 + $0x31c8] sm:$0xff]
    %v1648 = vld [vmem:[%s1 + $0x31d0] sm:$0xff]
    %v1649 = vld [vmem:[%s1 + $0x31d8] sm:$0xff]
    %v1650 = vld [vmem:[%s1 + $0x31e0] sm:$0xff]
    %v1651 = vld [vmem:[%s1 + $0x31e8] sm:$0xff]
    %v1652 = vld [vmem:[%s1 + $0x31f0] sm:$0xff]
    %v1653 = vld [vmem:[%s1 + $0x31f8] sm:$0xff]
    %v1654 = vld [vmem:[%s1 + $0x3200] sm:$0xff]
    %v1655 = vld [vmem:[%s1 + $0x3208] sm:$0xff]
    %v1656 = vld [vmem:[%s1 + $0x3210] sm:$0xff]
    %v1657 = vld [vmem:[%s1 + $0x3218] sm:$0xff]
    %v1658 = vld [vmem:[%s1 + $0x3220] sm:$0xff]
    %v1659 = vld [vmem:[%s1 + $0x3228] sm:$0xff]
    %v1660 = vld [vmem:[%s1 + $0x3230] sm:$0xff]
    %v1661 = vld [vmem:[%s1 + $0x3238] sm:$0xff]
    %v1662 = vld [vmem:[%s1 + $0x3240] sm:$0xff]
    %v1663 = vld [vmem:[%s1 + $0x3248] sm:$0xff]
    %v1664 = vld [vmem:[%s1 + $0x3250] sm:$0xff]
    %v1665 = vld [vmem:[%s1 + $0x3258] sm:$0xff]
    %v1666 = vld [vmem:[%s1 + $0x3260] sm:$0xff]
    %v1667 = vld [vmem:[%s1 + $0x3268] sm:$0xff]
    %v1668 = vld [vmem:[%s1 + $0x3270] sm:$0xff]
    %v1669 = vld [vmem:[%s1 + $0x3278] sm:$0xff]
    %v1670 = vld [vmem:[%s1 + $0x3280] sm:$0xff]
    %v1671 = vld [vmem:[%s1 + $0x3288] sm:$0xff]
    %v1672 = vld [vmem:[%s1 + $0x3290] sm:$0xff]
    %v1673 = vld [vmem:[%s1 + $0x3298] sm:$0xff]
    %v1674 = vld [vmem:[%s1 + $0x32a0] sm:$0xff]
    %v1675 = vld [vmem:[%s1 + $0x32a8] sm:$0xff]
    %v1676 = vld [vmem:[%s1 + $0x32b0] sm:$0xff]
    %v1677 = vld [vmem:[%s1 + $0x32b8] sm:$0xff]
    %v1678 = vld [vmem:[%s1 + $0x32c0] sm:$0xff]
    %v1679 = vld [vmem:[%s1 + $0x32c8] sm:$0xff]
    %v1680 = vld [vmem:[%s1 + $0x32d0] sm:$0xff]
    %v1681 = vld [vmem:[%s1 + $0x32d8] sm:$0xff]
    %v1682 = vld [vmem:[%s1 + $0x32e0] sm:$0xff]
    %v1683 = vld [vmem:[%s1 + $0x32e8] sm:$0xff]
    %v1684 = vld [vmem:[%s1 + $0x32f0] sm:$0xff]
    %v1685 = vld [vmem:[%s1 + $0x32f8] sm:$0xff]
    %v1686 = vld [vmem:[%s1 + $0x3300] sm:$0xff]
    %v1687 = vld [vmem:[%s1 + $0x3308] sm:$0xff]
    %v1688 = vld [vmem:[%s1 + $0x3310] sm:$0xff]
    %v1689 = vld [vmem:[%s1 + $0x3318] sm:$0xff]
    %v1690 = vld [vmem:[%s1 + $0x3320] sm:$0xff]
    %v1691 = vld [vmem:[%s1 + $0x3328] sm:$0xff]
    %v1692 = vld [vmem:[%s1 + $0x3330] sm:$0xff]
    %v1693 = vld [vmem:[%s1 + $0x3338] sm:$0xff]
    %v1694 = vld [vmem:[%s1 + $0x3340] sm:$0xff]
    %v1695 = vld [vmem:[%s1 + $0x3348] sm:$0xff]
    %v1696 = vld [vmem:[%s1 + $0x3350] sm:$0xff]
    %v1697 = vld [vmem:[%s1 + $0x3358] sm:$0xff]
    %v1698 = vld [vmem:[%s1 + $0x3360] sm:$0xff]
    %v1699 = vld [vmem:[%s1 + $0x3368] sm:$0xff]
    %v1700 = vld [vmem:[%s1 + $0x3370] sm:$0xff]
    %v1701 = vld [vmem:[%s1 + $0x3378] sm:$0xff]
    %v1702 = vld [vmem:[%s1 + $0x3380] sm:$0xff]
    %v1703 = vld [vmem:[%s1 + $0x3388] sm:$0xff]
    %v1704 = vld [vmem:[%s1 + $0x3390] sm:$0xff]
    %v1705 = vld [vmem:[%s1 + $0x3398] sm:$0xff]
    %v1706 = vld [vmem:[%s1 + $0x33a0] sm:$0xff]
    %v1707 = vld [vmem:[%s1 + $0x33a8] sm:$0xff]
    %v1708 = vld [vmem:[%s1 + $0x33b0] sm:$0xff]
    %v1709 = vld [vmem:[%s1 + $0x33b8] sm:$0xff]
    %v1710 = vld [vmem:[%s1 + $0x33c0] sm:$0xff]
    %v1711 = vld [vmem:[%s1 + $0x33c8] sm:$0xff]
    %v1712 = vld [vmem:[%s1 + $0x33d0] sm:$0xff]
    %v1713 = vld [vmem:[%s1 + $0x33d8] sm:$0xff]
    %v1714 = vld [vmem:[%s1 + $0x33e0] sm:$0xff]
    %v1715 = vld [vmem:[%s1 + $0x33e8] sm:$0xff]
    %v1716 = vld [vmem:[%s1 + $0x33f0] sm:$0xff]
    %v1717 = vld [vmem:[%s1 + $0x33f8] sm:$0xff]
    %v1718 = vld [vmem:[%s1 + $0x3400] sm:$0xff]
    %v1719 = vld [vmem:[%s1 + $0x3408] sm:$0xff]
    %v1720 = vld [vmem:[%s1 + $0x3410] sm:$0xff]
    %v1721 = vld [vmem:[%s1 + $0x3418] sm:$0xff]
    %v1722 = vld [vmem:[%s1 + $0x3420] sm:$0xff]
    %v1723 = vld [vmem:[%s1 + $0x3428] sm:$0xff]
    %v1724 = vld [vmem:[%s1 + $0x3430] sm:$0xff]
    %v1725 = vld [vmem:[%s1 + $0x3438] sm:$0xff]
    %v1726 = vld [vmem:[%s1 + $0x3440] sm:$0xff]
    %v1727 = vld [vmem:[%s1 + $0x3448] sm:$0xff]
    %v1728 = vld [vmem:[%s1 + $0x3450] sm:$0xff]
    %v1729 = vld [vmem:[%s1 + $0x3458] sm:$0xff]
    %v1730 = vld [vmem:[%s1 + $0x3460] sm:$0xff]
    %v1731 = vld [vmem:[%s1 + $0x3468] sm:$0xff]
    %v1732 = vld [vmem:[%s1 + $0x3470] sm:$0xff]
    %v1733 = vld [vmem:[%s1 + $0x3478] sm:$0xff]
    %v1734 = vld [vmem:[%s1 + $0x3480] sm:$0xff]
    %v1735 = vld [vmem:[%s1 + $0x3488] sm:$0xff]
    %v1736 = vld [vmem:[%s1 + $0x3490] sm:$0xff]
    %v1737 = vld [vmem:[%s1 + $0x3498] sm:$0xff]
    %v1738 = vld [vmem:[%s1 + $0x34a0] sm:$0xff]
    %v1739 = vld [vmem:[%s1 + $0x34a8] sm:$0xff]
    %v1740 = vld [vmem:[%s1 + $0x34b0] sm:$0xff]
    %v1741 = vld [vmem:[%s1 + $0x34b8] sm:$0xff]
    %v1742 = vld [vmem:[%s1 + $0x34c0] sm:$0xff]
    %v1743 = vld [vmem:[%s1 + $0x34c8] sm:$0xff]
    %v1744 = vld [vmem:[%s1 + $0x34d0] sm:$0xff]
    %v1745 = vld [vmem:[%s1 + $0x34d8] sm:$0xff]
    %v1746 = vld [vmem:[%s1 + $0x34e0] sm:$0xff]
    %v1747 = vld [vmem:[%s1 + $0x34e8] sm:$0xff]
    %v1748 = vld [vmem:[%s1 + $0x34f0] sm:$0xff]
    %v1749 = vld [vmem:[%s1 + $0x34f8] sm:$0xff]
    %v1750 = vld [vmem:[%s1 + $0x3500] sm:$0xff]
    %v1751 = vld [vmem:[%s1 + $0x3508] sm:$0xff]
    %v1752 = vld [vmem:[%s1 + $0x3510] sm:$0xff]
    %v1753 = vld [vmem:[%s1 + $0x3518] sm:$0xff]
    %v1754 = vld [vmem:[%s1 + $0x3520] sm:$0xff]
    %v1755 = vld [vmem:[%s1 + $0x3528] sm:$0xff]
    %v1756 = vld [vmem:[%s1 + $0x3530] sm:$0xff]
    %v1757 = vld [vmem:[%s1 + $0x3538] sm:$0xff]
    %v1758 = vld [vmem:[%s1 + $0x3540] sm:$0xff]
    %v1759 = vld [vmem:[%s1 + $0x3548] sm:$0xff]
    %v1760 = vld [vmem:[%s1 + $0x3550] sm:$0xff]
    %v1761 = vld [vmem:[%s1 + $0x3558] sm:$0xff]
    %v1762 = vld [vmem:[%s1 + $0x3560] sm:$0xff]
    %v1763 = vld [vmem:[%s1 + $0x3568] sm:$0xff]
    %v1764 = vld [vmem:[%s1 + $0x3570] sm:$0xff]
    %v1765 = vld [vmem:[%s1 + $0x3578] sm:$0xff]
    %v1766 = vld [vmem:[%s1 + $0x3580] sm:$0xff]
    %v1767 = vld [vmem:[%s1 + $0x3588] sm:$0xff]
    %v1768 = vld [vmem:[%s1 + $0x3590] sm:$0xff]
    %v1769 = vld [vmem:[%s1 + $0x3598] sm:$0xff]
    %v1770 = vld [vmem:[%s1 + $0x35a0] sm:$0xff]
    %v1771 = vld [vmem:[%s1 + $0x35a8] sm:$0xff]
    %v1772 = vld [vmem:[%s1 + $0x35b0] sm:$0xff]
    %v1773 = vld [vmem:[%s1 + $0x35b8] sm:$0xff]
    %v1774 = vld [vmem:[%s1 + $0x35c0] sm:$0xff]
    %v1775 = vld [vmem:[%s1 + $0x35c8] sm:$0xff]
    %v1776 = vld [vmem:[%s1 + $0x35d0] sm:$0xff]
    %v1777 = vld [vmem:[%s1 + $0x35d8] sm:$0xff]
    %v1778 = vld [vmem:[%s1 + $0x35e0] sm:$0xff]
    %v1779 = vld [vmem:[%s1 + $0x35e8] sm:$0xff]
    %v1780 = vld [vmem:[%s1 + $0x35f0] sm:$0xff]
    %v1781 = vld [vmem:[%s1 + $0x35f8] sm:$0xff]
    %v1782 = vld [vmem:[%s1 + $0x3600] sm:$0xff]
    %v1783 = vld [vmem:[%s1 + $0x3608] sm:$0xff]
    %v1784 = vld [vmem:[%s1 + $0x3610] sm:$0xff]
    %v1785 = vld [vmem:[%s1 + $0x3618] sm:$0xff]
    %v1786 = vld [vmem:[%s1 + $0x3620] sm:$0xff]
    %v1787 = vld [vmem:[%s1 + $0x3628] sm:$0xff]
    %v1788 = vld [vmem:[%s1 + $0x3630] sm:$0xff]
    %v1789 = vld [vmem:[%s1 + $0x3638] sm:$0xff]
    %v1790 = vld [vmem:[%s1 + $0x3640] sm:$0xff]
    %v1791 = vld [vmem:[%s1 + $0x3648] sm:$0xff]
    %v1792 = vld [vmem:[%s1 + $0x3650] sm:$0xff]
    %v1793 = vld [vmem:[%s1 + $0x3658] sm:$0xff]
    %v1794 = vld [vmem:[%s1 + $0x3660] sm:$0xff]
    %v1795 = vld [vmem:[%s1 + $0x3668] sm:$0xff]
    %v1796 = vld [vmem:[%s1 + $0x3670] sm:$0xff]
    %v1797 = vld [vmem:[%s1 + $0x3678] sm:$0xff]
    %v1798 = vld [vmem:[%s1 + $0x3680] sm:$0xff]
    %v1799 = vld [vmem:[%s1 + $0x3688] sm:$0xff]
    %v1800 = vld [vmem:[%s1 + $0x3690] sm:$0xff]
    %v1801 = vld [vmem:[%s1 + $0x3698] sm:$0xff]
    %v1802 = vld [vmem:[%s1 + $0x36a0] sm:$0xff]
    %v1803 = vld [vmem:[%s1 + $0x36a8] sm:$0xff]
    %v1804 = vld [vmem:[%s1 + $0x36b0] sm:$0xff]
    %v1805 = vld [vmem:[%s1 + $0x36b8] sm:$0xff]
    %v1806 = vld [vmem:[%s1 + $0x36c0] sm:$0xff]
    %v1807 = vld [vmem:[%s1 + $0x36c8] sm:$0xff]
    %v1808 = vld [vmem:[%s1 + $0x36d0] sm:$0xff]
    %v1809 = vld [vmem:[%s1 + $0x36d8] sm:$0xff]
    %v1810 = vld [vmem:[%s1 + $0x36e0] sm:$0xff]
    %v1811 = vld [vmem:[%s1 + $0x36e8] sm:$0xff]
    %v1812 = vld [vmem:[%s1 + $0x36f0] sm:$0xff]
    %v1813 = vld [vmem:[%s1 + $0x36f8] sm:$0xff]
    %v1814 = vld [vmem:[%s1 + $0x3700] sm:$0xff]
    %v1815 = vld [vmem:[%s1 + $0x3708] sm:$0xff]
    %v1816 = vld [vmem:[%s1 + $0x3710] sm:$0xff]
    %v1817 = vld [vmem:[%s1 + $0x3718] sm:$0xff]
    %v1818 = vld [vmem:[%s1 + $0x3720] sm:$0xff]
    %v1819 = vld [vmem:[%s1 + $0x3728] sm:$0xff]
    %v1820 = vld [vmem:[%s1 + $0x3730] sm:$0xff]
    %v1821 = vld [vmem:[%s1 + $0x3738] sm:$0xff]
    %v1822 = vld [vmem:[%s1 + $0x3740] sm:$0xff]
    %v1823 = vld [vmem:[%s1 + $0x3748] sm:$0xff]
    %v1824 = vld [vmem:[%s1 + $0x3750] sm:$0xff]
    %v1825 = vld [vmem:[%s1 + $0x3758] sm:$0xff]
    %v1826 = vld [vmem:[%s1 + $0x3760] sm:$0xff]
    %v1827 = vld [vmem:[%s1 + $0x3768] sm:$0xff]
    %v1828 = vld [vmem:[%s1 + $0x3770] sm:$0xff]
    %v1829 = vld [vmem:[%s1 + $0x3778] sm:$0xff]
    %v1830 = vld [vmem:[%s1 + $0x3780] sm:$0xff]
    %v1831 = vld [vmem:[%s1 + $0x3788] sm:$0xff]
    %v1832 = vld [vmem:[%s1 + $0x3790] sm:$0xff]
    %v1833 = vld [vmem:[%s1 + $0x3798] sm:$0xff]
    %v1834 = vld [vmem:[%s1 + $0x37a0] sm:$0xff]
    %v1835 = vld [vmem:[%s1 + $0x37a8] sm:$0xff]
    %v1836 = vld [vmem:[%s1 + $0x37b0] sm:$0xff]
    %v1837 = vld [vmem:[%s1 + $0x37b8] sm:$0xff]
    %v1838 = vld [vmem:[%s1 + $0x37c0] sm:$0xff]
    %v1839 = vld [vmem:[%s1 + $0x37c8] sm:$0xff]
    %v1840 = vld [vmem:[%s1 + $0x37d0] sm:$0xff]
    %v1841 = vld [vmem:[%s1 + $0x37d8] sm:$0xff]
    %v1842 = vld [vmem:[%s1 + $0x37e0] sm:$0xff]
    %v1843 = vld [vmem:[%s1 + $0x37e8] sm:$0xff]
    %v1844 = vld [vmem:[%s1 + $0x37f0] sm:$0xff]
    %v1845 = vld [vmem:[%s1 + $0x37f8] sm:$0xff]
    %v1846 = vld [vmem:[%s1 + $0x3800] sm:$0xff]
    %v1847 = vld [vmem:[%s1 + $0x3808] sm:$0xff]
    %v1848 = vld [vmem:[%s1 + $0x3810] sm:$0xff]
    %v1849 = vld [vmem:[%s1 + $0x3818] sm:$0xff]
    %v1850 = vld [vmem:[%s1 + $0x3820] sm:$0xff]
    %v1851 = vld [vmem:[%s1 + $0x3828] sm:$0xff]
    %v1852 = vld [vmem:[%s1 + $0x3830] sm:$0xff]
    %v1853 = vld [vmem:[%s1 + $0x3838] sm:$0xff]
    %v1854 = vld [vmem:[%s1 + $0x3840] sm:$0xff]
    %v1855 = vld [vmem:[%s1 + $0x3848] sm:$0xff]
    %v1856 = vld [vmem:[%s1 + $0x3850] sm:$0xff]
    %v1857 = vld [vmem:[%s1 + $0x3858] sm:$0xff]
    %v1858 = vld [vmem:[%s1 + $0x3860] sm:$0xff]
    %v1859 = vld [vmem:[%s1 + $0x3868] sm:$0xff]
    %v1860 = vld [vmem:[%s1 + $0x3870] sm:$0xff]
    %v1861 = vld [vmem:[%s1 + $0x3878] sm:$0xff]
    %v1862 = vld [vmem:[%s1 + $0x3880] sm:$0xff]
    %v1863 = vld [vmem:[%s1 + $0x3888] sm:$0xff]
    %v1864 = vld [vmem:[%s1 + $0x3890] sm:$0xff]
    %v1865 = vld [vmem:[%s1 + $0x3898] sm:$0xff]
    %v1866 = vld [vmem:[%s1 + $0x38a0] sm:$0xff]
    %v1867 = vld [vmem:[%s1 + $0x38a8] sm:$0xff]
    %v1868 = vld [vmem:[%s1 + $0x38b0] sm:$0xff]
    %v1869 = vld [vmem:[%s1 + $0x38b8] sm:$0xff]
    %v1870 = vld [vmem:[%s1 + $0x38c0] sm:$0xff]
    %v1871 = vld [vmem:[%s1 + $0x38c8] sm:$0xff]
    %v1872 = vld [vmem:[%s1 + $0x38d0] sm:$0xff]
    %v1873 = vld [vmem:[%s1 + $0x38d8] sm:$0xff]
    %v1874 = vld [vmem:[%s1 + $0x38e0] sm:$0xff]
    %v1875 = vld [vmem:[%s1 + $0x38e8] sm:$0xff]
    %v1876 = vld [vmem:[%s1 + $0x38f0] sm:$0xff]
    %v1877 = vld [vmem:[%s1 + $0x38f8] sm:$0xff]
    %v1878 = vld [vmem:[%s1 + $0x3900] sm:$0xff]
    %v1879 = vld [vmem:[%s1 + $0x3908] sm:$0xff]
    %v1880 = vld [vmem:[%s1 + $0x3910] sm:$0xff]
    %v1881 = vld [vmem:[%s1 + $0x3918] sm:$0xff]
    %v1882 = vld [vmem:[%s1 + $0x3920] sm:$0xff]
    %v1883 = vld [vmem:[%s1 + $0x3928] sm:$0xff]
    %v1884 = vld [vmem:[%s1 + $0x3930] sm:$0xff]
    %v1885 = vld [vmem:[%s1 + $0x3938] sm:$0xff]
    %v1886 = vld [vmem:[%s1 + $0x3940] sm:$0xff]
    %v1887 = vld [vmem:[%s1 + $0x3948] sm:$0xff]
    %v1888 = vld [vmem:[%s1 + $0x3950] sm:$0xff]
    %v1889 = vld [vmem:[%s1 + $0x3958] sm:$0xff]
    %v1890 = vld [vmem:[%s1 + $0x3960] sm:$0xff]
    %v1891 = vld [vmem:[%s1 + $0x3968] sm:$0xff]
    %v1892 = vld [vmem:[%s1 + $0x3970] sm:$0xff]
    %v1893 = vld [vmem:[%s1 + $0x3978] sm:$0xff]
    %v1894 = vld [vmem:[%s1 + $0x3980] sm:$0xff]
    %v1895 = vld [vmem:[%s1 + $0x3988] sm:$0xff]
    %v1896 = vld [vmem:[%s1 + $0x3990] sm:$0xff]
    %v1897 = vld [vmem:[%s1 + $0x3998] sm:$0xff]
    %v1898 = vld [vmem:[%s1 + $0x39a0] sm:$0xff]
    %v1899 = vld [vmem:[%s1 + $0x39a8] sm:$0xff]
    %v1900 = vld [vmem:[%s1 + $0x39b0] sm:$0xff]
    %v1901 = vld [vmem:[%s1 + $0x39b8] sm:$0xff]
    %v1902 = vld [vmem:[%s1 + $0x39c0] sm:$0xff]
    %v1903 = vld [vmem:[%s1 + $0x39c8] sm:$0xff]
    %v1904 = vld [vmem:[%s1 + $0x39d0] sm:$0xff]
    %v1905 = vld [vmem:[%s1 + $0x39d8] sm:$0xff]
    %v1906 = vld [vmem:[%s1 + $0x39e0] sm:$0xff]
    %v1907 = vld [vmem:[%s1 + $0x39e8] sm:$0xff]
    %v1908 = vld [vmem:[%s1 + $0x39f0] sm:$0xff]
    %v1909 = vld [vmem:[%s1 + $0x39f8] sm:$0xff]
    %v1910 = vld [vmem:[%s1 + $0x3a00] sm:$0xff]
    %v1911 = vld [vmem:[%s1 + $0x3a08] sm:$0xff]
    %v1912 = vld [vmem:[%s1 + $0x3a10] sm:$0xff]
    %v1913 = vld [vmem:[%s1 + $0x3a18] sm:$0xff]
    %v1914 = vld [vmem:[%s1 + $0x3a20] sm:$0xff]
    %v1915 = vld [vmem:[%s1 + $0x3a28] sm:$0xff]
    %v1916 = vld [vmem:[%s1 + $0x3a30] sm:$0xff]
    %v1917 = vld [vmem:[%s1 + $0x3a38] sm:$0xff]
    %v1918 = vld [vmem:[%s1 + $0x3a40] sm:$0xff]
    %v1919 = vld [vmem:[%s1 + $0x3a48] sm:$0xff]
    %v1920 = vld [vmem:[%s1 + $0x3a50] sm:$0xff]
    %v1921 = vld [vmem:[%s1 + $0x3a58] sm:$0xff]
    %v1922 = vld [vmem:[%s1 + $0x3a60] sm:$0xff]
    %v1923 = vld [vmem:[%s1 + $0x3a68] sm:$0xff]
    %v1924 = vld [vmem:[%s1 + $0x3a70] sm:$0xff]
    %v1925 = vld [vmem:[%s1 + $0x3a78] sm:$0xff]
    %v1926 = vld [vmem:[%s1 + $0x3a80] sm:$0xff]
    %v1927 = vld [vmem:[%s1 + $0x3a88] sm:$0xff]
    %v1928 = vld [vmem:[%s1 + $0x3a90] sm:$0xff]
    %v1929 = vld [vmem:[%s1 + $0x3a98] sm:$0xff]
    %v1930 = vld [vmem:[%s1 + $0x3aa0] sm:$0xff]
    %v1931 = vld [vmem:[%s1 + $0x3aa8] sm:$0xff]
    %v1932 = vld [vmem:[%s1 + $0x3ab0] sm:$0xff]
    %v1933 = vld [vmem:[%s1 + $0x3ab8] sm:$0xff]
    %v1934 = vld [vmem:[%s1 + $0x3ac0] sm:$0xff]
    %v1935 = vld [vmem:[%s1 + $0x3ac8] sm:$0xff]
    %v1936 = vld [vmem:[%s1 + $0x3ad0] sm:$0xff]
    %v1937 = vld [vmem:[%s1 + $0x3ad8] sm:$0xff]
    %v1938 = vld [vmem:[%s1 + $0x3ae0] sm:$0xff]
    %v1939 = vld [vmem:[%s1 + $0x3ae8] sm:$0xff]
    %v1940 = vld [vmem:[%s1 + $0x3af0] sm:$0xff]
    %v1941 = vld [vmem:[%s1 + $0x3af8] sm:$0xff]
    %v1942 = vld [vmem:[%s1 + $0x3b00] sm:$0xff]
    %v1943 = vld [vmem:[%s1 + $0x3b08] sm:$0xff]
    %v1944 = vld [vmem:[%s1 + $0x3b10] sm:$0xff]
    %v1945 = vld [vmem:[%s1 + $0x3b18] sm:$0xff]
    %v1946 = vld [vmem:[%s1 + $0x3b20] sm:$0xff]
    %v1947 = vld [vmem:[%s1 + $0x3b28] sm:$0xff]
    %v1948 = vld [vmem:[%s1 + $0x3b30] sm:$0xff]
    %v1949 = vld [vmem:[%s1 + $0x3b38] sm:$0xff]
    %v1950 = vld [vmem:[%s1 + $0x3b40] sm:$0xff]
    %v1951 = vld [vmem:[%s1 + $0x3b48] sm:$0xff]
    %v1952 = vld [vmem:[%s1 + $0x3b50] sm:$0xff]
    %v1953 = vld [vmem:[%s1 + $0x3b58] sm:$0xff]
    %v1954 = vld [vmem:[%s1 + $0x3b60] sm:$0xff]
    %v1955 = vld [vmem:[%s1 + $0x3b68] sm:$0xff]
    %v1956 = vld [vmem:[%s1 + $0x3b70] sm:$0xff]
    %v1957 = vld [vmem:[%s1 + $0x3b78] sm:$0xff]
    %v1958 = vld [vmem:[%s1 + $0x3b80] sm:$0xff]
    %v1959 = vld [vmem:[%s1 + $0x3b88] sm:$0xff]
    %v1960 = vld [vmem:[%s1 + $0x3b90] sm:$0xff]
    %v1961 = vld [vmem:[%s1 + $0x3b98] sm:$0xff]
    %v1962 = vld [vmem:[%s1 + $0x3ba0] sm:$0xff]
    %v1963 = vld [vmem:[%s1 + $0x3ba8] sm:$0xff]
    %v1964 = vld [vmem:[%s1 + $0x3bb0] sm:$0xff]
    %v1965 = vld [vmem:[%s1 + $0x3bb8] sm:$0xff]
    %v1966 = vld [vmem:[%s1 + $0x3bc0] sm:$0xff]
    %v1967 = vld [vmem:[%s1 + $0x3bc8] sm:$0xff]
    %v1968 = vld [vmem:[%s1 + $0x3bd0] sm:$0xff]
    %v1969 = vld [vmem:[%s1 + $0x3bd8] sm:$0xff]
    %v1970 = vld [vmem:[%s1 + $0x3be0] sm:$0xff]
    %v1971 = vld [vmem:[%s1 + $0x3be8] sm:$0xff]
    %v1972 = vld [vmem:[%s1 + $0x3bf0] sm:$0xff]
    %v1973 = vld [vmem:[%s1 + $0x3bf8] sm:$0xff]
    %v1974 = vld [vmem:[%s1 + $0x3c00] sm:$0xff]
    %v1975 = vld [vmem:[%s1 + $0x3c08] sm:$0xff]
    %v1976 = vld [vmem:[%s1 + $0x3c10] sm:$0xff]
    %v1977 = vld [vmem:[%s1 + $0x3c18] sm:$0xff]
    %v1978 = vld [vmem:[%s1 + $0x3c20] sm:$0xff]
    %v1979 = vld [vmem:[%s1 + $0x3c28] sm:$0xff]
    %v1980 = vld [vmem:[%s1 + $0x3c30] sm:$0xff]
    %v1981 = vld [vmem:[%s1 + $0x3c38] sm:$0xff]
    %v1982 = vld [vmem:[%s1 + $0x3c40] sm:$0xff]
    %v1983 = vld [vmem:[%s1 + $0x3c48] sm:$0xff]
    %v1984 = vld [vmem:[%s1 + $0x3c50] sm:$0xff]
    %v1985 = vld [vmem:[%s1 + $0x3c58] sm:$0xff]
    %v1986 = vld [vmem:[%s1 + $0x3c60] sm:$0xff]
    %v1987 = vld [vmem:[%s1 + $0x3c68] sm:$0xff]
    %v1988 = vld [vmem:[%s1 + $0x3c70] sm:$0xff]
    %v1989 = vld [vmem:[%s1 + $0x3c78] sm:$0xff]
    %v1990 = vld [vmem:[%s1 + $0x3c80] sm:$0xff]
    %v1991 = vld [vmem:[%s1 + $0x3c88] sm:$0xff]
    %v1992 = vld [vmem:[%s1 + $0x3c90] sm:$0xff]
    %v1993 = vld [vmem:[%s1 + $0x3c98] sm:$0xff]
    %v1994 = vld [vmem:[%s1 + $0x3ca0] sm:$0xff]
    %v1995 = vld [vmem:[%s1 + $0x3ca8] sm:$0xff]
    %v1996 = vld [vmem:[%s1 + $0x3cb0] sm:$0xff]
    %v1997 = vld [vmem:[%s1 + $0x3cb8] sm:$0xff]
    %v1998 = vld [vmem:[%s1 + $0x3cc0] sm:$0xff]
    %v1999 = vld [vmem:[%s1 + $0x3cc8] sm:$0xff]
    %v2000 = vld [vmem:[%s1 + $0x3cd0] sm:$0xff]
    %v2001 = vld [vmem:[%s1 + $0x3cd8] sm:$0xff]
    %v2002 = vld [vmem:[%s1 + $0x3ce0] sm:$0xff]
    %v2003 = vld [vmem:[%s1 + $0x3ce8] sm:$0xff]
    %v2004 = vld [vmem:[%s1 + $0x3cf0] sm:$0xff]
    %v2005 = vld [vmem:[%s1 + $0x3cf8] sm:$0xff]
    %v2006 = vld [vmem:[%s1 + $0x3d00] sm:$0xff]
    %v2007 = vld [vmem:[%s1 + $0x3d08] sm:$0xff]
    %v2008 = vld [vmem:[%s1 + $0x3d10] sm:$0xff]
    %v2009 = vld [vmem:[%s1 + $0x3d18] sm:$0xff]
    %v2010 = vld [vmem:[%s1 + $0x3d20] sm:$0xff]
    %v2011 = vld [vmem:[%s1 + $0x3d28] sm:$0xff]
    %v2012 = vld [vmem:[%s1 + $0x3d30] sm:$0xff]
    %v2013 = vld [vmem:[%s1 + $0x3d38] sm:$0xff]
    %v2014 = vld [vmem:[%s1 + $0x3d40] sm:$0xff]
    %v2015 = vld [vmem:[%s1 + $0x3d48] sm:$0xff]
    %v2016 = vld [vmem:[%s1 + $0x3d50] sm:$0xff]
    %v2017 = vld [vmem:[%s1 + $0x3d58] sm:$0xff]
    %v2018 = vld [vmem:[%s1 + $0x3d60] sm:$0xff]
    %v2019 = vld [vmem:[%s1 + $0x3d68] sm:$0xff]
    %v2020 = vld [vmem:[%s1 + $0x3d70] sm:$0xff]
    %v2021 = vld [vmem:[%s1 + $0x3d78] sm:$0xff]
    %v2022 = vld [vmem:[%s1 + $0x3d80] sm:$0xff]
    %v2023 = vld [vmem:[%s1 + $0x3d88] sm:$0xff]
    %v2024 = vld [vmem:[%s1 + $0x3d90] sm:$0xff]
    %v2025 = vld [vmem:[%s1 + $0x3d98] sm:$0xff]
    %v2026 = vld [vmem:[%s1 + $0x3da0] sm:$0xff]
    %v2027 = vld [vmem:[%s1 + $0x3da8] sm:$0xff]
    %v2028 = vld [vmem:[%s1 + $0x3db0] sm:$0xff]
    %v2029 = vld [vmem:[%s1 + $0x3db8] sm:$0xff]
    %v2030 = vld [vmem:[%s1 + $0x3dc0] sm:$0xff]
    %v2031 = vld [vmem:[%s1 + $0x3dc8] sm:$0xff]
    %v2032 = vld [vmem:[%s1 + $0x3dd0] sm:$0xff]
    %v2033 = vld [vmem:[%s1 + $0x3dd8] sm:$0xff]
    %v2034 = vld [vmem:[%s1 + $0x3de0] sm:$0xff]
    %v2035 = vld [vmem:[%s1 + $0x3de8] sm:$0xff]
    %v2036 = vld [vmem:[%s1 + $0x3df0] sm:$0xff]
    %v2037 = vld [vmem:[%s1 + $0x3df8] sm:$0xff]
    %v2038 = vld [vmem:[%s1 + $0x3e00] sm:$0xff]
    %v2039 = vld [vmem:[%s1 + $0x3e08] sm:$0xff]
    %v2040 = vld [vmem:[%s1 + $0x3e10] sm:$0xff]
    %v2041 = vld [vmem:[%s1 + $0x3e18] sm:$0xff]
    %v2042 = vld [vmem:[%s1 + $0x3e20] sm:$0xff]
    %v2043 = vld [vmem:[%s1 + $0x3e28] sm:$0xff]
    %v2044 = vld [vmem:[%s1 + $0x3e30] sm:$0xff]
    %v2045 = vld [vmem:[%s1 + $0x3e38] sm:$0xff]
    %v2046 = vld [vmem:[%s1 + $0x3e40] sm:$0xff]
    %v2047 = vld [vmem:[%s1 + $0x3e48] sm:$0xff]
    %v2048 = vld [vmem:[%s1 + $0x3e50] sm:$0xff]
    %v2049 = vld [vmem:[%s1 + $0x3e58] sm:$0xff]
    %v2050 = vld [vmem:[%s1 + $0x3e60] sm:$0xff]
    %v2051 = vld [vmem:[%s1 + $0x3e68] sm:$0xff]
    %v2052 = vld [vmem:[%s1 + $0x3e70] sm:$0xff]
    %v2053 = vld [vmem:[%s1 + $0x3e78] sm:$0xff]
    %v2054 = vld [vmem:[%s1 + $0x3e80] sm:$0xff]
    %v2055 = vld [vmem:[%s1 + $0x3e88] sm:$0xff]
    %v2056 = vld [vmem:[%s1 + $0x3e90] sm:$0xff]
    %v2057 = vld [vmem:[%s1 + $0x3e98] sm:$0xff]
    %v2058 = vld [vmem:[%s1 + $0x3ea0] sm:$0xff]
    %v2059 = vld [vmem:[%s1 + $0x3ea8] sm:$0xff]
    %v2060 = vld [vmem:[%s1 + $0x3eb0] sm:$0xff]
    %v2061 = vld [vmem:[%s1 + $0x3eb8] sm:$0xff]
    %v2062 = vld [vmem:[%s1 + $0x3ec0] sm:$0xff]
    %v2063 = vld [vmem:[%s1 + $0x3ec8] sm:$0xff]
    %v2064 = vld [vmem:[%s1 + $0x3ed0] sm:$0xff]
    %v2065 = vld [vmem:[%s1 + $0x3ed8] sm:$0xff]
    %v2066 = vld [vmem:[%s1 + $0x3ee0] sm:$0xff]
    %v2067 = vld [vmem:[%s1 + $0x3ee8] sm:$0xff]
    %v2068 = vld [vmem:[%s1 + $0x3ef0] sm:$0xff]
    %v2069 = vld [vmem:[%s1 + $0x3ef8] sm:$0xff]
    %v2070 = vld [vmem:[%s1 + $0x3f00] sm:$0xff]
    %v2071 = vld [vmem:[%s1 + $0x3f08] sm:$0xff]
    %v2072 = vld [vmem:[%s1 + $0x3f10] sm:$0xff]
    %v2073 = vld [vmem:[%s1 + $0x3f18] sm:$0xff]
    %v2074 = vld [vmem:[%s1 + $0x3f20] sm:$0xff]
    %v2075 = vld [vmem:[%s1 + $0x3f28] sm:$0xff]
    %v2076 = vld [vmem:[%s1 + $0x3f30] sm:$0xff]
    %v2077 = vld [vmem:[%s1 + $0x3f38] sm:$0xff]
    %v2078 = vld [vmem:[%s1 + $0x3f40] sm:$0xff]
    %v2079 = vld [vmem:[%s1 + $0x3f48] sm:$0xff]
    %v2080 = vld [vmem:[%s1 + $0x3f50] sm:$0xff]
    %v2081 = vld [vmem:[%s1 + $0x3f58] sm:$0xff]
    %v2082 = vld [vmem:[%s1 + $0x3f60] sm:$0xff]
    %v2083 = vld [vmem:[%s1 + $0x3f68] sm:$0xff]
    %v2084 = vld [vmem:[%s1 + $0x3f70] sm:$0xff]
    %v2085 = vld [vmem:[%s1 + $0x3f78] sm:$0xff]
    %v2086 = vld [vmem:[%s1 + $0x3f80] sm:$0xff]
    %v2087 = vld [vmem:[%s1 + $0x3f88] sm:$0xff]
    %v2088 = vld [vmem:[%s1 + $0x3f90] sm:$0xff]
    %v2089 = vld [vmem:[%s1 + $0x3f98] sm:$0xff]
    %v2090 = vld [vmem:[%s1 + $0x3fa0] sm:$0xff]
    %v2091 = vld [vmem:[%s1 + $0x3fa8] sm:$0xff]
    %v2092 = vld [vmem:[%s1 + $0x3fb0] sm:$0xff]
    %v2093 = vld [vmem:[%s1 + $0x3fb8] sm:$0xff]
    %v2094 = vld [vmem:[%s1 + $0x3fc0] sm:$0xff]
    %v2095 = vld [vmem:[%s1 + $0x3fc8] sm:$0xff]
    %v2096 = vld [vmem:[%s1 + $0x3fd0] sm:$0xff]
    %v2097 = vld [vmem:[%s1 + $0x3fd8] sm:$0xff]
    %v2098 = vld [vmem:[%s1 + $0x3fe0] sm:$0xff]
    %v2099 = vld [vmem:[%s1 + $0x3fe8] sm:$0xff]
    %v2100 = vld [vmem:[%s1 + $0x3ff0] sm:$0xff]
    %v2101 = vld [vmem:[%s1 + $0x3ff8] sm:$0xff]
    %v2102 = vld [vmem:[%s2] sm:$0xf]
    %v2104 = vperm.slane %v2102, 0
    %v2105 = vperm.slane %v2102, 1
    %v2106 = vperm.slane %v2102, 2
    %v2107 = vperm.slane %v2102, 3
    %2120 = vst [vmem:[#allocation1] ss:$4 sm:$0xff] %v46
    %s2121 = scalar_lea.vmem [#allocation1], 32
    %2122 = vst [vmem:[%s2121] ss:$4 sm:$0xff] %v47
    %v2123 = vld.sshfl [vmem:[#allocation1] sm:$0xff pattern:$0x73625140]
    %v2124 = vld.sshfl [vmem:[#allocation1 + $0x8] sm:$0xff pattern:$0x73625140]
    %v2125 = vld.sshfl [vmem:[#allocation1 + $0x10] sm:$0xff pattern:$0x73625140]
    %v2126 = vld.sshfl [vmem:[#allocation1 + $0x18] sm:$0xff pattern:$0x73625140]
    %v2127 = vld.sshfl [vmem:[#allocation1 + $0x20] sm:$0xff pattern:$0x73625140]
    %v2128 = vld.sshfl [vmem:[#allocation1 + $0x28] sm:$0xff pattern:$0x73625140]
    %v2129 = vld.sshfl [vmem:[#allocation1 + $0x30] sm:$0xff pattern:$0x73625140]
    %v2130 = vld.sshfl [vmem:[#allocation1 + $0x38] sm:$0xff pattern:$0x73625140]
    %2131 = vst [vmem:[#allocation1] ss:$4 sm:$0xff] %v48
    %2132 = vst [vmem:[%s2121] ss:$4 sm:$0xff] %v49
    %v2133 = vld.sshfl [vmem:[#allocation1] sm:$0xff pattern:$0x73625140]
    %v2134 = vld.sshfl [vmem:[#allocation1 + $0x8] sm:$0xff pattern:$0x73625140]
    %v2135 = vld.sshfl [vmem:[#allocation1 + $0x10] sm:$0xff pattern:$0x73625140]
    %v2136 = vld.sshfl [vmem:[#allocation1 + $0x18] sm:$0xff pattern:$0x73625140]
    %v2137 = vld.sshfl [vmem:[#allocation1 + $0x20] sm:$0xff pattern:$0x73625140]
    %v2138 = vld.sshfl [vmem:[#allocation1 + $0x28] sm:$0xff pattern:$0x73625140]
    %v2139 = vld.sshfl [vmem:[#allocation1 + $0x30] sm:$0xff pattern:$0x73625140]
    %v2140 = vld.sshfl [vmem:[#allocation1 + $0x38] sm:$0xff pattern:$0x73625140]
    %2141 = vst [vmem:[#allocation1] ss:$4 sm:$0xff] %v50
    %2142 = vst [vmem:[%s2121] ss:$4 sm:$0xff] %v51
    %v2143 = vld.sshfl [vmem:[#allocation1] sm:$0xff pattern:$0x73625140]
    %v2144 = vld.sshfl [vmem:[#allocation1 + $0x8] sm:$0xff pattern:$0x73625140]
    %v2145 = vld.sshfl [vmem:[#allocation1 + $0x10] sm:$0xff pattern:$0x73625140]
    %v2146 = vld.sshfl [vmem:[#allocation1 + $0x18] sm:$0xff pattern:$0x73625140]
    %v2147 = vld.sshfl [vmem:[#allocation1 + $0x20] sm:$0xff pattern:$0x73625140]
    %v2148 = vld.sshfl [vmem:[#allocation1 + $0x28] sm:$0xff pattern:$0x73625140]
    %v2149 = vld.sshfl [vmem:[#allocation1 + $0x30] sm:$0xff pattern:$0x73625140]
    %v2150 = vld.sshfl [vmem:[#allocation1 + $0x38] sm:$0xff pattern:$0x73625140]
    %2151 = vst [vmem:[#allocation1] ss:$4 sm:$0xff] %v52
    %2152 = vst [vmem:[%s2121] ss:$4 sm:$0xff] %v53
    %v2153 = vld.sshfl [vmem:[#allocation1] sm:$0xff pattern:$0x73625140]
    %v2154 = vld.sshfl [vmem:[#allocation1 + $0x8] sm:$0xff pattern:$0x73625140]
    %v2155 = vld.sshfl [vmem:[#allocation1 + $0x10] sm:$0xff pattern:$0x73625140]
    %v2156 = vld.sshfl [vmem:[#allocation1 + $0x18] sm:$0xff pattern:$0x73625140]
    %v2157 = vld.sshfl [vmem:[#allocation1 + $0x20] sm:$0xff pattern:$0x73625140]
    %v2158 = vld.sshfl [vmem:[#allocation1 + $0x28] sm:$0xff pattern:$0x73625140]
    %v2159 = vld.sshfl [vmem:[#allocation1 + $0x30] sm:$0xff pattern:$0x73625140]
    %v2160 = vld.sshfl [vmem:[#allocation1 + $0x38] sm:$0xff pattern:$0x73625140]
    %2193 = vmatpush.msra.mxu0 %v114
    %2194 = vmatpush.msra.mxu0 %v110
    %2195 = vmatpush.msra.mxu0 %v106
    %2196 = vmatpush.msra.mxu0 %v102
    %2197 = vmatpush.msra.mxu0 %v98
    %2198 = vmatpush.msra.mxu0 %v94
    %2199 = vmatpush.msra.mxu0 %v90
    %2200 = vmatpush.msra.mxu0 %v86
    %2201 = vmatpush.msra.mxu0 %v82
    %2202 = vmatpush.msra.mxu0 %v78
    %2203 = vmatpush.msra.mxu0 %v74
    %2204 = vmatpush.msra.mxu0 %v70
    %2205 = vmatpush.msra.mxu0 %v66
    %2206 = vmatpush.msra.mxu0 %v62
    %2207 = vmatpush.msra.mxu0 %v58
    %2208 = vmatpush.msra.mxu0 %v54
    %2209 = vmatmul.f32.gmra.mxu0 %v2123
    %v2210 = vpop.f32.mrf.mxu0
    %v2211 = vadd.f32 %v2104, %v2210
    %2212 = vdwg.mxu0
    %2213 = vmatpush.msra.mxu0 %v178
    %2214 = vmatpush.msra.mxu0 %v174
    %2215 = vmatpush.msra.mxu0 %v170
    %2216 = vmatpush.msra.mxu0 %v166
    %2217 = vmatpush.msra.mxu0 %v162
    %2218 = vmatpush.msra.mxu0 %v158
    %2219 = vmatpush.msra.mxu0 %v154
    %2220 = vmatpush.msra.mxu0 %v150
    %2221 = vmatpush.msra.mxu0 %v146
    %2222 = vmatpush.msra.mxu0 %v142
    %2223 = vmatpush.msra.mxu0 %v138
    %2224 = vmatpush.msra.mxu0 %v134
    %2225 = vmatpush.msra.mxu0 %v130
    %2226 = vmatpush.msra.mxu0 %v126
    %2227 = vmatpush.msra.mxu0 %v122
    %2228 = vmatpush.msra.mxu0 %v118
    %2229 = vmatmul.f32.gmra.mxu0 %v2124
    %v2230 = vpop.f32.mrf.mxu0
    %v2231 = vadd.f32 %v2211, %v2230
    %2232 = vdwg.mxu0
    %2233 = vmatpush.msra.mxu0 %v242
    %2234 = vmatpush.msra.mxu0 %v238
    %2235 = vmatpush.msra.mxu0 %v234
    %2236 = vmatpush.msra.mxu0 %v230
    %2237 = vmatpush.msra.mxu0 %v226
    %2238 = vmatpush.msra.mxu0 %v222
    %2239 = vmatpush.msra.mxu0 %v218
    %2240 = vmatpush.msra.mxu0 %v214
    %2241 = vmatpush.msra.mxu0 %v210
    %2242 = vmatpush.msra.mxu0 %v206
    %2243 = vmatpush.msra.mxu0 %v202
    %2244 = vmatpush.msra.mxu0 %v198
    %2245 = vmatpush.msra.mxu0 %v194
    %2246 = vmatpush.msra.mxu0 %v190
    %2247 = vmatpush.msra.mxu0 %v186
    %2248 = vmatpush.msra.mxu0 %v182
    %2249 = vmatmul.f32.gmra.mxu0 %v2125
    %v2250 = vpop.f32.mrf.mxu0
    %v2251 = vadd.f32 %v2231, %v2250
    %2252 = vdwg.mxu0
    %2253 = vmatpush.msra.mxu0 %v306
    %2254 = vmatpush.msra.mxu0 %v302
    %2255 = vmatpush.msra.mxu0 %v298
    %2256 = vmatpush.msra.mxu0 %v294
    %2257 = vmatpush.msra.mxu0 %v290
    %2258 = vmatpush.msra.mxu0 %v286
    %2259 = vmatpush.msra.mxu0 %v282
    %2260 = vmatpush.msra.mxu0 %v278
    %2261 = vmatpush.msra.mxu0 %v274
    %2262 = vmatpush.msra.mxu0 %v270
    %2263 = vmatpush.msra.mxu0 %v266
    %2264 = vmatpush.msra.mxu0 %v262
    %2265 = vmatpush.msra.mxu0 %v258
    %2266 = vmatpush.msra.mxu0 %v254
    %2267 = vmatpush.msra.mxu0 %v250
    %2268 = vmatpush.msra.mxu0 %v246
    %2269 = vmatmul.f32.gmra.mxu0 %v2126
    %v2270 = vpop.f32.mrf.mxu0
    %v2271 = vadd.f32 %v2251, %v2270
    %2272 = vdwg.mxu0
    %2273 = vmatpush.msra.mxu0 %v370
    %2274 = vmatpush.msra.mxu0 %v366
    %2275 = vmatpush.msra.mxu0 %v362
    %2276 = vmatpush.msra.mxu0 %v358
    %2277 = vmatpush.msra.mxu0 %v354
    %2278 = vmatpush.msra.mxu0 %v350
    %2279 = vmatpush.msra.mxu0 %v346
    %2280 = vmatpush.msra.mxu0 %v342
    %2281 = vmatpush.msra.mxu0 %v338
    %2282 = vmatpush.msra.mxu0 %v334
    %2283 = vmatpush.msra.mxu0 %v330
    %2284 = vmatpush.msra.mxu0 %v326
    %2285 = vmatpush.msra.mxu0 %v322
    %2286 = vmatpush.msra.mxu0 %v318
    %2287 = vmatpush.msra.mxu0 %v314
    %2288 = vmatpush.msra.mxu0 %v310
    %2289 = vmatmul.f32.gmra.mxu0 %v2127
    %v2290 = vpop.f32.mrf.mxu0
    %v2291 = vadd.f32 %v2271, %v2290
    %2292 = vdwg.mxu0
    %2293 = vmatpush.msra.mxu0 %v434
    %2294 = vmatpush.msra.mxu0 %v430
    %2295 = vmatpush.msra.mxu0 %v426
    %2296 = vmatpush.msra.mxu0 %v422
    %2297 = vmatpush.msra.mxu0 %v418
    %2298 = vmatpush.msra.mxu0 %v414
    %2299 = vmatpush.msra.mxu0 %v410
    %2300 = vmatpush.msra.mxu0 %v406
    %2301 = vmatpush.msra.mxu0 %v402
    %2302 = vmatpush.msra.mxu0 %v398
    %2303 = vmatpush.msra.mxu0 %v394
    %2304 = vmatpush.msra.mxu0 %v390
    %2305 = vmatpush.msra.mxu0 %v386
    %2306 = vmatpush.msra.mxu0 %v382
    %2307 = vmatpush.msra.mxu0 %v378
    %2308 = vmatpush.msra.mxu0 %v374
    %2309 = vmatmul.f32.gmra.mxu0 %v2128
    %v2310 = vpop.f32.mrf.mxu0
    %v2311 = vadd.f32 %v2291, %v2310
    %2312 = vdwg.mxu0
    %2313 = vmatpush.msra.mxu0 %v498
    %2314 = vmatpush.msra.mxu0 %v494
    %2315 = vmatpush.msra.mxu0 %v490
    %2316 = vmatpush.msra.mxu0 %v486
    %2317 = vmatpush.msra.mxu0 %v482
    %2318 = vmatpush.msra.mxu0 %v478
    %2319 = vmatpush.msra.mxu0 %v474
    %2320 = vmatpush.msra.mxu0 %v470
    %2321 = vmatpush.msra.mxu0 %v466
    %2322 = vmatpush.msra.mxu0 %v462
    %2323 = vmatpush.msra.mxu0 %v458
    %2324 = vmatpush.msra.mxu0 %v454
    %2325 = vmatpush.msra.mxu0 %v450
    %2326 = vmatpush.msra.mxu0 %v446
    %2327 = vmatpush.msra.mxu0 %v442
    %2328 = vmatpush.msra.mxu0 %v438
    %2329 = vmatmul.f32.gmra.mxu0 %v2129
    %v2330 = vpop.f32.mrf.mxu0
    %v2331 = vadd.f32 %v2311, %v2330
    %2332 = vdwg.mxu0
    %2333 = vmatpush.msra.mxu0 %v562
    %2334 = vmatpush.msra.mxu0 %v558
    %2335 = vmatpush.msra.mxu0 %v554
    %2336 = vmatpush.msra.mxu0 %v550
    %2337 = vmatpush.msra.mxu0 %v546
    %2338 = vmatpush.msra.mxu0 %v542
    %2339 = vmatpush.msra.mxu0 %v538
    %2340 = vmatpush.msra.mxu0 %v534
    %2341 = vmatpush.msra.mxu0 %v530
    %2342 = vmatpush.msra.mxu0 %v526
    %2343 = vmatpush.msra.mxu0 %v522
    %2344 = vmatpush.msra.mxu0 %v518
    %2345 = vmatpush.msra.mxu0 %v514
    %2346 = vmatpush.msra.mxu0 %v510
    %2347 = vmatpush.msra.mxu0 %v506
    %2348 = vmatpush.msra.mxu0 %v502
    %2349 = vmatmul.f32.gmra.mxu0 %v2130
    %v2350 = vpop.f32.mrf.mxu0
    %v2351 = vadd.f32 %v2331, %v2350
    %2352 = vdwg.mxu0
    %2353 = vmatpush.msra.mxu0 %v626
    %2354 = vmatpush.msra.mxu0 %v622
    %2355 = vmatpush.msra.mxu0 %v618
    %2356 = vmatpush.msra.mxu0 %v614
    %2357 = vmatpush.msra.mxu0 %v610
    %2358 = vmatpush.msra.mxu0 %v606
    %2359 = vmatpush.msra.mxu0 %v602
    %2360 = vmatpush.msra.mxu0 %v598
    %2361 = vmatpush.msra.mxu0 %v594
    %2362 = vmatpush.msra.mxu0 %v590
    %2363 = vmatpush.msra.mxu0 %v586
    %2364 = vmatpush.msra.mxu0 %v582
    %2365 = vmatpush.msra.mxu0 %v578
    %2366 = vmatpush.msra.mxu0 %v574
    %2367 = vmatpush.msra.mxu0 %v570
    %2368 = vmatpush.msra.mxu0 %v566
    %2369 = vmatmul.f32.gmra.mxu0 %v2133
    %v2370 = vpop.f32.mrf.mxu0
    %v2371 = vadd.f32 %v2351, %v2370
    %2372 = vdwg.mxu0
    %2373 = vmatpush.msra.mxu0 %v690
    %2374 = vmatpush.msra.mxu0 %v686
    %2375 = vmatpush.msra.mxu0 %v682
    %2376 = vmatpush.msra.mxu0 %v678
    %2377 = vmatpush.msra.mxu0 %v674
    %2378 = vmatpush.msra.mxu0 %v670
    %2379 = vmatpush.msra.mxu0 %v666
    %2380 = vmatpush.msra.mxu0 %v662
    %2381 = vmatpush.msra.mxu0 %v658
    %2382 = vmatpush.msra.mxu0 %v654
    %2383 = vmatpush.msra.mxu0 %v650
    %2384 = vmatpush.msra.mxu0 %v646
    %2385 = vmatpush.msra.mxu0 %v642
    %2386 = vmatpush.msra.mxu0 %v638
    %2387 = vmatpush.msra.mxu0 %v634
    %2388 = vmatpush.msra.mxu0 %v630
    %2389 = vmatmul.f32.gmra.mxu0 %v2134
    %v2390 = vpop.f32.mrf.mxu0
    %v2391 = vadd.f32 %v2371, %v2390
    %2392 = vdwg.mxu0
    %2393 = vmatpush.msra.mxu0 %v754
    %2394 = vmatpush.msra.mxu0 %v750
    %2395 = vmatpush.msra.mxu0 %v746
    %2396 = vmatpush.msra.mxu0 %v742
    %2397 = vmatpush.msra.mxu0 %v738
    %2398 = vmatpush.msra.mxu0 %v734
    %2399 = vmatpush.msra.mxu0 %v730
    %2400 = vmatpush.msra.mxu0 %v726
    %2401 = vmatpush.msra.mxu0 %v722
    %2402 = vmatpush.msra.mxu0 %v718
    %2403 = vmatpush.msra.mxu0 %v714
    %2404 = vmatpush.msra.mxu0 %v710
    %2405 = vmatpush.msra.mxu0 %v706
    %2406 = vmatpush.msra.mxu0 %v702
    %2407 = vmatpush.msra.mxu0 %v698
    %2408 = vmatpush.msra.mxu0 %v694
    %2409 = vmatmul.f32.gmra.mxu0 %v2135
    %v2410 = vpop.f32.mrf.mxu0
    %v2411 = vadd.f32 %v2391, %v2410
    %2412 = vdwg.mxu0
    %2413 = vmatpush.msra.mxu0 %v818
    %2414 = vmatpush.msra.mxu0 %v814
    %2415 = vmatpush.msra.mxu0 %v810
    %2416 = vmatpush.msra.mxu0 %v806
    %2417 = vmatpush.msra.mxu0 %v802
    %2418 = vmatpush.msra.mxu0 %v798
    %2419 = vmatpush.msra.mxu0 %v794
    %2420 = vmatpush.msra.mxu0 %v790
    %2421 = vmatpush.msra.mxu0 %v786
    %2422 = vmatpush.msra.mxu0 %v782
    %2423 = vmatpush.msra.mxu0 %v778
    %2424 = vmatpush.msra.mxu0 %v774
    %2425 = vmatpush.msra.mxu0 %v770
    %2426 = vmatpush.msra.mxu0 %v766
    %2427 = vmatpush.msra.mxu0 %v762
    %2428 = vmatpush.msra.mxu0 %v758
    %2429 = vmatmul.f32.gmra.mxu0 %v2136
    %v2430 = vpop.f32.mrf.mxu0
    %v2431 = vadd.f32 %v2411, %v2430
    %2432 = vdwg.mxu0
    %2433 = vmatpush.msra.mxu0 %v882
    %2434 = vmatpush.msra.mxu0 %v878
    %2435 = vmatpush.msra.mxu0 %v874
    %2436 = vmatpush.msra.mxu0 %v870
    %2437 = vmatpush.msra.mxu0 %v866
    %2438 = vmatpush.msra.mxu0 %v862
    %2439 = vmatpush.msra.mxu0 %v858
    %2440 = vmatpush.msra.mxu0 %v854
    %2441 = vmatpush.msra.mxu0 %v850
    %2442 = vmatpush.msra.mxu0 %v846
    %2443 = vmatpush.msra.mxu0 %v842
    %2444 = vmatpush.msra.mxu0 %v838
    %2445 = vmatpush.msra.mxu0 %v834
    %2446 = vmatpush.msra.mxu0 %v830
    %2447 = vmatpush.msra.mxu0 %v826
    %2448 = vmatpush.msra.mxu0 %v822
    %2449 = vmatmul.f32.gmra.mxu0 %v2137
    %v2450 = vpop.f32.mrf.mxu0
    %v2451 = vadd.f32 %v2431, %v2450
    %2452 = vdwg.mxu0
    %2453 = vmatpush.msra.mxu0 %v946
    %2454 = vmatpush.msra.mxu0 %v942
    %2455 = vmatpush.msra.mxu0 %v938
    %2456 = vmatpush.msra.mxu0 %v934
    %2457 = vmatpush.msra.mxu0 %v930
    %2458 = vmatpush.msra.mxu0 %v926
    %2459 = vmatpush.msra.mxu0 %v922
    %2460 = vmatpush.msra.mxu0 %v918
    %2461 = vmatpush.msra.mxu0 %v914
    %2462 = vmatpush.msra.mxu0 %v910
    %2463 = vmatpush.msra.mxu0 %v906
    %2464 = vmatpush.msra.mxu0 %v902
    %2465 = vmatpush.msra.mxu0 %v898
    %2466 = vmatpush.msra.mxu0 %v894
    %2467 = vmatpush.msra.mxu0 %v890
    %2468 = vmatpush.msra.mxu0 %v886
    %2469 = vmatmul.f32.gmra.mxu0 %v2138
    %v2470 = vpop.f32.mrf.mxu0
    %v2471 = vadd.f32 %v2451, %v2470
    %2472 = vdwg.mxu0
    %2473 = vmatpush.msra.mxu0 %v1010
    %2474 = vmatpush.msra.mxu0 %v1006
    %2475 = vmatpush.msra.mxu0 %v1002
    %2476 = vmatpush.msra.mxu0 %v998
    %2477 = vmatpush.msra.mxu0 %v994
    %2478 = vmatpush.msra.mxu0 %v990
    %2479 = vmatpush.msra.mxu0 %v986
    %2480 = vmatpush.msra.mxu0 %v982
    %2481 = vmatpush.msra.mxu0 %v978
    %2482 = vmatpush.msra.mxu0 %v974
    %2483 = vmatpush.msra.mxu0 %v970
    %2484 = vmatpush.msra.mxu0 %v966
    %2485 = vmatpush.msra.mxu0 %v962
    %2486 = vmatpush.msra.mxu0 %v958
    %2487 = vmatpush.msra.mxu0 %v954
    %2488 = vmatpush.msra.mxu0 %v950
    %2489 = vmatmul.f32.gmra.mxu0 %v2139
    %v2490 = vpop.f32.mrf.mxu0
    %v2491 = vadd.f32 %v2471, %v2490
    %2492 = vdwg.mxu0
    %2493 = vmatpush.msra.mxu0 %v1074
    %2494 = vmatpush.msra.mxu0 %v1070
    %2495 = vmatpush.msra.mxu0 %v1066
    %2496 = vmatpush.msra.mxu0 %v1062
    %2497 = vmatpush.msra.mxu0 %v1058
    %2498 = vmatpush.msra.mxu0 %v1054
    %2499 = vmatpush.msra.mxu0 %v1050
    %2500 = vmatpush.msra.mxu0 %v1046
    %2501 = vmatpush.msra.mxu0 %v1042
    %2502 = vmatpush.msra.mxu0 %v1038
    %2503 = vmatpush.msra.mxu0 %v1034
    %2504 = vmatpush.msra.mxu0 %v1030
    %2505 = vmatpush.msra.mxu0 %v1026
    %2506 = vmatpush.msra.mxu0 %v1022
    %2507 = vmatpush.msra.mxu0 %v1018
    %2508 = vmatpush.msra.mxu0 %v1014
    %2509 = vmatmul.f32.gmra.mxu0 %v2140
    %v2510 = vpop.f32.mrf.mxu0
    %v2511 = vadd.f32 %v2491, %v2510
    %2512 = vdwg.mxu0
    %2513 = vmatpush.msra.mxu0 %v1138
    %2514 = vmatpush.msra.mxu0 %v1134
    %2515 = vmatpush.msra.mxu0 %v1130
    %2516 = vmatpush.msra.mxu0 %v1126
    %2517 = vmatpush.msra.mxu0 %v1122
    %2518 = vmatpush.msra.mxu0 %v1118
    %2519 = vmatpush.msra.mxu0 %v1114
    %2520 = vmatpush.msra.mxu0 %v1110
    %2521 = vmatpush.msra.mxu0 %v1106
    %2522 = vmatpush.msra.mxu0 %v1102
    %2523 = vmatpush.msra.mxu0 %v1098
    %2524 = vmatpush.msra.mxu0 %v1094
    %2525 = vmatpush.msra.mxu0 %v1090
    %2526 = vmatpush.msra.mxu0 %v1086
    %2527 = vmatpush.msra.mxu0 %v1082
    %2528 = vmatpush.msra.mxu0 %v1078
    %2529 = vmatmul.f32.gmra.mxu0 %v2143
    %v2530 = vpop.f32.mrf.mxu0
    %v2531 = vadd.f32 %v2511, %v2530
    %2532 = vdwg.mxu0
    %2533 = vmatpush.msra.mxu0 %v1202
    %2534 = vmatpush.msra.mxu0 %v1198
    %2535 = vmatpush.msra.mxu0 %v1194
    %2536 = vmatpush.msra.mxu0 %v1190
    %2537 = vmatpush.msra.mxu0 %v1186
    %2538 = vmatpush.msra.mxu0 %v1182
    %2539 = vmatpush.msra.mxu0 %v1178
    %2540 = vmatpush.msra.mxu0 %v1174
    %2541 = vmatpush.msra.mxu0 %v1170
    %2542 = vmatpush.msra.mxu0 %v1166
    %2543 = vmatpush.msra.mxu0 %v1162
    %2544 = vmatpush.msra.mxu0 %v1158
    %2545 = vmatpush.msra.mxu0 %v1154
    %2546 = vmatpush.msra.mxu0 %v1150
    %2547 = vmatpush.msra.mxu0 %v1146
    %2548 = vmatpush.msra.mxu0 %v1142
    %2549 = vmatmul.f32.gmra.mxu0 %v2144
    %v2550 = vpop.f32.mrf.mxu0
    %v2551 = vadd.f32 %v2531, %v2550
    %2552 = vdwg.mxu0
    %2553 = vmatpush.msra.mxu0 %v1266
    %2554 = vmatpush.msra.mxu0 %v1262
    %2555 = vmatpush.msra.mxu0 %v1258
    %2556 = vmatpush.msra.mxu0 %v1254
    %2557 = vmatpush.msra.mxu0 %v1250
    %2558 = vmatpush.msra.mxu0 %v1246
    %2559 = vmatpush.msra.mxu0 %v1242
    %2560 = vmatpush.msra.mxu0 %v1238
    %2561 = vmatpush.msra.mxu0 %v1234
    %2562 = vmatpush.msra.mxu0 %v1230
    %2563 = vmatpush.msra.mxu0 %v1226
    %2564 = vmatpush.msra.mxu0 %v1222
    %2565 = vmatpush.msra.mxu0 %v1218
    %2566 = vmatpush.msra.mxu0 %v1214
    %2567 = vmatpush.msra.mxu0 %v1210
    %2568 = vmatpush.msra.mxu0 %v1206
    %2569 = vmatmul.f32.gmra.mxu0 %v2145
    %v2570 = vpop.f32.mrf.mxu0
    %v2571 = vadd.f32 %v2551, %v2570
    %2572 = vdwg.mxu0
    %2573 = vmatpush.msra.mxu0 %v1330
    %2574 = vmatpush.msra.mxu0 %v1326
    %2575 = vmatpush.msra.mxu0 %v1322
    %2576 = vmatpush.msra.mxu0 %v1318
    %2577 = vmatpush.msra.mxu0 %v1314
    %2578 = vmatpush.msra.mxu0 %v1310
    %2579 = vmatpush.msra.mxu0 %v1306
    %2580 = vmatpush.msra.mxu0 %v1302
    %2581 = vmatpush.msra.mxu0 %v1298
    %2582 = vmatpush.msra.mxu0 %v1294
    %2583 = vmatpush.msra.mxu0 %v1290
    %2584 = vmatpush.msra.mxu0 %v1286
    %2585 = vmatpush.msra.mxu0 %v1282
    %2586 = vmatpush.msra.mxu0 %v1278
    %2587 = vmatpush.msra.mxu0 %v1274
    %2588 = vmatpush.msra.mxu0 %v1270
    %2589 = vmatmul.f32.gmra.mxu0 %v2146
    %v2590 = vpop.f32.mrf.mxu0
    %v2591 = vadd.f32 %v2571, %v2590
    %2592 = vdwg.mxu0
    %2593 = vmatpush.msra.mxu0 %v1394
    %2594 = vmatpush.msra.mxu0 %v1390
    %2595 = vmatpush.msra.mxu0 %v1386
    %2596 = vmatpush.msra.mxu0 %v1382
    %2597 = vmatpush.msra.mxu0 %v1378
    %2598 = vmatpush.msra.mxu0 %v1374
    %2599 = vmatpush.msra.mxu0 %v1370
    %2600 = vmatpush.msra.mxu0 %v1366
    %2601 = vmatpush.msra.mxu0 %v1362
    %2602 = vmatpush.msra.mxu0 %v1358
    %2603 = vmatpush.msra.mxu0 %v1354
    %2604 = vmatpush.msra.mxu0 %v1350
    %2605 = vmatpush.msra.mxu0 %v1346
    %2606 = vmatpush.msra.mxu0 %v1342
    %2607 = vmatpush.msra.mxu0 %v1338
    %2608 = vmatpush.msra.mxu0 %v1334
    %2609 = vmatmul.f32.gmra.mxu0 %v2147
    %v2610 = vpop.f32.mrf.mxu0
    %v2611 = vadd.f32 %v2591, %v2610
    %2612 = vdwg.mxu0
    %2613 = vmatpush.msra.mxu0 %v1458
    %2614 = vmatpush.msra.mxu0 %v1454
    %2615 = vmatpush.msra.mxu0 %v1450
    %2616 = vmatpush.msra.mxu0 %v1446
    %2617 = vmatpush.msra.mxu0 %v1442
    %2618 = vmatpush.msra.mxu0 %v1438
    %2619 = vmatpush.msra.mxu0 %v1434
    %2620 = vmatpush.msra.mxu0 %v1430
    %2621 = vmatpush.msra.mxu0 %v1426
    %2622 = vmatpush.msra.mxu0 %v1422
    %2623 = vmatpush.msra.mxu0 %v1418
    %2624 = vmatpush.msra.mxu0 %v1414
    %2625 = vmatpush.msra.mxu0 %v1410
    %2626 = vmatpush.msra.mxu0 %v1406
    %2627 = vmatpush.msra.mxu0 %v1402
    %2628 = vmatpush.msra.mxu0 %v1398
    %2629 = vmatmul.f32.gmra.mxu0 %v2148
    %v2630 = vpop.f32.mrf.mxu0
    %v2631 = vadd.f32 %v2611, %v2630
    %2632 = vdwg.mxu0
    %2633 = vmatpush.msra.mxu0 %v1522
    %2634 = vmatpush.msra.mxu0 %v1518
    %2635 = vmatpush.msra.mxu0 %v1514
    %2636 = vmatpush.msra.mxu0 %v1510
    %2637 = vmatpush.msra.mxu0 %v1506
    %2638 = vmatpush.msra.mxu0 %v1502
    %2639 = vmatpush.msra.mxu0 %v1498
    %2640 = vmatpush.msra.mxu0 %v1494
    %2641 = vmatpush.msra.mxu0 %v1490
    %2642 = vmatpush.msra.mxu0 %v1486
    %2643 = vmatpush.msra.mxu0 %v1482
    %2644 = vmatpush.msra.mxu0 %v1478
    %2645 = vmatpush.msra.mxu0 %v1474
    %2646 = vmatpush.msra.mxu0 %v1470
    %2647 = vmatpush.msra.mxu0 %v1466
    %2648 = vmatpush.msra.mxu0 %v1462
    %2649 = vmatmul.f32.gmra.mxu0 %v2149
    %v2650 = vpop.f32.mrf.mxu0
    %v2651 = vadd.f32 %v2631, %v2650
    %2652 = vdwg.mxu0
    %2653 = vmatpush.msra.mxu0 %v1586
    %2654 = vmatpush.msra.mxu0 %v1582
    %2655 = vmatpush.msra.mxu0 %v1578
    %2656 = vmatpush.msra.mxu0 %v1574
    %2657 = vmatpush.msra.mxu0 %v1570
    %2658 = vmatpush.msra.mxu0 %v1566
    %2659 = vmatpush.msra.mxu0 %v1562
    %2660 = vmatpush.msra.mxu0 %v1558
    %2661 = vmatpush.msra.mxu0 %v1554
    %2662 = vmatpush.msra.mxu0 %v1550
    %2663 = vmatpush.msra.mxu0 %v1546
    %2664 = vmatpush.msra.mxu0 %v1542
    %2665 = vmatpush.msra.mxu0 %v1538
    %2666 = vmatpush.msra.mxu0 %v1534
    %2667 = vmatpush.msra.mxu0 %v1530
    %2668 = vmatpush.msra.mxu0 %v1526
    %2669 = vmatmul.f32.gmra.mxu0 %v2150
    %v2670 = vpop.f32.mrf.mxu0
    %v2671 = vadd.f32 %v2651, %v2670
    %2672 = vdwg.mxu0
    %2673 = vmatpush.msra.mxu0 %v1650
    %2674 = vmatpush.msra.mxu0 %v1646
    %2675 = vmatpush.msra.mxu0 %v1642
    %2676 = vmatpush.msra.mxu0 %v1638
    %2677 = vmatpush.msra.mxu0 %v1634
    %2678 = vmatpush.msra.mxu0 %v1630
    %2679 = vmatpush.msra.mxu0 %v1626
    %2680 = vmatpush.msra.mxu0 %v1622
    %2681 = vmatpush.msra.mxu0 %v1618
    %2682 = vmatpush.msra.mxu0 %v1614
    %2683 = vmatpush.msra.mxu0 %v1610
    %2684 = vmatpush.msra.mxu0 %v1606
    %2685 = vmatpush.msra.mxu0 %v1602
    %2686 = vmatpush.msra.mxu0 %v1598
    %2687 = vmatpush.msra.mxu0 %v1594
    %2688 = vmatpush.msra.mxu0 %v1590
    %2689 = vmatmul.f32.gmra.mxu0 %v2153
    %v2690 = vpop.f32.mrf.mxu0
    %v2691 = vadd.f32 %v2671, %v2690
    %2692 = vdwg.mxu0
    %2693 = vmatpush.msra.mxu0 %v1714
    %2694 = vmatpush.msra.mxu0 %v1710
    %2695 = vmatpush.msra.mxu0 %v1706
    %2696 = vmatpush.msra.mxu0 %v1702
    %2697 = vmatpush.msra.mxu0 %v1698
    %2698 = vmatpush.msra.mxu0 %v1694
    %2699 = vmatpush.msra.mxu0 %v1690
    %2700 = vmatpush.msra.mxu0 %v1686
    %2701 = vmatpush.msra.mxu0 %v1682
    %2702 = vmatpush.msra.mxu0 %v1678
    %2703 = vmatpush.msra.mxu0 %v1674
    %2704 = vmatpush.msra.mxu0 %v1670
    %2705 = vmatpush.msra.mxu0 %v1666
    %2706 = vmatpush.msra.mxu0 %v1662
    %2707 = vmatpush.msra.mxu0 %v1658
    %2708 = vmatpush.msra.mxu0 %v1654
    %2709 = vmatmul.f32.gmra.mxu0 %v2154
    %v2710 = vpop.f32.mrf.mxu0
    %v2711 = vadd.f32 %v2691, %v2710
    %2712 = vdwg.mxu0
    %2713 = vmatpush.msra.mxu0 %v1778
    %2714 = vmatpush.msra.mxu0 %v1774
    %2715 = vmatpush.msra.mxu0 %v1770
    %2716 = vmatpush.msra.mxu0 %v1766
    %2717 = vmatpush.msra.mxu0 %v1762
    %2718 = vmatpush.msra.mxu0 %v1758
    %2719 = vmatpush.msra.mxu0 %v1754
    %2720 = vmatpush.msra.mxu0 %v1750
    %2721 = vmatpush.msra.mxu0 %v1746
    %2722 = vmatpush.msra.mxu0 %v1742
    %2723 = vmatpush.msra.mxu0 %v1738
    %2724 = vmatpush.msra.mxu0 %v1734
    %2725 = vmatpush.msra.mxu0 %v1730
    %2726 = vmatpush.msra.mxu0 %v1726
    %2727 = vmatpush.msra.mxu0 %v1722
    %2728 = vmatpush.msra.mxu0 %v1718
    %2729 = vmatmul.f32.gmra.mxu0 %v2155
    %v2730 = vpop.f32.mrf.mxu0
    %v2731 = vadd.f32 %v2711, %v2730
    %2732 = vdwg.mxu0
    %2733 = vmatpush.msra.mxu0 %v1842
    %2734 = vmatpush.msra.mxu0 %v1838
    %2735 = vmatpush.msra.mxu0 %v1834
    %2736 = vmatpush.msra.mxu0 %v1830
    %2737 = vmatpush.msra.mxu0 %v1826
    %2738 = vmatpush.msra.mxu0 %v1822
    %2739 = vmatpush.msra.mxu0 %v1818
    %2740 = vmatpush.msra.mxu0 %v1814
    %2741 = vmatpush.msra.mxu0 %v1810
    %2742 = vmatpush.msra.mxu0 %v1806
    %2743 = vmatpush.msra.mxu0 %v1802
    %2744 = vmatpush.msra.mxu0 %v1798
    %2745 = vmatpush.msra.mxu0 %v1794
    %2746 = vmatpush.msra.mxu0 %v1790
    %2747 = vmatpush.msra.mxu0 %v1786
    %2748 = vmatpush.msra.mxu0 %v1782
    %2749 = vmatmul.f32.gmra.mxu0 %v2156
    %v2750 = vpop.f32.mrf.mxu0
    %v2751 = vadd.f32 %v2731, %v2750
    %2752 = vdwg.mxu0
    %2753 = vmatpush.msra.mxu0 %v1906
    %2754 = vmatpush.msra.mxu0 %v1902
    %2755 = vmatpush.msra.mxu0 %v1898
    %2756 = vmatpush.msra.mxu0 %v1894
    %2757 = vmatpush.msra.mxu0 %v1890
    %2758 = vmatpush.msra.mxu0 %v1886
    %2759 = vmatpush.msra.mxu0 %v1882
    %2760 = vmatpush.msra.mxu0 %v1878
    %2761 = vmatpush.msra.mxu0 %v1874
    %2762 = vmatpush.msra.mxu0 %v1870
    %2763 = vmatpush.msra.mxu0 %v1866
    %2764 = vmatpush.msra.mxu0 %v1862
    %2765 = vmatpush.msra.mxu0 %v1858
    %2766 = vmatpush.msra.mxu0 %v1854
    %2767 = vmatpush.msra.mxu0 %v1850
    %2768 = vmatpush.msra.mxu0 %v1846
    %2769 = vmatmul.f32.gmra.mxu0 %v2157
    %v2770 = vpop.f32.mrf.mxu0
    %v2771 = vadd.f32 %v2751, %v2770
    %2772 = vdwg.mxu0
    %2773 = vmatpush.msra.mxu0 %v1970
    %2774 = vmatpush.msra.mxu0 %v1966
    %2775 = vmatpush.msra.mxu0 %v1962
    %2776 = vmatpush.msra.mxu0 %v1958
    %2777 = vmatpush.msra.mxu0 %v1954
    %2778 = vmatpush.msra.mxu0 %v1950
    %2779 = vmatpush.msra.mxu0 %v1946
    %2780 = vmatpush.msra.mxu0 %v1942
    %2781 = vmatpush.msra.mxu0 %v1938
    %2782 = vmatpush.msra.mxu0 %v1934
    %2783 = vmatpush.msra.mxu0 %v1930
    %2784 = vmatpush.msra.mxu0 %v1926
    %2785 = vmatpush.msra.mxu0 %v1922
    %2786 = vmatpush.msra.mxu0 %v1918
    %2787 = vmatpush.msra.mxu0 %v1914
    %2788 = vmatpush.msra.mxu0 %v1910
    %2789 = vmatmul.f32.gmra.mxu0 %v2158
    %v2790 = vpop.f32.mrf.mxu0
    %v2791 = vadd.f32 %v2771, %v2790
    %2792 = vdwg.mxu0
    %2793 = vmatpush.msra.mxu0 %v2034
    %2794 = vmatpush.msra.mxu0 %v2030
    %2795 = vmatpush.msra.mxu0 %v2026
    %2796 = vmatpush.msra.mxu0 %v2022
    %2797 = vmatpush.msra.mxu0 %v2018
    %2798 = vmatpush.msra.mxu0 %v2014
    %2799 = vmatpush.msra.mxu0 %v2010
    %2800 = vmatpush.msra.mxu0 %v2006
    %2801 = vmatpush.msra.mxu0 %v2002
    %2802 = vmatpush.msra.mxu0 %v1998
    %2803 = vmatpush.msra.mxu0 %v1994
    %2804 = vmatpush.msra.mxu0 %v1990
    %2805 = vmatpush.msra.mxu0 %v1986
    %2806 = vmatpush.msra.mxu0 %v1982
    %2807 = vmatpush.msra.mxu0 %v1978
    %2808 = vmatpush.msra.mxu0 %v1974
    %2809 = vmatmul.f32.gmra.mxu0 %v2159
    %v2810 = vpop.f32.mrf.mxu0
    %v2811 = vadd.f32 %v2791, %v2810
    %2812 = vdwg.mxu0
    %2813 = vmatpush.msra.mxu0 %v2098
    %2814 = vmatpush.msra.mxu0 %v2094
    %2815 = vmatpush.msra.mxu0 %v2090
    %2816 = vmatpush.msra.mxu0 %v2086
    %2817 = vmatpush.msra.mxu0 %v2082
    %2818 = vmatpush.msra.mxu0 %v2078
    %2819 = vmatpush.msra.mxu0 %v2074
    %2820 = vmatpush.msra.mxu0 %v2070
    %2821 = vmatpush.msra.mxu0 %v2066
    %2822 = vmatpush.msra.mxu0 %v2062
    %2823 = vmatpush.msra.mxu0 %v2058
    %2824 = vmatpush.msra.mxu0 %v2054
    %2825 = vmatpush.msra.mxu0 %v2050
    %2826 = vmatpush.msra.mxu0 %v2046
    %2827 = vmatpush.msra.mxu0 %v2042
    %2828 = vmatpush.msra.mxu0 %v2038
    %2829 = vmatmul.f32.gmra.mxu0 %v2160
    %v2830 = vpop.f32.mrf.mxu0
    %v2831 = vadd.f32 %v2811, %v2830
    %2832 = vdwg.mxu0
    %2833 = vmatpush.msra.mxu0 %v115
    %2834 = vmatpush.msra.mxu0 %v111
    %2835 = vmatpush.msra.mxu0 %v107
    %2836 = vmatpush.msra.mxu0 %v103
    %2837 = vmatpush.msra.mxu0 %v99
    %2838 = vmatpush.msra.mxu0 %v95
    %2839 = vmatpush.msra.mxu0 %v91
    %2840 = vmatpush.msra.mxu0 %v87
    %2841 = vmatpush.msra.mxu0 %v83
    %2842 = vmatpush.msra.mxu0 %v79
    %2843 = vmatpush.msra.mxu0 %v75
    %2844 = vmatpush.msra.mxu0 %v71
    %2845 = vmatpush.msra.mxu0 %v67
    %2846 = vmatpush.msra.mxu0 %v63
    %2847 = vmatpush.msra.mxu0 %v59
    %2848 = vmatpush.msra.mxu0 %v55
    %2849 = vmatmul.f32.gmra.mxu0 %v2123
    %v2850 = vpop.f32.mrf.mxu0
    %v2851 = vadd.f32 %v2105, %v2850
    %2852 = vdwg.mxu0
    %2853 = vmatpush.msra.mxu0 %v179
    %2854 = vmatpush.msra.mxu0 %v175
    %2855 = vmatpush.msra.mxu0 %v171
    %2856 = vmatpush.msra.mxu0 %v167
    %2857 = vmatpush.msra.mxu0 %v163
    %2858 = vmatpush.msra.mxu0 %v159
    %2859 = vmatpush.msra.mxu0 %v155
    %2860 = vmatpush.msra.mxu0 %v151
    %2861 = vmatpush.msra.mxu0 %v147
    %2862 = vmatpush.msra.mxu0 %v143
    %2863 = vmatpush.msra.mxu0 %v139
    %2864 = vmatpush.msra.mxu0 %v135
    %2865 = vmatpush.msra.mxu0 %v131
    %2866 = vmatpush.msra.mxu0 %v127
    %2867 = vmatpush.msra.mxu0 %v123
    %2868 = vmatpush.msra.mxu0 %v119
    %2869 = vmatmul.f32.gmra.mxu0 %v2124
    %v2870 = vpop.f32.mrf.mxu0
    %v2871 = vadd.f32 %v2851, %v2870
    %2872 = vdwg.mxu0
    %2873 = vmatpush.msra.mxu0 %v243
    %2874 = vmatpush.msra.mxu0 %v239
    %2875 = vmatpush.msra.mxu0 %v235
    %2876 = vmatpush.msra.mxu0 %v231
    %2877 = vmatpush.msra.mxu0 %v227
    %2878 = vmatpush.msra.mxu0 %v223
    %2879 = vmatpush.msra.mxu0 %v219
    %2880 = vmatpush.msra.mxu0 %v215
    %2881 = vmatpush.msra.mxu0 %v211
    %2882 = vmatpush.msra.mxu0 %v207
    %2883 = vmatpush.msra.mxu0 %v203
    %2884 = vmatpush.msra.mxu0 %v199
    %2885 = vmatpush.msra.mxu0 %v195
    %2886 = vmatpush.msra.mxu0 %v191
    %2887 = vmatpush.msra.mxu0 %v187
    %2888 = vmatpush.msra.mxu0 %v183
    %2889 = vmatmul.f32.gmra.mxu0 %v2125
    %v2890 = vpop.f32.mrf.mxu0
    %v2891 = vadd.f32 %v2871, %v2890
    %2892 = vdwg.mxu0
    %2893 = vmatpush.msra.mxu0 %v307
    %2894 = vmatpush.msra.mxu0 %v303
    %2895 = vmatpush.msra.mxu0 %v299
    %2896 = vmatpush.msra.mxu0 %v295
    %2897 = vmatpush.msra.mxu0 %v291
    %2898 = vmatpush.msra.mxu0 %v287
    %2899 = vmatpush.msra.mxu0 %v283
    %2900 = vmatpush.msra.mxu0 %v279
    %2901 = vmatpush.msra.mxu0 %v275
    %2902 = vmatpush.msra.mxu0 %v271
    %2903 = vmatpush.msra.mxu0 %v267
    %2904 = vmatpush.msra.mxu0 %v263
    %2905 = vmatpush.msra.mxu0 %v259
    %2906 = vmatpush.msra.mxu0 %v255
    %2907 = vmatpush.msra.mxu0 %v251
    %2908 = vmatpush.msra.mxu0 %v247
    %2909 = vmatmul.f32.gmra.mxu0 %v2126
    %v2910 = vpop.f32.mrf.mxu0
    %v2911 = vadd.f32 %v2891, %v2910
    %2912 = vdwg.mxu0
    %2913 = vmatpush.msra.mxu0 %v371
    %2914 = vmatpush.msra.mxu0 %v367
    %2915 = vmatpush.msra.mxu0 %v363
    %2916 = vmatpush.msra.mxu0 %v359
    %2917 = vmatpush.msra.mxu0 %v355
    %2918 = vmatpush.msra.mxu0 %v351
    %2919 = vmatpush.msra.mxu0 %v347
    %2920 = vmatpush.msra.mxu0 %v343
    %2921 = vmatpush.msra.mxu0 %v339
    %2922 = vmatpush.msra.mxu0 %v335
    %2923 = vmatpush.msra.mxu0 %v331
    %2924 = vmatpush.msra.mxu0 %v327
    %2925 = vmatpush.msra.mxu0 %v323
    %2926 = vmatpush.msra.mxu0 %v319
    %2927 = vmatpush.msra.mxu0 %v315
    %2928 = vmatpush.msra.mxu0 %v311
    %2929 = vmatmul.f32.gmra.mxu0 %v2127
    %v2930 = vpop.f32.mrf.mxu0
    %v2931 = vadd.f32 %v2911, %v2930
    %2932 = vdwg.mxu0
    %2933 = vmatpush.msra.mxu0 %v435
    %2934 = vmatpush.msra.mxu0 %v431
    %2935 = vmatpush.msra.mxu0 %v427
    %2936 = vmatpush.msra.mxu0 %v423
    %2937 = vmatpush.msra.mxu0 %v419
    %2938 = vmatpush.msra.mxu0 %v415
    %2939 = vmatpush.msra.mxu0 %v411
    %2940 = vmatpush.msra.mxu0 %v407
    %2941 = vmatpush.msra.mxu0 %v403
    %2942 = vmatpush.msra.mxu0 %v399
    %2943 = vmatpush.msra.mxu0 %v395
    %2944 = vmatpush.msra.mxu0 %v391
    %2945 = vmatpush.msra.mxu0 %v387
    %2946 = vmatpush.msra.mxu0 %v383
    %2947 = vmatpush.msra.mxu0 %v379
    %2948 = vmatpush.msra.mxu0 %v375
    %2949 = vmatmul.f32.gmra.mxu0 %v2128
    %v2950 = vpop.f32.mrf.mxu0
    %v2951 = vadd.f32 %v2931, %v2950
    %2952 = vdwg.mxu0
    %2953 = vmatpush.msra.mxu0 %v499
    %2954 = vmatpush.msra.mxu0 %v495
    %2955 = vmatpush.msra.mxu0 %v491
    %2956 = vmatpush.msra.mxu0 %v487
    %2957 = vmatpush.msra.mxu0 %v483
    %2958 = vmatpush.msra.mxu0 %v479
    %2959 = vmatpush.msra.mxu0 %v475
    %2960 = vmatpush.msra.mxu0 %v471
    %2961 = vmatpush.msra.mxu0 %v467
    %2962 = vmatpush.msra.mxu0 %v463
    %2963 = vmatpush.msra.mxu0 %v459
    %2964 = vmatpush.msra.mxu0 %v455
    %2965 = vmatpush.msra.mxu0 %v451
    %2966 = vmatpush.msra.mxu0 %v447
    %2967 = vmatpush.msra.mxu0 %v443
    %2968 = vmatpush.msra.mxu0 %v439
    %2969 = vmatmul.f32.gmra.mxu0 %v2129
    %v2970 = vpop.f32.mrf.mxu0
    %v2971 = vadd.f32 %v2951, %v2970
    %2972 = vdwg.mxu0
    %2973 = vmatpush.msra.mxu0 %v563
    %2974 = vmatpush.msra.mxu0 %v559
    %2975 = vmatpush.msra.mxu0 %v555
    %2976 = vmatpush.msra.mxu0 %v551
    %2977 = vmatpush.msra.mxu0 %v547
    %2978 = vmatpush.msra.mxu0 %v543
    %2979 = vmatpush.msra.mxu0 %v539
    %2980 = vmatpush.msra.mxu0 %v535
    %2981 = vmatpush.msra.mxu0 %v531
    %2982 = vmatpush.msra.mxu0 %v527
    %2983 = vmatpush.msra.mxu0 %v523
    %2984 = vmatpush.msra.mxu0 %v519
    %2985 = vmatpush.msra.mxu0 %v515
    %2986 = vmatpush.msra.mxu0 %v511
    %2987 = vmatpush.msra.mxu0 %v507
    %2988 = vmatpush.msra.mxu0 %v503
    %2989 = vmatmul.f32.gmra.mxu0 %v2130
    %v2990 = vpop.f32.mrf.mxu0
    %v2991 = vadd.f32 %v2971, %v2990
    %2992 = vdwg.mxu0
    %2993 = vmatpush.msra.mxu0 %v627
    %2994 = vmatpush.msra.mxu0 %v623
    %2995 = vmatpush.msra.mxu0 %v619
    %2996 = vmatpush.msra.mxu0 %v615
    %2997 = vmatpush.msra.mxu0 %v611
    %2998 = vmatpush.msra.mxu0 %v607
    %2999 = vmatpush.msra.mxu0 %v603
    %3000 = vmatpush.msra.mxu0 %v599
    %3001 = vmatpush.msra.mxu0 %v595
    %3002 = vmatpush.msra.mxu0 %v591
    %3003 = vmatpush.msra.mxu0 %v587
    %3004 = vmatpush.msra.mxu0 %v583
    %3005 = vmatpush.msra.mxu0 %v579
    %3006 = vmatpush.msra.mxu0 %v575
    %3007 = vmatpush.msra.mxu0 %v571
    %3008 = vmatpush.msra.mxu0 %v567
    %3009 = vmatmul.f32.gmra.mxu0 %v2133
    %v3010 = vpop.f32.mrf.mxu0
    %v3011 = vadd.f32 %v2991, %v3010
    %3012 = vdwg.mxu0
    %3013 = vmatpush.msra.mxu0 %v691
    %3014 = vmatpush.msra.mxu0 %v687
    %3015 = vmatpush.msra.mxu0 %v683
    %3016 = vmatpush.msra.mxu0 %v679
    %3017 = vmatpush.msra.mxu0 %v675
    %3018 = vmatpush.msra.mxu0 %v671
    %3019 = vmatpush.msra.mxu0 %v667
    %3020 = vmatpush.msra.mxu0 %v663
    %3021 = vmatpush.msra.mxu0 %v659
    %3022 = vmatpush.msra.mxu0 %v655
    %3023 = vmatpush.msra.mxu0 %v651
    %3024 = vmatpush.msra.mxu0 %v647
    %3025 = vmatpush.msra.mxu0 %v643
    %3026 = vmatpush.msra.mxu0 %v639
    %3027 = vmatpush.msra.mxu0 %v635
    %3028 = vmatpush.msra.mxu0 %v631
    %3029 = vmatmul.f32.gmra.mxu0 %v2134
    %v3030 = vpop.f32.mrf.mxu0
    %v3031 = vadd.f32 %v3011, %v3030
    %3032 = vdwg.mxu0
    %3033 = vmatpush.msra.mxu0 %v755
    %3034 = vmatpush.msra.mxu0 %v751
    %3035 = vmatpush.msra.mxu0 %v747
    %3036 = vmatpush.msra.mxu0 %v743
    %3037 = vmatpush.msra.mxu0 %v739
    %3038 = vmatpush.msra.mxu0 %v735
    %3039 = vmatpush.msra.mxu0 %v731
    %3040 = vmatpush.msra.mxu0 %v727
    %3041 = vmatpush.msra.mxu0 %v723
    %3042 = vmatpush.msra.mxu0 %v719
    %3043 = vmatpush.msra.mxu0 %v715
    %3044 = vmatpush.msra.mxu0 %v711
    %3045 = vmatpush.msra.mxu0 %v707
    %3046 = vmatpush.msra.mxu0 %v703
    %3047 = vmatpush.msra.mxu0 %v699
    %3048 = vmatpush.msra.mxu0 %v695
    %3049 = vmatmul.f32.gmra.mxu0 %v2135
    %v3050 = vpop.f32.mrf.mxu0
    %v3051 = vadd.f32 %v3031, %v3050
    %3052 = vdwg.mxu0
    %3053 = vmatpush.msra.mxu0 %v819
    %3054 = vmatpush.msra.mxu0 %v815
    %3055 = vmatpush.msra.mxu0 %v811
    %3056 = vmatpush.msra.mxu0 %v807
    %3057 = vmatpush.msra.mxu0 %v803
    %3058 = vmatpush.msra.mxu0 %v799
    %3059 = vmatpush.msra.mxu0 %v795
    %3060 = vmatpush.msra.mxu0 %v791
    %3061 = vmatpush.msra.mxu0 %v787
    %3062 = vmatpush.msra.mxu0 %v783
    %3063 = vmatpush.msra.mxu0 %v779
    %3064 = vmatpush.msra.mxu0 %v775
    %3065 = vmatpush.msra.mxu0 %v771
    %3066 = vmatpush.msra.mxu0 %v767
    %3067 = vmatpush.msra.mxu0 %v763
    %3068 = vmatpush.msra.mxu0 %v759
    %3069 = vmatmul.f32.gmra.mxu0 %v2136
    %v3070 = vpop.f32.mrf.mxu0
    %v3071 = vadd.f32 %v3051, %v3070
    %3072 = vdwg.mxu0
    %3073 = vmatpush.msra.mxu0 %v883
    %3074 = vmatpush.msra.mxu0 %v879
    %3075 = vmatpush.msra.mxu0 %v875
    %3076 = vmatpush.msra.mxu0 %v871
    %3077 = vmatpush.msra.mxu0 %v867
    %3078 = vmatpush.msra.mxu0 %v863
    %3079 = vmatpush.msra.mxu0 %v859
    %3080 = vmatpush.msra.mxu0 %v855
    %3081 = vmatpush.msra.mxu0 %v851
    %3082 = vmatpush.msra.mxu0 %v847
    %3083 = vmatpush.msra.mxu0 %v843
    %3084 = vmatpush.msra.mxu0 %v839
    %3085 = vmatpush.msra.mxu0 %v835
    %3086 = vmatpush.msra.mxu0 %v831
    %3087 = vmatpush.msra.mxu0 %v827
    %3088 = vmatpush.msra.mxu0 %v823
    %3089 = vmatmul.f32.gmra.mxu0 %v2137
    %v3090 = vpop.f32.mrf.mxu0
    %v3091 = vadd.f32 %v3071, %v3090
    %3092 = vdwg.mxu0
    %3093 = vmatpush.msra.mxu0 %v947
    %3094 = vmatpush.msra.mxu0 %v943
    %3095 = vmatpush.msra.mxu0 %v939
    %3096 = vmatpush.msra.mxu0 %v935
    %3097 = vmatpush.msra.mxu0 %v931
    %3098 = vmatpush.msra.mxu0 %v927
    %3099 = vmatpush.msra.mxu0 %v923
    %3100 = vmatpush.msra.mxu0 %v919
    %3101 = vmatpush.msra.mxu0 %v915
    %3102 = vmatpush.msra.mxu0 %v911
    %3103 = vmatpush.msra.mxu0 %v907
    %3104 = vmatpush.msra.mxu0 %v903
    %3105 = vmatpush.msra.mxu0 %v899
    %3106 = vmatpush.msra.mxu0 %v895
    %3107 = vmatpush.msra.mxu0 %v891
    %3108 = vmatpush.msra.mxu0 %v887
    %3109 = vmatmul.f32.gmra.mxu0 %v2138
    %v3110 = vpop.f32.mrf.mxu0
    %v3111 = vadd.f32 %v3091, %v3110
    %3112 = vdwg.mxu0
    %3113 = vmatpush.msra.mxu0 %v1011
    %3114 = vmatpush.msra.mxu0 %v1007
    %3115 = vmatpush.msra.mxu0 %v1003
    %3116 = vmatpush.msra.mxu0 %v999
    %3117 = vmatpush.msra.mxu0 %v995
    %3118 = vmatpush.msra.mxu0 %v991
    %3119 = vmatpush.msra.mxu0 %v987
    %3120 = vmatpush.msra.mxu0 %v983
    %3121 = vmatpush.msra.mxu0 %v979
    %3122 = vmatpush.msra.mxu0 %v975
    %3123 = vmatpush.msra.mxu0 %v971
    %3124 = vmatpush.msra.mxu0 %v967
    %3125 = vmatpush.msra.mxu0 %v963
    %3126 = vmatpush.msra.mxu0 %v959
    %3127 = vmatpush.msra.mxu0 %v955
    %3128 = vmatpush.msra.mxu0 %v951
    %3129 = vmatmul.f32.gmra.mxu0 %v2139
    %v3130 = vpop.f32.mrf.mxu0
    %v3131 = vadd.f32 %v3111, %v3130
    %3132 = vdwg.mxu0
    %3133 = vmatpush.msra.mxu0 %v1075
    %3134 = vmatpush.msra.mxu0 %v1071
    %3135 = vmatpush.msra.mxu0 %v1067
    %3136 = vmatpush.msra.mxu0 %v1063
    %3137 = vmatpush.msra.mxu0 %v1059
    %3138 = vmatpush.msra.mxu0 %v1055
    %3139 = vmatpush.msra.mxu0 %v1051
    %3140 = vmatpush.msra.mxu0 %v1047
    %3141 = vmatpush.msra.mxu0 %v1043
    %3142 = vmatpush.msra.mxu0 %v1039
    %3143 = vmatpush.msra.mxu0 %v1035
    %3144 = vmatpush.msra.mxu0 %v1031
    %3145 = vmatpush.msra.mxu0 %v1027
    %3146 = vmatpush.msra.mxu0 %v1023
    %3147 = vmatpush.msra.mxu0 %v1019
    %3148 = vmatpush.msra.mxu0 %v1015
    %3149 = vmatmul.f32.gmra.mxu0 %v2140
    %v3150 = vpop.f32.mrf.mxu0
    %v3151 = vadd.f32 %v3131, %v3150
    %3152 = vdwg.mxu0
    %3153 = vmatpush.msra.mxu0 %v1139
    %3154 = vmatpush.msra.mxu0 %v1135
    %3155 = vmatpush.msra.mxu0 %v1131
    %3156 = vmatpush.msra.mxu0 %v1127
    %3157 = vmatpush.msra.mxu0 %v1123
    %3158 = vmatpush.msra.mxu0 %v1119
    %3159 = vmatpush.msra.mxu0 %v1115
    %3160 = vmatpush.msra.mxu0 %v1111
    %3161 = vmatpush.msra.mxu0 %v1107
    %3162 = vmatpush.msra.mxu0 %v1103
    %3163 = vmatpush.msra.mxu0 %v1099
    %3164 = vmatpush.msra.mxu0 %v1095
    %3165 = vmatpush.msra.mxu0 %v1091
    %3166 = vmatpush.msra.mxu0 %v1087
    %3167 = vmatpush.msra.mxu0 %v1083
    %3168 = vmatpush.msra.mxu0 %v1079
    %3169 = vmatmul.f32.gmra.mxu0 %v2143
    %v3170 = vpop.f32.mrf.mxu0
    %v3171 = vadd.f32 %v3151, %v3170
    %3172 = vdwg.mxu0
    %3173 = vmatpush.msra.mxu0 %v1203
    %3174 = vmatpush.msra.mxu0 %v1199
    %3175 = vmatpush.msra.mxu0 %v1195
    %3176 = vmatpush.msra.mxu0 %v1191
    %3177 = vmatpush.msra.mxu0 %v1187
    %3178 = vmatpush.msra.mxu0 %v1183
    %3179 = vmatpush.msra.mxu0 %v1179
    %3180 = vmatpush.msra.mxu0 %v1175
    %3181 = vmatpush.msra.mxu0 %v1171
    %3182 = vmatpush.msra.mxu0 %v1167
    %3183 = vmatpush.msra.mxu0 %v1163
    %3184 = vmatpush.msra.mxu0 %v1159
    %3185 = vmatpush.msra.mxu0 %v1155
    %3186 = vmatpush.msra.mxu0 %v1151
    %3187 = vmatpush.msra.mxu0 %v1147
    %3188 = vmatpush.msra.mxu0 %v1143
    %3189 = vmatmul.f32.gmra.mxu0 %v2144
    %v3190 = vpop.f32.mrf.mxu0
    %v3191 = vadd.f32 %v3171, %v3190
    %3192 = vdwg.mxu0
    %3193 = vmatpush.msra.mxu0 %v1267
    %3194 = vmatpush.msra.mxu0 %v1263
    %3195 = vmatpush.msra.mxu0 %v1259
    %3196 = vmatpush.msra.mxu0 %v1255
    %3197 = vmatpush.msra.mxu0 %v1251
    %3198 = vmatpush.msra.mxu0 %v1247
    %3199 = vmatpush.msra.mxu0 %v1243
    %3200 = vmatpush.msra.mxu0 %v1239
    %3201 = vmatpush.msra.mxu0 %v1235
    %3202 = vmatpush.msra.mxu0 %v1231
    %3203 = vmatpush.msra.mxu0 %v1227
    %3204 = vmatpush.msra.mxu0 %v1223
    %3205 = vmatpush.msra.mxu0 %v1219
    %3206 = vmatpush.msra.mxu0 %v1215
    %3207 = vmatpush.msra.mxu0 %v1211
    %3208 = vmatpush.msra.mxu0 %v1207
    %3209 = vmatmul.f32.gmra.mxu0 %v2145
    %v3210 = vpop.f32.mrf.mxu0
    %v3211 = vadd.f32 %v3191, %v3210
    %3212 = vdwg.mxu0
    %3213 = vmatpush.msra.mxu0 %v1331
    %3214 = vmatpush.msra.mxu0 %v1327
    %3215 = vmatpush.msra.mxu0 %v1323
    %3216 = vmatpush.msra.mxu0 %v1319
    %3217 = vmatpush.msra.mxu0 %v1315
    %3218 = vmatpush.msra.mxu0 %v1311
    %3219 = vmatpush.msra.mxu0 %v1307
    %3220 = vmatpush.msra.mxu0 %v1303
    %3221 = vmatpush.msra.mxu0 %v1299
    %3222 = vmatpush.msra.mxu0 %v1295
    %3223 = vmatpush.msra.mxu0 %v1291
    %3224 = vmatpush.msra.mxu0 %v1287
    %3225 = vmatpush.msra.mxu0 %v1283
    %3226 = vmatpush.msra.mxu0 %v1279
    %3227 = vmatpush.msra.mxu0 %v1275
    %3228 = vmatpush.msra.mxu0 %v1271
    %3229 = vmatmul.f32.gmra.mxu0 %v2146
    %v3230 = vpop.f32.mrf.mxu0
    %v3231 = vadd.f32 %v3211, %v3230
    %3232 = vdwg.mxu0
    %3233 = vmatpush.msra.mxu0 %v1395
    %3234 = vmatpush.msra.mxu0 %v1391
    %3235 = vmatpush.msra.mxu0 %v1387
    %3236 = vmatpush.msra.mxu0 %v1383
    %3237 = vmatpush.msra.mxu0 %v1379
    %3238 = vmatpush.msra.mxu0 %v1375
    %3239 = vmatpush.msra.mxu0 %v1371
    %3240 = vmatpush.msra.mxu0 %v1367
    %3241 = vmatpush.msra.mxu0 %v1363
    %3242 = vmatpush.msra.mxu0 %v1359
    %3243 = vmatpush.msra.mxu0 %v1355
    %3244 = vmatpush.msra.mxu0 %v1351
    %3245 = vmatpush.msra.mxu0 %v1347
    %3246 = vmatpush.msra.mxu0 %v1343
    %3247 = vmatpush.msra.mxu0 %v1339
    %3248 = vmatpush.msra.mxu0 %v1335
    %3249 = vmatmul.f32.gmra.mxu0 %v2147
    %v3250 = vpop.f32.mrf.mxu0
    %v3251 = vadd.f32 %v3231, %v3250
    %3252 = vdwg.mxu0
    %3253 = vmatpush.msra.mxu0 %v1459
    %3254 = vmatpush.msra.mxu0 %v1455
    %3255 = vmatpush.msra.mxu0 %v1451
    %3256 = vmatpush.msra.mxu0 %v1447
    %3257 = vmatpush.msra.mxu0 %v1443
    %3258 = vmatpush.msra.mxu0 %v1439
    %3259 = vmatpush.msra.mxu0 %v1435
    %3260 = vmatpush.msra.mxu0 %v1431
    %3261 = vmatpush.msra.mxu0 %v1427
    %3262 = vmatpush.msra.mxu0 %v1423
    %3263 = vmatpush.msra.mxu0 %v1419
    %3264 = vmatpush.msra.mxu0 %v1415
    %3265 = vmatpush.msra.mxu0 %v1411
    %3266 = vmatpush.msra.mxu0 %v1407
    %3267 = vmatpush.msra.mxu0 %v1403
    %3268 = vmatpush.msra.mxu0 %v1399
    %3269 = vmatmul.f32.gmra.mxu0 %v2148
    %v3270 = vpop.f32.mrf.mxu0
    %v3271 = vadd.f32 %v3251, %v3270
    %3272 = vdwg.mxu0
    %3273 = vmatpush.msra.mxu0 %v1523
    %3274 = vmatpush.msra.mxu0 %v1519
    %3275 = vmatpush.msra.mxu0 %v1515
    %3276 = vmatpush.msra.mxu0 %v1511
    %3277 = vmatpush.msra.mxu0 %v1507
    %3278 = vmatpush.msra.mxu0 %v1503
    %3279 = vmatpush.msra.mxu0 %v1499
    %3280 = vmatpush.msra.mxu0 %v1495
    %3281 = vmatpush.msra.mxu0 %v1491
    %3282 = vmatpush.msra.mxu0 %v1487
    %3283 = vmatpush.msra.mxu0 %v1483
    %3284 = vmatpush.msra.mxu0 %v1479
    %3285 = vmatpush.msra.mxu0 %v1475
    %3286 = vmatpush.msra.mxu0 %v1471
    %3287 = vmatpush.msra.mxu0 %v1467
    %3288 = vmatpush.msra.mxu0 %v1463
    %3289 = vmatmul.f32.gmra.mxu0 %v2149
    %v3290 = vpop.f32.mrf.mxu0
    %v3291 = vadd.f32 %v3271, %v3290
    %3292 = vdwg.mxu0
    %3293 = vmatpush.msra.mxu0 %v1587
    %3294 = vmatpush.msra.mxu0 %v1583
    %3295 = vmatpush.msra.mxu0 %v1579
    %3296 = vmatpush.msra.mxu0 %v1575
    %3297 = vmatpush.msra.mxu0 %v1571
    %3298 = vmatpush.msra.mxu0 %v1567
    %3299 = vmatpush.msra.mxu0 %v1563
    %3300 = vmatpush.msra.mxu0 %v1559
    %3301 = vmatpush.msra.mxu0 %v1555
    %3302 = vmatpush.msra.mxu0 %v1551
    %3303 = vmatpush.msra.mxu0 %v1547
    %3304 = vmatpush.msra.mxu0 %v1543
    %3305 = vmatpush.msra.mxu0 %v1539
    %3306 = vmatpush.msra.mxu0 %v1535
    %3307 = vmatpush.msra.mxu0 %v1531
    %3308 = vmatpush.msra.mxu0 %v1527
    %3309 = vmatmul.f32.gmra.mxu0 %v2150
    %v3310 = vpop.f32.mrf.mxu0
    %v3311 = vadd.f32 %v3291, %v3310
    %3312 = vdwg.mxu0
    %3313 = vmatpush.msra.mxu0 %v1651
    %3314 = vmatpush.msra.mxu0 %v1647
    %3315 = vmatpush.msra.mxu0 %v1643
    %3316 = vmatpush.msra.mxu0 %v1639
    %3317 = vmatpush.msra.mxu0 %v1635
    %3318 = vmatpush.msra.mxu0 %v1631
    %3319 = vmatpush.msra.mxu0 %v1627
    %3320 = vmatpush.msra.mxu0 %v1623
    %3321 = vmatpush.msra.mxu0 %v1619
    %3322 = vmatpush.msra.mxu0 %v1615
    %3323 = vmatpush.msra.mxu0 %v1611
    %3324 = vmatpush.msra.mxu0 %v1607
    %3325 = vmatpush.msra.mxu0 %v1603
    %3326 = vmatpush.msra.mxu0 %v1599
    %3327 = vmatpush.msra.mxu0 %v1595
    %3328 = vmatpush.msra.mxu0 %v1591
    %3329 = vmatmul.f32.gmra.mxu0 %v2153
    %v3330 = vpop.f32.mrf.mxu0
    %v3331 = vadd.f32 %v3311, %v3330
    %3332 = vdwg.mxu0
    %3333 = vmatpush.msra.mxu0 %v1715
    %3334 = vmatpush.msra.mxu0 %v1711
    %3335 = vmatpush.msra.mxu0 %v1707
    %3336 = vmatpush.msra.mxu0 %v1703
    %3337 = vmatpush.msra.mxu0 %v1699
    %3338 = vmatpush.msra.mxu0 %v1695
    %3339 = vmatpush.msra.mxu0 %v1691
    %3340 = vmatpush.msra.mxu0 %v1687
    %3341 = vmatpush.msra.mxu0 %v1683
    %3342 = vmatpush.msra.mxu0 %v1679
    %3343 = vmatpush.msra.mxu0 %v1675
    %3344 = vmatpush.msra.mxu0 %v1671
    %3345 = vmatpush.msra.mxu0 %v1667
    %3346 = vmatpush.msra.mxu0 %v1663
    %3347 = vmatpush.msra.mxu0 %v1659
    %3348 = vmatpush.msra.mxu0 %v1655
    %3349 = vmatmul.f32.gmra.mxu0 %v2154
    %v3350 = vpop.f32.mrf.mxu0
    %v3351 = vadd.f32 %v3331, %v3350
    %3352 = vdwg.mxu0
    %3353 = vmatpush.msra.mxu0 %v1779
    %3354 = vmatpush.msra.mxu0 %v1775
    %3355 = vmatpush.msra.mxu0 %v1771
    %3356 = vmatpush.msra.mxu0 %v1767
    %3357 = vmatpush.msra.mxu0 %v1763
    %3358 = vmatpush.msra.mxu0 %v1759
    %3359 = vmatpush.msra.mxu0 %v1755
    %3360 = vmatpush.msra.mxu0 %v1751
    %3361 = vmatpush.msra.mxu0 %v1747
    %3362 = vmatpush.msra.mxu0 %v1743
    %3363 = vmatpush.msra.mxu0 %v1739
    %3364 = vmatpush.msra.mxu0 %v1735
    %3365 = vmatpush.msra.mxu0 %v1731
    %3366 = vmatpush.msra.mxu0 %v1727
    %3367 = vmatpush.msra.mxu0 %v1723
    %3368 = vmatpush.msra.mxu0 %v1719
    %3369 = vmatmul.f32.gmra.mxu0 %v2155
    %v3370 = vpop.f32.mrf.mxu0
    %v3371 = vadd.f32 %v3351, %v3370
    %3372 = vdwg.mxu0
    %3373 = vmatpush.msra.mxu0 %v1843
    %3374 = vmatpush.msra.mxu0 %v1839
    %3375 = vmatpush.msra.mxu0 %v1835
    %3376 = vmatpush.msra.mxu0 %v1831
    %3377 = vmatpush.msra.mxu0 %v1827
    %3378 = vmatpush.msra.mxu0 %v1823
    %3379 = vmatpush.msra.mxu0 %v1819
    %3380 = vmatpush.msra.mxu0 %v1815
    %3381 = vmatpush.msra.mxu0 %v1811
    %3382 = vmatpush.msra.mxu0 %v1807
    %3383 = vmatpush.msra.mxu0 %v1803
    %3384 = vmatpush.msra.mxu0 %v1799
    %3385 = vmatpush.msra.mxu0 %v1795
    %3386 = vmatpush.msra.mxu0 %v1791
    %3387 = vmatpush.msra.mxu0 %v1787
    %3388 = vmatpush.msra.mxu0 %v1783
    %3389 = vmatmul.f32.gmra.mxu0 %v2156
    %v3390 = vpop.f32.mrf.mxu0
    %v3391 = vadd.f32 %v3371, %v3390
    %3392 = vdwg.mxu0
    %3393 = vmatpush.msra.mxu0 %v1907
    %3394 = vmatpush.msra.mxu0 %v1903
    %3395 = vmatpush.msra.mxu0 %v1899
    %3396 = vmatpush.msra.mxu0 %v1895
    %3397 = vmatpush.msra.mxu0 %v1891
    %3398 = vmatpush.msra.mxu0 %v1887
    %3399 = vmatpush.msra.mxu0 %v1883
    %3400 = vmatpush.msra.mxu0 %v1879
    %3401 = vmatpush.msra.mxu0 %v1875
    %3402 = vmatpush.msra.mxu0 %v1871
    %3403 = vmatpush.msra.mxu0 %v1867
    %3404 = vmatpush.msra.mxu0 %v1863
    %3405 = vmatpush.msra.mxu0 %v1859
    %3406 = vmatpush.msra.mxu0 %v1855
    %3407 = vmatpush.msra.mxu0 %v1851
    %3408 = vmatpush.msra.mxu0 %v1847
    %3409 = vmatmul.f32.gmra.mxu0 %v2157
    %v3410 = vpop.f32.mrf.mxu0
    %v3411 = vadd.f32 %v3391, %v3410
    %3412 = vdwg.mxu0
    %3413 = vmatpush.msra.mxu0 %v1971
    %3414 = vmatpush.msra.mxu0 %v1967
    %3415 = vmatpush.msra.mxu0 %v1963
    %3416 = vmatpush.msra.mxu0 %v1959
    %3417 = vmatpush.msra.mxu0 %v1955
    %3418 = vmatpush.msra.mxu0 %v1951
    %3419 = vmatpush.msra.mxu0 %v1947
    %3420 = vmatpush.msra.mxu0 %v1943
    %3421 = vmatpush.msra.mxu0 %v1939
    %3422 = vmatpush.msra.mxu0 %v1935
    %3423 = vmatpush.msra.mxu0 %v1931
    %3424 = vmatpush.msra.mxu0 %v1927
    %3425 = vmatpush.msra.mxu0 %v1923
    %3426 = vmatpush.msra.mxu0 %v1919
    %3427 = vmatpush.msra.mxu0 %v1915
    %3428 = vmatpush.msra.mxu0 %v1911
    %3429 = vmatmul.f32.gmra.mxu0 %v2158
    %v3430 = vpop.f32.mrf.mxu0
    %v3431 = vadd.f32 %v3411, %v3430
    %3432 = vdwg.mxu0
    %3433 = vmatpush.msra.mxu0 %v2035
    %3434 = vmatpush.msra.mxu0 %v2031
    %3435 = vmatpush.msra.mxu0 %v2027
    %3436 = vmatpush.msra.mxu0 %v2023
    %3437 = vmatpush.msra.mxu0 %v2019
    %3438 = vmatpush.msra.mxu0 %v2015
    %3439 = vmatpush.msra.mxu0 %v2011
    %3440 = vmatpush.msra.mxu0 %v2007
    %3441 = vmatpush.msra.mxu0 %v2003
    %3442 = vmatpush.msra.mxu0 %v1999
    %3443 = vmatpush.msra.mxu0 %v1995
    %3444 = vmatpush.msra.mxu0 %v1991
    %3445 = vmatpush.msra.mxu0 %v1987
    %3446 = vmatpush.msra.mxu0 %v1983
    %3447 = vmatpush.msra.mxu0 %v1979
    %3448 = vmatpush.msra.mxu0 %v1975
    %3449 = vmatmul.f32.gmra.mxu0 %v2159
    %v3450 = vpop.f32.mrf.mxu0
    %v3451 = vadd.f32 %v3431, %v3450
    %3452 = vdwg.mxu0
    %3453 = vmatpush.msra.mxu0 %v2099
    %3454 = vmatpush.msra.mxu0 %v2095
    %3455 = vmatpush.msra.mxu0 %v2091
    %3456 = vmatpush.msra.mxu0 %v2087
    %3457 = vmatpush.msra.mxu0 %v2083
    %3458 = vmatpush.msra.mxu0 %v2079
    %3459 = vmatpush.msra.mxu0 %v2075
    %3460 = vmatpush.msra.mxu0 %v2071
    %3461 = vmatpush.msra.mxu0 %v2067
    %3462 = vmatpush.msra.mxu0 %v2063
    %3463 = vmatpush.msra.mxu0 %v2059
    %3464 = vmatpush.msra.mxu0 %v2055
    %3465 = vmatpush.msra.mxu0 %v2051
    %3466 = vmatpush.msra.mxu0 %v2047
    %3467 = vmatpush.msra.mxu0 %v2043
    %3468 = vmatpush.msra.mxu0 %v2039
    %3469 = vmatmul.f32.gmra.mxu0 %v2160
    %v3470 = vpop.f32.mrf.mxu0
    %v3471 = vadd.f32 %v3451, %v3470
    %3472 = vdwg.mxu0
    %3473 = vmatpush.msra.mxu0 %v116
    %3474 = vmatpush.msra.mxu0 %v112
    %3475 = vmatpush.msra.mxu0 %v108
    %3476 = vmatpush.msra.mxu0 %v104
    %3477 = vmatpush.msra.mxu0 %v100
    %3478 = vmatpush.msra.mxu0 %v96
    %3479 = vmatpush.msra.mxu0 %v92
    %3480 = vmatpush.msra.mxu0 %v88
    %3481 = vmatpush.msra.mxu0 %v84
    %3482 = vmatpush.msra.mxu0 %v80
    %3483 = vmatpush.msra.mxu0 %v76
    %3484 = vmatpush.msra.mxu0 %v72
    %3485 = vmatpush.msra.mxu0 %v68
    %3486 = vmatpush.msra.mxu0 %v64
    %3487 = vmatpush.msra.mxu0 %v60
    %3488 = vmatpush.msra.mxu0 %v56
    %3489 = vmatmul.f32.gmra.mxu0 %v2123
    %v3490 = vpop.f32.mrf.mxu0
    %v3491 = vadd.f32 %v2106, %v3490
    %3492 = vdwg.mxu0
    %3493 = vmatpush.msra.mxu0 %v180
    %3494 = vmatpush.msra.mxu0 %v176
    %3495 = vmatpush.msra.mxu0 %v172
    %3496 = vmatpush.msra.mxu0 %v168
    %3497 = vmatpush.msra.mxu0 %v164
    %3498 = vmatpush.msra.mxu0 %v160
    %3499 = vmatpush.msra.mxu0 %v156
    %3500 = vmatpush.msra.mxu0 %v152
    %3501 = vmatpush.msra.mxu0 %v148
    %3502 = vmatpush.msra.mxu0 %v144
    %3503 = vmatpush.msra.mxu0 %v140
    %3504 = vmatpush.msra.mxu0 %v136
    %3505 = vmatpush.msra.mxu0 %v132
    %3506 = vmatpush.msra.mxu0 %v128
    %3507 = vmatpush.msra.mxu0 %v124
    %3508 = vmatpush.msra.mxu0 %v120
    %3509 = vmatmul.f32.gmra.mxu0 %v2124
    %v3510 = vpop.f32.mrf.mxu0
    %v3511 = vadd.f32 %v3491, %v3510
    %3512 = vdwg.mxu0
    %3513 = vmatpush.msra.mxu0 %v244
    %3514 = vmatpush.msra.mxu0 %v240
    %3515 = vmatpush.msra.mxu0 %v236
    %3516 = vmatpush.msra.mxu0 %v232
    %3517 = vmatpush.msra.mxu0 %v228
    %3518 = vmatpush.msra.mxu0 %v224
    %3519 = vmatpush.msra.mxu0 %v220
    %3520 = vmatpush.msra.mxu0 %v216
    %3521 = vmatpush.msra.mxu0 %v212
    %3522 = vmatpush.msra.mxu0 %v208
    %3523 = vmatpush.msra.mxu0 %v204
    %3524 = vmatpush.msra.mxu0 %v200
    %3525 = vmatpush.msra.mxu0 %v196
    %3526 = vmatpush.msra.mxu0 %v192
    %3527 = vmatpush.msra.mxu0 %v188
    %3528 = vmatpush.msra.mxu0 %v184
    %3529 = vmatmul.f32.gmra.mxu0 %v2125
    %v3530 = vpop.f32.mrf.mxu0
    %v3531 = vadd.f32 %v3511, %v3530
    %3532 = vdwg.mxu0
    %3533 = vmatpush.msra.mxu0 %v308
    %3534 = vmatpush.msra.mxu0 %v304
    %3535 = vmatpush.msra.mxu0 %v300
    %3536 = vmatpush.msra.mxu0 %v296
    %3537 = vmatpush.msra.mxu0 %v292
    %3538 = vmatpush.msra.mxu0 %v288
    %3539 = vmatpush.msra.mxu0 %v284
    %3540 = vmatpush.msra.mxu0 %v280
    %3541 = vmatpush.msra.mxu0 %v276
    %3542 = vmatpush.msra.mxu0 %v272
    %3543 = vmatpush.msra.mxu0 %v268
    %3544 = vmatpush.msra.mxu0 %v264
    %3545 = vmatpush.msra.mxu0 %v260
    %3546 = vmatpush.msra.mxu0 %v256
    %3547 = vmatpush.msra.mxu0 %v252
    %3548 = vmatpush.msra.mxu0 %v248
    %3549 = vmatmul.f32.gmra.mxu0 %v2126
    %v3550 = vpop.f32.mrf.mxu0
    %v3551 = vadd.f32 %v3531, %v3550
    %3552 = vdwg.mxu0
    %3553 = vmatpush.msra.mxu0 %v372
    %3554 = vmatpush.msra.mxu0 %v368
    %3555 = vmatpush.msra.mxu0 %v364
    %3556 = vmatpush.msra.mxu0 %v360
    %3557 = vmatpush.msra.mxu0 %v356
    %3558 = vmatpush.msra.mxu0 %v352
    %3559 = vmatpush.msra.mxu0 %v348
    %3560 = vmatpush.msra.mxu0 %v344
    %3561 = vmatpush.msra.mxu0 %v340
    %3562 = vmatpush.msra.mxu0 %v336
    %3563 = vmatpush.msra.mxu0 %v332
    %3564 = vmatpush.msra.mxu0 %v328
    %3565 = vmatpush.msra.mxu0 %v324
    %3566 = vmatpush.msra.mxu0 %v320
    %3567 = vmatpush.msra.mxu0 %v316
    %3568 = vmatpush.msra.mxu0 %v312
    %3569 = vmatmul.f32.gmra.mxu0 %v2127
    %v3570 = vpop.f32.mrf.mxu0
    %v3571 = vadd.f32 %v3551, %v3570
    %3572 = vdwg.mxu0
    %3573 = vmatpush.msra.mxu0 %v436
    %3574 = vmatpush.msra.mxu0 %v432
    %3575 = vmatpush.msra.mxu0 %v428
    %3576 = vmatpush.msra.mxu0 %v424
    %3577 = vmatpush.msra.mxu0 %v420
    %3578 = vmatpush.msra.mxu0 %v416
    %3579 = vmatpush.msra.mxu0 %v412
    %3580 = vmatpush.msra.mxu0 %v408
    %3581 = vmatpush.msra.mxu0 %v404
    %3582 = vmatpush.msra.mxu0 %v400
    %3583 = vmatpush.msra.mxu0 %v396
    %3584 = vmatpush.msra.mxu0 %v392
    %3585 = vmatpush.msra.mxu0 %v388
    %3586 = vmatpush.msra.mxu0 %v384
    %3587 = vmatpush.msra.mxu0 %v380
    %3588 = vmatpush.msra.mxu0 %v376
    %3589 = vmatmul.f32.gmra.mxu0 %v2128
    %v3590 = vpop.f32.mrf.mxu0
    %v3591 = vadd.f32 %v3571, %v3590
    %3592 = vdwg.mxu0
    %3593 = vmatpush.msra.mxu0 %v500
    %3594 = vmatpush.msra.mxu0 %v496
    %3595 = vmatpush.msra.mxu0 %v492
    %3596 = vmatpush.msra.mxu0 %v488
    %3597 = vmatpush.msra.mxu0 %v484
    %3598 = vmatpush.msra.mxu0 %v480
    %3599 = vmatpush.msra.mxu0 %v476
    %3600 = vmatpush.msra.mxu0 %v472
    %3601 = vmatpush.msra.mxu0 %v468
    %3602 = vmatpush.msra.mxu0 %v464
    %3603 = vmatpush.msra.mxu0 %v460
    %3604 = vmatpush.msra.mxu0 %v456
    %3605 = vmatpush.msra.mxu0 %v452
    %3606 = vmatpush.msra.mxu0 %v448
    %3607 = vmatpush.msra.mxu0 %v444
    %3608 = vmatpush.msra.mxu0 %v440
    %3609 = vmatmul.f32.gmra.mxu0 %v2129
    %v3610 = vpop.f32.mrf.mxu0
    %v3611 = vadd.f32 %v3591, %v3610
    %3612 = vdwg.mxu0
    %3613 = vmatpush.msra.mxu0 %v564
    %3614 = vmatpush.msra.mxu0 %v560
    %3615 = vmatpush.msra.mxu0 %v556
    %3616 = vmatpush.msra.mxu0 %v552
    %3617 = vmatpush.msra.mxu0 %v548
    %3618 = vmatpush.msra.mxu0 %v544
    %3619 = vmatpush.msra.mxu0 %v540
    %3620 = vmatpush.msra.mxu0 %v536
    %3621 = vmatpush.msra.mxu0 %v532
    %3622 = vmatpush.msra.mxu0 %v528
    %3623 = vmatpush.msra.mxu0 %v524
    %3624 = vmatpush.msra.mxu0 %v520
    %3625 = vmatpush.msra.mxu0 %v516
    %3626 = vmatpush.msra.mxu0 %v512
    %3627 = vmatpush.msra.mxu0 %v508
    %3628 = vmatpush.msra.mxu0 %v504
    %3629 = vmatmul.f32.gmra.mxu0 %v2130
    %v3630 = vpop.f32.mrf.mxu0
    %v3631 = vadd.f32 %v3611, %v3630
    %3632 = vdwg.mxu0
    %3633 = vmatpush.msra.mxu0 %v628
    %3634 = vmatpush.msra.mxu0 %v624
    %3635 = vmatpush.msra.mxu0 %v620
    %3636 = vmatpush.msra.mxu0 %v616
    %3637 = vmatpush.msra.mxu0 %v612
    %3638 = vmatpush.msra.mxu0 %v608
    %3639 = vmatpush.msra.mxu0 %v604
    %3640 = vmatpush.msra.mxu0 %v600
    %3641 = vmatpush.msra.mxu0 %v596
    %3642 = vmatpush.msra.mxu0 %v592
    %3643 = vmatpush.msra.mxu0 %v588
    %3644 = vmatpush.msra.mxu0 %v584
    %3645 = vmatpush.msra.mxu0 %v580
    %3646 = vmatpush.msra.mxu0 %v576
    %3647 = vmatpush.msra.mxu0 %v572
    %3648 = vmatpush.msra.mxu0 %v568
    %3649 = vmatmul.f32.gmra.mxu0 %v2133
    %v3650 = vpop.f32.mrf.mxu0
    %v3651 = vadd.f32 %v3631, %v3650
    %3652 = vdwg.mxu0
    %3653 = vmatpush.msra.mxu0 %v692
    %3654 = vmatpush.msra.mxu0 %v688
    %3655 = vmatpush.msra.mxu0 %v684
    %3656 = vmatpush.msra.mxu0 %v680
    %3657 = vmatpush.msra.mxu0 %v676
    %3658 = vmatpush.msra.mxu0 %v672
    %3659 = vmatpush.msra.mxu0 %v668
    %3660 = vmatpush.msra.mxu0 %v664
    %3661 = vmatpush.msra.mxu0 %v660
    %3662 = vmatpush.msra.mxu0 %v656
    %3663 = vmatpush.msra.mxu0 %v652
    %3664 = vmatpush.msra.mxu0 %v648
    %3665 = vmatpush.msra.mxu0 %v644
    %3666 = vmatpush.msra.mxu0 %v640
    %3667 = vmatpush.msra.mxu0 %v636
    %3668 = vmatpush.msra.mxu0 %v632
    %3669 = vmatmul.f32.gmra.mxu0 %v2134
    %v3670 = vpop.f32.mrf.mxu0
    %v3671 = vadd.f32 %v3651, %v3670
    %3672 = vdwg.mxu0
    %3673 = vmatpush.msra.mxu0 %v756
    %3674 = vmatpush.msra.mxu0 %v752
    %3675 = vmatpush.msra.mxu0 %v748
    %3676 = vmatpush.msra.mxu0 %v744
    %3677 = vmatpush.msra.mxu0 %v740
    %3678 = vmatpush.msra.mxu0 %v736
    %3679 = vmatpush.msra.mxu0 %v732
    %3680 = vmatpush.msra.mxu0 %v728
    %3681 = vmatpush.msra.mxu0 %v724
    %3682 = vmatpush.msra.mxu0 %v720
    %3683 = vmatpush.msra.mxu0 %v716
    %3684 = vmatpush.msra.mxu0 %v712
    %3685 = vmatpush.msra.mxu0 %v708
    %3686 = vmatpush.msra.mxu0 %v704
    %3687 = vmatpush.msra.mxu0 %v700
    %3688 = vmatpush.msra.mxu0 %v696
    %3689 = vmatmul.f32.gmra.mxu0 %v2135
    %v3690 = vpop.f32.mrf.mxu0
    %v3691 = vadd.f32 %v3671, %v3690
    %3692 = vdwg.mxu0
    %3693 = vmatpush.msra.mxu0 %v820
    %3694 = vmatpush.msra.mxu0 %v816
    %3695 = vmatpush.msra.mxu0 %v812
    %3696 = vmatpush.msra.mxu0 %v808
    %3697 = vmatpush.msra.mxu0 %v804
    %3698 = vmatpush.msra.mxu0 %v800
    %3699 = vmatpush.msra.mxu0 %v796
    %3700 = vmatpush.msra.mxu0 %v792
    %3701 = vmatpush.msra.mxu0 %v788
    %3702 = vmatpush.msra.mxu0 %v784
    %3703 = vmatpush.msra.mxu0 %v780
    %3704 = vmatpush.msra.mxu0 %v776
    %3705 = vmatpush.msra.mxu0 %v772
    %3706 = vmatpush.msra.mxu0 %v768
    %3707 = vmatpush.msra.mxu0 %v764
    %3708 = vmatpush.msra.mxu0 %v760
    %3709 = vmatmul.f32.gmra.mxu0 %v2136
    %v3710 = vpop.f32.mrf.mxu0
    %v3711 = vadd.f32 %v3691, %v3710
    %3712 = vdwg.mxu0
    %3713 = vmatpush.msra.mxu0 %v884
    %3714 = vmatpush.msra.mxu0 %v880
    %3715 = vmatpush.msra.mxu0 %v876
    %3716 = vmatpush.msra.mxu0 %v872
    %3717 = vmatpush.msra.mxu0 %v868
    %3718 = vmatpush.msra.mxu0 %v864
    %3719 = vmatpush.msra.mxu0 %v860
    %3720 = vmatpush.msra.mxu0 %v856
    %3721 = vmatpush.msra.mxu0 %v852
    %3722 = vmatpush.msra.mxu0 %v848
    %3723 = vmatpush.msra.mxu0 %v844
    %3724 = vmatpush.msra.mxu0 %v840
    %3725 = vmatpush.msra.mxu0 %v836
    %3726 = vmatpush.msra.mxu0 %v832
    %3727 = vmatpush.msra.mxu0 %v828
    %3728 = vmatpush.msra.mxu0 %v824
    %3729 = vmatmul.f32.gmra.mxu0 %v2137
    %v3730 = vpop.f32.mrf.mxu0
    %v3731 = vadd.f32 %v3711, %v3730
    %3732 = vdwg.mxu0
    %3733 = vmatpush.msra.mxu0 %v948
    %3734 = vmatpush.msra.mxu0 %v944
    %3735 = vmatpush.msra.mxu0 %v940
    %3736 = vmatpush.msra.mxu0 %v936
    %3737 = vmatpush.msra.mxu0 %v932
    %3738 = vmatpush.msra.mxu0 %v928
    %3739 = vmatpush.msra.mxu0 %v924
    %3740 = vmatpush.msra.mxu0 %v920
    %3741 = vmatpush.msra.mxu0 %v916
    %3742 = vmatpush.msra.mxu0 %v912
    %3743 = vmatpush.msra.mxu0 %v908
    %3744 = vmatpush.msra.mxu0 %v904
    %3745 = vmatpush.msra.mxu0 %v900
    %3746 = vmatpush.msra.mxu0 %v896
    %3747 = vmatpush.msra.mxu0 %v892
    %3748 = vmatpush.msra.mxu0 %v888
    %3749 = vmatmul.f32.gmra.mxu0 %v2138
    %v3750 = vpop.f32.mrf.mxu0
    %v3751 = vadd.f32 %v3731, %v3750
    %3752 = vdwg.mxu0
    %3753 = vmatpush.msra.mxu0 %v1012
    %3754 = vmatpush.msra.mxu0 %v1008
    %3755 = vmatpush.msra.mxu0 %v1004
    %3756 = vmatpush.msra.mxu0 %v1000
    %3757 = vmatpush.msra.mxu0 %v996
    %3758 = vmatpush.msra.mxu0 %v992
    %3759 = vmatpush.msra.mxu0 %v988
    %3760 = vmatpush.msra.mxu0 %v984
    %3761 = vmatpush.msra.mxu0 %v980
    %3762 = vmatpush.msra.mxu0 %v976
    %3763 = vmatpush.msra.mxu0 %v972
    %3764 = vmatpush.msra.mxu0 %v968
    %3765 = vmatpush.msra.mxu0 %v964
    %3766 = vmatpush.msra.mxu0 %v960
    %3767 = vmatpush.msra.mxu0 %v956
    %3768 = vmatpush.msra.mxu0 %v952
    %3769 = vmatmul.f32.gmra.mxu0 %v2139
    %v3770 = vpop.f32.mrf.mxu0
    %v3771 = vadd.f32 %v3751, %v3770
    %3772 = vdwg.mxu0
    %3773 = vmatpush.msra.mxu0 %v1076
    %3774 = vmatpush.msra.mxu0 %v1072
    %3775 = vmatpush.msra.mxu0 %v1068
    %3776 = vmatpush.msra.mxu0 %v1064
    %3777 = vmatpush.msra.mxu0 %v1060
    %3778 = vmatpush.msra.mxu0 %v1056
    %3779 = vmatpush.msra.mxu0 %v1052
    %3780 = vmatpush.msra.mxu0 %v1048
    %3781 = vmatpush.msra.mxu0 %v1044
    %3782 = vmatpush.msra.mxu0 %v1040
    %3783 = vmatpush.msra.mxu0 %v1036
    %3784 = vmatpush.msra.mxu0 %v1032
    %3785 = vmatpush.msra.mxu0 %v1028
    %3786 = vmatpush.msra.mxu0 %v1024
    %3787 = vmatpush.msra.mxu0 %v1020
    %3788 = vmatpush.msra.mxu0 %v1016
    %3789 = vmatmul.f32.gmra.mxu0 %v2140
    %v3790 = vpop.f32.mrf.mxu0
    %v3791 = vadd.f32 %v3771, %v3790
    %3792 = vdwg.mxu0
    %3793 = vmatpush.msra.mxu0 %v1140
    %3794 = vmatpush.msra.mxu0 %v1136
    %3795 = vmatpush.msra.mxu0 %v1132
    %3796 = vmatpush.msra.mxu0 %v1128
    %3797 = vmatpush.msra.mxu0 %v1124
    %3798 = vmatpush.msra.mxu0 %v1120
    %3799 = vmatpush.msra.mxu0 %v1116
    %3800 = vmatpush.msra.mxu0 %v1112
    %3801 = vmatpush.msra.mxu0 %v1108
    %3802 = vmatpush.msra.mxu0 %v1104
    %3803 = vmatpush.msra.mxu0 %v1100
    %3804 = vmatpush.msra.mxu0 %v1096
    %3805 = vmatpush.msra.mxu0 %v1092
    %3806 = vmatpush.msra.mxu0 %v1088
    %3807 = vmatpush.msra.mxu0 %v1084
    %3808 = vmatpush.msra.mxu0 %v1080
    %3809 = vmatmul.f32.gmra.mxu0 %v2143
    %v3810 = vpop.f32.mrf.mxu0
    %v3811 = vadd.f32 %v3791, %v3810
    %3812 = vdwg.mxu0
    %3813 = vmatpush.msra.mxu0 %v1204
    %3814 = vmatpush.msra.mxu0 %v1200
    %3815 = vmatpush.msra.mxu0 %v1196
    %3816 = vmatpush.msra.mxu0 %v1192
    %3817 = vmatpush.msra.mxu0 %v1188
    %3818 = vmatpush.msra.mxu0 %v1184
    %3819 = vmatpush.msra.mxu0 %v1180
    %3820 = vmatpush.msra.mxu0 %v1176
    %3821 = vmatpush.msra.mxu0 %v1172
    %3822 = vmatpush.msra.mxu0 %v1168
    %3823 = vmatpush.msra.mxu0 %v1164
    %3824 = vmatpush.msra.mxu0 %v1160
    %3825 = vmatpush.msra.mxu0 %v1156
    %3826 = vmatpush.msra.mxu0 %v1152
    %3827 = vmatpush.msra.mxu0 %v1148
    %3828 = vmatpush.msra.mxu0 %v1144
    %3829 = vmatmul.f32.gmra.mxu0 %v2144
    %v3830 = vpop.f32.mrf.mxu0
    %v3831 = vadd.f32 %v3811, %v3830
    %3832 = vdwg.mxu0
    %3833 = vmatpush.msra.mxu0 %v1268
    %3834 = vmatpush.msra.mxu0 %v1264
    %3835 = vmatpush.msra.mxu0 %v1260
    %3836 = vmatpush.msra.mxu0 %v1256
    %3837 = vmatpush.msra.mxu0 %v1252
    %3838 = vmatpush.msra.mxu0 %v1248
    %3839 = vmatpush.msra.mxu0 %v1244
    %3840 = vmatpush.msra.mxu0 %v1240
    %3841 = vmatpush.msra.mxu0 %v1236
    %3842 = vmatpush.msra.mxu0 %v1232
    %3843 = vmatpush.msra.mxu0 %v1228
    %3844 = vmatpush.msra.mxu0 %v1224
    %3845 = vmatpush.msra.mxu0 %v1220
    %3846 = vmatpush.msra.mxu0 %v1216
    %3847 = vmatpush.msra.mxu0 %v1212
    %3848 = vmatpush.msra.mxu0 %v1208
    %3849 = vmatmul.f32.gmra.mxu0 %v2145
    %v3850 = vpop.f32.mrf.mxu0
    %v3851 = vadd.f32 %v3831, %v3850
    %3852 = vdwg.mxu0
    %3853 = vmatpush.msra.mxu0 %v1332
    %3854 = vmatpush.msra.mxu0 %v1328
    %3855 = vmatpush.msra.mxu0 %v1324
    %3856 = vmatpush.msra.mxu0 %v1320
    %3857 = vmatpush.msra.mxu0 %v1316
    %3858 = vmatpush.msra.mxu0 %v1312
    %3859 = vmatpush.msra.mxu0 %v1308
    %3860 = vmatpush.msra.mxu0 %v1304
    %3861 = vmatpush.msra.mxu0 %v1300
    %3862 = vmatpush.msra.mxu0 %v1296
    %3863 = vmatpush.msra.mxu0 %v1292
    %3864 = vmatpush.msra.mxu0 %v1288
    %3865 = vmatpush.msra.mxu0 %v1284
    %3866 = vmatpush.msra.mxu0 %v1280
    %3867 = vmatpush.msra.mxu0 %v1276
    %3868 = vmatpush.msra.mxu0 %v1272
    %3869 = vmatmul.f32.gmra.mxu0 %v2146
    %v3870 = vpop.f32.mrf.mxu0
    %v3871 = vadd.f32 %v3851, %v3870
    %3872 = vdwg.mxu0
    %3873 = vmatpush.msra.mxu0 %v1396
    %3874 = vmatpush.msra.mxu0 %v1392
    %3875 = vmatpush.msra.mxu0 %v1388
    %3876 = vmatpush.msra.mxu0 %v1384
    %3877 = vmatpush.msra.mxu0 %v1380
    %3878 = vmatpush.msra.mxu0 %v1376
    %3879 = vmatpush.msra.mxu0 %v1372
    %3880 = vmatpush.msra.mxu0 %v1368
    %3881 = vmatpush.msra.mxu0 %v1364
    %3882 = vmatpush.msra.mxu0 %v1360
    %3883 = vmatpush.msra.mxu0 %v1356
    %3884 = vmatpush.msra.mxu0 %v1352
    %3885 = vmatpush.msra.mxu0 %v1348
    %3886 = vmatpush.msra.mxu0 %v1344
    %3887 = vmatpush.msra.mxu0 %v1340
    %3888 = vmatpush.msra.mxu0 %v1336
    %3889 = vmatmul.f32.gmra.mxu0 %v2147
    %v3890 = vpop.f32.mrf.mxu0
    %v3891 = vadd.f32 %v3871, %v3890
    %3892 = vdwg.mxu0
    %3893 = vmatpush.msra.mxu0 %v1460
    %3894 = vmatpush.msra.mxu0 %v1456
    %3895 = vmatpush.msra.mxu0 %v1452
    %3896 = vmatpush.msra.mxu0 %v1448
    %3897 = vmatpush.msra.mxu0 %v1444
    %3898 = vmatpush.msra.mxu0 %v1440
    %3899 = vmatpush.msra.mxu0 %v1436
    %3900 = vmatpush.msra.mxu0 %v1432
    %3901 = vmatpush.msra.mxu0 %v1428
    %3902 = vmatpush.msra.mxu0 %v1424
    %3903 = vmatpush.msra.mxu0 %v1420
    %3904 = vmatpush.msra.mxu0 %v1416
    %3905 = vmatpush.msra.mxu0 %v1412
    %3906 = vmatpush.msra.mxu0 %v1408
    %3907 = vmatpush.msra.mxu0 %v1404
    %3908 = vmatpush.msra.mxu0 %v1400
    %3909 = vmatmul.f32.gmra.mxu0 %v2148
    %v3910 = vpop.f32.mrf.mxu0
    %v3911 = vadd.f32 %v3891, %v3910
    %3912 = vdwg.mxu0
    %3913 = vmatpush.msra.mxu0 %v1524
    %3914 = vmatpush.msra.mxu0 %v1520
    %3915 = vmatpush.msra.mxu0 %v1516
    %3916 = vmatpush.msra.mxu0 %v1512
    %3917 = vmatpush.msra.mxu0 %v1508
    %3918 = vmatpush.msra.mxu0 %v1504
    %3919 = vmatpush.msra.mxu0 %v1500
    %3920 = vmatpush.msra.mxu0 %v1496
    %3921 = vmatpush.msra.mxu0 %v1492
    %3922 = vmatpush.msra.mxu0 %v1488
    %3923 = vmatpush.msra.mxu0 %v1484
    %3924 = vmatpush.msra.mxu0 %v1480
    %3925 = vmatpush.msra.mxu0 %v1476
    %3926 = vmatpush.msra.mxu0 %v1472
    %3927 = vmatpush.msra.mxu0 %v1468
    %3928 = vmatpush.msra.mxu0 %v1464
    %3929 = vmatmul.f32.gmra.mxu0 %v2149
    %v3930 = vpop.f32.mrf.mxu0
    %v3931 = vadd.f32 %v3911, %v3930
    %3932 = vdwg.mxu0
    %3933 = vmatpush.msra.mxu0 %v1588
    %3934 = vmatpush.msra.mxu0 %v1584
    %3935 = vmatpush.msra.mxu0 %v1580
    %3936 = vmatpush.msra.mxu0 %v1576
    %3937 = vmatpush.msra.mxu0 %v1572
    %3938 = vmatpush.msra.mxu0 %v1568
    %3939 = vmatpush.msra.mxu0 %v1564
    %3940 = vmatpush.msra.mxu0 %v1560
    %3941 = vmatpush.msra.mxu0 %v1556
    %3942 = vmatpush.msra.mxu0 %v1552
    %3943 = vmatpush.msra.mxu0 %v1548
    %3944 = vmatpush.msra.mxu0 %v1544
    %3945 = vmatpush.msra.mxu0 %v1540
    %3946 = vmatpush.msra.mxu0 %v1536
    %3947 = vmatpush.msra.mxu0 %v1532
    %3948 = vmatpush.msra.mxu0 %v1528
    %3949 = vmatmul.f32.gmra.mxu0 %v2150
    %v3950 = vpop.f32.mrf.mxu0
    %v3951 = vadd.f32 %v3931, %v3950
    %3952 = vdwg.mxu0
    %3953 = vmatpush.msra.mxu0 %v1652
    %3954 = vmatpush.msra.mxu0 %v1648
    %3955 = vmatpush.msra.mxu0 %v1644
    %3956 = vmatpush.msra.mxu0 %v1640
    %3957 = vmatpush.msra.mxu0 %v1636
    %3958 = vmatpush.msra.mxu0 %v1632
    %3959 = vmatpush.msra.mxu0 %v1628
    %3960 = vmatpush.msra.mxu0 %v1624
    %3961 = vmatpush.msra.mxu0 %v1620
    %3962 = vmatpush.msra.mxu0 %v1616
    %3963 = vmatpush.msra.mxu0 %v1612
    %3964 = vmatpush.msra.mxu0 %v1608
    %3965 = vmatpush.msra.mxu0 %v1604
    %3966 = vmatpush.msra.mxu0 %v1600
    %3967 = vmatpush.msra.mxu0 %v1596
    %3968 = vmatpush.msra.mxu0 %v1592
    %3969 = vmatmul.f32.gmra.mxu0 %v2153
    %v3970 = vpop.f32.mrf.mxu0
    %v3971 = vadd.f32 %v3951, %v3970
    %3972 = vdwg.mxu0
    %3973 = vmatpush.msra.mxu0 %v1716
    %3974 = vmatpush.msra.mxu0 %v1712
    %3975 = vmatpush.msra.mxu0 %v1708
    %3976 = vmatpush.msra.mxu0 %v1704
    %3977 = vmatpush.msra.mxu0 %v1700
    %3978 = vmatpush.msra.mxu0 %v1696
    %3979 = vmatpush.msra.mxu0 %v1692
    %3980 = vmatpush.msra.mxu0 %v1688
    %3981 = vmatpush.msra.mxu0 %v1684
    %3982 = vmatpush.msra.mxu0 %v1680
    %3983 = vmatpush.msra.mxu0 %v1676
    %3984 = vmatpush.msra.mxu0 %v1672
    %3985 = vmatpush.msra.mxu0 %v1668
    %3986 = vmatpush.msra.mxu0 %v1664
    %3987 = vmatpush.msra.mxu0 %v1660
    %3988 = vmatpush.msra.mxu0 %v1656
    %3989 = vmatmul.f32.gmra.mxu0 %v2154
    %v3990 = vpop.f32.mrf.mxu0
    %v3991 = vadd.f32 %v3971, %v3990
    %3992 = vdwg.mxu0
    %3993 = vmatpush.msra.mxu0 %v1780
    %3994 = vmatpush.msra.mxu0 %v1776
    %3995 = vmatpush.msra.mxu0 %v1772
    %3996 = vmatpush.msra.mxu0 %v1768
    %3997 = vmatpush.msra.mxu0 %v1764
    %3998 = vmatpush.msra.mxu0 %v1760
    %3999 = vmatpush.msra.mxu0 %v1756
    %4000 = vmatpush.msra.mxu0 %v1752
    %4001 = vmatpush.msra.mxu0 %v1748
    %4002 = vmatpush.msra.mxu0 %v1744
    %4003 = vmatpush.msra.mxu0 %v1740
    %4004 = vmatpush.msra.mxu0 %v1736
    %4005 = vmatpush.msra.mxu0 %v1732
    %4006 = vmatpush.msra.mxu0 %v1728
    %4007 = vmatpush.msra.mxu0 %v1724
    %4008 = vmatpush.msra.mxu0 %v1720
    %4009 = vmatmul.f32.gmra.mxu0 %v2155
    %v4010 = vpop.f32.mrf.mxu0
    %v4011 = vadd.f32 %v3991, %v4010
    %4012 = vdwg.mxu0
    %4013 = vmatpush.msra.mxu0 %v1844
    %4014 = vmatpush.msra.mxu0 %v1840
    %4015 = vmatpush.msra.mxu0 %v1836
    %4016 = vmatpush.msra.mxu0 %v1832
    %4017 = vmatpush.msra.mxu0 %v1828
    %4018 = vmatpush.msra.mxu0 %v1824
    %4019 = vmatpush.msra.mxu0 %v1820
    %4020 = vmatpush.msra.mxu0 %v1816
    %4021 = vmatpush.msra.mxu0 %v1812
    %4022 = vmatpush.msra.mxu0 %v1808
    %4023 = vmatpush.msra.mxu0 %v1804
    %4024 = vmatpush.msra.mxu0 %v1800
    %4025 = vmatpush.msra.mxu0 %v1796
    %4026 = vmatpush.msra.mxu0 %v1792
    %4027 = vmatpush.msra.mxu0 %v1788
    %4028 = vmatpush.msra.mxu0 %v1784
    %4029 = vmatmul.f32.gmra.mxu0 %v2156
    %v4030 = vpop.f32.mrf.mxu0
    %v4031 = vadd.f32 %v4011, %v4030
    %4032 = vdwg.mxu0
    %4033 = vmatpush.msra.mxu0 %v1908
    %4034 = vmatpush.msra.mxu0 %v1904
    %4035 = vmatpush.msra.mxu0 %v1900
    %4036 = vmatpush.msra.mxu0 %v1896
    %4037 = vmatpush.msra.mxu0 %v1892
    %4038 = vmatpush.msra.mxu0 %v1888
    %4039 = vmatpush.msra.mxu0 %v1884
    %4040 = vmatpush.msra.mxu0 %v1880
    %4041 = vmatpush.msra.mxu0 %v1876
    %4042 = vmatpush.msra.mxu0 %v1872
    %4043 = vmatpush.msra.mxu0 %v1868
    %4044 = vmatpush.msra.mxu0 %v1864
    %4045 = vmatpush.msra.mxu0 %v1860
    %4046 = vmatpush.msra.mxu0 %v1856
    %4047 = vmatpush.msra.mxu0 %v1852
    %4048 = vmatpush.msra.mxu0 %v1848
    %4049 = vmatmul.f32.gmra.mxu0 %v2157
    %v4050 = vpop.f32.mrf.mxu0
    %v4051 = vadd.f32 %v4031, %v4050
    %4052 = vdwg.mxu0
    %4053 = vmatpush.msra.mxu0 %v1972
    %4054 = vmatpush.msra.mxu0 %v1968
    %4055 = vmatpush.msra.mxu0 %v1964
    %4056 = vmatpush.msra.mxu0 %v1960
    %4057 = vmatpush.msra.mxu0 %v1956
    %4058 = vmatpush.msra.mxu0 %v1952
    %4059 = vmatpush.msra.mxu0 %v1948
    %4060 = vmatpush.msra.mxu0 %v1944
    %4061 = vmatpush.msra.mxu0 %v1940
    %4062 = vmatpush.msra.mxu0 %v1936
    %4063 = vmatpush.msra.mxu0 %v1932
    %4064 = vmatpush.msra.mxu0 %v1928
    %4065 = vmatpush.msra.mxu0 %v1924
    %4066 = vmatpush.msra.mxu0 %v1920
    %4067 = vmatpush.msra.mxu0 %v1916
    %4068 = vmatpush.msra.mxu0 %v1912
    %4069 = vmatmul.f32.gmra.mxu0 %v2158
    %v4070 = vpop.f32.mrf.mxu0
    %v4071 = vadd.f32 %v4051, %v4070
    %4072 = vdwg.mxu0
    %4073 = vmatpush.msra.mxu0 %v2036
    %4074 = vmatpush.msra.mxu0 %v2032
    %4075 = vmatpush.msra.mxu0 %v2028
    %4076 = vmatpush.msra.mxu0 %v2024
    %4077 = vmatpush.msra.mxu0 %v2020
    %4078 = vmatpush.msra.mxu0 %v2016
    %4079 = vmatpush.msra.mxu0 %v2012
    %4080 = vmatpush.msra.mxu0 %v2008
    %4081 = vmatpush.msra.mxu0 %v2004
    %4082 = vmatpush.msra.mxu0 %v2000
    %4083 = vmatpush.msra.mxu0 %v1996
    %4084 = vmatpush.msra.mxu0 %v1992
    %4085 = vmatpush.msra.mxu0 %v1988
    %4086 = vmatpush.msra.mxu0 %v1984
    %4087 = vmatpush.msra.mxu0 %v1980
    %4088 = vmatpush.msra.mxu0 %v1976
    %4089 = vmatmul.f32.gmra.mxu0 %v2159
    %v4090 = vpop.f32.mrf.mxu0
    %v4091 = vadd.f32 %v4071, %v4090
    %4092 = vdwg.mxu0
    %4093 = vmatpush.msra.mxu0 %v2100
    %4094 = vmatpush.msra.mxu0 %v2096
    %4095 = vmatpush.msra.mxu0 %v2092
    %4096 = vmatpush.msra.mxu0 %v2088
    %4097 = vmatpush.msra.mxu0 %v2084
    %4098 = vmatpush.msra.mxu0 %v2080
    %4099 = vmatpush.msra.mxu0 %v2076
    %4100 = vmatpush.msra.mxu0 %v2072
    %4101 = vmatpush.msra.mxu0 %v2068
    %4102 = vmatpush.msra.mxu0 %v2064
    %4103 = vmatpush.msra.mxu0 %v2060
    %4104 = vmatpush.msra.mxu0 %v2056
    %4105 = vmatpush.msra.mxu0 %v2052
    %4106 = vmatpush.msra.mxu0 %v2048
    %4107 = vmatpush.msra.mxu0 %v2044
    %4108 = vmatpush.msra.mxu0 %v2040
    %4109 = vmatmul.f32.gmra.mxu0 %v2160
    %v4110 = vpop.f32.mrf.mxu0
    %v4111 = vadd.f32 %v4091, %v4110
    %4112 = vdwg.mxu0
    %4113 = vmatpush.msra.mxu0 %v117
    %4114 = vmatpush.msra.mxu0 %v113
    %4115 = vmatpush.msra.mxu0 %v109
    %4116 = vmatpush.msra.mxu0 %v105
    %4117 = vmatpush.msra.mxu0 %v101
    %4118 = vmatpush.msra.mxu0 %v97
    %4119 = vmatpush.msra.mxu0 %v93
    %4120 = vmatpush.msra.mxu0 %v89
    %4121 = vmatpush.msra.mxu0 %v85
    %4122 = vmatpush.msra.mxu0 %v81
    %4123 = vmatpush.msra.mxu0 %v77
    %4124 = vmatpush.msra.mxu0 %v73
    %4125 = vmatpush.msra.mxu0 %v69
    %4126 = vmatpush.msra.mxu0 %v65
    %4127 = vmatpush.msra.mxu0 %v61
    %4128 = vmatpush.msra.mxu0 %v57
    %4129 = vmatmul.f32.gmra.mxu0 %v2123
    %v4130 = vpop.f32.mrf.mxu0
    %v4131 = vadd.f32 %v2107, %v4130
    %4132 = vdwg.mxu0
    %4133 = vmatpush.msra.mxu0 %v181
    %4134 = vmatpush.msra.mxu0 %v177
    %4135 = vmatpush.msra.mxu0 %v173
    %4136 = vmatpush.msra.mxu0 %v169
    %4137 = vmatpush.msra.mxu0 %v165
    %4138 = vmatpush.msra.mxu0 %v161
    %4139 = vmatpush.msra.mxu0 %v157
    %4140 = vmatpush.msra.mxu0 %v153
    %4141 = vmatpush.msra.mxu0 %v149
    %4142 = vmatpush.msra.mxu0 %v145
    %4143 = vmatpush.msra.mxu0 %v141
    %4144 = vmatpush.msra.mxu0 %v137
    %4145 = vmatpush.msra.mxu0 %v133
    %4146 = vmatpush.msra.mxu0 %v129
    %4147 = vmatpush.msra.mxu0 %v125
    %4148 = vmatpush.msra.mxu0 %v121
    %4149 = vmatmul.f32.gmra.mxu0 %v2124
    %v4150 = vpop.f32.mrf.mxu0
    %v4151 = vadd.f32 %v4131, %v4150
    %4152 = vdwg.mxu0
    %4153 = vmatpush.msra.mxu0 %v245
    %4154 = vmatpush.msra.mxu0 %v241
    %4155 = vmatpush.msra.mxu0 %v237
    %4156 = vmatpush.msra.mxu0 %v233
    %4157 = vmatpush.msra.mxu0 %v229
    %4158 = vmatpush.msra.mxu0 %v225
    %4159 = vmatpush.msra.mxu0 %v221
    %4160 = vmatpush.msra.mxu0 %v217
    %4161 = vmatpush.msra.mxu0 %v213
    %4162 = vmatpush.msra.mxu0 %v209
    %4163 = vmatpush.msra.mxu0 %v205
    %4164 = vmatpush.msra.mxu0 %v201
    %4165 = vmatpush.msra.mxu0 %v197
    %4166 = vmatpush.msra.mxu0 %v193
    %4167 = vmatpush.msra.mxu0 %v189
    %4168 = vmatpush.msra.mxu0 %v185
    %4169 = vmatmul.f32.gmra.mxu0 %v2125
    %v4170 = vpop.f32.mrf.mxu0
    %v4171 = vadd.f32 %v4151, %v4170
    %4172 = vdwg.mxu0
    %4173 = vmatpush.msra.mxu0 %v309
    %4174 = vmatpush.msra.mxu0 %v305
    %4175 = vmatpush.msra.mxu0 %v301
    %4176 = vmatpush.msra.mxu0 %v297
    %4177 = vmatpush.msra.mxu0 %v293
    %4178 = vmatpush.msra.mxu0 %v289
    %4179 = vmatpush.msra.mxu0 %v285
    %4180 = vmatpush.msra.mxu0 %v281
    %4181 = vmatpush.msra.mxu0 %v277
    %4182 = vmatpush.msra.mxu0 %v273
    %4183 = vmatpush.msra.mxu0 %v269
    %4184 = vmatpush.msra.mxu0 %v265
    %4185 = vmatpush.msra.mxu0 %v261
    %4186 = vmatpush.msra.mxu0 %v257
    %4187 = vmatpush.msra.mxu0 %v253
    %4188 = vmatpush.msra.mxu0 %v249
    %4189 = vmatmul.f32.gmra.mxu0 %v2126
    %v4190 = vpop.f32.mrf.mxu0
    %v4191 = vadd.f32 %v4171, %v4190
    %4192 = vdwg.mxu0
    %4193 = vmatpush.msra.mxu0 %v373
    %4194 = vmatpush.msra.mxu0 %v369
    %4195 = vmatpush.msra.mxu0 %v365
    %4196 = vmatpush.msra.mxu0 %v361
    %4197 = vmatpush.msra.mxu0 %v357
    %4198 = vmatpush.msra.mxu0 %v353
    %4199 = vmatpush.msra.mxu0 %v349
    %4200 = vmatpush.msra.mxu0 %v345
    %4201 = vmatpush.msra.mxu0 %v341
    %4202 = vmatpush.msra.mxu0 %v337
    %4203 = vmatpush.msra.mxu0 %v333
    %4204 = vmatpush.msra.mxu0 %v329
    %4205 = vmatpush.msra.mxu0 %v325
    %4206 = vmatpush.msra.mxu0 %v321
    %4207 = vmatpush.msra.mxu0 %v317
    %4208 = vmatpush.msra.mxu0 %v313
    %4209 = vmatmul.f32.gmra.mxu0 %v2127
    %v4210 = vpop.f32.mrf.mxu0
    %v4211 = vadd.f32 %v4191, %v4210
    %4212 = vdwg.mxu0
    %4213 = vmatpush.msra.mxu0 %v437
    %4214 = vmatpush.msra.mxu0 %v433
    %4215 = vmatpush.msra.mxu0 %v429
    %4216 = vmatpush.msra.mxu0 %v425
    %4217 = vmatpush.msra.mxu0 %v421
    %4218 = vmatpush.msra.mxu0 %v417
    %4219 = vmatpush.msra.mxu0 %v413
    %4220 = vmatpush.msra.mxu0 %v409
    %4221 = vmatpush.msra.mxu0 %v405
    %4222 = vmatpush.msra.mxu0 %v401
    %4223 = vmatpush.msra.mxu0 %v397
    %4224 = vmatpush.msra.mxu0 %v393
    %4225 = vmatpush.msra.mxu0 %v389
    %4226 = vmatpush.msra.mxu0 %v385
    %4227 = vmatpush.msra.mxu0 %v381
    %4228 = vmatpush.msra.mxu0 %v377
    %4229 = vmatmul.f32.gmra.mxu0 %v2128
    %v4230 = vpop.f32.mrf.mxu0
    %v4231 = vadd.f32 %v4211, %v4230
    %4232 = vdwg.mxu0
    %4233 = vmatpush.msra.mxu0 %v501
    %4234 = vmatpush.msra.mxu0 %v497
    %4235 = vmatpush.msra.mxu0 %v493
    %4236 = vmatpush.msra.mxu0 %v489
    %4237 = vmatpush.msra.mxu0 %v485
    %4238 = vmatpush.msra.mxu0 %v481
    %4239 = vmatpush.msra.mxu0 %v477
    %4240 = vmatpush.msra.mxu0 %v473
    %4241 = vmatpush.msra.mxu0 %v469
    %4242 = vmatpush.msra.mxu0 %v465
    %4243 = vmatpush.msra.mxu0 %v461
    %4244 = vmatpush.msra.mxu0 %v457
    %4245 = vmatpush.msra.mxu0 %v453
    %4246 = vmatpush.msra.mxu0 %v449
    %4247 = vmatpush.msra.mxu0 %v445
    %4248 = vmatpush.msra.mxu0 %v441
    %4249 = vmatmul.f32.gmra.mxu0 %v2129
    %v4250 = vpop.f32.mrf.mxu0
    %v4251 = vadd.f32 %v4231, %v4250
    %4252 = vdwg.mxu0
    %4253 = vmatpush.msra.mxu0 %v565
    %4254 = vmatpush.msra.mxu0 %v561
    %4255 = vmatpush.msra.mxu0 %v557
    %4256 = vmatpush.msra.mxu0 %v553
    %4257 = vmatpush.msra.mxu0 %v549
    %4258 = vmatpush.msra.mxu0 %v545
    %4259 = vmatpush.msra.mxu0 %v541
    %4260 = vmatpush.msra.mxu0 %v537
    %4261 = vmatpush.msra.mxu0 %v533
    %4262 = vmatpush.msra.mxu0 %v529
    %4263 = vmatpush.msra.mxu0 %v525
    %4264 = vmatpush.msra.mxu0 %v521
    %4265 = vmatpush.msra.mxu0 %v517
    %4266 = vmatpush.msra.mxu0 %v513
    %4267 = vmatpush.msra.mxu0 %v509
    %4268 = vmatpush.msra.mxu0 %v505
    %4269 = vmatmul.f32.gmra.mxu0 %v2130
    %v4270 = vpop.f32.mrf.mxu0
    %v4271 = vadd.f32 %v4251, %v4270
    %4272 = vdwg.mxu0
    %4273 = vmatpush.msra.mxu0 %v629
    %4274 = vmatpush.msra.mxu0 %v625
    %4275 = vmatpush.msra.mxu0 %v621
    %4276 = vmatpush.msra.mxu0 %v617
    %4277 = vmatpush.msra.mxu0 %v613
    %4278 = vmatpush.msra.mxu0 %v609
    %4279 = vmatpush.msra.mxu0 %v605
    %4280 = vmatpush.msra.mxu0 %v601
    %4281 = vmatpush.msra.mxu0 %v597
    %4282 = vmatpush.msra.mxu0 %v593
    %4283 = vmatpush.msra.mxu0 %v589
    %4284 = vmatpush.msra.mxu0 %v585
    %4285 = vmatpush.msra.mxu0 %v581
    %4286 = vmatpush.msra.mxu0 %v577
    %4287 = vmatpush.msra.mxu0 %v573
    %4288 = vmatpush.msra.mxu0 %v569
    %4289 = vmatmul.f32.gmra.mxu0 %v2133
    %v4290 = vpop.f32.mrf.mxu0
    %v4291 = vadd.f32 %v4271, %v4290
    %4292 = vdwg.mxu0
    %4293 = vmatpush.msra.mxu0 %v693
    %4294 = vmatpush.msra.mxu0 %v689
    %4295 = vmatpush.msra.mxu0 %v685
    %4296 = vmatpush.msra.mxu0 %v681
    %4297 = vmatpush.msra.mxu0 %v677
    %4298 = vmatpush.msra.mxu0 %v673
    %4299 = vmatpush.msra.mxu0 %v669
    %4300 = vmatpush.msra.mxu0 %v665
    %4301 = vmatpush.msra.mxu0 %v661
    %4302 = vmatpush.msra.mxu0 %v657
    %4303 = vmatpush.msra.mxu0 %v653
    %4304 = vmatpush.msra.mxu0 %v649
    %4305 = vmatpush.msra.mxu0 %v645
    %4306 = vmatpush.msra.mxu0 %v641
    %4307 = vmatpush.msra.mxu0 %v637
    %4308 = vmatpush.msra.mxu0 %v633
    %4309 = vmatmul.f32.gmra.mxu0 %v2134
    %v4310 = vpop.f32.mrf.mxu0
    %v4311 = vadd.f32 %v4291, %v4310
    %4312 = vdwg.mxu0
    %4313 = vmatpush.msra.mxu0 %v757
    %4314 = vmatpush.msra.mxu0 %v753
    %4315 = vmatpush.msra.mxu0 %v749
    %4316 = vmatpush.msra.mxu0 %v745
    %4317 = vmatpush.msra.mxu0 %v741
    %4318 = vmatpush.msra.mxu0 %v737
    %4319 = vmatpush.msra.mxu0 %v733
    %4320 = vmatpush.msra.mxu0 %v729
    %4321 = vmatpush.msra.mxu0 %v725
    %4322 = vmatpush.msra.mxu0 %v721
    %4323 = vmatpush.msra.mxu0 %v717
    %4324 = vmatpush.msra.mxu0 %v713
    %4325 = vmatpush.msra.mxu0 %v709
    %4326 = vmatpush.msra.mxu0 %v705
    %4327 = vmatpush.msra.mxu0 %v701
    %4328 = vmatpush.msra.mxu0 %v697
    %4329 = vmatmul.f32.gmra.mxu0 %v2135
    %v4330 = vpop.f32.mrf.mxu0
    %v4331 = vadd.f32 %v4311, %v4330
    %4332 = vdwg.mxu0
    %4333 = vmatpush.msra.mxu0 %v821
    %4334 = vmatpush.msra.mxu0 %v817
    %4335 = vmatpush.msra.mxu0 %v813
    %4336 = vmatpush.msra.mxu0 %v809
    %4337 = vmatpush.msra.mxu0 %v805
    %4338 = vmatpush.msra.mxu0 %v801
    %4339 = vmatpush.msra.mxu0 %v797
    %4340 = vmatpush.msra.mxu0 %v793
    %4341 = vmatpush.msra.mxu0 %v789
    %4342 = vmatpush.msra.mxu0 %v785
    %4343 = vmatpush.msra.mxu0 %v781
    %4344 = vmatpush.msra.mxu0 %v777
    %4345 = vmatpush.msra.mxu0 %v773
    %4346 = vmatpush.msra.mxu0 %v769
    %4347 = vmatpush.msra.mxu0 %v765
    %4348 = vmatpush.msra.mxu0 %v761
    %4349 = vmatmul.f32.gmra.mxu0 %v2136
    %v4350 = vpop.f32.mrf.mxu0
    %v4351 = vadd.f32 %v4331, %v4350
    %4352 = vdwg.mxu0
    %4353 = vmatpush.msra.mxu0 %v885
    %4354 = vmatpush.msra.mxu0 %v881
    %4355 = vmatpush.msra.mxu0 %v877
    %4356 = vmatpush.msra.mxu0 %v873
    %4357 = vmatpush.msra.mxu0 %v869
    %4358 = vmatpush.msra.mxu0 %v865
    %4359 = vmatpush.msra.mxu0 %v861
    %4360 = vmatpush.msra.mxu0 %v857
    %4361 = vmatpush.msra.mxu0 %v853
    %4362 = vmatpush.msra.mxu0 %v849
    %4363 = vmatpush.msra.mxu0 %v845
    %4364 = vmatpush.msra.mxu0 %v841
    %4365 = vmatpush.msra.mxu0 %v837
    %4366 = vmatpush.msra.mxu0 %v833
    %4367 = vmatpush.msra.mxu0 %v829
    %4368 = vmatpush.msra.mxu0 %v825
    %4369 = vmatmul.f32.gmra.mxu0 %v2137
    %v4370 = vpop.f32.mrf.mxu0
    %v4371 = vadd.f32 %v4351, %v4370
    %4372 = vdwg.mxu0
    %4373 = vmatpush.msra.mxu0 %v949
    %4374 = vmatpush.msra.mxu0 %v945
    %4375 = vmatpush.msra.mxu0 %v941
    %4376 = vmatpush.msra.mxu0 %v937
    %4377 = vmatpush.msra.mxu0 %v933
    %4378 = vmatpush.msra.mxu0 %v929
    %4379 = vmatpush.msra.mxu0 %v925
    %4380 = vmatpush.msra.mxu0 %v921
    %4381 = vmatpush.msra.mxu0 %v917
    %4382 = vmatpush.msra.mxu0 %v913
    %4383 = vmatpush.msra.mxu0 %v909
    %4384 = vmatpush.msra.mxu0 %v905
    %4385 = vmatpush.msra.mxu0 %v901
    %4386 = vmatpush.msra.mxu0 %v897
    %4387 = vmatpush.msra.mxu0 %v893
    %4388 = vmatpush.msra.mxu0 %v889
    %4389 = vmatmul.f32.gmra.mxu0 %v2138
    %v4390 = vpop.f32.mrf.mxu0
    %v4391 = vadd.f32 %v4371, %v4390
    %4392 = vdwg.mxu0
    %4393 = vmatpush.msra.mxu0 %v1013
    %4394 = vmatpush.msra.mxu0 %v1009
    %4395 = vmatpush.msra.mxu0 %v1005
    %4396 = vmatpush.msra.mxu0 %v1001
    %4397 = vmatpush.msra.mxu0 %v997
    %4398 = vmatpush.msra.mxu0 %v993
    %4399 = vmatpush.msra.mxu0 %v989
    %4400 = vmatpush.msra.mxu0 %v985
    %4401 = vmatpush.msra.mxu0 %v981
    %4402 = vmatpush.msra.mxu0 %v977
    %4403 = vmatpush.msra.mxu0 %v973
    %4404 = vmatpush.msra.mxu0 %v969
    %4405 = vmatpush.msra.mxu0 %v965
    %4406 = vmatpush.msra.mxu0 %v961
    %4407 = vmatpush.msra.mxu0 %v957
    %4408 = vmatpush.msra.mxu0 %v953
    %4409 = vmatmul.f32.gmra.mxu0 %v2139
    %v4410 = vpop.f32.mrf.mxu0
    %v4411 = vadd.f32 %v4391, %v4410
    %4412 = vdwg.mxu0
    %4413 = vmatpush.msra.mxu0 %v1077
    %4414 = vmatpush.msra.mxu0 %v1073
    %4415 = vmatpush.msra.mxu0 %v1069
    %4416 = vmatpush.msra.mxu0 %v1065
    %4417 = vmatpush.msra.mxu0 %v1061
    %4418 = vmatpush.msra.mxu0 %v1057
    %4419 = vmatpush.msra.mxu0 %v1053
    %4420 = vmatpush.msra.mxu0 %v1049
    %4421 = vmatpush.msra.mxu0 %v1045
    %4422 = vmatpush.msra.mxu0 %v1041
    %4423 = vmatpush.msra.mxu0 %v1037
    %4424 = vmatpush.msra.mxu0 %v1033
    %4425 = vmatpush.msra.mxu0 %v1029
    %4426 = vmatpush.msra.mxu0 %v1025
    %4427 = vmatpush.msra.mxu0 %v1021
    %4428 = vmatpush.msra.mxu0 %v1017
    %4429 = vmatmul.f32.gmra.mxu0 %v2140
    %v4430 = vpop.f32.mrf.mxu0
    %v4431 = vadd.f32 %v4411, %v4430
    %4432 = vdwg.mxu0
    %4433 = vmatpush.msra.mxu0 %v1141
    %4434 = vmatpush.msra.mxu0 %v1137
    %4435 = vmatpush.msra.mxu0 %v1133
    %4436 = vmatpush.msra.mxu0 %v1129
    %4437 = vmatpush.msra.mxu0 %v1125
    %4438 = vmatpush.msra.mxu0 %v1121
    %4439 = vmatpush.msra.mxu0 %v1117
    %4440 = vmatpush.msra.mxu0 %v1113
    %4441 = vmatpush.msra.mxu0 %v1109
    %4442 = vmatpush.msra.mxu0 %v1105
    %4443 = vmatpush.msra.mxu0 %v1101
    %4444 = vmatpush.msra.mxu0 %v1097
    %4445 = vmatpush.msra.mxu0 %v1093
    %4446 = vmatpush.msra.mxu0 %v1089
    %4447 = vmatpush.msra.mxu0 %v1085
    %4448 = vmatpush.msra.mxu0 %v1081
    %4449 = vmatmul.f32.gmra.mxu0 %v2143
    %v4450 = vpop.f32.mrf.mxu0
    %v4451 = vadd.f32 %v4431, %v4450
    %4452 = vdwg.mxu0
    %4453 = vmatpush.msra.mxu0 %v1205
    %4454 = vmatpush.msra.mxu0 %v1201
    %4455 = vmatpush.msra.mxu0 %v1197
    %4456 = vmatpush.msra.mxu0 %v1193
    %4457 = vmatpush.msra.mxu0 %v1189
    %4458 = vmatpush.msra.mxu0 %v1185
    %4459 = vmatpush.msra.mxu0 %v1181
    %4460 = vmatpush.msra.mxu0 %v1177
    %4461 = vmatpush.msra.mxu0 %v1173
    %4462 = vmatpush.msra.mxu0 %v1169
    %4463 = vmatpush.msra.mxu0 %v1165
    %4464 = vmatpush.msra.mxu0 %v1161
    %4465 = vmatpush.msra.mxu0 %v1157
    %4466 = vmatpush.msra.mxu0 %v1153
    %4467 = vmatpush.msra.mxu0 %v1149
    %4468 = vmatpush.msra.mxu0 %v1145
    %4469 = vmatmul.f32.gmra.mxu0 %v2144
    %v4470 = vpop.f32.mrf.mxu0
    %v4471 = vadd.f32 %v4451, %v4470
    %4472 = vdwg.mxu0
    %4473 = vmatpush.msra.mxu0 %v1269
    %4474 = vmatpush.msra.mxu0 %v1265
    %4475 = vmatpush.msra.mxu0 %v1261
    %4476 = vmatpush.msra.mxu0 %v1257
    %4477 = vmatpush.msra.mxu0 %v1253
    %4478 = vmatpush.msra.mxu0 %v1249
    %4479 = vmatpush.msra.mxu0 %v1245
    %4480 = vmatpush.msra.mxu0 %v1241
    %4481 = vmatpush.msra.mxu0 %v1237
    %4482 = vmatpush.msra.mxu0 %v1233
    %4483 = vmatpush.msra.mxu0 %v1229
    %4484 = vmatpush.msra.mxu0 %v1225
    %4485 = vmatpush.msra.mxu0 %v1221
    %4486 = vmatpush.msra.mxu0 %v1217
    %4487 = vmatpush.msra.mxu0 %v1213
    %4488 = vmatpush.msra.mxu0 %v1209
    %4489 = vmatmul.f32.gmra.mxu0 %v2145
    %v4490 = vpop.f32.mrf.mxu0
    %v4491 = vadd.f32 %v4471, %v4490
    %4492 = vdwg.mxu0
    %4493 = vmatpush.msra.mxu0 %v1333
    %4494 = vmatpush.msra.mxu0 %v1329
    %4495 = vmatpush.msra.mxu0 %v1325
    %4496 = vmatpush.msra.mxu0 %v1321
    %4497 = vmatpush.msra.mxu0 %v1317
    %4498 = vmatpush.msra.mxu0 %v1313
    %4499 = vmatpush.msra.mxu0 %v1309
    %4500 = vmatpush.msra.mxu0 %v1305
    %4501 = vmatpush.msra.mxu0 %v1301
    %4502 = vmatpush.msra.mxu0 %v1297
    %4503 = vmatpush.msra.mxu0 %v1293
    %4504 = vmatpush.msra.mxu0 %v1289
    %4505 = vmatpush.msra.mxu0 %v1285
    %4506 = vmatpush.msra.mxu0 %v1281
    %4507 = vmatpush.msra.mxu0 %v1277
    %4508 = vmatpush.msra.mxu0 %v1273
    %4509 = vmatmul.f32.gmra.mxu0 %v2146
    %v4510 = vpop.f32.mrf.mxu0
    %v4511 = vadd.f32 %v4491, %v4510
    %4512 = vdwg.mxu0
    %4513 = vmatpush.msra.mxu0 %v1397
    %4514 = vmatpush.msra.mxu0 %v1393
    %4515 = vmatpush.msra.mxu0 %v1389
    %4516 = vmatpush.msra.mxu0 %v1385
    %4517 = vmatpush.msra.mxu0 %v1381
    %4518 = vmatpush.msra.mxu0 %v1377
    %4519 = vmatpush.msra.mxu0 %v1373
    %4520 = vmatpush.msra.mxu0 %v1369
    %4521 = vmatpush.msra.mxu0 %v1365
    %4522 = vmatpush.msra.mxu0 %v1361
    %4523 = vmatpush.msra.mxu0 %v1357
    %4524 = vmatpush.msra.mxu0 %v1353
    %4525 = vmatpush.msra.mxu0 %v1349
    %4526 = vmatpush.msra.mxu0 %v1345
    %4527 = vmatpush.msra.mxu0 %v1341
    %4528 = vmatpush.msra.mxu0 %v1337
    %4529 = vmatmul.f32.gmra.mxu0 %v2147
    %v4530 = vpop.f32.mrf.mxu0
    %v4531 = vadd.f32 %v4511, %v4530
    %4532 = vdwg.mxu0
    %4533 = vmatpush.msra.mxu0 %v1461
    %4534 = vmatpush.msra.mxu0 %v1457
    %4535 = vmatpush.msra.mxu0 %v1453
    %4536 = vmatpush.msra.mxu0 %v1449
    %4537 = vmatpush.msra.mxu0 %v1445
    %4538 = vmatpush.msra.mxu0 %v1441
    %4539 = vmatpush.msra.mxu0 %v1437
    %4540 = vmatpush.msra.mxu0 %v1433
    %4541 = vmatpush.msra.mxu0 %v1429
    %4542 = vmatpush.msra.mxu0 %v1425
    %4543 = vmatpush.msra.mxu0 %v1421
    %4544 = vmatpush.msra.mxu0 %v1417
    %4545 = vmatpush.msra.mxu0 %v1413
    %4546 = vmatpush.msra.mxu0 %v1409
    %4547 = vmatpush.msra.mxu0 %v1405
    %4548 = vmatpush.msra.mxu0 %v1401
    %4549 = vmatmul.f32.gmra.mxu0 %v2148
    %v4550 = vpop.f32.mrf.mxu0
    %v4551 = vadd.f32 %v4531, %v4550
    %4552 = vdwg.mxu0
    %4553 = vmatpush.msra.mxu0 %v1525
    %4554 = vmatpush.msra.mxu0 %v1521
    %4555 = vmatpush.msra.mxu0 %v1517
    %4556 = vmatpush.msra.mxu0 %v1513
    %4557 = vmatpush.msra.mxu0 %v1509
    %4558 = vmatpush.msra.mxu0 %v1505
    %4559 = vmatpush.msra.mxu0 %v1501
    %4560 = vmatpush.msra.mxu0 %v1497
    %4561 = vmatpush.msra.mxu0 %v1493
    %4562 = vmatpush.msra.mxu0 %v1489
    %4563 = vmatpush.msra.mxu0 %v1485
    %4564 = vmatpush.msra.mxu0 %v1481
    %4565 = vmatpush.msra.mxu0 %v1477
    %4566 = vmatpush.msra.mxu0 %v1473
    %4567 = vmatpush.msra.mxu0 %v1469
    %4568 = vmatpush.msra.mxu0 %v1465
    %4569 = vmatmul.f32.gmra.mxu0 %v2149
    %v4570 = vpop.f32.mrf.mxu0
    %v4571 = vadd.f32 %v4551, %v4570
    %4572 = vdwg.mxu0
    %4573 = vmatpush.msra.mxu0 %v1589
    %4574 = vmatpush.msra.mxu0 %v1585
    %4575 = vmatpush.msra.mxu0 %v1581
    %4576 = vmatpush.msra.mxu0 %v1577
    %4577 = vmatpush.msra.mxu0 %v1573
    %4578 = vmatpush.msra.mxu0 %v1569
    %4579 = vmatpush.msra.mxu0 %v1565
    %4580 = vmatpush.msra.mxu0 %v1561
    %4581 = vmatpush.msra.mxu0 %v1557
    %4582 = vmatpush.msra.mxu0 %v1553
    %4583 = vmatpush.msra.mxu0 %v1549
    %4584 = vmatpush.msra.mxu0 %v1545
    %4585 = vmatpush.msra.mxu0 %v1541
    %4586 = vmatpush.msra.mxu0 %v1537
    %4587 = vmatpush.msra.mxu0 %v1533
    %4588 = vmatpush.msra.mxu0 %v1529
    %4589 = vmatmul.f32.gmra.mxu0 %v2150
    %v4590 = vpop.f32.mrf.mxu0
    %v4591 = vadd.f32 %v4571, %v4590
    %4592 = vdwg.mxu0
    %4593 = vmatpush.msra.mxu0 %v1653
    %4594 = vmatpush.msra.mxu0 %v1649
    %4595 = vmatpush.msra.mxu0 %v1645
    %4596 = vmatpush.msra.mxu0 %v1641
    %4597 = vmatpush.msra.mxu0 %v1637
    %4598 = vmatpush.msra.mxu0 %v1633
    %4599 = vmatpush.msra.mxu0 %v1629
    %4600 = vmatpush.msra.mxu0 %v1625
    %4601 = vmatpush.msra.mxu0 %v1621
    %4602 = vmatpush.msra.mxu0 %v1617
    %4603 = vmatpush.msra.mxu0 %v1613
    %4604 = vmatpush.msra.mxu0 %v1609
    %4605 = vmatpush.msra.mxu0 %v1605
    %4606 = vmatpush.msra.mxu0 %v1601
    %4607 = vmatpush.msra.mxu0 %v1597
    %4608 = vmatpush.msra.mxu0 %v1593
    %4609 = vmatmul.f32.gmra.mxu0 %v2153
    %v4610 = vpop.f32.mrf.mxu0
    %v4611 = vadd.f32 %v4591, %v4610
    %4612 = vdwg.mxu0
    %4613 = vmatpush.msra.mxu0 %v1717
    %4614 = vmatpush.msra.mxu0 %v1713
    %4615 = vmatpush.msra.mxu0 %v1709
    %4616 = vmatpush.msra.mxu0 %v1705
    %4617 = vmatpush.msra.mxu0 %v1701
    %4618 = vmatpush.msra.mxu0 %v1697
    %4619 = vmatpush.msra.mxu0 %v1693
    %4620 = vmatpush.msra.mxu0 %v1689
    %4621 = vmatpush.msra.mxu0 %v1685
    %4622 = vmatpush.msra.mxu0 %v1681
    %4623 = vmatpush.msra.mxu0 %v1677
    %4624 = vmatpush.msra.mxu0 %v1673
    %4625 = vmatpush.msra.mxu0 %v1669
    %4626 = vmatpush.msra.mxu0 %v1665
    %4627 = vmatpush.msra.mxu0 %v1661
    %4628 = vmatpush.msra.mxu0 %v1657
    %4629 = vmatmul.f32.gmra.mxu0 %v2154
    %v4630 = vpop.f32.mrf.mxu0
    %v4631 = vadd.f32 %v4611, %v4630
    %4632 = vdwg.mxu0
    %4633 = vmatpush.msra.mxu0 %v1781
    %4634 = vmatpush.msra.mxu0 %v1777
    %4635 = vmatpush.msra.mxu0 %v1773
    %4636 = vmatpush.msra.mxu0 %v1769
    %4637 = vmatpush.msra.mxu0 %v1765
    %4638 = vmatpush.msra.mxu0 %v1761
    %4639 = vmatpush.msra.mxu0 %v1757
    %4640 = vmatpush.msra.mxu0 %v1753
    %4641 = vmatpush.msra.mxu0 %v1749
    %4642 = vmatpush.msra.mxu0 %v1745
    %4643 = vmatpush.msra.mxu0 %v1741
    %4644 = vmatpush.msra.mxu0 %v1737
    %4645 = vmatpush.msra.mxu0 %v1733
    %4646 = vmatpush.msra.mxu0 %v1729
    %4647 = vmatpush.msra.mxu0 %v1725
    %4648 = vmatpush.msra.mxu0 %v1721
    %4649 = vmatmul.f32.gmra.mxu0 %v2155
    %v4650 = vpop.f32.mrf.mxu0
    %v4651 = vadd.f32 %v4631, %v4650
    %4652 = vdwg.mxu0
    %4653 = vmatpush.msra.mxu0 %v1845
    %4654 = vmatpush.msra.mxu0 %v1841
    %4655 = vmatpush.msra.mxu0 %v1837
    %4656 = vmatpush.msra.mxu0 %v1833
    %4657 = vmatpush.msra.mxu0 %v1829
    %4658 = vmatpush.msra.mxu0 %v1825
    %4659 = vmatpush.msra.mxu0 %v1821
    %4660 = vmatpush.msra.mxu0 %v1817
    %4661 = vmatpush.msra.mxu0 %v1813
    %4662 = vmatpush.msra.mxu0 %v1809
    %4663 = vmatpush.msra.mxu0 %v1805
    %4664 = vmatpush.msra.mxu0 %v1801
    %4665 = vmatpush.msra.mxu0 %v1797
    %4666 = vmatpush.msra.mxu0 %v1793
    %4667 = vmatpush.msra.mxu0 %v1789
    %4668 = vmatpush.msra.mxu0 %v1785
    %4669 = vmatmul.f32.gmra.mxu0 %v2156
    %v4670 = vpop.f32.mrf.mxu0
    %v4671 = vadd.f32 %v4651, %v4670
    %4672 = vdwg.mxu0
    %4673 = vmatpush.msra.mxu0 %v1909
    %4674 = vmatpush.msra.mxu0 %v1905
    %4675 = vmatpush.msra.mxu0 %v1901
    %4676 = vmatpush.msra.mxu0 %v1897
    %4677 = vmatpush.msra.mxu0 %v1893
    %4678 = vmatpush.msra.mxu0 %v1889
    %4679 = vmatpush.msra.mxu0 %v1885
    %4680 = vmatpush.msra.mxu0 %v1881
    %4681 = vmatpush.msra.mxu0 %v1877
    %4682 = vmatpush.msra.mxu0 %v1873
    %4683 = vmatpush.msra.mxu0 %v1869
    %4684 = vmatpush.msra.mxu0 %v1865
    %4685 = vmatpush.msra.mxu0 %v1861
    %4686 = vmatpush.msra.mxu0 %v1857
    %4687 = vmatpush.msra.mxu0 %v1853
    %4688 = vmatpush.msra.mxu0 %v1849
    %4689 = vmatmul.f32.gmra.mxu0 %v2157
    %v4690 = vpop.f32.mrf.mxu0
    %v4691 = vadd.f32 %v4671, %v4690
    %4692 = vdwg.mxu0
    %4693 = vmatpush.msra.mxu0 %v1973
    %4694 = vmatpush.msra.mxu0 %v1969
    %4695 = vmatpush.msra.mxu0 %v1965
    %4696 = vmatpush.msra.mxu0 %v1961
    %4697 = vmatpush.msra.mxu0 %v1957
    %4698 = vmatpush.msra.mxu0 %v1953
    %4699 = vmatpush.msra.mxu0 %v1949
    %4700 = vmatpush.msra.mxu0 %v1945
    %4701 = vmatpush.msra.mxu0 %v1941
    %4702 = vmatpush.msra.mxu0 %v1937
    %4703 = vmatpush.msra.mxu0 %v1933
    %4704 = vmatpush.msra.mxu0 %v1929
    %4705 = vmatpush.msra.mxu0 %v1925
    %4706 = vmatpush.msra.mxu0 %v1921
    %4707 = vmatpush.msra.mxu0 %v1917
    %4708 = vmatpush.msra.mxu0 %v1913
    %4709 = vmatmul.f32.gmra.mxu0 %v2158
    %v4710 = vpop.f32.mrf.mxu0
    %v4711 = vadd.f32 %v4691, %v4710
    %4712 = vdwg.mxu0
    %4713 = vmatpush.msra.mxu0 %v2037
    %4714 = vmatpush.msra.mxu0 %v2033
    %4715 = vmatpush.msra.mxu0 %v2029
    %4716 = vmatpush.msra.mxu0 %v2025
    %4717 = vmatpush.msra.mxu0 %v2021
    %4718 = vmatpush.msra.mxu0 %v2017
    %4719 = vmatpush.msra.mxu0 %v2013
    %4720 = vmatpush.msra.mxu0 %v2009
    %4721 = vmatpush.msra.mxu0 %v2005
    %4722 = vmatpush.msra.mxu0 %v2001
    %4723 = vmatpush.msra.mxu0 %v1997
    %4724 = vmatpush.msra.mxu0 %v1993
    %4725 = vmatpush.msra.mxu0 %v1989
    %4726 = vmatpush.msra.mxu0 %v1985
    %4727 = vmatpush.msra.mxu0 %v1981
    %4728 = vmatpush.msra.mxu0 %v1977
    %4729 = vmatmul.f32.gmra.mxu0 %v2159
    %v4730 = vpop.f32.mrf.mxu0
    %v4731 = vadd.f32 %v4711, %v4730
    %4732 = vdwg.mxu0
    %4733 = vmatpush.msra.mxu0 %v2101
    %4734 = vmatpush.msra.mxu0 %v2097
    %4735 = vmatpush.msra.mxu0 %v2093
    %4736 = vmatpush.msra.mxu0 %v2089
    %4737 = vmatpush.msra.mxu0 %v2085
    %4738 = vmatpush.msra.mxu0 %v2081
    %4739 = vmatpush.msra.mxu0 %v2077
    %4740 = vmatpush.msra.mxu0 %v2073
    %4741 = vmatpush.msra.mxu0 %v2069
    %4742 = vmatpush.msra.mxu0 %v2065
    %4743 = vmatpush.msra.mxu0 %v2061
    %4744 = vmatpush.msra.mxu0 %v2057
    %4745 = vmatpush.msra.mxu0 %v2053
    %4746 = vmatpush.msra.mxu0 %v2049
    %4747 = vmatpush.msra.mxu0 %v2045
    %4748 = vmatpush.msra.mxu0 %v2041
    %4749 = vmatmul.f32.gmra.mxu0 %v2160
    %v4750 = vpop.f32.mrf.mxu0
    %v4751 = vadd.f32 %v4731, %v4750
    %4752 = vdwg.mxu0
    %v4753 = vmax.f32 %v2831, 0.0
    %v4754 = vmax.f32 %v3471, 0.0
    %v4755 = vmax.f32 %v4111, 0.0
    %v4756 = vmax.f32 %v4751, 0.0
    %v4757 = vld [vmem:[%s3] sm:$0xff]
    %v4758 = vld [vmem:[%s3 + $0x8] sm:$0xff]
    %v4759 = vld [vmem:[%s3 + $0x10] sm:$0xff]
    %v4760 = vld [vmem:[%s3 + $0x18] sm:$0xff]
    %v4761 = vld [vmem:[%s3 + $0x20] sm:$0xff]
    %v4762 = vld [vmem:[%s3 + $0x28] sm:$0xff]
    %v4763 = vld [vmem:[%s3 + $0x30] sm:$0xff]
    %v4764 = vld [vmem:[%s3 + $0x38] sm:$0xff]
    %v4765 = vld [vmem:[%s3 + $0x40] sm:$0xff]
    %v4766 = vld [vmem:[%s3 + $0x48] sm:$0xff]
    %v4767 = vld [vmem:[%s3 + $0x50] sm:$0xff]
    %v4768 = vld [vmem:[%s3 + $0x58] sm:$0xff]
    %v4769 = vld [vmem:[%s3 + $0x60] sm:$0xff]
    %v4770 = vld [vmem:[%s3 + $0x68] sm:$0xff]
    %v4771 = vld [vmem:[%s3 + $0x70] sm:$0xff]
    %v4772 = vld [vmem:[%s3 + $0x78] sm:$0xff]
    %v4773 = vld [vmem:[%s3 + $0x80] sm:$0xff]
    %v4774 = vld [vmem:[%s3 + $0x88] sm:$0xff]
    %v4775 = vld [vmem:[%s3 + $0x90] sm:$0xff]
    %v4776 = vld [vmem:[%s3 + $0x98] sm:$0xff]
    %v4777 = vld [vmem:[%s3 + $0xa0] sm:$0xff]
    %v4778 = vld [vmem:[%s3 + $0xa8] sm:$0xff]
    %v4779 = vld [vmem:[%s3 + $0xb0] sm:$0xff]
    %v4780 = vld [vmem:[%s3 + $0xb8] sm:$0xff]
    %v4781 = vld [vmem:[%s3 + $0xc0] sm:$0xff]
    %v4782 = vld [vmem:[%s3 + $0xc8] sm:$0xff]
    %v4783 = vld [vmem:[%s3 + $0xd0] sm:$0xff]
    %v4784 = vld [vmem:[%s3 + $0xd8] sm:$0xff]
    %v4785 = vld [vmem:[%s3 + $0xe0] sm:$0xff]
    %v4786 = vld [vmem:[%s3 + $0xe8] sm:$0xff]
    %v4787 = vld [vmem:[%s3 + $0xf0] sm:$0xff]
    %v4788 = vld [vmem:[%s3 + $0xf8] sm:$0xff]
    %v4789 = vld [vmem:[%s3 + $0x100] sm:$0xff]
    %v4790 = vld [vmem:[%s3 + $0x108] sm:$0xff]
    %v4791 = vld [vmem:[%s3 + $0x110] sm:$0xff]
    %v4792 = vld [vmem:[%s3 + $0x118] sm:$0xff]
    %v4793 = vld [vmem:[%s3 + $0x120] sm:$0xff]
    %v4794 = vld [vmem:[%s3 + $0x128] sm:$0xff]
    %v4795 = vld [vmem:[%s3 + $0x130] sm:$0xff]
    %v4796 = vld [vmem:[%s3 + $0x138] sm:$0xff]
    %v4797 = vld [vmem:[%s3 + $0x140] sm:$0xff]
    %v4798 = vld [vmem:[%s3 + $0x148] sm:$0xff]
    %v4799 = vld [vmem:[%s3 + $0x150] sm:$0xff]
    %v4800 = vld [vmem:[%s3 + $0x158] sm:$0xff]
    %v4801 = vld [vmem:[%s3 + $0x160] sm:$0xff]
    %v4802 = vld [vmem:[%s3 + $0x168] sm:$0xff]
    %v4803 = vld [vmem:[%s3 + $0x170] sm:$0xff]
    %v4804 = vld [vmem:[%s3 + $0x178] sm:$0xff]
    %v4805 = vld [vmem:[%s3 + $0x180] sm:$0xff]
    %v4806 = vld [vmem:[%s3 + $0x188] sm:$0xff]
    %v4807 = vld [vmem:[%s4] sm:$0x1]
    %v4809 = vperm.slane %v4807, 0
    %vm4811 = vcmask 130048
    %v4813 = vsel %vm4811, %v4756, 0
    %4815 = vmatpush.msra.mxu0 %v4772
    %4816 = vmatpush.msra.mxu0 %v4771
    %4817 = vmatpush.msra.mxu0 %v4770
    %4818 = vmatpush.msra.mxu0 %v4769
    %4819 = vmatpush.msra.mxu0 %v4768
    %4820 = vmatpush.msra.mxu0 %v4767
    %4821 = vmatpush.msra.mxu0 %v4766
    %4822 = vmatpush.msra.mxu0 %v4765
    %4823 = vmatpush.msra.mxu0 %v4764
    %4824 = vmatpush.msra.mxu0 %v4763
    %4825 = vmatpush.msra.mxu0 %v4762
    %4826 = vmatpush.msra.mxu0 %v4761
    %4827 = vmatpush.msra.mxu0 %v4760
    %4828 = vmatpush.msra.mxu0 %v4759
    %4829 = vmatpush.msra.mxu0 %v4758
    %4830 = vmatpush.msra.mxu0 %v4757
    %4831 = vmatmul.f32.gmra.mxu0 %v4753
    %v4832 = vpop.f32.mrf.mxu0
    %v4833 = vadd.f32 %v4809, %v4832
    %4834 = vdwg.mxu0
    %4835 = vmatpush.msra.mxu0 %v4788
    %4836 = vmatpush.msra.mxu0 %v4787
    %4837 = vmatpush.msra.mxu0 %v4786
    %4838 = vmatpush.msra.mxu0 %v4785
    %4839 = vmatpush.msra.mxu0 %v4784
    %4840 = vmatpush.msra.mxu0 %v4783
    %4841 = vmatpush.msra.mxu0 %v4782
    %4842 = vmatpush.msra.mxu0 %v4781
    %4843 = vmatpush.msra.mxu0 %v4780
    %4844 = vmatpush.msra.mxu0 %v4779
    %4845 = vmatpush.msra.mxu0 %v4778
    %4846 = vmatpush.msra.mxu0 %v4777
    %4847 = vmatpush.msra.mxu0 %v4776
    %4848 = vmatpush.msra.mxu0 %v4775
    %4849 = vmatpush.msra.mxu0 %v4774
    %4850 = vmatpush.msra.mxu0 %v4773
    %4851 = vmatmul.f32.gmra.mxu0 %v4754
    %v4852 = vpop.f32.mrf.mxu0
    %v4853 = vadd.f32 %v4833, %v4852
    %4854 = vdwg.mxu0
    %4855 = vmatpush.msra.mxu0 %v4804
    %4856 = vmatpush.msra.mxu0 %v4803
    %4857 = vmatpush.msra.mxu0 %v4802
    %4858 = vmatpush.msra.mxu0 %v4801
    %4859 = vmatpush.msra.mxu0 %v4800
    %4860 = vmatpush.msra.mxu0 %v4799
    %4861 = vmatpush.msra.mxu0 %v4798
    %4862 = vmatpush.msra.mxu0 %v4797
    %4863 = vmatpush.msra.mxu0 %v4796
    %4864 = vmatpush.msra.mxu0 %v4795
    %4865 = vmatpush.msra.mxu0 %v4794
    %4866 = vmatpush.msra.mxu0 %v4793
    %4867 = vmatpush.msra.mxu0 %v4792
    %4868 = vmatpush.msra.mxu0 %v4791
    %4869 = vmatpush.msra.mxu0 %v4790
    %4870 = vmatpush.msra.mxu0 %v4789
    %4871 = vmatmul.f32.gmra.mxu0 %v4755
    %v4872 = vpop.f32.mrf.mxu0
    %v4873 = vadd.f32 %v4853, %v4872
    %4874 = vdwg.mxu0
    %4875 = vmatpush.msra.mxu0 0.0
    %4876 = vmatpush.msra.mxu0 0.0
    %4877 = vmatpush.msra.mxu0 0.0
    %4878 = vmatpush.msra.mxu0 0.0
    %4879 = vmatpush.msra.mxu0 0.0
    %4880 = vmatpush.msra.mxu0 0.0
    %4881 = vmatpush.msra.mxu0 0.0
    %4882 = vmatpush.msra.mxu0 0.0
    %4883 = vmatpush.msra.mxu0 0.0
    %4884 = vmatpush.msra.mxu0 0.0
    %4885 = vmatpush.msra.mxu0 0.0
    %4886 = vmatpush.msra.mxu0 0.0
    %4887 = vmatpush.msra.mxu0 0.0
    %4888 = vmatpush.msra.mxu0 0.0
    %4889 = vmatpush.msra.mxu0 %v4806
    %4890 = vmatpush.msra.mxu0 %v4805
    %4891 = vmatmul.f32.gmra.mxu0 %v4813
    %v4892 = vpop.f32.mrf.mxu0
    %v4893 = vadd.f32 %v4873, %v4892
    %4894 = vdwg.mxu0
    %v4895 = vld [vmem:[%s5] sm:$0xff]
    %v4896 = vld [vmem:[%s5 + $0x8] sm:$0xff]
    %v4897 = vld [vmem:[%s5 + $0x10] sm:$0xff]
    %v4898 = vld [vmem:[%s5 + $0x18] sm:$0xff]
    %v4899 = vld [vmem:[%s5 + $0x20] sm:$0xff]
    %v4900 = vld [vmem:[%s5 + $0x28] sm:$0xff]
    %v4901 = vld [vmem:[%s5 + $0x30] sm:$0xff]
    %v4902 = vld [vmem:[%s5 + $0x38] sm:$0xff]
    %v4903 = vld [vmem:[%s5 + $0x40] sm:$0xff]
    %v4904 = vld [vmem:[%s5 + $0x48] sm:$0xff]
    %v4905 = vld [vmem:[%s5 + $0x50] sm:$0xff]
    %v4906 = vld [vmem:[%s5 + $0x58] sm:$0xff]
    %v4907 = vld [vmem:[%s5 + $0x60] sm:$0xff]
    %v4908 = vld [vmem:[%s5 + $0x68] sm:$0xff]
    %v4909 = vld [vmem:[%s5 + $0x70] sm:$0xff]
    %v4910 = vld [vmem:[%s5 + $0x78] sm:$0xff]
    %v4911 = vld [vmem:[%s5 + $0x80] sm:$0xff]
    %v4912 = vld [vmem:[%s5 + $0x88] sm:$0xff]
    %v4913 = vld [vmem:[%s5 + $0x90] sm:$0xff]
    %v4914 = vld [vmem:[%s5 + $0x98] sm:$0xff]
    %v4915 = vld [vmem:[%s5 + $0xa0] sm:$0xff]
    %v4916 = vld [vmem:[%s5 + $0xa8] sm:$0xff]
    %v4917 = vld [vmem:[%s5 + $0xb0] sm:$0xff]
    %v4918 = vld [vmem:[%s5 + $0xb8] sm:$0xff]
    %v4919 = vld [vmem:[%s5 + $0xc0] sm:$0xff]
    %v4920 = vld [vmem:[%s5 + $0xc8] sm:$0xff]
    %v4921 = vld [vmem:[%s5 + $0xd0] sm:$0xff]
    %v4922 = vld [vmem:[%s5 + $0xd8] sm:$0xff]
    %v4923 = vld [vmem:[%s5 + $0xe0] sm:$0xff]
    %v4924 = vld [vmem:[%s5 + $0xe8] sm:$0xff]
    %v4925 = vld [vmem:[%s5 + $0xf0] sm:$0xff]
    %v4926 = vld [vmem:[%s5 + $0xf8] sm:$0xff]
    %v4927 = vld [vmem:[%s5 + $0x100] sm:$0xff]
    %v4928 = vld [vmem:[%s5 + $0x108] sm:$0xff]
    %v4929 = vld [vmem:[%s5 + $0x110] sm:$0xff]
    %v4930 = vld [vmem:[%s5 + $0x118] sm:$0xff]
    %v4931 = vld [vmem:[%s5 + $0x120] sm:$0xff]
    %v4932 = vld [vmem:[%s5 + $0x128] sm:$0xff]
    %v4933 = vld [vmem:[%s5 + $0x130] sm:$0xff]
    %v4934 = vld [vmem:[%s5 + $0x138] sm:$0xff]
    %v4935 = vld [vmem:[%s5 + $0x140] sm:$0xff]
    %v4936 = vld [vmem:[%s5 + $0x148] sm:$0xff]
    %v4937 = vld [vmem:[%s5 + $0x150] sm:$0xff]
    %v4938 = vld [vmem:[%s5 + $0x158] sm:$0xff]
    %v4939 = vld [vmem:[%s5 + $0x160] sm:$0xff]
    %v4940 = vld [vmem:[%s5 + $0x168] sm:$0xff]
    %v4941 = vld [vmem:[%s5 + $0x170] sm:$0xff]
    %v4942 = vld [vmem:[%s5 + $0x178] sm:$0xff]
    %v4943 = vld [vmem:[%s5 + $0x180] sm:$0xff]
    %v4944 = vld [vmem:[%s5 + $0x188] sm:$0xff]
    %v4945 = vld [vmem:[%s6] sm:$0x1]
    %v4947 = vperm.slane %v4945, 0
    %4949 = vmatpush.msra.mxu0 %v4910
    %4950 = vmatpush.msra.mxu0 %v4909
    %4951 = vmatpush.msra.mxu0 %v4908
    %4952 = vmatpush.msra.mxu0 %v4907
    %4953 = vmatpush.msra.mxu0 %v4906
    %4954 = vmatpush.msra.mxu0 %v4905
    %4955 = vmatpush.msra.mxu0 %v4904
    %4956 = vmatpush.msra.mxu0 %v4903
    %4957 = vmatpush.msra.mxu0 %v4902
    %4958 = vmatpush.msra.mxu0 %v4901
    %4959 = vmatpush.msra.mxu0 %v4900
    %4960 = vmatpush.msra.mxu0 %v4899
    %4961 = vmatpush.msra.mxu0 %v4898
    %4962 = vmatpush.msra.mxu0 %v4897
    %4963 = vmatpush.msra.mxu0 %v4896
    %4964 = vmatpush.msra.mxu0 %v4895
    %4965 = vmatmul.f32.gmra.mxu0 %v4753
    %v4966 = vpop.f32.mrf.mxu0
    %v4967 = vadd.f32 %v4947, %v4966
    %4968 = vdwg.mxu0
    %4969 = vmatpush.msra.mxu0 %v4926
    %4970 = vmatpush.msra.mxu0 %v4925
    %4971 = vmatpush.msra.mxu0 %v4924
    %4972 = vmatpush.msra.mxu0 %v4923
    %4973 = vmatpush.msra.mxu0 %v4922
    %4974 = vmatpush.msra.mxu0 %v4921
    %4975 = vmatpush.msra.mxu0 %v4920
    %4976 = vmatpush.msra.mxu0 %v4919
    %4977 = vmatpush.msra.mxu0 %v4918
    %4978 = vmatpush.msra.mxu0 %v4917
    %4979 = vmatpush.msra.mxu0 %v4916
    %4980 = vmatpush.msra.mxu0 %v4915
    %4981 = vmatpush.msra.mxu0 %v4914
    %4982 = vmatpush.msra.mxu0 %v4913
    %4983 = vmatpush.msra.mxu0 %v4912
    %4984 = vmatpush.msra.mxu0 %v4911
    %4985 = vmatmul.f32.gmra.mxu0 %v4754
    %v4986 = vpop.f32.mrf.mxu0
    %v4987 = vadd.f32 %v4967, %v4986
    %4988 = vdwg.mxu0
    %4989 = vmatpush.msra.mxu0 %v4942
    %4990 = vmatpush.msra.mxu0 %v4941
    %4991 = vmatpush.msra.mxu0 %v4940
    %4992 = vmatpush.msra.mxu0 %v4939
    %4993 = vmatpush.msra.mxu0 %v4938
    %4994 = vmatpush.msra.mxu0 %v4937
    %4995 = vmatpush.msra.mxu0 %v4936
    %4996 = vmatpush.msra.mxu0 %v4935
    %4997 = vmatpush.msra.mxu0 %v4934
    %4998 = vmatpush.msra.mxu0 %v4933
    %4999 = vmatpush.msra.mxu0 %v4932
    %5000 = vmatpush.msra.mxu0 %v4931
    %5001 = vmatpush.msra.mxu0 %v4930
    %5002 = vmatpush.msra.mxu0 %v4929
    %5003 = vmatpush.msra.mxu0 %v4928
    %5004 = vmatpush.msra.mxu0 %v4927
    %5005 = vmatmul.f32.gmra.mxu0 %v4755
    %v5006 = vpop.f32.mrf.mxu0
    %v5007 = vadd.f32 %v4987, %v5006
    %5008 = vdwg.mxu0
    %5009 = vmatpush.msra.mxu0 0.0
    %5010 = vmatpush.msra.mxu0 0.0
    %5011 = vmatpush.msra.mxu0 0.0
    %5012 = vmatpush.msra.mxu0 0.0
    %5013 = vmatpush.msra.mxu0 0.0
    %5014 = vmatpush.msra.mxu0 0.0
    %5015 = vmatpush.msra.mxu0 0.0
    %5016 = vmatpush.msra.mxu0 0.0
    %5017 = vmatpush.msra.mxu0 0.0
    %5018 = vmatpush.msra.mxu0 0.0
    %5019 = vmatpush.msra.mxu0 0.0
    %5020 = vmatpush.msra.mxu0 0.0
    %5021 = vmatpush.msra.mxu0 0.0
    %5022 = vmatpush.msra.mxu0 0.0
    %5023 = vmatpush.msra.mxu0 %v4944
    %5024 = vmatpush.msra.mxu0 %v4943
    %5025 = vmatmul.f32.gmra.mxu0 %v4813
    %v5026 = vpop.f32.mrf.mxu0
    %v5027 = vadd.f32 %v5007, %v5026
    %5028 = vdwg.mxu0
    %v5029 = vld [vmem:[%s11] sm:$0x3]
    %v5030 = vmul.f32 %v5027, 0.5
    %v5031 = vmul.f32 %v5030, 1.442695
    %v5032 = vpow.pop %v5031
    %v5033 = vmul.f32 %v5029, %v5032
    %v5034 = vadd.f32 %v4893, %v5033
    %v5035 = vld [vmem:[%s7] sm:$0xff]
    %v5036 = vld [vmem:[%s7 + $0x8] sm:$0xff]
    %v5037 = vld [vmem:[%s7 + $0x10] sm:$0xff]
    %v5038 = vld [vmem:[%s7 + $0x18] sm:$0xff]
    %v5039 = vld [vmem:[%s7 + $0x20] sm:$0xff]
    %v5040 = vld [vmem:[%s7 + $0x28] sm:$0xff]
    %v5041 = vld [vmem:[%s7 + $0x30] sm:$0xff]
    %v5042 = vld [vmem:[%s7 + $0x38] sm:$0xff]
    %v5043 = vld [vmem:[%s7 + $0x40] sm:$0xf]
    %v5044 = vld [vmem:[%s7 + $0x48] sm:$0xf]
    %v5045 = vld [vmem:[%s7 + $0x50] sm:$0xf]
    %v5046 = vld [vmem:[%s7 + $0x58] sm:$0xf]
    %v5047 = vld [vmem:[%s8] sm:$0xf]
    %v5049 = vperm.slane %v5047, 0
    %v5050 = vperm.slane %v5047, 1
    %v5051 = vperm.slane %v5047, 2
    %v5052 = vperm.slane %v5047, 3
    %vm5057 = vcmask 162816
    %v5059 = vsel %vm5057, %v5034, 0
    %vm5061 = vcmask 1043456
    %v5063 = vsel %vm5061, %v5043, 0
    %v5066 = vsel %vm5061, %v5044, 0
    %v5069 = vsel %vm5061, %v5045, 0
    %v5072 = vsel %vm5061, %v5046, 0
    %5074 = vmatpush.msra.mxu0 0.0
    %5075 = vmatpush.msra.mxu0 0.0
    %5076 = vmatpush.msra.mxu0 0.0
    %5077 = vmatpush.msra.mxu0 0.0
    %5078 = vmatpush.msra.mxu0 0.0
    %5079 = vmatpush.msra.mxu0 0.0
    %5080 = vmatpush.msra.mxu0 0.0
    %5081 = vmatpush.msra.mxu0 0.0
    %5082 = vmatpush.msra.mxu0 0.0
    %5083 = vmatpush.msra.mxu0 0.0
    %5084 = vmatpush.msra.mxu0 0.0
    %5085 = vmatpush.msra.mxu0 0.0
    %5086 = vmatpush.msra.mxu0 0.0
    %5087 = vmatpush.msra.mxu0 %v5063
    %5088 = vmatpush.msra.mxu0 %v5039
    %5089 = vmatpush.msra.mxu0 %v5035
    %5090 = vmatmul.f32.gmra.mxu0 %v5059
    %v5091 = vpop.f32.mrf.mxu0
    %v5092 = vadd.f32 %v5049, %v5091
    %5093 = vdwg.mxu0
    %5094 = vmatpush.msra.mxu0 0.0
    %5095 = vmatpush.msra.mxu0 0.0
    %5096 = vmatpush.msra.mxu0 0.0
    %5097 = vmatpush.msra.mxu0 0.0
    %5098 = vmatpush.msra.mxu0 0.0
    %5099 = vmatpush.msra.mxu0 0.0
    %5100 = vmatpush.msra.mxu0 0.0
    %5101 = vmatpush.msra.mxu0 0.0
    %5102 = vmatpush.msra.mxu0 0.0
    %5103 = vmatpush.msra.mxu0 0.0
    %5104 = vmatpush.msra.mxu0 0.0
    %5105 = vmatpush.msra.mxu0 0.0
    %5106 = vmatpush.msra.mxu0 0.0
    %5107 = vmatpush.msra.mxu0 %v5066
    %5108 = vmatpush.msra.mxu0 %v5040
    %5109 = vmatpush.msra.mxu0 %v5036
    %5110 = vmatmul.f32.gmra.mxu0 %v5059
    %v5111 = vpop.f32.mrf.mxu0
    %v5112 = vadd.f32 %v5050, %v5111
    %5113 = vdwg.mxu0
    %5114 = vmatpush.msra.mxu0 0.0
    %5115 = vmatpush.msra.mxu0 0.0
    %5116 = vmatpush.msra.mxu0 0.0
    %5117 = vmatpush.msra.mxu0 0.0
    %5118 = vmatpush.msra.mxu0 0.0
    %5119 = vmatpush.msra.mxu0 0.0
    %5120 = vmatpush.msra.mxu0 0.0
    %5121 = vmatpush.msra.mxu0 0.0
    %5122 = vmatpush.msra.mxu0 0.0
    %5123 = vmatpush.msra.mxu0 0.0
    %5124 = vmatpush.msra.mxu0 0.0
    %5125 = vmatpush.msra.mxu0 0.0
    %5126 = vmatpush.msra.mxu0 0.0
    %5127 = vmatpush.msra.mxu0 %v5069
    %5128 = vmatpush.msra.mxu0 %v5041
    %5129 = vmatpush.msra.mxu0 %v5037
    %5130 = vmatmul.f32.gmra.mxu0 %v5059
    %v5131 = vpop.f32.mrf.mxu0
    %v5132 = vadd.f32 %v5051, %v5131
    %5133 = vdwg.mxu0
    %5134 = vmatpush.msra.mxu0 0.0
    %5135 = vmatpush.msra.mxu0 0.0
    %5136 = vmatpush.msra.mxu0 0.0
    %5137 = vmatpush.msra.mxu0 0.0
    %5138 = vmatpush.msra.mxu0 0.0
    %5139 = vmatpush.msra.mxu0 0.0
    %5140 = vmatpush.msra.mxu0 0.0
    %5141 = vmatpush.msra.mxu0 0.0
    %5142 = vmatpush.msra.mxu0 0.0
    %5143 = vmatpush.msra.mxu0 0.0
    %5144 = vmatpush.msra.mxu0 0.0
    %5145 = vmatpush.msra.mxu0 0.0
    %5146 = vmatpush.msra.mxu0 0.0
    %5147 = vmatpush.msra.mxu0 %v5072
    %5148 = vmatpush.msra.mxu0 %v5042
    %5149 = vmatpush.msra.mxu0 %v5038
    %5150 = vmatmul.f32.gmra.mxu0 %v5059
    %v5151 = vpop.f32.mrf.mxu0
    %v5152 = vadd.f32 %v5052, %v5151
    %5153 = vdwg.mxu0
    %v5154 = vmax.f32 %v5092, 0.0
    %v5155 = vmax.f32 %v5112, 0.0
    %v5156 = vmax.f32 %v5132, 0.0
    %v5157 = vmax.f32 %v5152, 0.0
    %v5158 = vld [vmem:[%s9] sm:$0xff]
    %v5159 = vld [vmem:[%s9 + $0x8] sm:$0xff]
    %v5160 = vld [vmem:[%s9 + $0x10] sm:$0xff]
    %v5161 = vld [vmem:[%s9 + $0x18] sm:$0xff]
    %v5162 = vld [vmem:[%s9 + $0x20] sm:$0xff]
    %v5163 = vld [vmem:[%s9 + $0x28] sm:$0xff]
    %v5164 = vld [vmem:[%s9 + $0x30] sm:$0xff]
    %v5165 = vld [vmem:[%s9 + $0x38] sm:$0xff]
    %v5166 = vld [vmem:[%s9 + $0x40] sm:$0xff]
    %v5167 = vld [vmem:[%s9 + $0x48] sm:$0xff]
    %v5168 = vld [vmem:[%s9 + $0x50] sm:$0xff]
    %v5169 = vld [vmem:[%s9 + $0x58] sm:$0xff]
    %v5170 = vld [vmem:[%s9 + $0x60] sm:$0xff]
    %v5171 = vld [vmem:[%s9 + $0x68] sm:$0xff]
    %v5172 = vld [vmem:[%s9 + $0x70] sm:$0xff]
    %v5173 = vld [vmem:[%s9 + $0x78] sm:$0xff]
    %v5174 = vld [vmem:[%s9 + $0x80] sm:$0xff]
    %v5175 = vld [vmem:[%s9 + $0x88] sm:$0xff]
    %v5176 = vld [vmem:[%s9 + $0x90] sm:$0xff]
    %v5177 = vld [vmem:[%s9 + $0x98] sm:$0xff]
    %v5178 = vld [vmem:[%s9 + $0xa0] sm:$0xff]
    %v5179 = vld [vmem:[%s9 + $0xa8] sm:$0xff]
    %v5180 = vld [vmem:[%s9 + $0xb0] sm:$0xff]
    %v5181 = vld [vmem:[%s9 + $0xb8] sm:$0xff]
    %v5182 = vld [vmem:[%s9 + $0xc0] sm:$0xff]
    %v5183 = vld [vmem:[%s9 + $0xc8] sm:$0xff]
    %v5184 = vld [vmem:[%s9 + $0xd0] sm:$0xff]
    %v5185 = vld [vmem:[%s9 + $0xd8] sm:$0xff]
    %v5186 = vld [vmem:[%s9 + $0xe0] sm:$0xff]
    %v5187 = vld [vmem:[%s9 + $0xe8] sm:$0xff]
    %v5188 = vld [vmem:[%s9 + $0xf0] sm:$0xff]
    %v5189 = vld [vmem:[%s9 + $0xf8] sm:$0xff]
    %v5190 = vld [vmem:[%s9 + $0x100] sm:$0xff]
    %v5191 = vld [vmem:[%s9 + $0x108] sm:$0xff]
    %v5192 = vld [vmem:[%s9 + $0x110] sm:$0xff]
    %v5193 = vld [vmem:[%s9 + $0x118] sm:$0xff]
    %v5194 = vld [vmem:[%s9 + $0x120] sm:$0xff]
    %v5195 = vld [vmem:[%s9 + $0x128] sm:$0xff]
    %v5196 = vld [vmem:[%s9 + $0x130] sm:$0xff]
    %v5197 = vld [vmem:[%s9 + $0x138] sm:$0xff]
    %v5198 = vld [vmem:[%s9 + $0x140] sm:$0xff]
    %v5199 = vld [vmem:[%s9 + $0x148] sm:$0xff]
    %v5200 = vld [vmem:[%s9 + $0x150] sm:$0xff]
    %v5201 = vld [vmem:[%s9 + $0x158] sm:$0xff]
    %v5202 = vld [vmem:[%s9 + $0x160] sm:$0xff]
    %v5203 = vld [vmem:[%s9 + $0x168] sm:$0xff]
    %v5204 = vld [vmem:[%s9 + $0x170] sm:$0xff]
    %v5205 = vld [vmem:[%s9 + $0x178] sm:$0xff]
    %v5206 = vld [vmem:[%s9 + $0x180] sm:$0xff]
    %v5207 = vld [vmem:[%s9 + $0x188] sm:$0xff]
    %v5208 = vld [vmem:[%s9 + $0x190] sm:$0xff]
    %v5209 = vld [vmem:[%s9 + $0x198] sm:$0xff]
    %v5210 = vld [vmem:[%s9 + $0x1a0] sm:$0xff]
    %v5211 = vld [vmem:[%s9 + $0x1a8] sm:$0xff]
    %v5212 = vld [vmem:[%s9 + $0x1b0] sm:$0xff]
    %v5213 = vld [vmem:[%s9 + $0x1b8] sm:$0xff]
    %v5214 = vld [vmem:[%s9 + $0x1c0] sm:$0xff]
    %v5215 = vld [vmem:[%s9 + $0x1c8] sm:$0xff]
    %v5216 = vld [vmem:[%s9 + $0x1d0] sm:$0xff]
    %v5217 = vld [vmem:[%s9 + $0x1d8] sm:$0xff]
    %v5218 = vld [vmem:[%s9 + $0x1e0] sm:$0xff]
    %v5219 = vld [vmem:[%s9 + $0x1e8] sm:$0xff]
    %v5220 = vld [vmem:[%s9 + $0x1f0] sm:$0xff]
    %v5221 = vld [vmem:[%s9 + $0x1f8] sm:$0xff]
    %v5222 = vld [vmem:[%s9 + $0x200] sm:$0xff]
    %v5223 = vld [vmem:[%s9 + $0x208] sm:$0xff]
    %v5224 = vld [vmem:[%s9 + $0x210] sm:$0xff]
    %v5225 = vld [vmem:[%s9 + $0x218] sm:$0xff]
    %v5226 = vld [vmem:[%s9 + $0x220] sm:$0xff]
    %v5227 = vld [vmem:[%s9 + $0x228] sm:$0xff]
    %v5228 = vld [vmem:[%s9 + $0x230] sm:$0xff]
    %v5229 = vld [vmem:[%s9 + $0x238] sm:$0xff]
    %v5230 = vld [vmem:[%s9 + $0x240] sm:$0xff]
    %v5231 = vld [vmem:[%s9 + $0x248] sm:$0xff]
    %v5232 = vld [vmem:[%s9 + $0x250] sm:$0xff]
    %v5233 = vld [vmem:[%s9 + $0x258] sm:$0xff]
    %v5234 = vld [vmem:[%s9 + $0x260] sm:$0xff]
    %v5235 = vld [vmem:[%s9 + $0x268] sm:$0xff]
    %v5236 = vld [vmem:[%s9 + $0x270] sm:$0xff]
    %v5237 = vld [vmem:[%s9 + $0x278] sm:$0xff]
    %v5238 = vld [vmem:[%s9 + $0x280] sm:$0xff]
    %v5239 = vld [vmem:[%s9 + $0x288] sm:$0xff]
    %v5240 = vld [vmem:[%s9 + $0x290] sm:$0xff]
    %v5241 = vld [vmem:[%s9 + $0x298] sm:$0xff]
    %v5242 = vld [vmem:[%s9 + $0x2a0] sm:$0xff]
    %v5243 = vld [vmem:[%s9 + $0x2a8] sm:$0xff]
    %v5244 = vld [vmem:[%s9 + $0x2b0] sm:$0xff]
    %v5245 = vld [vmem:[%s9 + $0x2b8] sm:$0xff]
    %v5246 = vld [vmem:[%s9 + $0x2c0] sm:$0xff]
    %v5247 = vld [vmem:[%s9 + $0x2c8] sm:$0xff]
    %v5248 = vld [vmem:[%s9 + $0x2d0] sm:$0xff]
    %v5249 = vld [vmem:[%s9 + $0x2d8] sm:$0xff]
    %v5250 = vld [vmem:[%s9 + $0x2e0] sm:$0xff]
    %v5251 = vld [vmem:[%s9 + $0x2e8] sm:$0xff]
    %v5252 = vld [vmem:[%s9 + $0x2f0] sm:$0xff]
    %v5253 = vld [vmem:[%s9 + $0x2f8] sm:$0xff]
    %v5254 = vld [vmem:[%s9 + $0x300] sm:$0xff]
    %v5255 = vld [vmem:[%s9 + $0x308] sm:$0xff]
    %v5256 = vld [vmem:[%s9 + $0x310] sm:$0xff]
    %v5257 = vld [vmem:[%s9 + $0x318] sm:$0xff]
    %v5258 = vld [vmem:[%s9 + $0x320] sm:$0xff]
    %v5259 = vld [vmem:[%s9 + $0x328] sm:$0xff]
    %v5260 = vld [vmem:[%s9 + $0x330] sm:$0xff]
    %v5261 = vld [vmem:[%s9 + $0x338] sm:$0xff]
    %v5262 = vld [vmem:[%s9 + $0x340] sm:$0xff]
    %v5263 = vld [vmem:[%s9 + $0x348] sm:$0xff]
    %v5264 = vld [vmem:[%s9 + $0x350] sm:$0xff]
    %v5265 = vld [vmem:[%s9 + $0x358] sm:$0xff]
    %v5266 = vld [vmem:[%s9 + $0x360] sm:$0xff]
    %v5267 = vld [vmem:[%s9 + $0x368] sm:$0xff]
    %v5268 = vld [vmem:[%s9 + $0x370] sm:$0xff]
    %v5269 = vld [vmem:[%s9 + $0x378] sm:$0xff]
    %v5270 = vld [vmem:[%s9 + $0x380] sm:$0xff]
    %v5271 = vld [vmem:[%s9 + $0x388] sm:$0xff]
    %v5272 = vld [vmem:[%s9 + $0x390] sm:$0xff]
    %v5273 = vld [vmem:[%s9 + $0x398] sm:$0xff]
    %v5274 = vld [vmem:[%s9 + $0x3a0] sm:$0xff]
    %v5275 = vld [vmem:[%s9 + $0x3a8] sm:$0xff]
    %v5276 = vld [vmem:[%s9 + $0x3b0] sm:$0xff]
    %v5277 = vld [vmem:[%s9 + $0x3b8] sm:$0xff]
    %v5278 = vld [vmem:[%s9 + $0x3c0] sm:$0xff]
    %v5279 = vld [vmem:[%s9 + $0x3c8] sm:$0xff]
    %v5280 = vld [vmem:[%s9 + $0x3d0] sm:$0xff]
    %v5281 = vld [vmem:[%s9 + $0x3d8] sm:$0xff]
    %v5282 = vld [vmem:[%s9 + $0x3e0] sm:$0xff]
    %v5283 = vld [vmem:[%s9 + $0x3e8] sm:$0xff]
    %v5284 = vld [vmem:[%s9 + $0x3f0] sm:$0xff]
    %v5285 = vld [vmem:[%s9 + $0x3f8] sm:$0xff]
    %v5286 = vld [vmem:[%s9 + $0x400] sm:$0xff]
    %v5287 = vld [vmem:[%s9 + $0x408] sm:$0xff]
    %v5288 = vld [vmem:[%s9 + $0x410] sm:$0xff]
    %v5289 = vld [vmem:[%s9 + $0x418] sm:$0xff]
    %v5290 = vld [vmem:[%s9 + $0x420] sm:$0xff]
    %v5291 = vld [vmem:[%s9 + $0x428] sm:$0xff]
    %v5292 = vld [vmem:[%s9 + $0x430] sm:$0xff]
    %v5293 = vld [vmem:[%s9 + $0x438] sm:$0xff]
    %v5294 = vld [vmem:[%s9 + $0x440] sm:$0xff]
    %v5295 = vld [vmem:[%s9 + $0x448] sm:$0xff]
    %v5296 = vld [vmem:[%s9 + $0x450] sm:$0xff]
    %v5297 = vld [vmem:[%s9 + $0x458] sm:$0xff]
    %v5298 = vld [vmem:[%s9 + $0x460] sm:$0xff]
    %v5299 = vld [vmem:[%s9 + $0x468] sm:$0xff]
    %v5300 = vld [vmem:[%s9 + $0x470] sm:$0xff]
    %v5301 = vld [vmem:[%s9 + $0x478] sm:$0xff]
    %v5302 = vld [vmem:[%s9 + $0x480] sm:$0xff]
    %v5303 = vld [vmem:[%s9 + $0x488] sm:$0xff]
    %v5304 = vld [vmem:[%s9 + $0x490] sm:$0xff]
    %v5305 = vld [vmem:[%s9 + $0x498] sm:$0xff]
    %v5306 = vld [vmem:[%s9 + $0x4a0] sm:$0xff]
    %v5307 = vld [vmem:[%s9 + $0x4a8] sm:$0xff]
    %v5308 = vld [vmem:[%s9 + $0x4b0] sm:$0xff]
    %v5309 = vld [vmem:[%s9 + $0x4b8] sm:$0xff]
    %v5310 = vld [vmem:[%s9 + $0x4c0] sm:$0xff]
    %v5311 = vld [vmem:[%s9 + $0x4c8] sm:$0xff]
    %v5312 = vld [vmem:[%s9 + $0x4d0] sm:$0xff]
    %v5313 = vld [vmem:[%s9 + $0x4d8] sm:$0xff]
    %v5314 = vld [vmem:[%s9 + $0x4e0] sm:$0xff]
    %v5315 = vld [vmem:[%s9 + $0x4e8] sm:$0xff]
    %v5316 = vld [vmem:[%s9 + $0x4f0] sm:$0xff]
    %v5317 = vld [vmem:[%s9 + $0x4f8] sm:$0xff]
    %v5318 = vld [vmem:[%s9 + $0x500] sm:$0xff]
    %v5319 = vld [vmem:[%s9 + $0x508] sm:$0xff]
    %v5320 = vld [vmem:[%s9 + $0x510] sm:$0xff]
    %v5321 = vld [vmem:[%s9 + $0x518] sm:$0xff]
    %v5322 = vld [vmem:[%s9 + $0x520] sm:$0xff]
    %v5323 = vld [vmem:[%s9 + $0x528] sm:$0xff]
    %v5324 = vld [vmem:[%s9 + $0x530] sm:$0xff]
    %v5325 = vld [vmem:[%s9 + $0x538] sm:$0xff]
    %v5326 = vld [vmem:[%s9 + $0x540] sm:$0xff]
    %v5327 = vld [vmem:[%s9 + $0x548] sm:$0xff]
    %v5328 = vld [vmem:[%s9 + $0x550] sm:$0xff]
    %v5329 = vld [vmem:[%s9 + $0x558] sm:$0xff]
    %v5330 = vld [vmem:[%s9 + $0x560] sm:$0xff]
    %v5331 = vld [vmem:[%s9 + $0x568] sm:$0xff]
    %v5332 = vld [vmem:[%s9 + $0x570] sm:$0xff]
    %v5333 = vld [vmem:[%s9 + $0x578] sm:$0xff]
    %v5334 = vld [vmem:[%s9 + $0x580] sm:$0xff]
    %v5335 = vld [vmem:[%s9 + $0x588] sm:$0xff]
    %v5336 = vld [vmem:[%s9 + $0x590] sm:$0xff]
    %v5337 = vld [vmem:[%s9 + $0x598] sm:$0xff]
    %v5338 = vld [vmem:[%s9 + $0x5a0] sm:$0xff]
    %v5339 = vld [vmem:[%s9 + $0x5a8] sm:$0xff]
    %v5340 = vld [vmem:[%s9 + $0x5b0] sm:$0xff]
    %v5341 = vld [vmem:[%s9 + $0x5b8] sm:$0xff]
    %v5342 = vld [vmem:[%s9 + $0x5c0] sm:$0xff]
    %v5343 = vld [vmem:[%s9 + $0x5c8] sm:$0xff]
    %v5344 = vld [vmem:[%s9 + $0x5d0] sm:$0xff]
    %v5345 = vld [vmem:[%s9 + $0x5d8] sm:$0xff]
    %v5346 = vld [vmem:[%s9 + $0x5e0] sm:$0xff]
    %v5347 = vld [vmem:[%s9 + $0x5e8] sm:$0xff]
    %v5348 = vld [vmem:[%s9 + $0x5f0] sm:$0xff]
    %v5349 = vld [vmem:[%s9 + $0x5f8] sm:$0xff]
    %v5350 = vld [vmem:[%s9 + $0x600] sm:$0xff]
    %v5351 = vld [vmem:[%s9 + $0x608] sm:$0xff]
    %v5352 = vld [vmem:[%s9 + $0x610] sm:$0xff]
    %v5353 = vld [vmem:[%s9 + $0x618] sm:$0xff]
    %v5354 = vld [vmem:[%s9 + $0x620] sm:$0xff]
    %v5355 = vld [vmem:[%s9 + $0x628] sm:$0xff]
    %v5356 = vld [vmem:[%s9 + $0x630] sm:$0xff]
    %v5357 = vld [vmem:[%s9 + $0x638] sm:$0xff]
    %v5358 = vld [vmem:[%s9 + $0x640] sm:$0xff]
    %v5359 = vld [vmem:[%s9 + $0x648] sm:$0xff]
    %v5360 = vld [vmem:[%s9 + $0x650] sm:$0xff]
    %v5361 = vld [vmem:[%s9 + $0x658] sm:$0xff]
    %v5362 = vld [vmem:[%s9 + $0x660] sm:$0xff]
    %v5363 = vld [vmem:[%s9 + $0x668] sm:$0xff]
    %v5364 = vld [vmem:[%s9 + $0x670] sm:$0xff]
    %v5365 = vld [vmem:[%s9 + $0x678] sm:$0xff]
    %v5366 = vld [vmem:[%s9 + $0x680] sm:$0xff]
    %v5367 = vld [vmem:[%s9 + $0x688] sm:$0xff]
    %v5368 = vld [vmem:[%s9 + $0x690] sm:$0xff]
    %v5369 = vld [vmem:[%s9 + $0x698] sm:$0xff]
    %v5370 = vld [vmem:[%s9 + $0x6a0] sm:$0xff]
    %v5371 = vld [vmem:[%s9 + $0x6a8] sm:$0xff]
    %v5372 = vld [vmem:[%s9 + $0x6b0] sm:$0xff]
    %v5373 = vld [vmem:[%s9 + $0x6b8] sm:$0xff]
    %v5374 = vld [vmem:[%s9 + $0x6c0] sm:$0xff]
    %v5375 = vld [vmem:[%s9 + $0x6c8] sm:$0xff]
    %v5376 = vld [vmem:[%s9 + $0x6d0] sm:$0xff]
    %v5377 = vld [vmem:[%s9 + $0x6d8] sm:$0xff]
    %v5378 = vld [vmem:[%s9 + $0x6e0] sm:$0xff]
    %v5379 = vld [vmem:[%s9 + $0x6e8] sm:$0xff]
    %v5380 = vld [vmem:[%s9 + $0x6f0] sm:$0xff]
    %v5381 = vld [vmem:[%s9 + $0x6f8] sm:$0xff]
    %v5382 = vld [vmem:[%s9 + $0x700] sm:$0xff]
    %v5383 = vld [vmem:[%s9 + $0x708] sm:$0xff]
    %v5384 = vld [vmem:[%s9 + $0x710] sm:$0xff]
    %v5385 = vld [vmem:[%s9 + $0x718] sm:$0xff]
    %v5386 = vld [vmem:[%s9 + $0x720] sm:$0xff]
    %v5387 = vld [vmem:[%s9 + $0x728] sm:$0xff]
    %v5388 = vld [vmem:[%s9 + $0x730] sm:$0xff]
    %v5389 = vld [vmem:[%s9 + $0x738] sm:$0xff]
    %v5390 = vld [vmem:[%s9 + $0x740] sm:$0xff]
    %v5391 = vld [vmem:[%s9 + $0x748] sm:$0xff]
    %v5392 = vld [vmem:[%s9 + $0x750] sm:$0xff]
    %v5393 = vld [vmem:[%s9 + $0x758] sm:$0xff]
    %v5394 = vld [vmem:[%s9 + $0x760] sm:$0xff]
    %v5395 = vld [vmem:[%s9 + $0x768] sm:$0xff]
    %v5396 = vld [vmem:[%s9 + $0x770] sm:$0xff]
    %v5397 = vld [vmem:[%s9 + $0x778] sm:$0xff]
    %v5398 = vld [vmem:[%s9 + $0x780] sm:$0xff]
    %v5399 = vld [vmem:[%s9 + $0x788] sm:$0xff]
    %v5400 = vld [vmem:[%s9 + $0x790] sm:$0xff]
    %v5401 = vld [vmem:[%s9 + $0x798] sm:$0xff]
    %v5402 = vld [vmem:[%s9 + $0x7a0] sm:$0xff]
    %v5403 = vld [vmem:[%s9 + $0x7a8] sm:$0xff]
    %v5404 = vld [vmem:[%s9 + $0x7b0] sm:$0xff]
    %v5405 = vld [vmem:[%s9 + $0x7b8] sm:$0xff]
    %v5406 = vld [vmem:[%s9 + $0x7c0] sm:$0xff]
    %v5407 = vld [vmem:[%s9 + $0x7c8] sm:$0xff]
    %v5408 = vld [vmem:[%s9 + $0x7d0] sm:$0xff]
    %v5409 = vld [vmem:[%s9 + $0x7d8] sm:$0xff]
    %v5410 = vld [vmem:[%s9 + $0x7e0] sm:$0xff]
    %v5411 = vld [vmem:[%s9 + $0x7e8] sm:$0xff]
    %v5412 = vld [vmem:[%s9 + $0x7f0] sm:$0xff]
    %v5413 = vld [vmem:[%s9 + $0x7f8] sm:$0xff]
    %v5414 = vld [vmem:[%s9 + $0x800] sm:$0xff]
    %v5415 = vld [vmem:[%s9 + $0x808] sm:$0xff]
    %v5416 = vld [vmem:[%s9 + $0x810] sm:$0xff]
    %v5417 = vld [vmem:[%s9 + $0x818] sm:$0xff]
    %v5418 = vld [vmem:[%s9 + $0x820] sm:$0xff]
    %v5419 = vld [vmem:[%s9 + $0x828] sm:$0xff]
    %v5420 = vld [vmem:[%s9 + $0x830] sm:$0xff]
    %v5421 = vld [vmem:[%s9 + $0x838] sm:$0xff]
    %v5422 = vld [vmem:[%s9 + $0x840] sm:$0xff]
    %v5423 = vld [vmem:[%s9 + $0x848] sm:$0xff]
    %v5424 = vld [vmem:[%s9 + $0x850] sm:$0xff]
    %v5425 = vld [vmem:[%s9 + $0x858] sm:$0xff]
    %v5426 = vld [vmem:[%s9 + $0x860] sm:$0xff]
    %v5427 = vld [vmem:[%s9 + $0x868] sm:$0xff]
    %v5428 = vld [vmem:[%s9 + $0x870] sm:$0xff]
    %v5429 = vld [vmem:[%s9 + $0x878] sm:$0xff]
    %v5430 = vld [vmem:[%s9 + $0x880] sm:$0xff]
    %v5431 = vld [vmem:[%s9 + $0x888] sm:$0xff]
    %v5432 = vld [vmem:[%s9 + $0x890] sm:$0xff]
    %v5433 = vld [vmem:[%s9 + $0x898] sm:$0xff]
    %v5434 = vld [vmem:[%s9 + $0x8a0] sm:$0xff]
    %v5435 = vld [vmem:[%s9 + $0x8a8] sm:$0xff]
    %v5436 = vld [vmem:[%s9 + $0x8b0] sm:$0xff]
    %v5437 = vld [vmem:[%s9 + $0x8b8] sm:$0xff]
    %v5438 = vld [vmem:[%s9 + $0x8c0] sm:$0xff]
    %v5439 = vld [vmem:[%s9 + $0x8c8] sm:$0xff]
    %v5440 = vld [vmem:[%s9 + $0x8d0] sm:$0xff]
    %v5441 = vld [vmem:[%s9 + $0x8d8] sm:$0xff]
    %v5442 = vld [vmem:[%s9 + $0x8e0] sm:$0xff]
    %v5443 = vld [vmem:[%s9 + $0x8e8] sm:$0xff]
    %v5444 = vld [vmem:[%s9 + $0x8f0] sm:$0xff]
    %v5445 = vld [vmem:[%s9 + $0x8f8] sm:$0xff]
    %v5446 = vld [vmem:[%s9 + $0x900] sm:$0xff]
    %v5447 = vld [vmem:[%s9 + $0x908] sm:$0xff]
    %v5448 = vld [vmem:[%s9 + $0x910] sm:$0xff]
    %v5449 = vld [vmem:[%s9 + $0x918] sm:$0xff]
    %v5450 = vld [vmem:[%s9 + $0x920] sm:$0xff]
    %v5451 = vld [vmem:[%s9 + $0x928] sm:$0xff]
    %v5452 = vld [vmem:[%s9 + $0x930] sm:$0xff]
    %v5453 = vld [vmem:[%s9 + $0x938] sm:$0xff]
    %v5454 = vld [vmem:[%s9 + $0x940] sm:$0xff]
    %v5455 = vld [vmem:[%s9 + $0x948] sm:$0xff]
    %v5456 = vld [vmem:[%s9 + $0x950] sm:$0xff]
    %v5457 = vld [vmem:[%s9 + $0x958] sm:$0xff]
    %v5458 = vld [vmem:[%s9 + $0x960] sm:$0xff]
    %v5459 = vld [vmem:[%s9 + $0x968] sm:$0xff]
    %v5460 = vld [vmem:[%s9 + $0x970] sm:$0xff]
    %v5461 = vld [vmem:[%s9 + $0x978] sm:$0xff]
    %v5462 = vld [vmem:[%s9 + $0x980] sm:$0xff]
    %v5463 = vld [vmem:[%s9 + $0x988] sm:$0xff]
    %v5464 = vld [vmem:[%s9 + $0x990] sm:$0xff]
    %v5465 = vld [vmem:[%s9 + $0x998] sm:$0xff]
    %v5466 = vld [vmem:[%s9 + $0x9a0] sm:$0xff]
    %v5467 = vld [vmem:[%s9 + $0x9a8] sm:$0xff]
    %v5468 = vld [vmem:[%s9 + $0x9b0] sm:$0xff]
    %v5469 = vld [vmem:[%s9 + $0x9b8] sm:$0xff]
    %v5470 = vld [vmem:[%s9 + $0x9c0] sm:$0xff]
    %v5471 = vld [vmem:[%s9 + $0x9c8] sm:$0xff]
    %v5472 = vld [vmem:[%s9 + $0x9d0] sm:$0xff]
    %v5473 = vld [vmem:[%s9 + $0x9d8] sm:$0xff]
    %v5474 = vld [vmem:[%s9 + $0x9e0] sm:$0xff]
    %v5475 = vld [vmem:[%s9 + $0x9e8] sm:$0xff]
    %v5476 = vld [vmem:[%s9 + $0x9f0] sm:$0xff]
    %v5477 = vld [vmem:[%s9 + $0x9f8] sm:$0xff]
    %v5478 = vld [vmem:[%s9 + $0xa00] sm:$0xff]
    %v5479 = vld [vmem:[%s9 + $0xa08] sm:$0xff]
    %v5480 = vld [vmem:[%s9 + $0xa10] sm:$0xff]
    %v5481 = vld [vmem:[%s9 + $0xa18] sm:$0xff]
    %v5482 = vld [vmem:[%s9 + $0xa20] sm:$0xff]
    %v5483 = vld [vmem:[%s9 + $0xa28] sm:$0xff]
    %v5484 = vld [vmem:[%s9 + $0xa30] sm:$0xff]
    %v5485 = vld [vmem:[%s9 + $0xa38] sm:$0xff]
    %v5486 = vld [vmem:[%s9 + $0xa40] sm:$0xff]
    %v5487 = vld [vmem:[%s9 + $0xa48] sm:$0xff]
    %v5488 = vld [vmem:[%s9 + $0xa50] sm:$0xff]
    %v5489 = vld [vmem:[%s9 + $0xa58] sm:$0xff]
    %v5490 = vld [vmem:[%s9 + $0xa60] sm:$0xff]
    %v5491 = vld [vmem:[%s9 + $0xa68] sm:$0xff]
    %v5492 = vld [vmem:[%s9 + $0xa70] sm:$0xff]
    %v5493 = vld [vmem:[%s9 + $0xa78] sm:$0xff]
    %v5494 = vld [vmem:[%s9 + $0xa80] sm:$0xff]
    %v5495 = vld [vmem:[%s9 + $0xa88] sm:$0xff]
    %v5496 = vld [vmem:[%s9 + $0xa90] sm:$0xff]
    %v5497 = vld [vmem:[%s9 + $0xa98] sm:$0xff]
    %v5498 = vld [vmem:[%s9 + $0xaa0] sm:$0xff]
    %v5499 = vld [vmem:[%s9 + $0xaa8] sm:$0xff]
    %v5500 = vld [vmem:[%s9 + $0xab0] sm:$0xff]
    %v5501 = vld [vmem:[%s9 + $0xab8] sm:$0xff]
    %v5502 = vld [vmem:[%s9 + $0xac0] sm:$0xff]
    %v5503 = vld [vmem:[%s9 + $0xac8] sm:$0xff]
    %v5504 = vld [vmem:[%s9 + $0xad0] sm:$0xff]
    %v5505 = vld [vmem:[%s9 + $0xad8] sm:$0xff]
    %v5506 = vld [vmem:[%s9 + $0xae0] sm:$0xff]
    %v5507 = vld [vmem:[%s9 + $0xae8] sm:$0xff]
    %v5508 = vld [vmem:[%s9 + $0xaf0] sm:$0xff]
    %v5509 = vld [vmem:[%s9 + $0xaf8] sm:$0xff]
    %v5510 = vld [vmem:[%s9 + $0xb00] sm:$0xff]
    %v5511 = vld [vmem:[%s9 + $0xb08] sm:$0xff]
    %v5512 = vld [vmem:[%s9 + $0xb10] sm:$0xff]
    %v5513 = vld [vmem:[%s9 + $0xb18] sm:$0xff]
    %v5514 = vld [vmem:[%s9 + $0xb20] sm:$0xff]
    %v5515 = vld [vmem:[%s9 + $0xb28] sm:$0xff]
    %v5516 = vld [vmem:[%s9 + $0xb30] sm:$0xff]
    %v5517 = vld [vmem:[%s9 + $0xb38] sm:$0xff]
    %v5518 = vld [vmem:[%s9 + $0xb40] sm:$0xff]
    %v5519 = vld [vmem:[%s9 + $0xb48] sm:$0xff]
    %v5520 = vld [vmem:[%s9 + $0xb50] sm:$0xff]
    %v5521 = vld [vmem:[%s9 + $0xb58] sm:$0xff]
    %v5522 = vld [vmem:[%s9 + $0xb60] sm:$0xff]
    %v5523 = vld [vmem:[%s9 + $0xb68] sm:$0xff]
    %v5524 = vld [vmem:[%s9 + $0xb70] sm:$0xff]
    %v5525 = vld [vmem:[%s9 + $0xb78] sm:$0xff]
    %v5526 = vld [vmem:[%s9 + $0xb80] sm:$0xff]
    %v5527 = vld [vmem:[%s9 + $0xb88] sm:$0xff]
    %v5528 = vld [vmem:[%s9 + $0xb90] sm:$0xff]
    %v5529 = vld [vmem:[%s9 + $0xb98] sm:$0xff]
    %v5530 = vld [vmem:[%s9 + $0xba0] sm:$0xff]
    %v5531 = vld [vmem:[%s9 + $0xba8] sm:$0xff]
    %v5532 = vld [vmem:[%s9 + $0xbb0] sm:$0xff]
    %v5533 = vld [vmem:[%s9 + $0xbb8] sm:$0xff]
    %v5534 = vld [vmem:[%s9 + $0xbc0] sm:$0xff]
    %v5535 = vld [vmem:[%s9 + $0xbc8] sm:$0xff]
    %v5536 = vld [vmem:[%s9 + $0xbd0] sm:$0xff]
    %v5537 = vld [vmem:[%s9 + $0xbd8] sm:$0xff]
    %v5538 = vld [vmem:[%s9 + $0xbe0] sm:$0xff]
    %v5539 = vld [vmem:[%s9 + $0xbe8] sm:$0xff]
    %v5540 = vld [vmem:[%s9 + $0xbf0] sm:$0xff]
    %v5541 = vld [vmem:[%s9 + $0xbf8] sm:$0xff]
    %v5542 = vld [vmem:[%s9 + $0xc00] sm:$0xff]
    %v5543 = vld [vmem:[%s9 + $0xc08] sm:$0xff]
    %v5544 = vld [vmem:[%s9 + $0xc10] sm:$0xff]
    %v5545 = vld [vmem:[%s9 + $0xc18] sm:$0xff]
    %v5546 = vld [vmem:[%s9 + $0xc20] sm:$0xff]
    %v5547 = vld [vmem:[%s9 + $0xc28] sm:$0xff]
    %v5548 = vld [vmem:[%s9 + $0xc30] sm:$0xff]
    %v5549 = vld [vmem:[%s9 + $0xc38] sm:$0xff]
    %v5550 = vld [vmem:[%s9 + $0xc40] sm:$0xff]
    %v5551 = vld [vmem:[%s9 + $0xc48] sm:$0xff]
    %v5552 = vld [vmem:[%s9 + $0xc50] sm:$0xff]
    %v5553 = vld [vmem:[%s9 + $0xc58] sm:$0xff]
    %v5554 = vld [vmem:[%s9 + $0xc60] sm:$0xff]
    %v5555 = vld [vmem:[%s9 + $0xc68] sm:$0xff]
    %v5556 = vld [vmem:[%s9 + $0xc70] sm:$0xff]
    %v5557 = vld [vmem:[%s9 + $0xc78] sm:$0xff]
    %v5558 = vld [vmem:[%s9 + $0xc80] sm:$0xff]
    %v5559 = vld [vmem:[%s9 + $0xc88] sm:$0xff]
    %v5560 = vld [vmem:[%s9 + $0xc90] sm:$0xff]
    %v5561 = vld [vmem:[%s9 + $0xc98] sm:$0xff]
    %v5562 = vld [vmem:[%s9 + $0xca0] sm:$0xff]
    %v5563 = vld [vmem:[%s9 + $0xca8] sm:$0xff]
    %v5564 = vld [vmem:[%s9 + $0xcb0] sm:$0xff]
    %v5565 = vld [vmem:[%s9 + $0xcb8] sm:$0xff]
    %v5566 = vld [vmem:[%s9 + $0xcc0] sm:$0xff]
    %v5567 = vld [vmem:[%s9 + $0xcc8] sm:$0xff]
    %v5568 = vld [vmem:[%s9 + $0xcd0] sm:$0xff]
    %v5569 = vld [vmem:[%s9 + $0xcd8] sm:$0xff]
    %v5570 = vld [vmem:[%s9 + $0xce0] sm:$0xff]
    %v5571 = vld [vmem:[%s9 + $0xce8] sm:$0xff]
    %v5572 = vld [vmem:[%s9 + $0xcf0] sm:$0xff]
    %v5573 = vld [vmem:[%s9 + $0xcf8] sm:$0xff]
    %v5574 = vld [vmem:[%s9 + $0xd00] sm:$0xff]
    %v5575 = vld [vmem:[%s9 + $0xd08] sm:$0xff]
    %v5576 = vld [vmem:[%s9 + $0xd10] sm:$0xff]
    %v5577 = vld [vmem:[%s9 + $0xd18] sm:$0xff]
    %v5578 = vld [vmem:[%s9 + $0xd20] sm:$0xff]
    %v5579 = vld [vmem:[%s9 + $0xd28] sm:$0xff]
    %v5580 = vld [vmem:[%s9 + $0xd30] sm:$0xff]
    %v5581 = vld [vmem:[%s9 + $0xd38] sm:$0xff]
    %v5582 = vld [vmem:[%s9 + $0xd40] sm:$0xff]
    %v5583 = vld [vmem:[%s9 + $0xd48] sm:$0xff]
    %v5584 = vld [vmem:[%s9 + $0xd50] sm:$0xff]
    %v5585 = vld [vmem:[%s9 + $0xd58] sm:$0xff]
    %v5586 = vld [vmem:[%s9 + $0xd60] sm:$0xff]
    %v5587 = vld [vmem:[%s9 + $0xd68] sm:$0xff]
    %v5588 = vld [vmem:[%s9 + $0xd70] sm:$0xff]
    %v5589 = vld [vmem:[%s9 + $0xd78] sm:$0xff]
    %v5590 = vld [vmem:[%s9 + $0xd80] sm:$0xff]
    %v5591 = vld [vmem:[%s9 + $0xd88] sm:$0xff]
    %v5592 = vld [vmem:[%s9 + $0xd90] sm:$0xff]
    %v5593 = vld [vmem:[%s9 + $0xd98] sm:$0xff]
    %v5594 = vld [vmem:[%s9 + $0xda0] sm:$0xff]
    %v5595 = vld [vmem:[%s9 + $0xda8] sm:$0xff]
    %v5596 = vld [vmem:[%s9 + $0xdb0] sm:$0xff]
    %v5597 = vld [vmem:[%s9 + $0xdb8] sm:$0xff]
    %v5598 = vld [vmem:[%s9 + $0xdc0] sm:$0xff]
    %v5599 = vld [vmem:[%s9 + $0xdc8] sm:$0xff]
    %v5600 = vld [vmem:[%s9 + $0xdd0] sm:$0xff]
    %v5601 = vld [vmem:[%s9 + $0xdd8] sm:$0xff]
    %v5602 = vld [vmem:[%s9 + $0xde0] sm:$0xff]
    %v5603 = vld [vmem:[%s9 + $0xde8] sm:$0xff]
    %v5604 = vld [vmem:[%s9 + $0xdf0] sm:$0xff]
    %v5605 = vld [vmem:[%s9 + $0xdf8] sm:$0xff]
    %v5606 = vld [vmem:[%s9 + $0xe00] sm:$0xff]
    %v5607 = vld [vmem:[%s9 + $0xe08] sm:$0xff]
    %v5608 = vld [vmem:[%s9 + $0xe10] sm:$0xff]
    %v5609 = vld [vmem:[%s9 + $0xe18] sm:$0xff]
    %v5610 = vld [vmem:[%s9 + $0xe20] sm:$0xff]
    %v5611 = vld [vmem:[%s9 + $0xe28] sm:$0xff]
    %v5612 = vld [vmem:[%s9 + $0xe30] sm:$0xff]
    %v5613 = vld [vmem:[%s9 + $0xe38] sm:$0xff]
    %v5614 = vld [vmem:[%s9 + $0xe40] sm:$0xff]
    %v5615 = vld [vmem:[%s9 + $0xe48] sm:$0xff]
    %v5616 = vld [vmem:[%s9 + $0xe50] sm:$0xff]
    %v5617 = vld [vmem:[%s9 + $0xe58] sm:$0xff]
    %v5618 = vld [vmem:[%s9 + $0xe60] sm:$0xff]
    %v5619 = vld [vmem:[%s9 + $0xe68] sm:$0xff]
    %v5620 = vld [vmem:[%s9 + $0xe70] sm:$0xff]
    %v5621 = vld [vmem:[%s9 + $0xe78] sm:$0xff]
    %v5622 = vld [vmem:[%s9 + $0xe80] sm:$0xff]
    %v5623 = vld [vmem:[%s9 + $0xe88] sm:$0xff]
    %v5624 = vld [vmem:[%s9 + $0xe90] sm:$0xff]
    %v5625 = vld [vmem:[%s9 + $0xe98] sm:$0xff]
    %v5626 = vld [vmem:[%s9 + $0xea0] sm:$0xff]
    %v5627 = vld [vmem:[%s9 + $0xea8] sm:$0xff]
    %v5628 = vld [vmem:[%s9 + $0xeb0] sm:$0xff]
    %v5629 = vld [vmem:[%s9 + $0xeb8] sm:$0xff]
    %v5630 = vld [vmem:[%s9 + $0xec0] sm:$0xff]
    %v5631 = vld [vmem:[%s9 + $0xec8] sm:$0xff]
    %v5632 = vld [vmem:[%s9 + $0xed0] sm:$0xff]
    %v5633 = vld [vmem:[%s9 + $0xed8] sm:$0xff]
    %v5634 = vld [vmem:[%s9 + $0xee0] sm:$0xff]
    %v5635 = vld [vmem:[%s9 + $0xee8] sm:$0xff]
    %v5636 = vld [vmem:[%s9 + $0xef0] sm:$0xff]
    %v5637 = vld [vmem:[%s9 + $0xef8] sm:$0xff]
    %v5638 = vld [vmem:[%s9 + $0xf00] sm:$0xff]
    %v5639 = vld [vmem:[%s9 + $0xf08] sm:$0xff]
    %v5640 = vld [vmem:[%s9 + $0xf10] sm:$0xff]
    %v5641 = vld [vmem:[%s9 + $0xf18] sm:$0xff]
    %v5642 = vld [vmem:[%s9 + $0xf20] sm:$0xff]
    %v5643 = vld [vmem:[%s9 + $0xf28] sm:$0xff]
    %v5644 = vld [vmem:[%s9 + $0xf30] sm:$0xff]
    %v5645 = vld [vmem:[%s9 + $0xf38] sm:$0xff]
    %v5646 = vld [vmem:[%s9 + $0xf40] sm:$0xff]
    %v5647 = vld [vmem:[%s9 + $0xf48] sm:$0xff]
    %v5648 = vld [vmem:[%s9 + $0xf50] sm:$0xff]
    %v5649 = vld [vmem:[%s9 + $0xf58] sm:$0xff]
    %v5650 = vld [vmem:[%s9 + $0xf60] sm:$0xff]
    %v5651 = vld [vmem:[%s9 + $0xf68] sm:$0xff]
    %v5652 = vld [vmem:[%s9 + $0xf70] sm:$0xff]
    %v5653 = vld [vmem:[%s9 + $0xf78] sm:$0xff]
    %v5654 = vld [vmem:[%s9 + $0xf80] sm:$0xff]
    %v5655 = vld [vmem:[%s9 + $0xf88] sm:$0xff]
    %v5656 = vld [vmem:[%s9 + $0xf90] sm:$0xff]
    %v5657 = vld [vmem:[%s9 + $0xf98] sm:$0xff]
    %v5658 = vld [vmem:[%s9 + $0xfa0] sm:$0xff]
    %v5659 = vld [vmem:[%s9 + $0xfa8] sm:$0xff]
    %v5660 = vld [vmem:[%s9 + $0xfb0] sm:$0xff]
    %v5661 = vld [vmem:[%s9 + $0xfb8] sm:$0xff]
    %v5662 = vld [vmem:[%s9 + $0xfc0] sm:$0xff]
    %v5663 = vld [vmem:[%s9 + $0xfc8] sm:$0xff]
    %v5664 = vld [vmem:[%s9 + $0xfd0] sm:$0xff]
    %v5665 = vld [vmem:[%s9 + $0xfd8] sm:$0xff]
    %v5666 = vld [vmem:[%s9 + $0xfe0] sm:$0xff]
    %v5667 = vld [vmem:[%s9 + $0xfe8] sm:$0xff]
    %v5668 = vld [vmem:[%s9 + $0xff0] sm:$0xff]
    %v5669 = vld [vmem:[%s9 + $0xff8] sm:$0xff]
    %v5670 = vld [vmem:[%s9 + $0x1000] sm:$0xff]
    %v5671 = vld [vmem:[%s9 + $0x1008] sm:$0xff]
    %v5672 = vld [vmem:[%s9 + $0x1010] sm:$0xff]
    %v5673 = vld [vmem:[%s9 + $0x1018] sm:$0xff]
    %v5674 = vld [vmem:[%s9 + $0x1020] sm:$0xff]
    %v5675 = vld [vmem:[%s9 + $0x1028] sm:$0xff]
    %v5676 = vld [vmem:[%s9 + $0x1030] sm:$0xff]
    %v5677 = vld [vmem:[%s9 + $0x1038] sm:$0xff]
    %v5678 = vld [vmem:[%s9 + $0x1040] sm:$0xff]
    %v5679 = vld [vmem:[%s9 + $0x1048] sm:$0xff]
    %v5680 = vld [vmem:[%s9 + $0x1050] sm:$0xff]
    %v5681 = vld [vmem:[%s9 + $0x1058] sm:$0xff]
    %v5682 = vld [vmem:[%s9 + $0x1060] sm:$0xff]
    %v5683 = vld [vmem:[%s9 + $0x1068] sm:$0xff]
    %v5684 = vld [vmem:[%s9 + $0x1070] sm:$0xff]
    %v5685 = vld [vmem:[%s9 + $0x1078] sm:$0xff]
    %v5686 = vld [vmem:[%s9 + $0x1080] sm:$0xff]
    %v5687 = vld [vmem:[%s9 + $0x1088] sm:$0xff]
    %v5688 = vld [vmem:[%s9 + $0x1090] sm:$0xff]
    %v5689 = vld [vmem:[%s9 + $0x1098] sm:$0xff]
    %v5690 = vld [vmem:[%s9 + $0x10a0] sm:$0xff]
    %v5691 = vld [vmem:[%s9 + $0x10a8] sm:$0xff]
    %v5692 = vld [vmem:[%s9 + $0x10b0] sm:$0xff]
    %v5693 = vld [vmem:[%s9 + $0x10b8] sm:$0xff]
    %v5694 = vld [vmem:[%s9 + $0x10c0] sm:$0xff]
    %v5695 = vld [vmem:[%s9 + $0x10c8] sm:$0xff]
    %v5696 = vld [vmem:[%s9 + $0x10d0] sm:$0xff]
    %v5697 = vld [vmem:[%s9 + $0x10d8] sm:$0xff]
    %v5698 = vld [vmem:[%s9 + $0x10e0] sm:$0xff]
    %v5699 = vld [vmem:[%s9 + $0x10e8] sm:$0xff]
    %v5700 = vld [vmem:[%s9 + $0x10f0] sm:$0xff]
    %v5701 = vld [vmem:[%s9 + $0x10f8] sm:$0xff]
    %v5702 = vld [vmem:[%s9 + $0x1100] sm:$0xff]
    %v5703 = vld [vmem:[%s9 + $0x1108] sm:$0xff]
    %v5704 = vld [vmem:[%s9 + $0x1110] sm:$0xff]
    %v5705 = vld [vmem:[%s9 + $0x1118] sm:$0xff]
    %v5706 = vld [vmem:[%s9 + $0x1120] sm:$0xff]
    %v5707 = vld [vmem:[%s9 + $0x1128] sm:$0xff]
    %v5708 = vld [vmem:[%s9 + $0x1130] sm:$0xff]
    %v5709 = vld [vmem:[%s9 + $0x1138] sm:$0xff]
    %v5710 = vld [vmem:[%s9 + $0x1140] sm:$0xff]
    %v5711 = vld [vmem:[%s9 + $0x1148] sm:$0xff]
    %v5712 = vld [vmem:[%s9 + $0x1150] sm:$0xff]
    %v5713 = vld [vmem:[%s9 + $0x1158] sm:$0xff]
    %v5714 = vld [vmem:[%s9 + $0x1160] sm:$0xff]
    %v5715 = vld [vmem:[%s9 + $0x1168] sm:$0xff]
    %v5716 = vld [vmem:[%s9 + $0x1170] sm:$0xff]
    %v5717 = vld [vmem:[%s9 + $0x1178] sm:$0xff]
    %v5718 = vld [vmem:[%s9 + $0x1180] sm:$0xff]
    %v5719 = vld [vmem:[%s9 + $0x1188] sm:$0xff]
    %v5720 = vld [vmem:[%s9 + $0x1190] sm:$0xff]
    %v5721 = vld [vmem:[%s9 + $0x1198] sm:$0xff]
    %v5722 = vld [vmem:[%s9 + $0x11a0] sm:$0xff]
    %v5723 = vld [vmem:[%s9 + $0x11a8] sm:$0xff]
    %v5724 = vld [vmem:[%s9 + $0x11b0] sm:$0xff]
    %v5725 = vld [vmem:[%s9 + $0x11b8] sm:$0xff]
    %v5726 = vld [vmem:[%s9 + $0x11c0] sm:$0xff]
    %v5727 = vld [vmem:[%s9 + $0x11c8] sm:$0xff]
    %v5728 = vld [vmem:[%s9 + $0x11d0] sm:$0xff]
    %v5729 = vld [vmem:[%s9 + $0x11d8] sm:$0xff]
    %v5730 = vld [vmem:[%s9 + $0x11e0] sm:$0xff]
    %v5731 = vld [vmem:[%s9 + $0x11e8] sm:$0xff]
    %v5732 = vld [vmem:[%s9 + $0x11f0] sm:$0xff]
    %v5733 = vld [vmem:[%s9 + $0x11f8] sm:$0xff]
    %v5734 = vld [vmem:[%s9 + $0x1200] sm:$0xff]
    %v5735 = vld [vmem:[%s9 + $0x1208] sm:$0xff]
    %v5736 = vld [vmem:[%s9 + $0x1210] sm:$0xff]
    %v5737 = vld [vmem:[%s9 + $0x1218] sm:$0xff]
    %v5738 = vld [vmem:[%s9 + $0x1220] sm:$0xff]
    %v5739 = vld [vmem:[%s9 + $0x1228] sm:$0xff]
    %v5740 = vld [vmem:[%s9 + $0x1230] sm:$0xff]
    %v5741 = vld [vmem:[%s9 + $0x1238] sm:$0xff]
    %v5742 = vld [vmem:[%s9 + $0x1240] sm:$0xff]
    %v5743 = vld [vmem:[%s9 + $0x1248] sm:$0xff]
    %v5744 = vld [vmem:[%s9 + $0x1250] sm:$0xff]
    %v5745 = vld [vmem:[%s9 + $0x1258] sm:$0xff]
    %v5746 = vld [vmem:[%s9 + $0x1260] sm:$0xff]
    %v5747 = vld [vmem:[%s9 + $0x1268] sm:$0xff]
    %v5748 = vld [vmem:[%s9 + $0x1270] sm:$0xff]
    %v5749 = vld [vmem:[%s9 + $0x1278] sm:$0xff]
    %v5750 = vld [vmem:[%s9 + $0x1280] sm:$0xff]
    %v5751 = vld [vmem:[%s9 + $0x1288] sm:$0xff]
    %v5752 = vld [vmem:[%s9 + $0x1290] sm:$0xff]
    %v5753 = vld [vmem:[%s9 + $0x1298] sm:$0xff]
    %v5754 = vld [vmem:[%s9 + $0x12a0] sm:$0xff]
    %v5755 = vld [vmem:[%s9 + $0x12a8] sm:$0xff]
    %v5756 = vld [vmem:[%s9 + $0x12b0] sm:$0xff]
    %v5757 = vld [vmem:[%s9 + $0x12b8] sm:$0xff]
    %v5758 = vld [vmem:[%s9 + $0x12c0] sm:$0xff]
    %v5759 = vld [vmem:[%s9 + $0x12c8] sm:$0xff]
    %v5760 = vld [vmem:[%s9 + $0x12d0] sm:$0xff]
    %v5761 = vld [vmem:[%s9 + $0x12d8] sm:$0xff]
    %v5762 = vld [vmem:[%s9 + $0x12e0] sm:$0xff]
    %v5763 = vld [vmem:[%s9 + $0x12e8] sm:$0xff]
    %v5764 = vld [vmem:[%s9 + $0x12f0] sm:$0xff]
    %v5765 = vld [vmem:[%s9 + $0x12f8] sm:$0xff]
    %v5766 = vld [vmem:[%s9 + $0x1300] sm:$0xff]
    %v5767 = vld [vmem:[%s9 + $0x1308] sm:$0xff]
    %v5768 = vld [vmem:[%s9 + $0x1310] sm:$0xff]
    %v5769 = vld [vmem:[%s9 + $0x1318] sm:$0xff]
    %v5770 = vld [vmem:[%s9 + $0x1320] sm:$0xff]
    %v5771 = vld [vmem:[%s9 + $0x1328] sm:$0xff]
    %v5772 = vld [vmem:[%s9 + $0x1330] sm:$0xff]
    %v5773 = vld [vmem:[%s9 + $0x1338] sm:$0xff]
    %v5774 = vld [vmem:[%s9 + $0x1340] sm:$0xff]
    %v5775 = vld [vmem:[%s9 + $0x1348] sm:$0xff]
    %v5776 = vld [vmem:[%s9 + $0x1350] sm:$0xff]
    %v5777 = vld [vmem:[%s9 + $0x1358] sm:$0xff]
    %v5778 = vld [vmem:[%s9 + $0x1360] sm:$0xff]
    %v5779 = vld [vmem:[%s9 + $0x1368] sm:$0xff]
    %v5780 = vld [vmem:[%s9 + $0x1370] sm:$0xff]
    %v5781 = vld [vmem:[%s9 + $0x1378] sm:$0xff]
    %v5782 = vld [vmem:[%s9 + $0x1380] sm:$0xff]
    %v5783 = vld [vmem:[%s9 + $0x1388] sm:$0xff]
    %v5784 = vld [vmem:[%s9 + $0x1390] sm:$0xff]
    %v5785 = vld [vmem:[%s9 + $0x1398] sm:$0xff]
    %v5786 = vld [vmem:[%s9 + $0x13a0] sm:$0xff]
    %v5787 = vld [vmem:[%s9 + $0x13a8] sm:$0xff]
    %v5788 = vld [vmem:[%s9 + $0x13b0] sm:$0xff]
    %v5789 = vld [vmem:[%s9 + $0x13b8] sm:$0xff]
    %v5790 = vld [vmem:[%s9 + $0x13c0] sm:$0xff]
    %v5791 = vld [vmem:[%s9 + $0x13c8] sm:$0xff]
    %v5792 = vld [vmem:[%s9 + $0x13d0] sm:$0xff]
    %v5793 = vld [vmem:[%s9 + $0x13d8] sm:$0xff]
    %v5794 = vld [vmem:[%s9 + $0x13e0] sm:$0xff]
    %v5795 = vld [vmem:[%s9 + $0x13e8] sm:$0xff]
    %v5796 = vld [vmem:[%s9 + $0x13f0] sm:$0xff]
    %v5797 = vld [vmem:[%s9 + $0x13f8] sm:$0xff]
    %v5798 = vld [vmem:[%s9 + $0x1400] sm:$0xff]
    %v5799 = vld [vmem:[%s9 + $0x1408] sm:$0xff]
    %v5800 = vld [vmem:[%s9 + $0x1410] sm:$0xff]
    %v5801 = vld [vmem:[%s9 + $0x1418] sm:$0xff]
    %v5802 = vld [vmem:[%s9 + $0x1420] sm:$0xff]
    %v5803 = vld [vmem:[%s9 + $0x1428] sm:$0xff]
    %v5804 = vld [vmem:[%s9 + $0x1430] sm:$0xff]
    %v5805 = vld [vmem:[%s9 + $0x1438] sm:$0xff]
    %v5806 = vld [vmem:[%s9 + $0x1440] sm:$0xff]
    %v5807 = vld [vmem:[%s9 + $0x1448] sm:$0xff]
    %v5808 = vld [vmem:[%s9 + $0x1450] sm:$0xff]
    %v5809 = vld [vmem:[%s9 + $0x1458] sm:$0xff]
    %v5810 = vld [vmem:[%s9 + $0x1460] sm:$0xff]
    %v5811 = vld [vmem:[%s9 + $0x1468] sm:$0xff]
    %v5812 = vld [vmem:[%s9 + $0x1470] sm:$0xff]
    %v5813 = vld [vmem:[%s9 + $0x1478] sm:$0xff]
    %v5814 = vld [vmem:[%s9 + $0x1480] sm:$0xff]
    %v5815 = vld [vmem:[%s9 + $0x1488] sm:$0xff]
    %v5816 = vld [vmem:[%s9 + $0x1490] sm:$0xff]
    %v5817 = vld [vmem:[%s9 + $0x1498] sm:$0xff]
    %v5818 = vld [vmem:[%s9 + $0x14a0] sm:$0xff]
    %v5819 = vld [vmem:[%s9 + $0x14a8] sm:$0xff]
    %v5820 = vld [vmem:[%s9 + $0x14b0] sm:$0xff]
    %v5821 = vld [vmem:[%s9 + $0x14b8] sm:$0xff]
    %v5822 = vld [vmem:[%s9 + $0x14c0] sm:$0xff]
    %v5823 = vld [vmem:[%s9 + $0x14c8] sm:$0xff]
    %v5824 = vld [vmem:[%s9 + $0x14d0] sm:$0xff]
    %v5825 = vld [vmem:[%s9 + $0x14d8] sm:$0xff]
    %v5826 = vld [vmem:[%s9 + $0x14e0] sm:$0xff]
    %v5827 = vld [vmem:[%s9 + $0x14e8] sm:$0xff]
    %v5828 = vld [vmem:[%s9 + $0x14f0] sm:$0xff]
    %v5829 = vld [vmem:[%s9 + $0x14f8] sm:$0xff]
    %v5830 = vld [vmem:[%s9 + $0x1500] sm:$0xff]
    %v5831 = vld [vmem:[%s9 + $0x1508] sm:$0xff]
    %v5832 = vld [vmem:[%s9 + $0x1510] sm:$0xff]
    %v5833 = vld [vmem:[%s9 + $0x1518] sm:$0xff]
    %v5834 = vld [vmem:[%s9 + $0x1520] sm:$0xff]
    %v5835 = vld [vmem:[%s9 + $0x1528] sm:$0xff]
    %v5836 = vld [vmem:[%s9 + $0x1530] sm:$0xff]
    %v5837 = vld [vmem:[%s9 + $0x1538] sm:$0xff]
    %v5838 = vld [vmem:[%s9 + $0x1540] sm:$0xff]
    %v5839 = vld [vmem:[%s9 + $0x1548] sm:$0xff]
    %v5840 = vld [vmem:[%s9 + $0x1550] sm:$0xff]
    %v5841 = vld [vmem:[%s9 + $0x1558] sm:$0xff]
    %v5842 = vld [vmem:[%s9 + $0x1560] sm:$0xff]
    %v5843 = vld [vmem:[%s9 + $0x1568] sm:$0xff]
    %v5844 = vld [vmem:[%s9 + $0x1570] sm:$0xff]
    %v5845 = vld [vmem:[%s9 + $0x1578] sm:$0xff]
    %v5846 = vld [vmem:[%s9 + $0x1580] sm:$0xff]
    %v5847 = vld [vmem:[%s9 + $0x1588] sm:$0xff]
    %v5848 = vld [vmem:[%s9 + $0x1590] sm:$0xff]
    %v5849 = vld [vmem:[%s9 + $0x1598] sm:$0xff]
    %v5850 = vld [vmem:[%s9 + $0x15a0] sm:$0xff]
    %v5851 = vld [vmem:[%s9 + $0x15a8] sm:$0xff]
    %v5852 = vld [vmem:[%s9 + $0x15b0] sm:$0xff]
    %v5853 = vld [vmem:[%s9 + $0x15b8] sm:$0xff]
    %v5854 = vld [vmem:[%s9 + $0x15c0] sm:$0xff]
    %v5855 = vld [vmem:[%s9 + $0x15c8] sm:$0xff]
    %v5856 = vld [vmem:[%s9 + $0x15d0] sm:$0xff]
    %v5857 = vld [vmem:[%s9 + $0x15d8] sm:$0xff]
    %v5858 = vld [vmem:[%s9 + $0x15e0] sm:$0xff]
    %v5859 = vld [vmem:[%s9 + $0x15e8] sm:$0xff]
    %v5860 = vld [vmem:[%s9 + $0x15f0] sm:$0xff]
    %v5861 = vld [vmem:[%s9 + $0x15f8] sm:$0xff]
    %v5862 = vld [vmem:[%s9 + $0x1600] sm:$0xff]
    %v5863 = vld [vmem:[%s9 + $0x1608] sm:$0xff]
    %v5864 = vld [vmem:[%s9 + $0x1610] sm:$0xff]
    %v5865 = vld [vmem:[%s9 + $0x1618] sm:$0xff]
    %v5866 = vld [vmem:[%s9 + $0x1620] sm:$0xff]
    %v5867 = vld [vmem:[%s9 + $0x1628] sm:$0xff]
    %v5868 = vld [vmem:[%s9 + $0x1630] sm:$0xff]
    %v5869 = vld [vmem:[%s9 + $0x1638] sm:$0xff]
    %v5870 = vld [vmem:[%s9 + $0x1640] sm:$0xff]
    %v5871 = vld [vmem:[%s9 + $0x1648] sm:$0xff]
    %v5872 = vld [vmem:[%s9 + $0x1650] sm:$0xff]
    %v5873 = vld [vmem:[%s9 + $0x1658] sm:$0xff]
    %v5874 = vld [vmem:[%s9 + $0x1660] sm:$0xff]
    %v5875 = vld [vmem:[%s9 + $0x1668] sm:$0xff]
    %v5876 = vld [vmem:[%s9 + $0x1670] sm:$0xff]
    %v5877 = vld [vmem:[%s9 + $0x1678] sm:$0xff]
    %v5878 = vld [vmem:[%s9 + $0x1680] sm:$0xff]
    %v5879 = vld [vmem:[%s9 + $0x1688] sm:$0xff]
    %v5880 = vld [vmem:[%s9 + $0x1690] sm:$0xff]
    %v5881 = vld [vmem:[%s9 + $0x1698] sm:$0xff]
    %v5882 = vld [vmem:[%s9 + $0x16a0] sm:$0xff]
    %v5883 = vld [vmem:[%s9 + $0x16a8] sm:$0xff]
    %v5884 = vld [vmem:[%s9 + $0x16b0] sm:$0xff]
    %v5885 = vld [vmem:[%s9 + $0x16b8] sm:$0xff]
    %v5886 = vld [vmem:[%s9 + $0x16c0] sm:$0xff]
    %v5887 = vld [vmem:[%s9 + $0x16c8] sm:$0xff]
    %v5888 = vld [vmem:[%s9 + $0x16d0] sm:$0xff]
    %v5889 = vld [vmem:[%s9 + $0x16d8] sm:$0xff]
    %v5890 = vld [vmem:[%s9 + $0x16e0] sm:$0xff]
    %v5891 = vld [vmem:[%s9 + $0x16e8] sm:$0xff]
    %v5892 = vld [vmem:[%s9 + $0x16f0] sm:$0xff]
    %v5893 = vld [vmem:[%s9 + $0x16f8] sm:$0xff]
    %v5894 = vld [vmem:[%s9 + $0x1700] sm:$0xff]
    %v5895 = vld [vmem:[%s9 + $0x1708] sm:$0xff]
    %v5896 = vld [vmem:[%s9 + $0x1710] sm:$0xff]
    %v5897 = vld [vmem:[%s9 + $0x1718] sm:$0xff]
    %v5898 = vld [vmem:[%s9 + $0x1720] sm:$0xff]
    %v5899 = vld [vmem:[%s9 + $0x1728] sm:$0xff]
    %v5900 = vld [vmem:[%s9 + $0x1730] sm:$0xff]
    %v5901 = vld [vmem:[%s9 + $0x1738] sm:$0xff]
    %v5902 = vld [vmem:[%s9 + $0x1740] sm:$0xff]
    %v5903 = vld [vmem:[%s9 + $0x1748] sm:$0xff]
    %v5904 = vld [vmem:[%s9 + $0x1750] sm:$0xff]
    %v5905 = vld [vmem:[%s9 + $0x1758] sm:$0xff]
    %v5906 = vld [vmem:[%s9 + $0x1760] sm:$0xff]
    %v5907 = vld [vmem:[%s9 + $0x1768] sm:$0xff]
    %v5908 = vld [vmem:[%s9 + $0x1770] sm:$0xff]
    %v5909 = vld [vmem:[%s9 + $0x1778] sm:$0xff]
    %v5910 = vld [vmem:[%s9 + $0x1780] sm:$0xff]
    %v5911 = vld [vmem:[%s9 + $0x1788] sm:$0xff]
    %v5912 = vld [vmem:[%s9 + $0x1790] sm:$0xff]
    %v5913 = vld [vmem:[%s9 + $0x1798] sm:$0xff]
    %v5914 = vld [vmem:[%s9 + $0x17a0] sm:$0xff]
    %v5915 = vld [vmem:[%s9 + $0x17a8] sm:$0xff]
    %v5916 = vld [vmem:[%s9 + $0x17b0] sm:$0xff]
    %v5917 = vld [vmem:[%s9 + $0x17b8] sm:$0xff]
    %v5918 = vld [vmem:[%s9 + $0x17c0] sm:$0xff]
    %v5919 = vld [vmem:[%s9 + $0x17c8] sm:$0xff]
    %v5920 = vld [vmem:[%s9 + $0x17d0] sm:$0xff]
    %v5921 = vld [vmem:[%s9 + $0x17d8] sm:$0xff]
    %v5922 = vld [vmem:[%s9 + $0x17e0] sm:$0xff]
    %v5923 = vld [vmem:[%s9 + $0x17e8] sm:$0xff]
    %v5924 = vld [vmem:[%s9 + $0x17f0] sm:$0xff]
    %v5925 = vld [vmem:[%s9 + $0x17f8] sm:$0xff]
    %v5926 = vld [vmem:[%s9 + $0x1800] sm:$0xff]
    %v5927 = vld [vmem:[%s9 + $0x1808] sm:$0xff]
    %v5928 = vld [vmem:[%s9 + $0x1810] sm:$0xff]
    %v5929 = vld [vmem:[%s9 + $0x1818] sm:$0xff]
    %v5930 = vld [vmem:[%s9 + $0x1820] sm:$0xff]
    %v5931 = vld [vmem:[%s9 + $0x1828] sm:$0xff]
    %v5932 = vld [vmem:[%s9 + $0x1830] sm:$0xff]
    %v5933 = vld [vmem:[%s9 + $0x1838] sm:$0xff]
    %v5934 = vld [vmem:[%s9 + $0x1840] sm:$0xff]
    %v5935 = vld [vmem:[%s9 + $0x1848] sm:$0xff]
    %v5936 = vld [vmem:[%s9 + $0x1850] sm:$0xff]
    %v5937 = vld [vmem:[%s9 + $0x1858] sm:$0xff]
    %v5938 = vld [vmem:[%s9 + $0x1860] sm:$0xff]
    %v5939 = vld [vmem:[%s9 + $0x1868] sm:$0xff]
    %v5940 = vld [vmem:[%s9 + $0x1870] sm:$0xff]
    %v5941 = vld [vmem:[%s9 + $0x1878] sm:$0xff]
    %v5942 = vld [vmem:[%s9 + $0x1880] sm:$0xff]
    %v5943 = vld [vmem:[%s9 + $0x1888] sm:$0xff]
    %v5944 = vld [vmem:[%s9 + $0x1890] sm:$0xff]
    %v5945 = vld [vmem:[%s9 + $0x1898] sm:$0xff]
    %v5946 = vld [vmem:[%s9 + $0x18a0] sm:$0xff]
    %v5947 = vld [vmem:[%s9 + $0x18a8] sm:$0xff]
    %v5948 = vld [vmem:[%s9 + $0x18b0] sm:$0xff]
    %v5949 = vld [vmem:[%s9 + $0x18b8] sm:$0xff]
    %v5950 = vld [vmem:[%s9 + $0x18c0] sm:$0xff]
    %v5951 = vld [vmem:[%s9 + $0x18c8] sm:$0xff]
    %v5952 = vld [vmem:[%s9 + $0x18d0] sm:$0xff]
    %v5953 = vld [vmem:[%s9 + $0x18d8] sm:$0xff]
    %v5954 = vld [vmem:[%s9 + $0x18e0] sm:$0xff]
    %v5955 = vld [vmem:[%s9 + $0x18e8] sm:$0xff]
    %v5956 = vld [vmem:[%s9 + $0x18f0] sm:$0xff]
    %v5957 = vld [vmem:[%s9 + $0x18f8] sm:$0xff]
    %v5958 = vld [vmem:[%s9 + $0x1900] sm:$0xff]
    %v5959 = vld [vmem:[%s9 + $0x1908] sm:$0xff]
    %v5960 = vld [vmem:[%s9 + $0x1910] sm:$0xff]
    %v5961 = vld [vmem:[%s9 + $0x1918] sm:$0xff]
    %v5962 = vld [vmem:[%s9 + $0x1920] sm:$0xff]
    %v5963 = vld [vmem:[%s9 + $0x1928] sm:$0xff]
    %v5964 = vld [vmem:[%s9 + $0x1930] sm:$0xff]
    %v5965 = vld [vmem:[%s9 + $0x1938] sm:$0xff]
    %v5966 = vld [vmem:[%s9 + $0x1940] sm:$0xff]
    %v5967 = vld [vmem:[%s9 + $0x1948] sm:$0xff]
    %v5968 = vld [vmem:[%s9 + $0x1950] sm:$0xff]
    %v5969 = vld [vmem:[%s9 + $0x1958] sm:$0xff]
    %v5970 = vld [vmem:[%s9 + $0x1960] sm:$0xff]
    %v5971 = vld [vmem:[%s9 + $0x1968] sm:$0xff]
    %v5972 = vld [vmem:[%s9 + $0x1970] sm:$0xff]
    %v5973 = vld [vmem:[%s9 + $0x1978] sm:$0xff]
    %v5974 = vld [vmem:[%s9 + $0x1980] sm:$0xff]
    %v5975 = vld [vmem:[%s9 + $0x1988] sm:$0xff]
    %v5976 = vld [vmem:[%s9 + $0x1990] sm:$0xff]
    %v5977 = vld [vmem:[%s9 + $0x1998] sm:$0xff]
    %v5978 = vld [vmem:[%s9 + $0x19a0] sm:$0xff]
    %v5979 = vld [vmem:[%s9 + $0x19a8] sm:$0xff]
    %v5980 = vld [vmem:[%s9 + $0x19b0] sm:$0xff]
    %v5981 = vld [vmem:[%s9 + $0x19b8] sm:$0xff]
    %v5982 = vld [vmem:[%s9 + $0x19c0] sm:$0xff]
    %v5983 = vld [vmem:[%s9 + $0x19c8] sm:$0xff]
    %v5984 = vld [vmem:[%s9 + $0x19d0] sm:$0xff]
    %v5985 = vld [vmem:[%s9 + $0x19d8] sm:$0xff]
    %v5986 = vld [vmem:[%s9 + $0x19e0] sm:$0xff]
    %v5987 = vld [vmem:[%s9 + $0x19e8] sm:$0xff]
    %v5988 = vld [vmem:[%s9 + $0x19f0] sm:$0xff]
    %v5989 = vld [vmem:[%s9 + $0x19f8] sm:$0xff]
    %v5990 = vld [vmem:[%s9 + $0x1a00] sm:$0xff]
    %v5991 = vld [vmem:[%s9 + $0x1a08] sm:$0xff]
    %v5992 = vld [vmem:[%s9 + $0x1a10] sm:$0xff]
    %v5993 = vld [vmem:[%s9 + $0x1a18] sm:$0xff]
    %v5994 = vld [vmem:[%s9 + $0x1a20] sm:$0xff]
    %v5995 = vld [vmem:[%s9 + $0x1a28] sm:$0xff]
    %v5996 = vld [vmem:[%s9 + $0x1a30] sm:$0xff]
    %v5997 = vld [vmem:[%s9 + $0x1a38] sm:$0xff]
    %v5998 = vld [vmem:[%s9 + $0x1a40] sm:$0xff]
    %v5999 = vld [vmem:[%s9 + $0x1a48] sm:$0xff]
    %v6000 = vld [vmem:[%s9 + $0x1a50] sm:$0xff]
    %v6001 = vld [vmem:[%s9 + $0x1a58] sm:$0xff]
    %v6002 = vld [vmem:[%s9 + $0x1a60] sm:$0xff]
    %v6003 = vld [vmem:[%s9 + $0x1a68] sm:$0xff]
    %v6004 = vld [vmem:[%s9 + $0x1a70] sm:$0xff]
    %v6005 = vld [vmem:[%s9 + $0x1a78] sm:$0xff]
    %v6006 = vld [vmem:[%s9 + $0x1a80] sm:$0xff]
    %v6007 = vld [vmem:[%s9 + $0x1a88] sm:$0xff]
    %v6008 = vld [vmem:[%s9 + $0x1a90] sm:$0xff]
    %v6009 = vld [vmem:[%s9 + $0x1a98] sm:$0xff]
    %v6010 = vld [vmem:[%s9 + $0x1aa0] sm:$0xff]
    %v6011 = vld [vmem:[%s9 + $0x1aa8] sm:$0xff]
    %v6012 = vld [vmem:[%s9 + $0x1ab0] sm:$0xff]
    %v6013 = vld [vmem:[%s9 + $0x1ab8] sm:$0xff]
    %v6014 = vld [vmem:[%s9 + $0x1ac0] sm:$0xff]
    %v6015 = vld [vmem:[%s9 + $0x1ac8] sm:$0xff]
    %v6016 = vld [vmem:[%s9 + $0x1ad0] sm:$0xff]
    %v6017 = vld [vmem:[%s9 + $0x1ad8] sm:$0xff]
    %v6018 = vld [vmem:[%s9 + $0x1ae0] sm:$0xff]
    %v6019 = vld [vmem:[%s9 + $0x1ae8] sm:$0xff]
    %v6020 = vld [vmem:[%s9 + $0x1af0] sm:$0xff]
    %v6021 = vld [vmem:[%s9 + $0x1af8] sm:$0xff]
    %v6022 = vld [vmem:[%s9 + $0x1b00] sm:$0xff]
    %v6023 = vld [vmem:[%s9 + $0x1b08] sm:$0xff]
    %v6024 = vld [vmem:[%s9 + $0x1b10] sm:$0xff]
    %v6025 = vld [vmem:[%s9 + $0x1b18] sm:$0xff]
    %v6026 = vld [vmem:[%s9 + $0x1b20] sm:$0xff]
    %v6027 = vld [vmem:[%s9 + $0x1b28] sm:$0xff]
    %v6028 = vld [vmem:[%s9 + $0x1b30] sm:$0xff]
    %v6029 = vld [vmem:[%s9 + $0x1b38] sm:$0xff]
    %v6030 = vld [vmem:[%s9 + $0x1b40] sm:$0xff]
    %v6031 = vld [vmem:[%s9 + $0x1b48] sm:$0xff]
    %v6032 = vld [vmem:[%s9 + $0x1b50] sm:$0xff]
    %v6033 = vld [vmem:[%s9 + $0x1b58] sm:$0xff]
    %v6034 = vld [vmem:[%s9 + $0x1b60] sm:$0xff]
    %v6035 = vld [vmem:[%s9 + $0x1b68] sm:$0xff]
    %v6036 = vld [vmem:[%s9 + $0x1b70] sm:$0xff]
    %v6037 = vld [vmem:[%s9 + $0x1b78] sm:$0xff]
    %v6038 = vld [vmem:[%s9 + $0x1b80] sm:$0xff]
    %v6039 = vld [vmem:[%s9 + $0x1b88] sm:$0xff]
    %v6040 = vld [vmem:[%s9 + $0x1b90] sm:$0xff]
    %v6041 = vld [vmem:[%s9 + $0x1b98] sm:$0xff]
    %v6042 = vld [vmem:[%s9 + $0x1ba0] sm:$0xff]
    %v6043 = vld [vmem:[%s9 + $0x1ba8] sm:$0xff]
    %v6044 = vld [vmem:[%s9 + $0x1bb0] sm:$0xff]
    %v6045 = vld [vmem:[%s9 + $0x1bb8] sm:$0xff]
    %v6046 = vld [vmem:[%s9 + $0x1bc0] sm:$0xff]
    %v6047 = vld [vmem:[%s9 + $0x1bc8] sm:$0xff]
    %v6048 = vld [vmem:[%s9 + $0x1bd0] sm:$0xff]
    %v6049 = vld [vmem:[%s9 + $0x1bd8] sm:$0xff]
    %v6050 = vld [vmem:[%s9 + $0x1be0] sm:$0xff]
    %v6051 = vld [vmem:[%s9 + $0x1be8] sm:$0xff]
    %v6052 = vld [vmem:[%s9 + $0x1bf0] sm:$0xff]
    %v6053 = vld [vmem:[%s9 + $0x1bf8] sm:$0xff]
    %v6054 = vld [vmem:[%s9 + $0x1c00] sm:$0xff]
    %v6055 = vld [vmem:[%s9 + $0x1c08] sm:$0xff]
    %v6056 = vld [vmem:[%s9 + $0x1c10] sm:$0xff]
    %v6057 = vld [vmem:[%s9 + $0x1c18] sm:$0xff]
    %v6058 = vld [vmem:[%s9 + $0x1c20] sm:$0xff]
    %v6059 = vld [vmem:[%s9 + $0x1c28] sm:$0xff]
    %v6060 = vld [vmem:[%s9 + $0x1c30] sm:$0xff]
    %v6061 = vld [vmem:[%s9 + $0x1c38] sm:$0xff]
    %v6062 = vld [vmem:[%s9 + $0x1c40] sm:$0xff]
    %v6063 = vld [vmem:[%s9 + $0x1c48] sm:$0xff]
    %v6064 = vld [vmem:[%s9 + $0x1c50] sm:$0xff]
    %v6065 = vld [vmem:[%s9 + $0x1c58] sm:$0xff]
    %v6066 = vld [vmem:[%s9 + $0x1c60] sm:$0xff]
    %v6067 = vld [vmem:[%s9 + $0x1c68] sm:$0xff]
    %v6068 = vld [vmem:[%s9 + $0x1c70] sm:$0xff]
    %v6069 = vld [vmem:[%s9 + $0x1c78] sm:$0xff]
    %v6070 = vld [vmem:[%s9 + $0x1c80] sm:$0xff]
    %v6071 = vld [vmem:[%s9 + $0x1c88] sm:$0xff]
    %v6072 = vld [vmem:[%s9 + $0x1c90] sm:$0xff]
    %v6073 = vld [vmem:[%s9 + $0x1c98] sm:$0xff]
    %v6074 = vld [vmem:[%s9 + $0x1ca0] sm:$0xff]
    %v6075 = vld [vmem:[%s9 + $0x1ca8] sm:$0xff]
    %v6076 = vld [vmem:[%s9 + $0x1cb0] sm:$0xff]
    %v6077 = vld [vmem:[%s9 + $0x1cb8] sm:$0xff]
    %v6078 = vld [vmem:[%s9 + $0x1cc0] sm:$0xff]
    %v6079 = vld [vmem:[%s9 + $0x1cc8] sm:$0xff]
    %v6080 = vld [vmem:[%s9 + $0x1cd0] sm:$0xff]
    %v6081 = vld [vmem:[%s9 + $0x1cd8] sm:$0xff]
    %v6082 = vld [vmem:[%s9 + $0x1ce0] sm:$0xff]
    %v6083 = vld [vmem:[%s9 + $0x1ce8] sm:$0xff]
    %v6084 = vld [vmem:[%s9 + $0x1cf0] sm:$0xff]
    %v6085 = vld [vmem:[%s9 + $0x1cf8] sm:$0xff]
    %v6086 = vld [vmem:[%s9 + $0x1d00] sm:$0xff]
    %v6087 = vld [vmem:[%s9 + $0x1d08] sm:$0xff]
    %v6088 = vld [vmem:[%s9 + $0x1d10] sm:$0xff]
    %v6089 = vld [vmem:[%s9 + $0x1d18] sm:$0xff]
    %v6090 = vld [vmem:[%s9 + $0x1d20] sm:$0xff]
    %v6091 = vld [vmem:[%s9 + $0x1d28] sm:$0xff]
    %v6092 = vld [vmem:[%s9 + $0x1d30] sm:$0xff]
    %v6093 = vld [vmem:[%s9 + $0x1d38] sm:$0xff]
    %v6094 = vld [vmem:[%s9 + $0x1d40] sm:$0xff]
    %v6095 = vld [vmem:[%s9 + $0x1d48] sm:$0xff]
    %v6096 = vld [vmem:[%s9 + $0x1d50] sm:$0xff]
    %v6097 = vld [vmem:[%s9 + $0x1d58] sm:$0xff]
    %v6098 = vld [vmem:[%s9 + $0x1d60] sm:$0xff]
    %v6099 = vld [vmem:[%s9 + $0x1d68] sm:$0xff]
    %v6100 = vld [vmem:[%s9 + $0x1d70] sm:$0xff]
    %v6101 = vld [vmem:[%s9 + $0x1d78] sm:$0xff]
    %v6102 = vld [vmem:[%s9 + $0x1d80] sm:$0xff]
    %v6103 = vld [vmem:[%s9 + $0x1d88] sm:$0xff]
    %v6104 = vld [vmem:[%s9 + $0x1d90] sm:$0xff]
    %v6105 = vld [vmem:[%s9 + $0x1d98] sm:$0xff]
    %v6106 = vld [vmem:[%s9 + $0x1da0] sm:$0xff]
    %v6107 = vld [vmem:[%s9 + $0x1da8] sm:$0xff]
    %v6108 = vld [vmem:[%s9 + $0x1db0] sm:$0xff]
    %v6109 = vld [vmem:[%s9 + $0x1db8] sm:$0xff]
    %v6110 = vld [vmem:[%s9 + $0x1dc0] sm:$0xff]
    %v6111 = vld [vmem:[%s9 + $0x1dc8] sm:$0xff]
    %v6112 = vld [vmem:[%s9 + $0x1dd0] sm:$0xff]
    %v6113 = vld [vmem:[%s9 + $0x1dd8] sm:$0xff]
    %v6114 = vld [vmem:[%s9 + $0x1de0] sm:$0xff]
    %v6115 = vld [vmem:[%s9 + $0x1de8] sm:$0xff]
    %v6116 = vld [vmem:[%s9 + $0x1df0] sm:$0xff]
    %v6117 = vld [vmem:[%s9 + $0x1df8] sm:$0xff]
    %v6118 = vld [vmem:[%s9 + $0x1e00] sm:$0xff]
    %v6119 = vld [vmem:[%s9 + $0x1e08] sm:$0xff]
    %v6120 = vld [vmem:[%s9 + $0x1e10] sm:$0xff]
    %v6121 = vld [vmem:[%s9 + $0x1e18] sm:$0xff]
    %v6122 = vld [vmem:[%s9 + $0x1e20] sm:$0xff]
    %v6123 = vld [vmem:[%s9 + $0x1e28] sm:$0xff]
    %v6124 = vld [vmem:[%s9 + $0x1e30] sm:$0xff]
    %v6125 = vld [vmem:[%s9 + $0x1e38] sm:$0xff]
    %v6126 = vld [vmem:[%s9 + $0x1e40] sm:$0xff]
    %v6127 = vld [vmem:[%s9 + $0x1e48] sm:$0xff]
    %v6128 = vld [vmem:[%s9 + $0x1e50] sm:$0xff]
    %v6129 = vld [vmem:[%s9 + $0x1e58] sm:$0xff]
    %v6130 = vld [vmem:[%s9 + $0x1e60] sm:$0xff]
    %v6131 = vld [vmem:[%s9 + $0x1e68] sm:$0xff]
    %v6132 = vld [vmem:[%s9 + $0x1e70] sm:$0xff]
    %v6133 = vld [vmem:[%s9 + $0x1e78] sm:$0xff]
    %v6134 = vld [vmem:[%s9 + $0x1e80] sm:$0xff]
    %v6135 = vld [vmem:[%s9 + $0x1e88] sm:$0xff]
    %v6136 = vld [vmem:[%s9 + $0x1e90] sm:$0xff]
    %v6137 = vld [vmem:[%s9 + $0x1e98] sm:$0xff]
    %v6138 = vld [vmem:[%s9 + $0x1ea0] sm:$0xff]
    %v6139 = vld [vmem:[%s9 + $0x1ea8] sm:$0xff]
    %v6140 = vld [vmem:[%s9 + $0x1eb0] sm:$0xff]
    %v6141 = vld [vmem:[%s9 + $0x1eb8] sm:$0xff]
    %v6142 = vld [vmem:[%s9 + $0x1ec0] sm:$0xff]
    %v6143 = vld [vmem:[%s9 + $0x1ec8] sm:$0xff]
    %v6144 = vld [vmem:[%s9 + $0x1ed0] sm:$0xff]
    %v6145 = vld [vmem:[%s9 + $0x1ed8] sm:$0xff]
    %v6146 = vld [vmem:[%s9 + $0x1ee0] sm:$0xff]
    %v6147 = vld [vmem:[%s9 + $0x1ee8] sm:$0xff]
    %v6148 = vld [vmem:[%s9 + $0x1ef0] sm:$0xff]
    %v6149 = vld [vmem:[%s9 + $0x1ef8] sm:$0xff]
    %v6150 = vld [vmem:[%s9 + $0x1f00] sm:$0xff]
    %v6151 = vld [vmem:[%s9 + $0x1f08] sm:$0xff]
    %v6152 = vld [vmem:[%s9 + $0x1f10] sm:$0xff]
    %v6153 = vld [vmem:[%s9 + $0x1f18] sm:$0xff]
    %v6154 = vld [vmem:[%s9 + $0x1f20] sm:$0xff]
    %v6155 = vld [vmem:[%s9 + $0x1f28] sm:$0xff]
    %v6156 = vld [vmem:[%s9 + $0x1f30] sm:$0xff]
    %v6157 = vld [vmem:[%s9 + $0x1f38] sm:$0xff]
    %v6158 = vld [vmem:[%s9 + $0x1f40] sm:$0xff]
    %v6159 = vld [vmem:[%s9 + $0x1f48] sm:$0xff]
    %v6160 = vld [vmem:[%s9 + $0x1f50] sm:$0xff]
    %v6161 = vld [vmem:[%s9 + $0x1f58] sm:$0xff]
    %v6162 = vld [vmem:[%s9 + $0x1f60] sm:$0xff]
    %v6163 = vld [vmem:[%s9 + $0x1f68] sm:$0xff]
    %v6164 = vld [vmem:[%s9 + $0x1f70] sm:$0xff]
    %v6165 = vld [vmem:[%s9 + $0x1f78] sm:$0xff]
    %v6166 = vld [vmem:[%s9 + $0x1f80] sm:$0xff]
    %v6167 = vld [vmem:[%s9 + $0x1f88] sm:$0xff]
    %v6168 = vld [vmem:[%s9 + $0x1f90] sm:$0xff]
    %v6169 = vld [vmem:[%s9 + $0x1f98] sm:$0xff]
    %v6170 = vld [vmem:[%s9 + $0x1fa0] sm:$0xff]
    %v6171 = vld [vmem:[%s9 + $0x1fa8] sm:$0xff]
    %v6172 = vld [vmem:[%s9 + $0x1fb0] sm:$0xff]
    %v6173 = vld [vmem:[%s9 + $0x1fb8] sm:$0xff]
    %v6174 = vld [vmem:[%s9 + $0x1fc0] sm:$0xff]
    %v6175 = vld [vmem:[%s9 + $0x1fc8] sm:$0xff]
    %v6176 = vld [vmem:[%s9 + $0x1fd0] sm:$0xff]
    %v6177 = vld [vmem:[%s9 + $0x1fd8] sm:$0xff]
    %v6178 = vld [vmem:[%s9 + $0x1fe0] sm:$0xff]
    %v6179 = vld [vmem:[%s9 + $0x1fe8] sm:$0xff]
    %v6180 = vld [vmem:[%s9 + $0x1ff0] sm:$0xff]
    %v6181 = vld [vmem:[%s9 + $0x1ff8] sm:$0xff]
    %v6182 = vld [vmem:[%s9 + $0x2000] sm:$0xff]
    %v6183 = vld [vmem:[%s9 + $0x2008] sm:$0xff]
    %v6184 = vld [vmem:[%s9 + $0x2010] sm:$0xff]
    %v6185 = vld [vmem:[%s9 + $0x2018] sm:$0xff]
    %v6186 = vld [vmem:[%s9 + $0x2020] sm:$0xff]
    %v6187 = vld [vmem:[%s9 + $0x2028] sm:$0xff]
    %v6188 = vld [vmem:[%s9 + $0x2030] sm:$0xff]
    %v6189 = vld [vmem:[%s9 + $0x2038] sm:$0xff]
    %v6190 = vld [vmem:[%s9 + $0x2040] sm:$0xff]
    %v6191 = vld [vmem:[%s9 + $0x2048] sm:$0xff]
    %v6192 = vld [vmem:[%s9 + $0x2050] sm:$0xff]
    %v6193 = vld [vmem:[%s9 + $0x2058] sm:$0xff]
    %v6194 = vld [vmem:[%s9 + $0x2060] sm:$0xff]
    %v6195 = vld [vmem:[%s9 + $0x2068] sm:$0xff]
    %v6196 = vld [vmem:[%s9 + $0x2070] sm:$0xff]
    %v6197 = vld [vmem:[%s9 + $0x2078] sm:$0xff]
    %v6198 = vld [vmem:[%s9 + $0x2080] sm:$0xff]
    %v6199 = vld [vmem:[%s9 + $0x2088] sm:$0xff]
    %v6200 = vld [vmem:[%s9 + $0x2090] sm:$0xff]
    %v6201 = vld [vmem:[%s9 + $0x2098] sm:$0xff]
    %v6202 = vld [vmem:[%s9 + $0x20a0] sm:$0xff]
    %v6203 = vld [vmem:[%s9 + $0x20a8] sm:$0xff]
    %v6204 = vld [vmem:[%s9 + $0x20b0] sm:$0xff]
    %v6205 = vld [vmem:[%s9 + $0x20b8] sm:$0xff]
    %v6206 = vld [vmem:[%s9 + $0x20c0] sm:$0xff]
    %v6207 = vld [vmem:[%s9 + $0x20c8] sm:$0xff]
    %v6208 = vld [vmem:[%s9 + $0x20d0] sm:$0xff]
    %v6209 = vld [vmem:[%s9 + $0x20d8] sm:$0xff]
    %v6210 = vld [vmem:[%s9 + $0x20e0] sm:$0xff]
    %v6211 = vld [vmem:[%s9 + $0x20e8] sm:$0xff]
    %v6212 = vld [vmem:[%s9 + $0x20f0] sm:$0xff]
    %v6213 = vld [vmem:[%s9 + $0x20f8] sm:$0xff]
    %v6214 = vld [vmem:[%s9 + $0x2100] sm:$0xff]
    %v6215 = vld [vmem:[%s9 + $0x2108] sm:$0xff]
    %v6216 = vld [vmem:[%s9 + $0x2110] sm:$0xff]
    %v6217 = vld [vmem:[%s9 + $0x2118] sm:$0xff]
    %v6218 = vld [vmem:[%s9 + $0x2120] sm:$0xff]
    %v6219 = vld [vmem:[%s9 + $0x2128] sm:$0xff]
    %v6220 = vld [vmem:[%s9 + $0x2130] sm:$0xff]
    %v6221 = vld [vmem:[%s9 + $0x2138] sm:$0xff]
    %v6222 = vld [vmem:[%s9 + $0x2140] sm:$0xff]
    %v6223 = vld [vmem:[%s9 + $0x2148] sm:$0xff]
    %v6224 = vld [vmem:[%s9 + $0x2150] sm:$0xff]
    %v6225 = vld [vmem:[%s9 + $0x2158] sm:$0xff]
    %v6226 = vld [vmem:[%s9 + $0x2160] sm:$0xff]
    %v6227 = vld [vmem:[%s9 + $0x2168] sm:$0xff]
    %v6228 = vld [vmem:[%s9 + $0x2170] sm:$0xff]
    %v6229 = vld [vmem:[%s9 + $0x2178] sm:$0xff]
    %v6230 = vld [vmem:[%s9 + $0x2180] sm:$0xff]
    %v6231 = vld [vmem:[%s9 + $0x2188] sm:$0xff]
    %v6232 = vld [vmem:[%s9 + $0x2190] sm:$0xff]
    %v6233 = vld [vmem:[%s9 + $0x2198] sm:$0xff]
    %v6234 = vld [vmem:[%s9 + $0x21a0] sm:$0xff]
    %v6235 = vld [vmem:[%s9 + $0x21a8] sm:$0xff]
    %v6236 = vld [vmem:[%s9 + $0x21b0] sm:$0xff]
    %v6237 = vld [vmem:[%s9 + $0x21b8] sm:$0xff]
    %v6238 = vld [vmem:[%s9 + $0x21c0] sm:$0xff]
    %v6239 = vld [vmem:[%s9 + $0x21c8] sm:$0xff]
    %v6240 = vld [vmem:[%s9 + $0x21d0] sm:$0xff]
    %v6241 = vld [vmem:[%s9 + $0x21d8] sm:$0xff]
    %v6242 = vld [vmem:[%s9 + $0x21e0] sm:$0xff]
    %v6243 = vld [vmem:[%s9 + $0x21e8] sm:$0xff]
    %v6244 = vld [vmem:[%s9 + $0x21f0] sm:$0xff]
    %v6245 = vld [vmem:[%s9 + $0x21f8] sm:$0xff]
    %v6246 = vld [vmem:[%s9 + $0x2200] sm:$0xff]
    %v6247 = vld [vmem:[%s9 + $0x2208] sm:$0xff]
    %v6248 = vld [vmem:[%s9 + $0x2210] sm:$0xff]
    %v6249 = vld [vmem:[%s9 + $0x2218] sm:$0xff]
    %v6250 = vld [vmem:[%s9 + $0x2220] sm:$0xff]
    %v6251 = vld [vmem:[%s9 + $0x2228] sm:$0xff]
    %v6252 = vld [vmem:[%s9 + $0x2230] sm:$0xff]
    %v6253 = vld [vmem:[%s9 + $0x2238] sm:$0xff]
    %v6254 = vld [vmem:[%s9 + $0x2240] sm:$0xff]
    %v6255 = vld [vmem:[%s9 + $0x2248] sm:$0xff]
    %v6256 = vld [vmem:[%s9 + $0x2250] sm:$0xff]
    %v6257 = vld [vmem:[%s9 + $0x2258] sm:$0xff]
    %v6258 = vld [vmem:[%s9 + $0x2260] sm:$0xff]
    %v6259 = vld [vmem:[%s9 + $0x2268] sm:$0xff]
    %v6260 = vld [vmem:[%s9 + $0x2270] sm:$0xff]
    %v6261 = vld [vmem:[%s9 + $0x2278] sm:$0xff]
    %v6262 = vld [vmem:[%s9 + $0x2280] sm:$0xff]
    %v6263 = vld [vmem:[%s9 + $0x2288] sm:$0xff]
    %v6264 = vld [vmem:[%s9 + $0x2290] sm:$0xff]
    %v6265 = vld [vmem:[%s9 + $0x2298] sm:$0xff]
    %v6266 = vld [vmem:[%s9 + $0x22a0] sm:$0xff]
    %v6267 = vld [vmem:[%s9 + $0x22a8] sm:$0xff]
    %v6268 = vld [vmem:[%s9 + $0x22b0] sm:$0xff]
    %v6269 = vld [vmem:[%s9 + $0x22b8] sm:$0xff]
    %v6270 = vld [vmem:[%s9 + $0x22c0] sm:$0xff]
    %v6271 = vld [vmem:[%s9 + $0x22c8] sm:$0xff]
    %v6272 = vld [vmem:[%s9 + $0x22d0] sm:$0xff]
    %v6273 = vld [vmem:[%s9 + $0x22d8] sm:$0xff]
    %v6274 = vld [vmem:[%s9 + $0x22e0] sm:$0xff]
    %v6275 = vld [vmem:[%s9 + $0x22e8] sm:$0xff]
    %v6276 = vld [vmem:[%s9 + $0x22f0] sm:$0xff]
    %v6277 = vld [vmem:[%s9 + $0x22f8] sm:$0xff]
    %v6278 = vld [vmem:[%s9 + $0x2300] sm:$0xff]
    %v6279 = vld [vmem:[%s9 + $0x2308] sm:$0xff]
    %v6280 = vld [vmem:[%s9 + $0x2310] sm:$0xff]
    %v6281 = vld [vmem:[%s9 + $0x2318] sm:$0xff]
    %v6282 = vld [vmem:[%s9 + $0x2320] sm:$0xff]
    %v6283 = vld [vmem:[%s9 + $0x2328] sm:$0xff]
    %v6284 = vld [vmem:[%s9 + $0x2330] sm:$0xff]
    %v6285 = vld [vmem:[%s9 + $0x2338] sm:$0xff]
    %v6286 = vld [vmem:[%s9 + $0x2340] sm:$0xff]
    %v6287 = vld [vmem:[%s9 + $0x2348] sm:$0xff]
    %v6288 = vld [vmem:[%s9 + $0x2350] sm:$0xff]
    %v6289 = vld [vmem:[%s9 + $0x2358] sm:$0xff]
    %v6290 = vld [vmem:[%s9 + $0x2360] sm:$0xff]
    %v6291 = vld [vmem:[%s9 + $0x2368] sm:$0xff]
    %v6292 = vld [vmem:[%s9 + $0x2370] sm:$0xff]
    %v6293 = vld [vmem:[%s9 + $0x2378] sm:$0xff]
    %v6294 = vld [vmem:[%s9 + $0x2380] sm:$0xff]
    %v6295 = vld [vmem:[%s9 + $0x2388] sm:$0xff]
    %v6296 = vld [vmem:[%s9 + $0x2390] sm:$0xff]
    %v6297 = vld [vmem:[%s9 + $0x2398] sm:$0xff]
    %v6298 = vld [vmem:[%s9 + $0x23a0] sm:$0xff]
    %v6299 = vld [vmem:[%s9 + $0x23a8] sm:$0xff]
    %v6300 = vld [vmem:[%s9 + $0x23b0] sm:$0xff]
    %v6301 = vld [vmem:[%s9 + $0x23b8] sm:$0xff]
    %v6302 = vld [vmem:[%s9 + $0x23c0] sm:$0xff]
    %v6303 = vld [vmem:[%s9 + $0x23c8] sm:$0xff]
    %v6304 = vld [vmem:[%s9 + $0x23d0] sm:$0xff]
    %v6305 = vld [vmem:[%s9 + $0x23d8] sm:$0xff]
    %v6306 = vld [vmem:[%s9 + $0x23e0] sm:$0xff]
    %v6307 = vld [vmem:[%s9 + $0x23e8] sm:$0xff]
    %v6308 = vld [vmem:[%s9 + $0x23f0] sm:$0xff]
    %v6309 = vld [vmem:[%s9 + $0x23f8] sm:$0xff]
    %v6310 = vld [vmem:[%s9 + $0x2400] sm:$0xff]
    %v6311 = vld [vmem:[%s9 + $0x2408] sm:$0xff]
    %v6312 = vld [vmem:[%s9 + $0x2410] sm:$0xff]
    %v6313 = vld [vmem:[%s9 + $0x2418] sm:$0xff]
    %v6314 = vld [vmem:[%s9 + $0x2420] sm:$0xff]
    %v6315 = vld [vmem:[%s9 + $0x2428] sm:$0xff]
    %v6316 = vld [vmem:[%s9 + $0x2430] sm:$0xff]
    %v6317 = vld [vmem:[%s9 + $0x2438] sm:$0xff]
    %v6318 = vld [vmem:[%s9 + $0x2440] sm:$0xff]
    %v6319 = vld [vmem:[%s9 + $0x2448] sm:$0xff]
    %v6320 = vld [vmem:[%s9 + $0x2450] sm:$0xff]
    %v6321 = vld [vmem:[%s9 + $0x2458] sm:$0xff]
    %v6322 = vld [vmem:[%s9 + $0x2460] sm:$0xff]
    %v6323 = vld [vmem:[%s9 + $0x2468] sm:$0xff]
    %v6324 = vld [vmem:[%s9 + $0x2470] sm:$0xff]
    %v6325 = vld [vmem:[%s9 + $0x2478] sm:$0xff]
    %v6326 = vld [vmem:[%s9 + $0x2480] sm:$0xff]
    %v6327 = vld [vmem:[%s9 + $0x2488] sm:$0xff]
    %v6328 = vld [vmem:[%s9 + $0x2490] sm:$0xff]
    %v6329 = vld [vmem:[%s9 + $0x2498] sm:$0xff]
    %v6330 = vld [vmem:[%s9 + $0x24a0] sm:$0xff]
    %v6331 = vld [vmem:[%s9 + $0x24a8] sm:$0xff]
    %v6332 = vld [vmem:[%s9 + $0x24b0] sm:$0xff]
    %v6333 = vld [vmem:[%s9 + $0x24b8] sm:$0xff]
    %v6334 = vld [vmem:[%s9 + $0x24c0] sm:$0xff]
    %v6335 = vld [vmem:[%s9 + $0x24c8] sm:$0xff]
    %v6336 = vld [vmem:[%s9 + $0x24d0] sm:$0xff]
    %v6337 = vld [vmem:[%s9 + $0x24d8] sm:$0xff]
    %v6338 = vld [vmem:[%s9 + $0x24e0] sm:$0xff]
    %v6339 = vld [vmem:[%s9 + $0x24e8] sm:$0xff]
    %v6340 = vld [vmem:[%s9 + $0x24f0] sm:$0xff]
    %v6341 = vld [vmem:[%s9 + $0x24f8] sm:$0xff]
    %v6342 = vld [vmem:[%s9 + $0x2500] sm:$0xff]
    %v6343 = vld [vmem:[%s9 + $0x2508] sm:$0xff]
    %v6344 = vld [vmem:[%s9 + $0x2510] sm:$0xff]
    %v6345 = vld [vmem:[%s9 + $0x2518] sm:$0xff]
    %v6346 = vld [vmem:[%s9 + $0x2520] sm:$0xff]
    %v6347 = vld [vmem:[%s9 + $0x2528] sm:$0xff]
    %v6348 = vld [vmem:[%s9 + $0x2530] sm:$0xff]
    %v6349 = vld [vmem:[%s9 + $0x2538] sm:$0xff]
    %v6350 = vld [vmem:[%s9 + $0x2540] sm:$0xff]
    %v6351 = vld [vmem:[%s9 + $0x2548] sm:$0xff]
    %v6352 = vld [vmem:[%s9 + $0x2550] sm:$0xff]
    %v6353 = vld [vmem:[%s9 + $0x2558] sm:$0xff]
    %v6354 = vld [vmem:[%s9 + $0x2560] sm:$0xff]
    %v6355 = vld [vmem:[%s9 + $0x2568] sm:$0xff]
    %v6356 = vld [vmem:[%s9 + $0x2570] sm:$0xff]
    %v6357 = vld [vmem:[%s9 + $0x2578] sm:$0xff]
    %v6358 = vld [vmem:[%s9 + $0x2580] sm:$0xff]
    %v6359 = vld [vmem:[%s9 + $0x2588] sm:$0xff]
    %v6360 = vld [vmem:[%s9 + $0x2590] sm:$0xff]
    %v6361 = vld [vmem:[%s9 + $0x2598] sm:$0xff]
    %v6362 = vld [vmem:[%s9 + $0x25a0] sm:$0xff]
    %v6363 = vld [vmem:[%s9 + $0x25a8] sm:$0xff]
    %v6364 = vld [vmem:[%s9 + $0x25b0] sm:$0xff]
    %v6365 = vld [vmem:[%s9 + $0x25b8] sm:$0xff]
    %v6366 = vld [vmem:[%s9 + $0x25c0] sm:$0xff]
    %v6367 = vld [vmem:[%s9 + $0x25c8] sm:$0xff]
    %v6368 = vld [vmem:[%s9 + $0x25d0] sm:$0xff]
    %v6369 = vld [vmem:[%s9 + $0x25d8] sm:$0xff]
    %v6370 = vld [vmem:[%s9 + $0x25e0] sm:$0xff]
    %v6371 = vld [vmem:[%s9 + $0x25e8] sm:$0xff]
    %v6372 = vld [vmem:[%s9 + $0x25f0] sm:$0xff]
    %v6373 = vld [vmem:[%s9 + $0x25f8] sm:$0xff]
    %v6374 = vld [vmem:[%s9 + $0x2600] sm:$0xff]
    %v6375 = vld [vmem:[%s9 + $0x2608] sm:$0xff]
    %v6376 = vld [vmem:[%s9 + $0x2610] sm:$0xff]
    %v6377 = vld [vmem:[%s9 + $0x2618] sm:$0xff]
    %v6378 = vld [vmem:[%s9 + $0x2620] sm:$0xff]
    %v6379 = vld [vmem:[%s9 + $0x2628] sm:$0xff]
    %v6380 = vld [vmem:[%s9 + $0x2630] sm:$0xff]
    %v6381 = vld [vmem:[%s9 + $0x2638] sm:$0xff]
    %v6382 = vld [vmem:[%s9 + $0x2640] sm:$0xff]
    %v6383 = vld [vmem:[%s9 + $0x2648] sm:$0xff]
    %v6384 = vld [vmem:[%s9 + $0x2650] sm:$0xff]
    %v6385 = vld [vmem:[%s9 + $0x2658] sm:$0xff]
    %v6386 = vld [vmem:[%s9 + $0x2660] sm:$0xff]
    %v6387 = vld [vmem:[%s9 + $0x2668] sm:$0xff]
    %v6388 = vld [vmem:[%s9 + $0x2670] sm:$0xff]
    %v6389 = vld [vmem:[%s9 + $0x2678] sm:$0xff]
    %v6390 = vld [vmem:[%s9 + $0x2680] sm:$0xff]
    %v6391 = vld [vmem:[%s9 + $0x2688] sm:$0xff]
    %v6392 = vld [vmem:[%s9 + $0x2690] sm:$0xff]
    %v6393 = vld [vmem:[%s9 + $0x2698] sm:$0xff]
    %v6394 = vld [vmem:[%s9 + $0x26a0] sm:$0xff]
    %v6395 = vld [vmem:[%s9 + $0x26a8] sm:$0xff]
    %v6396 = vld [vmem:[%s9 + $0x26b0] sm:$0xff]
    %v6397 = vld [vmem:[%s9 + $0x26b8] sm:$0xff]
    %v6398 = vld [vmem:[%s9 + $0x26c0] sm:$0xff]
    %v6399 = vld [vmem:[%s9 + $0x26c8] sm:$0xff]
    %v6400 = vld [vmem:[%s9 + $0x26d0] sm:$0xff]
    %v6401 = vld [vmem:[%s9 + $0x26d8] sm:$0xff]
    %v6402 = vld [vmem:[%s9 + $0x26e0] sm:$0xff]
    %v6403 = vld [vmem:[%s9 + $0x26e8] sm:$0xff]
    %v6404 = vld [vmem:[%s9 + $0x26f0] sm:$0xff]
    %v6405 = vld [vmem:[%s9 + $0x26f8] sm:$0xff]
    %v6406 = vld [vmem:[%s9 + $0x2700] sm:$0xff]
    %v6407 = vld [vmem:[%s9 + $0x2708] sm:$0xff]
    %v6408 = vld [vmem:[%s9 + $0x2710] sm:$0xff]
    %v6409 = vld [vmem:[%s9 + $0x2718] sm:$0xff]
    %v6410 = vld [vmem:[%s9 + $0x2720] sm:$0xff]
    %v6411 = vld [vmem:[%s9 + $0x2728] sm:$0xff]
    %v6412 = vld [vmem:[%s9 + $0x2730] sm:$0xff]
    %v6413 = vld [vmem:[%s9 + $0x2738] sm:$0xff]
    %v6414 = vld [vmem:[%s9 + $0x2740] sm:$0xff]
    %v6415 = vld [vmem:[%s9 + $0x2748] sm:$0xff]
    %v6416 = vld [vmem:[%s9 + $0x2750] sm:$0xff]
    %v6417 = vld [vmem:[%s9 + $0x2758] sm:$0xff]
    %v6418 = vld [vmem:[%s9 + $0x2760] sm:$0xff]
    %v6419 = vld [vmem:[%s9 + $0x2768] sm:$0xff]
    %v6420 = vld [vmem:[%s9 + $0x2770] sm:$0xff]
    %v6421 = vld [vmem:[%s9 + $0x2778] sm:$0xff]
    %v6422 = vld [vmem:[%s9 + $0x2780] sm:$0xff]
    %v6423 = vld [vmem:[%s9 + $0x2788] sm:$0xff]
    %v6424 = vld [vmem:[%s9 + $0x2790] sm:$0xff]
    %v6425 = vld [vmem:[%s9 + $0x2798] sm:$0xff]
    %v6426 = vld [vmem:[%s9 + $0x27a0] sm:$0xff]
    %v6427 = vld [vmem:[%s9 + $0x27a8] sm:$0xff]
    %v6428 = vld [vmem:[%s9 + $0x27b0] sm:$0xff]
    %v6429 = vld [vmem:[%s9 + $0x27b8] sm:$0xff]
    %v6430 = vld [vmem:[%s9 + $0x27c0] sm:$0xff]
    %v6431 = vld [vmem:[%s9 + $0x27c8] sm:$0xff]
    %v6432 = vld [vmem:[%s9 + $0x27d0] sm:$0xff]
    %v6433 = vld [vmem:[%s9 + $0x27d8] sm:$0xff]
    %v6434 = vld [vmem:[%s9 + $0x27e0] sm:$0xff]
    %v6435 = vld [vmem:[%s9 + $0x27e8] sm:$0xff]
    %v6436 = vld [vmem:[%s9 + $0x27f0] sm:$0xff]
    %v6437 = vld [vmem:[%s9 + $0x27f8] sm:$0xff]
    %v6438 = vld [vmem:[%s9 + $0x2800] sm:$0xff]
    %v6439 = vld [vmem:[%s9 + $0x2808] sm:$0xff]
    %v6440 = vld [vmem:[%s9 + $0x2810] sm:$0xff]
    %v6441 = vld [vmem:[%s9 + $0x2818] sm:$0xff]
    %v6442 = vld [vmem:[%s9 + $0x2820] sm:$0xff]
    %v6443 = vld [vmem:[%s9 + $0x2828] sm:$0xff]
    %v6444 = vld [vmem:[%s9 + $0x2830] sm:$0xff]
    %v6445 = vld [vmem:[%s9 + $0x2838] sm:$0xff]
    %v6446 = vld [vmem:[%s9 + $0x2840] sm:$0xff]
    %v6447 = vld [vmem:[%s9 + $0x2848] sm:$0xff]
    %v6448 = vld [vmem:[%s9 + $0x2850] sm:$0xff]
    %v6449 = vld [vmem:[%s9 + $0x2858] sm:$0xff]
    %v6450 = vld [vmem:[%s9 + $0x2860] sm:$0xff]
    %v6451 = vld [vmem:[%s9 + $0x2868] sm:$0xff]
    %v6452 = vld [vmem:[%s9 + $0x2870] sm:$0xff]
    %v6453 = vld [vmem:[%s9 + $0x2878] sm:$0xff]
    %v6454 = vld [vmem:[%s9 + $0x2880] sm:$0xff]
    %v6455 = vld [vmem:[%s9 + $0x2888] sm:$0xff]
    %v6456 = vld [vmem:[%s9 + $0x2890] sm:$0xff]
    %v6457 = vld [vmem:[%s9 + $0x2898] sm:$0xff]
    %v6458 = vld [vmem:[%s9 + $0x28a0] sm:$0xff]
    %v6459 = vld [vmem:[%s9 + $0x28a8] sm:$0xff]
    %v6460 = vld [vmem:[%s9 + $0x28b0] sm:$0xff]
    %v6461 = vld [vmem:[%s9 + $0x28b8] sm:$0xff]
    %v6462 = vld [vmem:[%s9 + $0x28c0] sm:$0xff]
    %v6463 = vld [vmem:[%s9 + $0x28c8] sm:$0xff]
    %v6464 = vld [vmem:[%s9 + $0x28d0] sm:$0xff]
    %v6465 = vld [vmem:[%s9 + $0x28d8] sm:$0xff]
    %v6466 = vld [vmem:[%s9 + $0x28e0] sm:$0xff]
    %v6467 = vld [vmem:[%s9 + $0x28e8] sm:$0xff]
    %v6468 = vld [vmem:[%s9 + $0x28f0] sm:$0xff]
    %v6469 = vld [vmem:[%s9 + $0x28f8] sm:$0xff]
    %v6470 = vld [vmem:[%s9 + $0x2900] sm:$0xff]
    %v6471 = vld [vmem:[%s9 + $0x2908] sm:$0xff]
    %v6472 = vld [vmem:[%s9 + $0x2910] sm:$0xff]
    %v6473 = vld [vmem:[%s9 + $0x2918] sm:$0xff]
    %v6474 = vld [vmem:[%s9 + $0x2920] sm:$0xff]
    %v6475 = vld [vmem:[%s9 + $0x2928] sm:$0xff]
    %v6476 = vld [vmem:[%s9 + $0x2930] sm:$0xff]
    %v6477 = vld [vmem:[%s9 + $0x2938] sm:$0xff]
    %v6478 = vld [vmem:[%s9 + $0x2940] sm:$0xff]
    %v6479 = vld [vmem:[%s9 + $0x2948] sm:$0xff]
    %v6480 = vld [vmem:[%s9 + $0x2950] sm:$0xff]
    %v6481 = vld [vmem:[%s9 + $0x2958] sm:$0xff]
    %v6482 = vld [vmem:[%s9 + $0x2960] sm:$0xff]
    %v6483 = vld [vmem:[%s9 + $0x2968] sm:$0xff]
    %v6484 = vld [vmem:[%s9 + $0x2970] sm:$0xff]
    %v6485 = vld [vmem:[%s9 + $0x2978] sm:$0xff]
    %v6486 = vld [vmem:[%s9 + $0x2980] sm:$0xff]
    %v6487 = vld [vmem:[%s9 + $0x2988] sm:$0xff]
    %v6488 = vld [vmem:[%s9 + $0x2990] sm:$0xff]
    %v6489 = vld [vmem:[%s9 + $0x2998] sm:$0xff]
    %v6490 = vld [vmem:[%s9 + $0x29a0] sm:$0xff]
    %v6491 = vld [vmem:[%s9 + $0x29a8] sm:$0xff]
    %v6492 = vld [vmem:[%s9 + $0x29b0] sm:$0xff]
    %v6493 = vld [vmem:[%s9 + $0x29b8] sm:$0xff]
    %v6494 = vld [vmem:[%s9 + $0x29c0] sm:$0xff]
    %v6495 = vld [vmem:[%s9 + $0x29c8] sm:$0xff]
    %v6496 = vld [vmem:[%s9 + $0x29d0] sm:$0xff]
    %v6497 = vld [vmem:[%s9 + $0x29d8] sm:$0xff]
    %v6498 = vld [vmem:[%s9 + $0x29e0] sm:$0xff]
    %v6499 = vld [vmem:[%s9 + $0x29e8] sm:$0xff]
    %v6500 = vld [vmem:[%s9 + $0x29f0] sm:$0xff]
    %v6501 = vld [vmem:[%s9 + $0x29f8] sm:$0xff]
    %v6502 = vld [vmem:[%s9 + $0x2a00] sm:$0xff]
    %v6503 = vld [vmem:[%s9 + $0x2a08] sm:$0xff]
    %v6504 = vld [vmem:[%s9 + $0x2a10] sm:$0xff]
    %v6505 = vld [vmem:[%s9 + $0x2a18] sm:$0xff]
    %v6506 = vld [vmem:[%s9 + $0x2a20] sm:$0xff]
    %v6507 = vld [vmem:[%s9 + $0x2a28] sm:$0xff]
    %v6508 = vld [vmem:[%s9 + $0x2a30] sm:$0xff]
    %v6509 = vld [vmem:[%s9 + $0x2a38] sm:$0xff]
    %v6510 = vld [vmem:[%s9 + $0x2a40] sm:$0xff]
    %v6511 = vld [vmem:[%s9 + $0x2a48] sm:$0xff]
    %v6512 = vld [vmem:[%s9 + $0x2a50] sm:$0xff]
    %v6513 = vld [vmem:[%s9 + $0x2a58] sm:$0xff]
    %v6514 = vld [vmem:[%s9 + $0x2a60] sm:$0xff]
    %v6515 = vld [vmem:[%s9 + $0x2a68] sm:$0xff]
    %v6516 = vld [vmem:[%s9 + $0x2a70] sm:$0xff]
    %v6517 = vld [vmem:[%s9 + $0x2a78] sm:$0xff]
    %v6518 = vld [vmem:[%s9 + $0x2a80] sm:$0xff]
    %v6519 = vld [vmem:[%s9 + $0x2a88] sm:$0xff]
    %v6520 = vld [vmem:[%s9 + $0x2a90] sm:$0xff]
    %v6521 = vld [vmem:[%s9 + $0x2a98] sm:$0xff]
    %v6522 = vld [vmem:[%s9 + $0x2aa0] sm:$0xff]
    %v6523 = vld [vmem:[%s9 + $0x2aa8] sm:$0xff]
    %v6524 = vld [vmem:[%s9 + $0x2ab0] sm:$0xff]
    %v6525 = vld [vmem:[%s9 + $0x2ab8] sm:$0xff]
    %v6526 = vld [vmem:[%s9 + $0x2ac0] sm:$0xff]
    %v6527 = vld [vmem:[%s9 + $0x2ac8] sm:$0xff]
    %v6528 = vld [vmem:[%s9 + $0x2ad0] sm:$0xff]
    %v6529 = vld [vmem:[%s9 + $0x2ad8] sm:$0xff]
    %v6530 = vld [vmem:[%s9 + $0x2ae0] sm:$0xff]
    %v6531 = vld [vmem:[%s9 + $0x2ae8] sm:$0xff]
    %v6532 = vld [vmem:[%s9 + $0x2af0] sm:$0xff]
    %v6533 = vld [vmem:[%s9 + $0x2af8] sm:$0xff]
    %v6534 = vld [vmem:[%s9 + $0x2b00] sm:$0xff]
    %v6535 = vld [vmem:[%s9 + $0x2b08] sm:$0xff]
    %v6536 = vld [vmem:[%s9 + $0x2b10] sm:$0xff]
    %v6537 = vld [vmem:[%s9 + $0x2b18] sm:$0xff]
    %v6538 = vld [vmem:[%s9 + $0x2b20] sm:$0xff]
    %v6539 = vld [vmem:[%s9 + $0x2b28] sm:$0xff]
    %v6540 = vld [vmem:[%s9 + $0x2b30] sm:$0xff]
    %v6541 = vld [vmem:[%s9 + $0x2b38] sm:$0xff]
    %v6542 = vld [vmem:[%s9 + $0x2b40] sm:$0xff]
    %v6543 = vld [vmem:[%s9 + $0x2b48] sm:$0xff]
    %v6544 = vld [vmem:[%s9 + $0x2b50] sm:$0xff]
    %v6545 = vld [vmem:[%s9 + $0x2b58] sm:$0xff]
    %v6546 = vld [vmem:[%s9 + $0x2b60] sm:$0xff]
    %v6547 = vld [vmem:[%s9 + $0x2b68] sm:$0xff]
    %v6548 = vld [vmem:[%s9 + $0x2b70] sm:$0xff]
    %v6549 = vld [vmem:[%s9 + $0x2b78] sm:$0xff]
    %v6550 = vld [vmem:[%s9 + $0x2b80] sm:$0xff]
    %v6551 = vld [vmem:[%s9 + $0x2b88] sm:$0xff]
    %v6552 = vld [vmem:[%s9 + $0x2b90] sm:$0xff]
    %v6553 = vld [vmem:[%s9 + $0x2b98] sm:$0xff]
    %v6554 = vld [vmem:[%s9 + $0x2ba0] sm:$0xff]
    %v6555 = vld [vmem:[%s9 + $0x2ba8] sm:$0xff]
    %v6556 = vld [vmem:[%s9 + $0x2bb0] sm:$0xff]
    %v6557 = vld [vmem:[%s9 + $0x2bb8] sm:$0xff]
    %v6558 = vld [vmem:[%s9 + $0x2bc0] sm:$0xff]
    %v6559 = vld [vmem:[%s9 + $0x2bc8] sm:$0xff]
    %v6560 = vld [vmem:[%s9 + $0x2bd0] sm:$0xff]
    %v6561 = vld [vmem:[%s9 + $0x2bd8] sm:$0xff]
    %v6562 = vld [vmem:[%s9 + $0x2be0] sm:$0xff]
    %v6563 = vld [vmem:[%s9 + $0x2be8] sm:$0xff]
    %v6564 = vld [vmem:[%s9 + $0x2bf0] sm:$0xff]
    %v6565 = vld [vmem:[%s9 + $0x2bf8] sm:$0xff]
    %v6566 = vld [vmem:[%s9 + $0x2c00] sm:$0xff]
    %v6567 = vld [vmem:[%s9 + $0x2c08] sm:$0xff]
    %v6568 = vld [vmem:[%s9 + $0x2c10] sm:$0xff]
    %v6569 = vld [vmem:[%s9 + $0x2c18] sm:$0xff]
    %v6570 = vld [vmem:[%s9 + $0x2c20] sm:$0xff]
    %v6571 = vld [vmem:[%s9 + $0x2c28] sm:$0xff]
    %v6572 = vld [vmem:[%s9 + $0x2c30] sm:$0xff]
    %v6573 = vld [vmem:[%s9 + $0x2c38] sm:$0xff]
    %v6574 = vld [vmem:[%s9 + $0x2c40] sm:$0xff]
    %v6575 = vld [vmem:[%s9 + $0x2c48] sm:$0xff]
    %v6576 = vld [vmem:[%s9 + $0x2c50] sm:$0xff]
    %v6577 = vld [vmem:[%s9 + $0x2c58] sm:$0xff]
    %v6578 = vld [vmem:[%s9 + $0x2c60] sm:$0xff]
    %v6579 = vld [vmem:[%s9 + $0x2c68] sm:$0xff]
    %v6580 = vld [vmem:[%s9 + $0x2c70] sm:$0xff]
    %v6581 = vld [vmem:[%s9 + $0x2c78] sm:$0xff]
    %v6582 = vld [vmem:[%s9 + $0x2c80] sm:$0xff]
    %v6583 = vld [vmem:[%s9 + $0x2c88] sm:$0xff]
    %v6584 = vld [vmem:[%s9 + $0x2c90] sm:$0xff]
    %v6585 = vld [vmem:[%s9 + $0x2c98] sm:$0xff]
    %v6586 = vld [vmem:[%s9 + $0x2ca0] sm:$0xff]
    %v6587 = vld [vmem:[%s9 + $0x2ca8] sm:$0xff]
    %v6588 = vld [vmem:[%s9 + $0x2cb0] sm:$0xff]
    %v6589 = vld [vmem:[%s9 + $0x2cb8] sm:$0xff]
    %v6590 = vld [vmem:[%s9 + $0x2cc0] sm:$0xff]
    %v6591 = vld [vmem:[%s9 + $0x2cc8] sm:$0xff]
    %v6592 = vld [vmem:[%s9 + $0x2cd0] sm:$0xff]
    %v6593 = vld [vmem:[%s9 + $0x2cd8] sm:$0xff]
    %v6594 = vld [vmem:[%s9 + $0x2ce0] sm:$0xff]
    %v6595 = vld [vmem:[%s9 + $0x2ce8] sm:$0xff]
    %v6596 = vld [vmem:[%s9 + $0x2cf0] sm:$0xff]
    %v6597 = vld [vmem:[%s9 + $0x2cf8] sm:$0xff]
    %v6598 = vld [vmem:[%s9 + $0x2d00] sm:$0xff]
    %v6599 = vld [vmem:[%s9 + $0x2d08] sm:$0xff]
    %v6600 = vld [vmem:[%s9 + $0x2d10] sm:$0xff]
    %v6601 = vld [vmem:[%s9 + $0x2d18] sm:$0xff]
    %v6602 = vld [vmem:[%s9 + $0x2d20] sm:$0xff]
    %v6603 = vld [vmem:[%s9 + $0x2d28] sm:$0xff]
    %v6604 = vld [vmem:[%s9 + $0x2d30] sm:$0xff]
    %v6605 = vld [vmem:[%s9 + $0x2d38] sm:$0xff]
    %v6606 = vld [vmem:[%s9 + $0x2d40] sm:$0xff]
    %v6607 = vld [vmem:[%s9 + $0x2d48] sm:$0xff]
    %v6608 = vld [vmem:[%s9 + $0x2d50] sm:$0xff]
    %v6609 = vld [vmem:[%s9 + $0x2d58] sm:$0xff]
    %v6610 = vld [vmem:[%s9 + $0x2d60] sm:$0xff]
    %v6611 = vld [vmem:[%s9 + $0x2d68] sm:$0xff]
    %v6612 = vld [vmem:[%s9 + $0x2d70] sm:$0xff]
    %v6613 = vld [vmem:[%s9 + $0x2d78] sm:$0xff]
    %v6614 = vld [vmem:[%s9 + $0x2d80] sm:$0xff]
    %v6615 = vld [vmem:[%s9 + $0x2d88] sm:$0xff]
    %v6616 = vld [vmem:[%s9 + $0x2d90] sm:$0xff]
    %v6617 = vld [vmem:[%s9 + $0x2d98] sm:$0xff]
    %v6618 = vld [vmem:[%s9 + $0x2da0] sm:$0xff]
    %v6619 = vld [vmem:[%s9 + $0x2da8] sm:$0xff]
    %v6620 = vld [vmem:[%s9 + $0x2db0] sm:$0xff]
    %v6621 = vld [vmem:[%s9 + $0x2db8] sm:$0xff]
    %v6622 = vld [vmem:[%s9 + $0x2dc0] sm:$0xff]
    %v6623 = vld [vmem:[%s9 + $0x2dc8] sm:$0xff]
    %v6624 = vld [vmem:[%s9 + $0x2dd0] sm:$0xff]
    %v6625 = vld [vmem:[%s9 + $0x2dd8] sm:$0xff]
    %v6626 = vld [vmem:[%s9 + $0x2de0] sm:$0xff]
    %v6627 = vld [vmem:[%s9 + $0x2de8] sm:$0xff]
    %v6628 = vld [vmem:[%s9 + $0x2df0] sm:$0xff]
    %v6629 = vld [vmem:[%s9 + $0x2df8] sm:$0xff]
    %v6630 = vld [vmem:[%s9 + $0x2e00] sm:$0xff]
    %v6631 = vld [vmem:[%s9 + $0x2e08] sm:$0xff]
    %v6632 = vld [vmem:[%s9 + $0x2e10] sm:$0xff]
    %v6633 = vld [vmem:[%s9 + $0x2e18] sm:$0xff]
    %v6634 = vld [vmem:[%s9 + $0x2e20] sm:$0xff]
    %v6635 = vld [vmem:[%s9 + $0x2e28] sm:$0xff]
    %v6636 = vld [vmem:[%s9 + $0x2e30] sm:$0xff]
    %v6637 = vld [vmem:[%s9 + $0x2e38] sm:$0xff]
    %v6638 = vld [vmem:[%s9 + $0x2e40] sm:$0xff]
    %v6639 = vld [vmem:[%s9 + $0x2e48] sm:$0xff]
    %v6640 = vld [vmem:[%s9 + $0x2e50] sm:$0xff]
    %v6641 = vld [vmem:[%s9 + $0x2e58] sm:$0xff]
    %v6642 = vld [vmem:[%s9 + $0x2e60] sm:$0xff]
    %v6643 = vld [vmem:[%s9 + $0x2e68] sm:$0xff]
    %v6644 = vld [vmem:[%s9 + $0x2e70] sm:$0xff]
    %v6645 = vld [vmem:[%s9 + $0x2e78] sm:$0xff]
    %v6646 = vld [vmem:[%s9 + $0x2e80] sm:$0xff]
    %v6647 = vld [vmem:[%s9 + $0x2e88] sm:$0xff]
    %v6648 = vld [vmem:[%s9 + $0x2e90] sm:$0xff]
    %v6649 = vld [vmem:[%s9 + $0x2e98] sm:$0xff]
    %v6650 = vld [vmem:[%s9 + $0x2ea0] sm:$0xff]
    %v6651 = vld [vmem:[%s9 + $0x2ea8] sm:$0xff]
    %v6652 = vld [vmem:[%s9 + $0x2eb0] sm:$0xff]
    %v6653 = vld [vmem:[%s9 + $0x2eb8] sm:$0xff]
    %v6654 = vld [vmem:[%s9 + $0x2ec0] sm:$0xff]
    %v6655 = vld [vmem:[%s9 + $0x2ec8] sm:$0xff]
    %v6656 = vld [vmem:[%s9 + $0x2ed0] sm:$0xff]
    %v6657 = vld [vmem:[%s9 + $0x2ed8] sm:$0xff]
    %v6658 = vld [vmem:[%s9 + $0x2ee0] sm:$0xff]
    %v6659 = vld [vmem:[%s9 + $0x2ee8] sm:$0xff]
    %v6660 = vld [vmem:[%s9 + $0x2ef0] sm:$0xff]
    %v6661 = vld [vmem:[%s9 + $0x2ef8] sm:$0xff]
    %v6662 = vld [vmem:[%s9 + $0x2f00] sm:$0xff]
    %v6663 = vld [vmem:[%s9 + $0x2f08] sm:$0xff]
    %v6664 = vld [vmem:[%s9 + $0x2f10] sm:$0xff]
    %v6665 = vld [vmem:[%s9 + $0x2f18] sm:$0xff]
    %v6666 = vld [vmem:[%s9 + $0x2f20] sm:$0xff]
    %v6667 = vld [vmem:[%s9 + $0x2f28] sm:$0xff]
    %v6668 = vld [vmem:[%s9 + $0x2f30] sm:$0xff]
    %v6669 = vld [vmem:[%s9 + $0x2f38] sm:$0xff]
    %v6670 = vld [vmem:[%s9 + $0x2f40] sm:$0xff]
    %v6671 = vld [vmem:[%s9 + $0x2f48] sm:$0xff]
    %v6672 = vld [vmem:[%s9 + $0x2f50] sm:$0xff]
    %v6673 = vld [vmem:[%s9 + $0x2f58] sm:$0xff]
    %v6674 = vld [vmem:[%s9 + $0x2f60] sm:$0xff]
    %v6675 = vld [vmem:[%s9 + $0x2f68] sm:$0xff]
    %v6676 = vld [vmem:[%s9 + $0x2f70] sm:$0xff]
    %v6677 = vld [vmem:[%s9 + $0x2f78] sm:$0xff]
    %v6678 = vld [vmem:[%s9 + $0x2f80] sm:$0xff]
    %v6679 = vld [vmem:[%s9 + $0x2f88] sm:$0xff]
    %v6680 = vld [vmem:[%s9 + $0x2f90] sm:$0xff]
    %v6681 = vld [vmem:[%s9 + $0x2f98] sm:$0xff]
    %v6682 = vld [vmem:[%s9 + $0x2fa0] sm:$0xff]
    %v6683 = vld [vmem:[%s9 + $0x2fa8] sm:$0xff]
    %v6684 = vld [vmem:[%s9 + $0x2fb0] sm:$0xff]
    %v6685 = vld [vmem:[%s9 + $0x2fb8] sm:$0xff]
    %v6686 = vld [vmem:[%s9 + $0x2fc0] sm:$0xff]
    %v6687 = vld [vmem:[%s9 + $0x2fc8] sm:$0xff]
    %v6688 = vld [vmem:[%s9 + $0x2fd0] sm:$0xff]
    %v6689 = vld [vmem:[%s9 + $0x2fd8] sm:$0xff]
    %v6690 = vld [vmem:[%s9 + $0x2fe0] sm:$0xff]
    %v6691 = vld [vmem:[%s9 + $0x2fe8] sm:$0xff]
    %v6692 = vld [vmem:[%s9 + $0x2ff0] sm:$0xff]
    %v6693 = vld [vmem:[%s9 + $0x2ff8] sm:$0xff]
    %v6694 = vld [vmem:[%s9 + $0x3000] sm:$0xff]
    %v6695 = vld [vmem:[%s9 + $0x3008] sm:$0xff]
    %v6696 = vld [vmem:[%s9 + $0x3010] sm:$0xff]
    %v6697 = vld [vmem:[%s9 + $0x3018] sm:$0xff]
    %v6698 = vld [vmem:[%s9 + $0x3020] sm:$0xff]
    %v6699 = vld [vmem:[%s9 + $0x3028] sm:$0xff]
    %v6700 = vld [vmem:[%s9 + $0x3030] sm:$0xff]
    %v6701 = vld [vmem:[%s9 + $0x3038] sm:$0xff]
    %v6702 = vld [vmem:[%s9 + $0x3040] sm:$0xff]
    %v6703 = vld [vmem:[%s9 + $0x3048] sm:$0xff]
    %v6704 = vld [vmem:[%s9 + $0x3050] sm:$0xff]
    %v6705 = vld [vmem:[%s9 + $0x3058] sm:$0xff]
    %v6706 = vld [vmem:[%s9 + $0x3060] sm:$0xff]
    %v6707 = vld [vmem:[%s9 + $0x3068] sm:$0xff]
    %v6708 = vld [vmem:[%s9 + $0x3070] sm:$0xff]
    %v6709 = vld [vmem:[%s9 + $0x3078] sm:$0xff]
    %v6710 = vld [vmem:[%s9 + $0x3080] sm:$0xff]
    %v6711 = vld [vmem:[%s9 + $0x3088] sm:$0xff]
    %v6712 = vld [vmem:[%s9 + $0x3090] sm:$0xff]
    %v6713 = vld [vmem:[%s9 + $0x3098] sm:$0xff]
    %v6714 = vld [vmem:[%s9 + $0x30a0] sm:$0xff]
    %v6715 = vld [vmem:[%s9 + $0x30a8] sm:$0xff]
    %v6716 = vld [vmem:[%s9 + $0x30b0] sm:$0xff]
    %v6717 = vld [vmem:[%s9 + $0x30b8] sm:$0xff]
    %v6718 = vld [vmem:[%s9 + $0x30c0] sm:$0xff]
    %v6719 = vld [vmem:[%s9 + $0x30c8] sm:$0xff]
    %v6720 = vld [vmem:[%s9 + $0x30d0] sm:$0xff]
    %v6721 = vld [vmem:[%s9 + $0x30d8] sm:$0xff]
    %v6722 = vld [vmem:[%s9 + $0x30e0] sm:$0xff]
    %v6723 = vld [vmem:[%s9 + $0x30e8] sm:$0xff]
    %v6724 = vld [vmem:[%s9 + $0x30f0] sm:$0xff]
    %v6725 = vld [vmem:[%s9 + $0x30f8] sm:$0xff]
    %v6726 = vld [vmem:[%s9 + $0x3100] sm:$0xff]
    %v6727 = vld [vmem:[%s9 + $0x3108] sm:$0xff]
    %v6728 = vld [vmem:[%s9 + $0x3110] sm:$0xff]
    %v6729 = vld [vmem:[%s9 + $0x3118] sm:$0xff]
    %v6730 = vld [vmem:[%s9 + $0x3120] sm:$0xff]
    %v6731 = vld [vmem:[%s9 + $0x3128] sm:$0xff]
    %v6732 = vld [vmem:[%s9 + $0x3130] sm:$0xff]
    %v6733 = vld [vmem:[%s9 + $0x3138] sm:$0xff]
    %v6734 = vld [vmem:[%s9 + $0x3140] sm:$0xff]
    %v6735 = vld [vmem:[%s9 + $0x3148] sm:$0xff]
    %v6736 = vld [vmem:[%s9 + $0x3150] sm:$0xff]
    %v6737 = vld [vmem:[%s9 + $0x3158] sm:$0xff]
    %v6738 = vld [vmem:[%s9 + $0x3160] sm:$0xff]
    %v6739 = vld [vmem:[%s9 + $0x3168] sm:$0xff]
    %v6740 = vld [vmem:[%s9 + $0x3170] sm:$0xff]
    %v6741 = vld [vmem:[%s9 + $0x3178] sm:$0xff]
    %v6742 = vld [vmem:[%s9 + $0x3180] sm:$0xff]
    %v6743 = vld [vmem:[%s9 + $0x3188] sm:$0xff]
    %v6744 = vld [vmem:[%s9 + $0x3190] sm:$0xff]
    %v6745 = vld [vmem:[%s9 + $0x3198] sm:$0xff]
    %v6746 = vld [vmem:[%s9 + $0x31a0] sm:$0xff]
    %v6747 = vld [vmem:[%s9 + $0x31a8] sm:$0xff]
    %v6748 = vld [vmem:[%s9 + $0x31b0] sm:$0xff]
    %v6749 = vld [vmem:[%s9 + $0x31b8] sm:$0xff]
    %v6750 = vld [vmem:[%s9 + $0x31c0] sm:$0xff]
    %v6751 = vld [vmem:[%s9 + $0x31c8] sm:$0xff]
    %v6752 = vld [vmem:[%s9 + $0x31d0] sm:$0xff]
    %v6753 = vld [vmem:[%s9 + $0x31d8] sm:$0xff]
    %v6754 = vld [vmem:[%s9 + $0x31e0] sm:$0xff]
    %v6755 = vld [vmem:[%s9 + $0x31e8] sm:$0xff]
    %v6756 = vld [vmem:[%s9 + $0x31f0] sm:$0xff]
    %v6757 = vld [vmem:[%s9 + $0x31f8] sm:$0xff]
    %v6758 = vld [vmem:[%s10] sm:$0xff]
    %v6759 = vld [vmem:[%s10 + $0x8] sm:$0xff]
    %v6760 = vld [vmem:[%s10 + $0x10] sm:$0xff]
    %v6761 = vld [vmem:[%s10 + $0x18] sm:$0xff]
    %v6766 = vperm.slane %v6758, 0
    %v6767 = vperm.slane %v6758, 1
    %v6768 = vperm.slane %v6758, 2
    %v6769 = vperm.slane %v6758, 3
    %v6770 = vperm.slane %v6758, 4
    %v6771 = vperm.slane %v6758, 5
    %v6772 = vperm.slane %v6758, 6
    %v6773 = vperm.slane %v6758, 7
    %v6774 = vperm.slane %v6759, 0
    %v6775 = vperm.slane %v6759, 1
    %v6776 = vperm.slane %v6759, 2
    %v6777 = vperm.slane %v6759, 3
    %v6778 = vperm.slane %v6759, 4
    %v6779 = vperm.slane %v6759, 5
    %v6780 = vperm.slane %v6759, 6
    %v6781 = vperm.slane %v6759, 7
    %v6782 = vperm.slane %v6760, 0
    %v6783 = vperm.slane %v6760, 1
    %v6784 = vperm.slane %v6760, 2
    %v6785 = vperm.slane %v6760, 3
    %v6786 = vperm.slane %v6760, 4
    %v6787 = vperm.slane %v6760, 5
    %v6788 = vperm.slane %v6760, 6
    %v6789 = vperm.slane %v6760, 7
    %v6790 = vperm.slane %v6761, 0
    %v6791 = vperm.slane %v6761, 1
    %v6792 = vperm.slane %v6761, 2
    %v6793 = vperm.slane %v6761, 3
    %v6794 = vperm.slane %v6761, 4
    %v6795 = vperm.slane %v6761, 5
    %v6796 = vperm.slane %v6761, 6
    %v6797 = vperm.slane %v6761, 7
    %v6831 = vsel %vm4811, %v5157, 0
    %6833 = vmatpush.msra.mxu0 %v5638
    %6834 = vmatpush.msra.mxu0 %v5606
    %6835 = vmatpush.msra.mxu0 %v5574
    %6836 = vmatpush.msra.mxu0 %v5542
    %6837 = vmatpush.msra.mxu0 %v5510
    %6838 = vmatpush.msra.mxu0 %v5478
    %6839 = vmatpush.msra.mxu0 %v5446
    %6840 = vmatpush.msra.mxu0 %v5414
    %6841 = vmatpush.msra.mxu0 %v5382
    %6842 = vmatpush.msra.mxu0 %v5350
    %6843 = vmatpush.msra.mxu0 %v5318
    %6844 = vmatpush.msra.mxu0 %v5286
    %6845 = vmatpush.msra.mxu0 %v5254
    %6846 = vmatpush.msra.mxu0 %v5222
    %6847 = vmatpush.msra.mxu0 %v5190
    %6848 = vmatpush.msra.mxu0 %v5158
    %6849 = vmatmul.f32.gmra.mxu0 %v5154
    %v6850 = vpop.f32.mrf.mxu0
    %v6851 = vadd.f32 %v6766, %v6850
    %6852 = vdwg.mxu0
    %6853 = vmatpush.msra.mxu0 %v6150
    %6854 = vmatpush.msra.mxu0 %v6118
    %6855 = vmatpush.msra.mxu0 %v6086
    %6856 = vmatpush.msra.mxu0 %v6054
    %6857 = vmatpush.msra.mxu0 %v6022
    %6858 = vmatpush.msra.mxu0 %v5990
    %6859 = vmatpush.msra.mxu0 %v5958
    %6860 = vmatpush.msra.mxu0 %v5926
    %6861 = vmatpush.msra.mxu0 %v5894
    %6862 = vmatpush.msra.mxu0 %v5862
    %6863 = vmatpush.msra.mxu0 %v5830
    %6864 = vmatpush.msra.mxu0 %v5798
    %6865 = vmatpush.msra.mxu0 %v5766
    %6866 = vmatpush.msra.mxu0 %v5734
    %6867 = vmatpush.msra.mxu0 %v5702
    %6868 = vmatpush.msra.mxu0 %v5670
    %6869 = vmatmul.f32.gmra.mxu0 %v5155
    %v6870 = vpop.f32.mrf.mxu0
    %v6871 = vadd.f32 %v6851, %v6870
    %6872 = vdwg.mxu0
    %6873 = vmatpush.msra.mxu0 %v6662
    %6874 = vmatpush.msra.mxu0 %v6630
    %6875 = vmatpush.msra.mxu0 %v6598
    %6876 = vmatpush.msra.mxu0 %v6566
    %6877 = vmatpush.msra.mxu0 %v6534
    %6878 = vmatpush.msra.mxu0 %v6502
    %6879 = vmatpush.msra.mxu0 %v6470
    %6880 = vmatpush.msra.mxu0 %v6438
    %6881 = vmatpush.msra.mxu0 %v6406
    %6882 = vmatpush.msra.mxu0 %v6374
    %6883 = vmatpush.msra.mxu0 %v6342
    %6884 = vmatpush.msra.mxu0 %v6310
    %6885 = vmatpush.msra.mxu0 %v6278
    %6886 = vmatpush.msra.mxu0 %v6246
    %6887 = vmatpush.msra.mxu0 %v6214
    %6888 = vmatpush.msra.mxu0 %v6182
    %6889 = vmatmul.f32.gmra.mxu0 %v5156
    %v6890 = vpop.f32.mrf.mxu0
    %v6891 = vadd.f32 %v6871, %v6890
    %6892 = vdwg.mxu0
    %6893 = vmatpush.msra.mxu0 0.0
    %6894 = vmatpush.msra.mxu0 0.0
    %6895 = vmatpush.msra.mxu0 0.0
    %6896 = vmatpush.msra.mxu0 0.0
    %6897 = vmatpush.msra.mxu0 0.0
    %6898 = vmatpush.msra.mxu0 0.0
    %6899 = vmatpush.msra.mxu0 0.0
    %6900 = vmatpush.msra.mxu0 0.0
    %6901 = vmatpush.msra.mxu0 0.0
    %6902 = vmatpush.msra.mxu0 0.0
    %6903 = vmatpush.msra.mxu0 0.0
    %6904 = vmatpush.msra.mxu0 0.0
    %6905 = vmatpush.msra.mxu0 0.0
    %6906 = vmatpush.msra.mxu0 0.0
    %6907 = vmatpush.msra.mxu0 %v6726
    %6908 = vmatpush.msra.mxu0 %v6694
    %6909 = vmatmul.f32.gmra.mxu0 %v6831
    %v6910 = vpop.f32.mrf.mxu0
    %v6911 = vadd.f32 %v6891, %v6910
    %6912 = vdwg.mxu0
    %6913 = vmatpush.msra.mxu0 %v5639
    %6914 = vmatpush.msra.mxu0 %v5607
    %6915 = vmatpush.msra.mxu0 %v5575
    %6916 = vmatpush.msra.mxu0 %v5543
    %6917 = vmatpush.msra.mxu0 %v5511
    %6918 = vmatpush.msra.mxu0 %v5479
    %6919 = vmatpush.msra.mxu0 %v5447
    %6920 = vmatpush.msra.mxu0 %v5415
    %6921 = vmatpush.msra.mxu0 %v5383
    %6922 = vmatpush.msra.mxu0 %v5351
    %6923 = vmatpush.msra.mxu0 %v5319
    %6924 = vmatpush.msra.mxu0 %v5287
    %6925 = vmatpush.msra.mxu0 %v5255
    %6926 = vmatpush.msra.mxu0 %v5223
    %6927 = vmatpush.msra.mxu0 %v5191
    %6928 = vmatpush.msra.mxu0 %v5159
    %6929 = vmatmul.f32.gmra.mxu0 %v5154
    %v6930 = vpop.f32.mrf.mxu0
    %v6931 = vadd.f32 %v6767, %v6930
    %6932 = vdwg.mxu0
    %6933 = vmatpush.msra.mxu0 %v6151
    %6934 = vmatpush.msra.mxu0 %v6119
    %6935 = vmatpush.msra.mxu0 %v6087
    %6936 = vmatpush.msra.mxu0 %v6055
    %6937 = vmatpush.msra.mxu0 %v6023
    %6938 = vmatpush.msra.mxu0 %v5991
    %6939 = vmatpush.msra.mxu0 %v5959
    %6940 = vmatpush.msra.mxu0 %v5927
    %6941 = vmatpush.msra.mxu0 %v5895
    %6942 = vmatpush.msra.mxu0 %v5863
    %6943 = vmatpush.msra.mxu0 %v5831
    %6944 = vmatpush.msra.mxu0 %v5799
    %6945 = vmatpush.msra.mxu0 %v5767
    %6946 = vmatpush.msra.mxu0 %v5735
    %6947 = vmatpush.msra.mxu0 %v5703
    %6948 = vmatpush.msra.mxu0 %v5671
    %6949 = vmatmul.f32.gmra.mxu0 %v5155
    %v6950 = vpop.f32.mrf.mxu0
    %v6951 = vadd.f32 %v6931, %v6950
    %6952 = vdwg.mxu0
    %6953 = vmatpush.msra.mxu0 %v6663
    %6954 = vmatpush.msra.mxu0 %v6631
    %6955 = vmatpush.msra.mxu0 %v6599
    %6956 = vmatpush.msra.mxu0 %v6567
    %6957 = vmatpush.msra.mxu0 %v6535
    %6958 = vmatpush.msra.mxu0 %v6503
    %6959 = vmatpush.msra.mxu0 %v6471
    %6960 = vmatpush.msra.mxu0 %v6439
    %6961 = vmatpush.msra.mxu0 %v6407
    %6962 = vmatpush.msra.mxu0 %v6375
    %6963 = vmatpush.msra.mxu0 %v6343
    %6964 = vmatpush.msra.mxu0 %v6311
    %6965 = vmatpush.msra.mxu0 %v6279
    %6966 = vmatpush.msra.mxu0 %v6247
    %6967 = vmatpush.msra.mxu0 %v6215
    %6968 = vmatpush.msra.mxu0 %v6183
    %6969 = vmatmul.f32.gmra.mxu0 %v5156
    %v6970 = vpop.f32.mrf.mxu0
    %v6971 = vadd.f32 %v6951, %v6970
    %6972 = vdwg.mxu0
    %6973 = vmatpush.msra.mxu0 0.0
    %6974 = vmatpush.msra.mxu0 0.0
    %6975 = vmatpush.msra.mxu0 0.0
    %6976 = vmatpush.msra.mxu0 0.0
    %6977 = vmatpush.msra.mxu0 0.0
    %6978 = vmatpush.msra.mxu0 0.0
    %6979 = vmatpush.msra.mxu0 0.0
    %6980 = vmatpush.msra.mxu0 0.0
    %6981 = vmatpush.msra.mxu0 0.0
    %6982 = vmatpush.msra.mxu0 0.0
    %6983 = vmatpush.msra.mxu0 0.0
    %6984 = vmatpush.msra.mxu0 0.0
    %6985 = vmatpush.msra.mxu0 0.0
    %6986 = vmatpush.msra.mxu0 0.0
    %6987 = vmatpush.msra.mxu0 %v6727
    %6988 = vmatpush.msra.mxu0 %v6695
    %6989 = vmatmul.f32.gmra.mxu0 %v6831
    %v6990 = vpop.f32.mrf.mxu0
    %v6991 = vadd.f32 %v6971, %v6990
    %6992 = vdwg.mxu0
    %6993 = vmatpush.msra.mxu0 %v5640
    %6994 = vmatpush.msra.mxu0 %v5608
    %6995 = vmatpush.msra.mxu0 %v5576
    %6996 = vmatpush.msra.mxu0 %v5544
    %6997 = vmatpush.msra.mxu0 %v5512
    %6998 = vmatpush.msra.mxu0 %v5480
    %6999 = vmatpush.msra.mxu0 %v5448
    %7000 = vmatpush.msra.mxu0 %v5416
    %7001 = vmatpush.msra.mxu0 %v5384
    %7002 = vmatpush.msra.mxu0 %v5352
    %7003 = vmatpush.msra.mxu0 %v5320
    %7004 = vmatpush.msra.mxu0 %v5288
    %7005 = vmatpush.msra.mxu0 %v5256
    %7006 = vmatpush.msra.mxu0 %v5224
    %7007 = vmatpush.msra.mxu0 %v5192
    %7008 = vmatpush.msra.mxu0 %v5160
    %7009 = vmatmul.f32.gmra.mxu0 %v5154
    %v7010 = vpop.f32.mrf.mxu0
    %v7011 = vadd.f32 %v6768, %v7010
    %7012 = vdwg.mxu0
    %7013 = vmatpush.msra.mxu0 %v6152
    %7014 = vmatpush.msra.mxu0 %v6120
    %7015 = vmatpush.msra.mxu0 %v6088
    %7016 = vmatpush.msra.mxu0 %v6056
    %7017 = vmatpush.msra.mxu0 %v6024
    %7018 = vmatpush.msra.mxu0 %v5992
    %7019 = vmatpush.msra.mxu0 %v5960
    %7020 = vmatpush.msra.mxu0 %v5928
    %7021 = vmatpush.msra.mxu0 %v5896
    %7022 = vmatpush.msra.mxu0 %v5864
    %7023 = vmatpush.msra.mxu0 %v5832
    %7024 = vmatpush.msra.mxu0 %v5800
    %7025 = vmatpush.msra.mxu0 %v5768
    %7026 = vmatpush.msra.mxu0 %v5736
    %7027 = vmatpush.msra.mxu0 %v5704
    %7028 = vmatpush.msra.mxu0 %v5672
    %7029 = vmatmul.f32.gmra.mxu0 %v5155
    %v7030 = vpop.f32.mrf.mxu0
    %v7031 = vadd.f32 %v7011, %v7030
    %7032 = vdwg.mxu0
    %7033 = vmatpush.msra.mxu0 %v6664
    %7034 = vmatpush.msra.mxu0 %v6632
    %7035 = vmatpush.msra.mxu0 %v6600
    %7036 = vmatpush.msra.mxu0 %v6568
    %7037 = vmatpush.msra.mxu0 %v6536
    %7038 = vmatpush.msra.mxu0 %v6504
    %7039 = vmatpush.msra.mxu0 %v6472
    %7040 = vmatpush.msra.mxu0 %v6440
    %7041 = vmatpush.msra.mxu0 %v6408
    %7042 = vmatpush.msra.mxu0 %v6376
    %7043 = vmatpush.msra.mxu0 %v6344
    %7044 = vmatpush.msra.mxu0 %v6312
    %7045 = vmatpush.msra.mxu0 %v6280
    %7046 = vmatpush.msra.mxu0 %v6248
    %7047 = vmatpush.msra.mxu0 %v6216
    %7048 = vmatpush.msra.mxu0 %v6184
    %7049 = vmatmul.f32.gmra.mxu0 %v5156
    %v7050 = vpop.f32.mrf.mxu0
    %v7051 = vadd.f32 %v7031, %v7050
    %7052 = vdwg.mxu0
    %7053 = vmatpush.msra.mxu0 0.0
    %7054 = vmatpush.msra.mxu0 0.0
    %7055 = vmatpush.msra.mxu0 0.0
    %7056 = vmatpush.msra.mxu0 0.0
    %7057 = vmatpush.msra.mxu0 0.0
    %7058 = vmatpush.msra.mxu0 0.0
    %7059 = vmatpush.msra.mxu0 0.0
    %7060 = vmatpush.msra.mxu0 0.0
    %7061 = vmatpush.msra.mxu0 0.0
    %7062 = vmatpush.msra.mxu0 0.0
    %7063 = vmatpush.msra.mxu0 0.0
    %7064 = vmatpush.msra.mxu0 0.0
    %7065 = vmatpush.msra.mxu0 0.0
    %7066 = vmatpush.msra.mxu0 0.0
    %7067 = vmatpush.msra.mxu0 %v6728
    %7068 = vmatpush.msra.mxu0 %v6696
    %7069 = vmatmul.f32.gmra.mxu0 %v6831
    %v7070 = vpop.f32.mrf.mxu0
    %v7071 = vadd.f32 %v7051, %v7070
    %7072 = vdwg.mxu0
    %7073 = vmatpush.msra.mxu0 %v5641
    %7074 = vmatpush.msra.mxu0 %v5609
    %7075 = vmatpush.msra.mxu0 %v5577
    %7076 = vmatpush.msra.mxu0 %v5545
    %7077 = vmatpush.msra.mxu0 %v5513
    %7078 = vmatpush.msra.mxu0 %v5481
    %7079 = vmatpush.msra.mxu0 %v5449
    %7080 = vmatpush.msra.mxu0 %v5417
    %7081 = vmatpush.msra.mxu0 %v5385
    %7082 = vmatpush.msra.mxu0 %v5353
    %7083 = vmatpush.msra.mxu0 %v5321
    %7084 = vmatpush.msra.mxu0 %v5289
    %7085 = vmatpush.msra.mxu0 %v5257
    %7086 = vmatpush.msra.mxu0 %v5225
    %7087 = vmatpush.msra.mxu0 %v5193
    %7088 = vmatpush.msra.mxu0 %v5161
    %7089 = vmatmul.f32.gmra.mxu0 %v5154
    %v7090 = vpop.f32.mrf.mxu0
    %v7091 = vadd.f32 %v6769, %v7090
    %7092 = vdwg.mxu0
    %7093 = vmatpush.msra.mxu0 %v6153
    %7094 = vmatpush.msra.mxu0 %v6121
    %7095 = vmatpush.msra.mxu0 %v6089
    %7096 = vmatpush.msra.mxu0 %v6057
    %7097 = vmatpush.msra.mxu0 %v6025
    %7098 = vmatpush.msra.mxu0 %v5993
    %7099 = vmatpush.msra.mxu0 %v5961
    %7100 = vmatpush.msra.mxu0 %v5929
    %7101 = vmatpush.msra.mxu0 %v5897
    %7102 = vmatpush.msra.mxu0 %v5865
    %7103 = vmatpush.msra.mxu0 %v5833
    %7104 = vmatpush.msra.mxu0 %v5801
    %7105 = vmatpush.msra.mxu0 %v5769
    %7106 = vmatpush.msra.mxu0 %v5737
    %7107 = vmatpush.msra.mxu0 %v5705
    %7108 = vmatpush.msra.mxu0 %v5673
    %7109 = vmatmul.f32.gmra.mxu0 %v5155
    %v7110 = vpop.f32.mrf.mxu0
    %v7111 = vadd.f32 %v7091, %v7110
    %7112 = vdwg.mxu0
    %7113 = vmatpush.msra.mxu0 %v6665
    %7114 = vmatpush.msra.mxu0 %v6633
    %7115 = vmatpush.msra.mxu0 %v6601
    %7116 = vmatpush.msra.mxu0 %v6569
    %7117 = vmatpush.msra.mxu0 %v6537
    %7118 = vmatpush.msra.mxu0 %v6505
    %7119 = vmatpush.msra.mxu0 %v6473
    %7120 = vmatpush.msra.mxu0 %v6441
    %7121 = vmatpush.msra.mxu0 %v6409
    %7122 = vmatpush.msra.mxu0 %v6377
    %7123 = vmatpush.msra.mxu0 %v6345
    %7124 = vmatpush.msra.mxu0 %v6313
    %7125 = vmatpush.msra.mxu0 %v6281
    %7126 = vmatpush.msra.mxu0 %v6249
    %7127 = vmatpush.msra.mxu0 %v6217
    %7128 = vmatpush.msra.mxu0 %v6185
    %7129 = vmatmul.f32.gmra.mxu0 %v5156
    %v7130 = vpop.f32.mrf.mxu0
    %v7131 = vadd.f32 %v7111, %v7130
    %7132 = vdwg.mxu0
    %7133 = vmatpush.msra.mxu0 0.0
    %7134 = vmatpush.msra.mxu0 0.0
    %7135 = vmatpush.msra.mxu0 0.0
    %7136 = vmatpush.msra.mxu0 0.0
    %7137 = vmatpush.msra.mxu0 0.0
    %7138 = vmatpush.msra.mxu0 0.0
    %7139 = vmatpush.msra.mxu0 0.0
    %7140 = vmatpush.msra.mxu0 0.0
    %7141 = vmatpush.msra.mxu0 0.0
    %7142 = vmatpush.msra.mxu0 0.0
    %7143 = vmatpush.msra.mxu0 0.0
    %7144 = vmatpush.msra.mxu0 0.0
    %7145 = vmatpush.msra.mxu0 0.0
    %7146 = vmatpush.msra.mxu0 0.0
    %7147 = vmatpush.msra.mxu0 %v6729
    %7148 = vmatpush.msra.mxu0 %v6697
    %7149 = vmatmul.f32.gmra.mxu0 %v6831
    %v7150 = vpop.f32.mrf.mxu0
    %v7151 = vadd.f32 %v7131, %v7150
    %7152 = vdwg.mxu0
    %7153 = vmatpush.msra.mxu0 %v5642
    %7154 = vmatpush.msra.mxu0 %v5610
    %7155 = vmatpush.msra.mxu0 %v5578
    %7156 = vmatpush.msra.mxu0 %v5546
    %7157 = vmatpush.msra.mxu0 %v5514
    %7158 = vmatpush.msra.mxu0 %v5482
    %7159 = vmatpush.msra.mxu0 %v5450
    %7160 = vmatpush.msra.mxu0 %v5418
    %7161 = vmatpush.msra.mxu0 %v5386
    %7162 = vmatpush.msra.mxu0 %v5354
    %7163 = vmatpush.msra.mxu0 %v5322
    %7164 = vmatpush.msra.mxu0 %v5290
    %7165 = vmatpush.msra.mxu0 %v5258
    %7166 = vmatpush.msra.mxu0 %v5226
    %7167 = vmatpush.msra.mxu0 %v5194
    %7168 = vmatpush.msra.mxu0 %v5162
    %7169 = vmatmul.f32.gmra.mxu0 %v5154
    %v7170 = vpop.f32.mrf.mxu0
    %v7171 = vadd.f32 %v6770, %v7170
    %7172 = vdwg.mxu0
    %7173 = vmatpush.msra.mxu0 %v6154
    %7174 = vmatpush.msra.mxu0 %v6122
    %7175 = vmatpush.msra.mxu0 %v6090
    %7176 = vmatpush.msra.mxu0 %v6058
    %7177 = vmatpush.msra.mxu0 %v6026
    %7178 = vmatpush.msra.mxu0 %v5994
    %7179 = vmatpush.msra.mxu0 %v5962
    %7180 = vmatpush.msra.mxu0 %v5930
    %7181 = vmatpush.msra.mxu0 %v5898
    %7182 = vmatpush.msra.mxu0 %v5866
    %7183 = vmatpush.msra.mxu0 %v5834
    %7184 = vmatpush.msra.mxu0 %v5802
    %7185 = vmatpush.msra.mxu0 %v5770
    %7186 = vmatpush.msra.mxu0 %v5738
    %7187 = vmatpush.msra.mxu0 %v5706
    %7188 = vmatpush.msra.mxu0 %v5674
    %7189 = vmatmul.f32.gmra.mxu0 %v5155
    %v7190 = vpop.f32.mrf.mxu0
    %v7191 = vadd.f32 %v7171, %v7190
    %7192 = vdwg.mxu0
    %7193 = vmatpush.msra.mxu0 %v6666
    %7194 = vmatpush.msra.mxu0 %v6634
    %7195 = vmatpush.msra.mxu0 %v6602
    %7196 = vmatpush.msra.mxu0 %v6570
    %7197 = vmatpush.msra.mxu0 %v6538
    %7198 = vmatpush.msra.mxu0 %v6506
    %7199 = vmatpush.msra.mxu0 %v6474
    %7200 = vmatpush.msra.mxu0 %v6442
    %7201 = vmatpush.msra.mxu0 %v6410
    %7202 = vmatpush.msra.mxu0 %v6378
    %7203 = vmatpush.msra.mxu0 %v6346
    %7204 = vmatpush.msra.mxu0 %v6314
    %7205 = vmatpush.msra.mxu0 %v6282
    %7206 = vmatpush.msra.mxu0 %v6250
    %7207 = vmatpush.msra.mxu0 %v6218
    %7208 = vmatpush.msra.mxu0 %v6186
    %7209 = vmatmul.f32.gmra.mxu0 %v5156
    %v7210 = vpop.f32.mrf.mxu0
    %v7211 = vadd.f32 %v7191, %v7210
    %7212 = vdwg.mxu0
    %7213 = vmatpush.msra.mxu0 0.0
    %7214 = vmatpush.msra.mxu0 0.0
    %7215 = vmatpush.msra.mxu0 0.0
    %7216 = vmatpush.msra.mxu0 0.0
    %7217 = vmatpush.msra.mxu0 0.0
    %7218 = vmatpush.msra.mxu0 0.0
    %7219 = vmatpush.msra.mxu0 0.0
    %7220 = vmatpush.msra.mxu0 0.0
    %7221 = vmatpush.msra.mxu0 0.0
    %7222 = vmatpush.msra.mxu0 0.0
    %7223 = vmatpush.msra.mxu0 0.0
    %7224 = vmatpush.msra.mxu0 0.0
    %7225 = vmatpush.msra.mxu0 0.0
    %7226 = vmatpush.msra.mxu0 0.0
    %7227 = vmatpush.msra.mxu0 %v6730
    %7228 = vmatpush.msra.mxu0 %v6698
    %7229 = vmatmul.f32.gmra.mxu0 %v6831
    %v7230 = vpop.f32.mrf.mxu0
    %v7231 = vadd.f32 %v7211, %v7230
    %7232 = vdwg.mxu0
    %7233 = vmatpush.msra.mxu0 %v5643
    %7234 = vmatpush.msra.mxu0 %v5611
    %7235 = vmatpush.msra.mxu0 %v5579
    %7236 = vmatpush.msra.mxu0 %v5547
    %7237 = vmatpush.msra.mxu0 %v5515
    %7238 = vmatpush.msra.mxu0 %v5483
    %7239 = vmatpush.msra.mxu0 %v5451
    %7240 = vmatpush.msra.mxu0 %v5419
    %7241 = vmatpush.msra.mxu0 %v5387
    %7242 = vmatpush.msra.mxu0 %v5355
    %7243 = vmatpush.msra.mxu0 %v5323
    %7244 = vmatpush.msra.mxu0 %v5291
    %7245 = vmatpush.msra.mxu0 %v5259
    %7246 = vmatpush.msra.mxu0 %v5227
    %7247 = vmatpush.msra.mxu0 %v5195
    %7248 = vmatpush.msra.mxu0 %v5163
    %7249 = vmatmul.f32.gmra.mxu0 %v5154
    %v7250 = vpop.f32.mrf.mxu0
    %v7251 = vadd.f32 %v6771, %v7250
    %7252 = vdwg.mxu0
    %7253 = vmatpush.msra.mxu0 %v6155
    %7254 = vmatpush.msra.mxu0 %v6123
    %7255 = vmatpush.msra.mxu0 %v6091
    %7256 = vmatpush.msra.mxu0 %v6059
    %7257 = vmatpush.msra.mxu0 %v6027
    %7258 = vmatpush.msra.mxu0 %v5995
    %7259 = vmatpush.msra.mxu0 %v5963
    %7260 = vmatpush.msra.mxu0 %v5931
    %7261 = vmatpush.msra.mxu0 %v5899
    %7262 = vmatpush.msra.mxu0 %v5867
    %7263 = vmatpush.msra.mxu0 %v5835
    %7264 = vmatpush.msra.mxu0 %v5803
    %7265 = vmatpush.msra.mxu0 %v5771
    %7266 = vmatpush.msra.mxu0 %v5739
    %7267 = vmatpush.msra.mxu0 %v5707
    %7268 = vmatpush.msra.mxu0 %v5675
    %7269 = vmatmul.f32.gmra.mxu0 %v5155
    %v7270 = vpop.f32.mrf.mxu0
    %v7271 = vadd.f32 %v7251, %v7270
    %7272 = vdwg.mxu0
    %7273 = vmatpush.msra.mxu0 %v6667
    %7274 = vmatpush.msra.mxu0 %v6635
    %7275 = vmatpush.msra.mxu0 %v6603
    %7276 = vmatpush.msra.mxu0 %v6571
    %7277 = vmatpush.msra.mxu0 %v6539
    %7278 = vmatpush.msra.mxu0 %v6507
    %7279 = vmatpush.msra.mxu0 %v6475
    %7280 = vmatpush.msra.mxu0 %v6443
    %7281 = vmatpush.msra.mxu0 %v6411
    %7282 = vmatpush.msra.mxu0 %v6379
    %7283 = vmatpush.msra.mxu0 %v6347
    %7284 = vmatpush.msra.mxu0 %v6315
    %7285 = vmatpush.msra.mxu0 %v6283
    %7286 = vmatpush.msra.mxu0 %v6251
    %7287 = vmatpush.msra.mxu0 %v6219
    %7288 = vmatpush.msra.mxu0 %v6187
    %7289 = vmatmul.f32.gmra.mxu0 %v5156
    %v7290 = vpop.f32.mrf.mxu0
    %v7291 = vadd.f32 %v7271, %v7290
    %7292 = vdwg.mxu0
    %7293 = vmatpush.msra.mxu0 0.0
    %7294 = vmatpush.msra.mxu0 0.0
    %7295 = vmatpush.msra.mxu0 0.0
    %7296 = vmatpush.msra.mxu0 0.0
    %7297 = vmatpush.msra.mxu0 0.0
    %7298 = vmatpush.msra.mxu0 0.0
    %7299 = vmatpush.msra.mxu0 0.0
    %7300 = vmatpush.msra.mxu0 0.0
    %7301 = vmatpush.msra.mxu0 0.0
    %7302 = vmatpush.msra.mxu0 0.0
    %7303 = vmatpush.msra.mxu0 0.0
    %7304 = vmatpush.msra.mxu0 0.0
    %7305 = vmatpush.msra.mxu0 0.0
    %7306 = vmatpush.msra.mxu0 0.0
    %7307 = vmatpush.msra.mxu0 %v6731
    %7308 = vmatpush.msra.mxu0 %v6699
    %7309 = vmatmul.f32.gmra.mxu0 %v6831
    %v7310 = vpop.f32.mrf.mxu0
    %v7311 = vadd.f32 %v7291, %v7310
    %7312 = vdwg.mxu0
    %7313 = vmatpush.msra.mxu0 %v5644
    %7314 = vmatpush.msra.mxu0 %v5612
    %7315 = vmatpush.msra.mxu0 %v5580
    %7316 = vmatpush.msra.mxu0 %v5548
    %7317 = vmatpush.msra.mxu0 %v5516
    %7318 = vmatpush.msra.mxu0 %v5484
    %7319 = vmatpush.msra.mxu0 %v5452
    %7320 = vmatpush.msra.mxu0 %v5420
    %7321 = vmatpush.msra.mxu0 %v5388
    %7322 = vmatpush.msra.mxu0 %v5356
    %7323 = vmatpush.msra.mxu0 %v5324
    %7324 = vmatpush.msra.mxu0 %v5292
    %7325 = vmatpush.msra.mxu0 %v5260
    %7326 = vmatpush.msra.mxu0 %v5228
    %7327 = vmatpush.msra.mxu0 %v5196
    %7328 = vmatpush.msra.mxu0 %v5164
    %7329 = vmatmul.f32.gmra.mxu0 %v5154
    %v7330 = vpop.f32.mrf.mxu0
    %v7331 = vadd.f32 %v6772, %v7330
    %7332 = vdwg.mxu0
    %7333 = vmatpush.msra.mxu0 %v6156
    %7334 = vmatpush.msra.mxu0 %v6124
    %7335 = vmatpush.msra.mxu0 %v6092
    %7336 = vmatpush.msra.mxu0 %v6060
    %7337 = vmatpush.msra.mxu0 %v6028
    %7338 = vmatpush.msra.mxu0 %v5996
    %7339 = vmatpush.msra.mxu0 %v5964
    %7340 = vmatpush.msra.mxu0 %v5932
    %7341 = vmatpush.msra.mxu0 %v5900
    %7342 = vmatpush.msra.mxu0 %v5868
    %7343 = vmatpush.msra.mxu0 %v5836
    %7344 = vmatpush.msra.mxu0 %v5804
    %7345 = vmatpush.msra.mxu0 %v5772
    %7346 = vmatpush.msra.mxu0 %v5740
    %7347 = vmatpush.msra.mxu0 %v5708
    %7348 = vmatpush.msra.mxu0 %v5676
    %7349 = vmatmul.f32.gmra.mxu0 %v5155
    %v7350 = vpop.f32.mrf.mxu0
    %v7351 = vadd.f32 %v7331, %v7350
    %7352 = vdwg.mxu0
    %7353 = vmatpush.msra.mxu0 %v6668
    %7354 = vmatpush.msra.mxu0 %v6636
    %7355 = vmatpush.msra.mxu0 %v6604
    %7356 = vmatpush.msra.mxu0 %v6572
    %7357 = vmatpush.msra.mxu0 %v6540
    %7358 = vmatpush.msra.mxu0 %v6508
    %7359 = vmatpush.msra.mxu0 %v6476
    %7360 = vmatpush.msra.mxu0 %v6444
    %7361 = vmatpush.msra.mxu0 %v6412
    %7362 = vmatpush.msra.mxu0 %v6380
    %7363 = vmatpush.msra.mxu0 %v6348
    %7364 = vmatpush.msra.mxu0 %v6316
    %7365 = vmatpush.msra.mxu0 %v6284
    %7366 = vmatpush.msra.mxu0 %v6252
    %7367 = vmatpush.msra.mxu0 %v6220
    %7368 = vmatpush.msra.mxu0 %v6188
    %7369 = vmatmul.f32.gmra.mxu0 %v5156
    %v7370 = vpop.f32.mrf.mxu0
    %v7371 = vadd.f32 %v7351, %v7370
    %7372 = vdwg.mxu0
    %7373 = vmatpush.msra.mxu0 0.0
    %7374 = vmatpush.msra.mxu0 0.0
    %7375 = vmatpush.msra.mxu0 0.0
    %7376 = vmatpush.msra.mxu0 0.0
    %7377 = vmatpush.msra.mxu0 0.0
    %7378 = vmatpush.msra.mxu0 0.0
    %7379 = vmatpush.msra.mxu0 0.0
    %7380 = vmatpush.msra.mxu0 0.0
    %7381 = vmatpush.msra.mxu0 0.0
    %7382 = vmatpush.msra.mxu0 0.0
    %7383 = vmatpush.msra.mxu0 0.0
    %7384 = vmatpush.msra.mxu0 0.0
    %7385 = vmatpush.msra.mxu0 0.0
    %7386 = vmatpush.msra.mxu0 0.0
    %7387 = vmatpush.msra.mxu0 %v6732
    %7388 = vmatpush.msra.mxu0 %v6700
    %7389 = vmatmul.f32.gmra.mxu0 %v6831
    %v7390 = vpop.f32.mrf.mxu0
    %v7391 = vadd.f32 %v7371, %v7390
    %7392 = vdwg.mxu0
    %7393 = vmatpush.msra.mxu0 %v5645
    %7394 = vmatpush.msra.mxu0 %v5613
    %7395 = vmatpush.msra.mxu0 %v5581
    %7396 = vmatpush.msra.mxu0 %v5549
    %7397 = vmatpush.msra.mxu0 %v5517
    %7398 = vmatpush.msra.mxu0 %v5485
    %7399 = vmatpush.msra.mxu0 %v5453
    %7400 = vmatpush.msra.mxu0 %v5421
    %7401 = vmatpush.msra.mxu0 %v5389
    %7402 = vmatpush.msra.mxu0 %v5357
    %7403 = vmatpush.msra.mxu0 %v5325
    %7404 = vmatpush.msra.mxu0 %v5293
    %7405 = vmatpush.msra.mxu0 %v5261
    %7406 = vmatpush.msra.mxu0 %v5229
    %7407 = vmatpush.msra.mxu0 %v5197
    %7408 = vmatpush.msra.mxu0 %v5165
    %7409 = vmatmul.f32.gmra.mxu0 %v5154
    %v7410 = vpop.f32.mrf.mxu0
    %v7411 = vadd.f32 %v6773, %v7410
    %7412 = vdwg.mxu0
    %7413 = vmatpush.msra.mxu0 %v6157
    %7414 = vmatpush.msra.mxu0 %v6125
    %7415 = vmatpush.msra.mxu0 %v6093
    %7416 = vmatpush.msra.mxu0 %v6061
    %7417 = vmatpush.msra.mxu0 %v6029
    %7418 = vmatpush.msra.mxu0 %v5997
    %7419 = vmatpush.msra.mxu0 %v5965
    %7420 = vmatpush.msra.mxu0 %v5933
    %7421 = vmatpush.msra.mxu0 %v5901
    %7422 = vmatpush.msra.mxu0 %v5869
    %7423 = vmatpush.msra.mxu0 %v5837
    %7424 = vmatpush.msra.mxu0 %v5805
    %7425 = vmatpush.msra.mxu0 %v5773
    %7426 = vmatpush.msra.mxu0 %v5741
    %7427 = vmatpush.msra.mxu0 %v5709
    %7428 = vmatpush.msra.mxu0 %v5677
    %7429 = vmatmul.f32.gmra.mxu0 %v5155
    %v7430 = vpop.f32.mrf.mxu0
    %v7431 = vadd.f32 %v7411, %v7430
    %7432 = vdwg.mxu0
    %7433 = vmatpush.msra.mxu0 %v6669
    %7434 = vmatpush.msra.mxu0 %v6637
    %7435 = vmatpush.msra.mxu0 %v6605
    %7436 = vmatpush.msra.mxu0 %v6573
    %7437 = vmatpush.msra.mxu0 %v6541
    %7438 = vmatpush.msra.mxu0 %v6509
    %7439 = vmatpush.msra.mxu0 %v6477
    %7440 = vmatpush.msra.mxu0 %v6445
    %7441 = vmatpush.msra.mxu0 %v6413
    %7442 = vmatpush.msra.mxu0 %v6381
    %7443 = vmatpush.msra.mxu0 %v6349
    %7444 = vmatpush.msra.mxu0 %v6317
    %7445 = vmatpush.msra.mxu0 %v6285
    %7446 = vmatpush.msra.mxu0 %v6253
    %7447 = vmatpush.msra.mxu0 %v6221
    %7448 = vmatpush.msra.mxu0 %v6189
    %7449 = vmatmul.f32.gmra.mxu0 %v5156
    %v7450 = vpop.f32.mrf.mxu0
    %v7451 = vadd.f32 %v7431, %v7450
    %7452 = vdwg.mxu0
    %7453 = vmatpush.msra.mxu0 0.0
    %7454 = vmatpush.msra.mxu0 0.0
    %7455 = vmatpush.msra.mxu0 0.0
    %7456 = vmatpush.msra.mxu0 0.0
    %7457 = vmatpush.msra.mxu0 0.0
    %7458 = vmatpush.msra.mxu0 0.0
    %7459 = vmatpush.msra.mxu0 0.0
    %7460 = vmatpush.msra.mxu0 0.0
    %7461 = vmatpush.msra.mxu0 0.0
    %7462 = vmatpush.msra.mxu0 0.0
    %7463 = vmatpush.msra.mxu0 0.0
    %7464 = vmatpush.msra.mxu0 0.0
    %7465 = vmatpush.msra.mxu0 0.0
    %7466 = vmatpush.msra.mxu0 0.0
    %7467 = vmatpush.msra.mxu0 %v6733
    %7468 = vmatpush.msra.mxu0 %v6701
    %7469 = vmatmul.f32.gmra.mxu0 %v6831
    %v7470 = vpop.f32.mrf.mxu0
    %v7471 = vadd.f32 %v7451, %v7470
    %7472 = vdwg.mxu0
    %7473 = vmatpush.msra.mxu0 %v5646
    %7474 = vmatpush.msra.mxu0 %v5614
    %7475 = vmatpush.msra.mxu0 %v5582
    %7476 = vmatpush.msra.mxu0 %v5550
    %7477 = vmatpush.msra.mxu0 %v5518
    %7478 = vmatpush.msra.mxu0 %v5486
    %7479 = vmatpush.msra.mxu0 %v5454
    %7480 = vmatpush.msra.mxu0 %v5422
    %7481 = vmatpush.msra.mxu0 %v5390
    %7482 = vmatpush.msra.mxu0 %v5358
    %7483 = vmatpush.msra.mxu0 %v5326
    %7484 = vmatpush.msra.mxu0 %v5294
    %7485 = vmatpush.msra.mxu0 %v5262
    %7486 = vmatpush.msra.mxu0 %v5230
    %7487 = vmatpush.msra.mxu0 %v5198
    %7488 = vmatpush.msra.mxu0 %v5166
    %7489 = vmatmul.f32.gmra.mxu0 %v5154
    %v7490 = vpop.f32.mrf.mxu0
    %v7491 = vadd.f32 %v6774, %v7490
    %7492 = vdwg.mxu0
    %7493 = vmatpush.msra.mxu0 %v6158
    %7494 = vmatpush.msra.mxu0 %v6126
    %7495 = vmatpush.msra.mxu0 %v6094
    %7496 = vmatpush.msra.mxu0 %v6062
    %7497 = vmatpush.msra.mxu0 %v6030
    %7498 = vmatpush.msra.mxu0 %v5998
    %7499 = vmatpush.msra.mxu0 %v5966
    %7500 = vmatpush.msra.mxu0 %v5934
    %7501 = vmatpush.msra.mxu0 %v5902
    %7502 = vmatpush.msra.mxu0 %v5870
    %7503 = vmatpush.msra.mxu0 %v5838
    %7504 = vmatpush.msra.mxu0 %v5806
    %7505 = vmatpush.msra.mxu0 %v5774
    %7506 = vmatpush.msra.mxu0 %v5742
    %7507 = vmatpush.msra.mxu0 %v5710
    %7508 = vmatpush.msra.mxu0 %v5678
    %7509 = vmatmul.f32.gmra.mxu0 %v5155
    %v7510 = vpop.f32.mrf.mxu0
    %v7511 = vadd.f32 %v7491, %v7510
    %7512 = vdwg.mxu0
    %7513 = vmatpush.msra.mxu0 %v6670
    %7514 = vmatpush.msra.mxu0 %v6638
    %7515 = vmatpush.msra.mxu0 %v6606
    %7516 = vmatpush.msra.mxu0 %v6574
    %7517 = vmatpush.msra.mxu0 %v6542
    %7518 = vmatpush.msra.mxu0 %v6510
    %7519 = vmatpush.msra.mxu0 %v6478
    %7520 = vmatpush.msra.mxu0 %v6446
    %7521 = vmatpush.msra.mxu0 %v6414
    %7522 = vmatpush.msra.mxu0 %v6382
    %7523 = vmatpush.msra.mxu0 %v6350
    %7524 = vmatpush.msra.mxu0 %v6318
    %7525 = vmatpush.msra.mxu0 %v6286
    %7526 = vmatpush.msra.mxu0 %v6254
    %7527 = vmatpush.msra.mxu0 %v6222
    %7528 = vmatpush.msra.mxu0 %v6190
    %7529 = vmatmul.f32.gmra.mxu0 %v5156
    %v7530 = vpop.f32.mrf.mxu0
    %v7531 = vadd.f32 %v7511, %v7530
    %7532 = vdwg.mxu0
    %7533 = vmatpush.msra.mxu0 0.0
    %7534 = vmatpush.msra.mxu0 0.0
    %7535 = vmatpush.msra.mxu0 0.0
    %7536 = vmatpush.msra.mxu0 0.0
    %7537 = vmatpush.msra.mxu0 0.0
    %7538 = vmatpush.msra.mxu0 0.0
    %7539 = vmatpush.msra.mxu0 0.0
    %7540 = vmatpush.msra.mxu0 0.0
    %7541 = vmatpush.msra.mxu0 0.0
    %7542 = vmatpush.msra.mxu0 0.0
    %7543 = vmatpush.msra.mxu0 0.0
    %7544 = vmatpush.msra.mxu0 0.0
    %7545 = vmatpush.msra.mxu0 0.0
    %7546 = vmatpush.msra.mxu0 0.0
    %7547 = vmatpush.msra.mxu0 %v6734
    %7548 = vmatpush.msra.mxu0 %v6702
    %7549 = vmatmul.f32.gmra.mxu0 %v6831
    %v7550 = vpop.f32.mrf.mxu0
    %v7551 = vadd.f32 %v7531, %v7550
    %7552 = vdwg.mxu0
    %7553 = vmatpush.msra.mxu0 %v5647
    %7554 = vmatpush.msra.mxu0 %v5615
    %7555 = vmatpush.msra.mxu0 %v5583
    %7556 = vmatpush.msra.mxu0 %v5551
    %7557 = vmatpush.msra.mxu0 %v5519
    %7558 = vmatpush.msra.mxu0 %v5487
    %7559 = vmatpush.msra.mxu0 %v5455
    %7560 = vmatpush.msra.mxu0 %v5423
    %7561 = vmatpush.msra.mxu0 %v5391
    %7562 = vmatpush.msra.mxu0 %v5359
    %7563 = vmatpush.msra.mxu0 %v5327
    %7564 = vmatpush.msra.mxu0 %v5295
    %7565 = vmatpush.msra.mxu0 %v5263
    %7566 = vmatpush.msra.mxu0 %v5231
    %7567 = vmatpush.msra.mxu0 %v5199
    %7568 = vmatpush.msra.mxu0 %v5167
    %7569 = vmatmul.f32.gmra.mxu0 %v5154
    %v7570 = vpop.f32.mrf.mxu0
    %v7571 = vadd.f32 %v6775, %v7570
    %7572 = vdwg.mxu0
    %7573 = vmatpush.msra.mxu0 %v6159
    %7574 = vmatpush.msra.mxu0 %v6127
    %7575 = vmatpush.msra.mxu0 %v6095
    %7576 = vmatpush.msra.mxu0 %v6063
    %7577 = vmatpush.msra.mxu0 %v6031
    %7578 = vmatpush.msra.mxu0 %v5999
    %7579 = vmatpush.msra.mxu0 %v5967
    %7580 = vmatpush.msra.mxu0 %v5935
    %7581 = vmatpush.msra.mxu0 %v5903
    %7582 = vmatpush.msra.mxu0 %v5871
    %7583 = vmatpush.msra.mxu0 %v5839
    %7584 = vmatpush.msra.mxu0 %v5807
    %7585 = vmatpush.msra.mxu0 %v5775
    %7586 = vmatpush.msra.mxu0 %v5743
    %7587 = vmatpush.msra.mxu0 %v5711
    %7588 = vmatpush.msra.mxu0 %v5679
    %7589 = vmatmul.f32.gmra.mxu0 %v5155
    %v7590 = vpop.f32.mrf.mxu0
    %v7591 = vadd.f32 %v7571, %v7590
    %7592 = vdwg.mxu0
    %7593 = vmatpush.msra.mxu0 %v6671
    %7594 = vmatpush.msra.mxu0 %v6639
    %7595 = vmatpush.msra.mxu0 %v6607
    %7596 = vmatpush.msra.mxu0 %v6575
    %7597 = vmatpush.msra.mxu0 %v6543
    %7598 = vmatpush.msra.mxu0 %v6511
    %7599 = vmatpush.msra.mxu0 %v6479
    %7600 = vmatpush.msra.mxu0 %v6447
    %7601 = vmatpush.msra.mxu0 %v6415
    %7602 = vmatpush.msra.mxu0 %v6383
    %7603 = vmatpush.msra.mxu0 %v6351
    %7604 = vmatpush.msra.mxu0 %v6319
    %7605 = vmatpush.msra.mxu0 %v6287
    %7606 = vmatpush.msra.mxu0 %v6255
    %7607 = vmatpush.msra.mxu0 %v6223
    %7608 = vmatpush.msra.mxu0 %v6191
    %7609 = vmatmul.f32.gmra.mxu0 %v5156
    %v7610 = vpop.f32.mrf.mxu0
    %v7611 = vadd.f32 %v7591, %v7610
    %7612 = vdwg.mxu0
    %7613 = vmatpush.msra.mxu0 0.0
    %7614 = vmatpush.msra.mxu0 0.0
    %7615 = vmatpush.msra.mxu0 0.0
    %7616 = vmatpush.msra.mxu0 0.0
    %7617 = vmatpush.msra.mxu0 0.0
    %7618 = vmatpush.msra.mxu0 0.0
    %7619 = vmatpush.msra.mxu0 0.0
    %7620 = vmatpush.msra.mxu0 0.0
    %7621 = vmatpush.msra.mxu0 0.0
    %7622 = vmatpush.msra.mxu0 0.0
    %7623 = vmatpush.msra.mxu0 0.0
    %7624 = vmatpush.msra.mxu0 0.0
    %7625 = vmatpush.msra.mxu0 0.0
    %7626 = vmatpush.msra.mxu0 0.0
    %7627 = vmatpush.msra.mxu0 %v6735
    %7628 = vmatpush.msra.mxu0 %v6703
    %7629 = vmatmul.f32.gmra.mxu0 %v6831
    %v7630 = vpop.f32.mrf.mxu0
    %v7631 = vadd.f32 %v7611, %v7630
    %7632 = vdwg.mxu0
    %7633 = vmatpush.msra.mxu0 %v5648
    %7634 = vmatpush.msra.mxu0 %v5616
    %7635 = vmatpush.msra.mxu0 %v5584
    %7636 = vmatpush.msra.mxu0 %v5552
    %7637 = vmatpush.msra.mxu0 %v5520
    %7638 = vmatpush.msra.mxu0 %v5488
    %7639 = vmatpush.msra.mxu0 %v5456
    %7640 = vmatpush.msra.mxu0 %v5424
    %7641 = vmatpush.msra.mxu0 %v5392
    %7642 = vmatpush.msra.mxu0 %v5360
    %7643 = vmatpush.msra.mxu0 %v5328
    %7644 = vmatpush.msra.mxu0 %v5296
    %7645 = vmatpush.msra.mxu0 %v5264
    %7646 = vmatpush.msra.mxu0 %v5232
    %7647 = vmatpush.msra.mxu0 %v5200
    %7648 = vmatpush.msra.mxu0 %v5168
    %7649 = vmatmul.f32.gmra.mxu0 %v5154
    %v7650 = vpop.f32.mrf.mxu0
    %v7651 = vadd.f32 %v6776, %v7650
    %7652 = vdwg.mxu0
    %7653 = vmatpush.msra.mxu0 %v6160
    %7654 = vmatpush.msra.mxu0 %v6128
    %7655 = vmatpush.msra.mxu0 %v6096
    %7656 = vmatpush.msra.mxu0 %v6064
    %7657 = vmatpush.msra.mxu0 %v6032
    %7658 = vmatpush.msra.mxu0 %v6000
    %7659 = vmatpush.msra.mxu0 %v5968
    %7660 = vmatpush.msra.mxu0 %v5936
    %7661 = vmatpush.msra.mxu0 %v5904
    %7662 = vmatpush.msra.mxu0 %v5872
    %7663 = vmatpush.msra.mxu0 %v5840
    %7664 = vmatpush.msra.mxu0 %v5808
    %7665 = vmatpush.msra.mxu0 %v5776
    %7666 = vmatpush.msra.mxu0 %v5744
    %7667 = vmatpush.msra.mxu0 %v5712
    %7668 = vmatpush.msra.mxu0 %v5680
    %7669 = vmatmul.f32.gmra.mxu0 %v5155
    %v7670 = vpop.f32.mrf.mxu0
    %v7671 = vadd.f32 %v7651, %v7670
    %7672 = vdwg.mxu0
    %7673 = vmatpush.msra.mxu0 %v6672
    %7674 = vmatpush.msra.mxu0 %v6640
    %7675 = vmatpush.msra.mxu0 %v6608
    %7676 = vmatpush.msra.mxu0 %v6576
    %7677 = vmatpush.msra.mxu0 %v6544
    %7678 = vmatpush.msra.mxu0 %v6512
    %7679 = vmatpush.msra.mxu0 %v6480
    %7680 = vmatpush.msra.mxu0 %v6448
    %7681 = vmatpush.msra.mxu0 %v6416
    %7682 = vmatpush.msra.mxu0 %v6384
    %7683 = vmatpush.msra.mxu0 %v6352
    %7684 = vmatpush.msra.mxu0 %v6320
    %7685 = vmatpush.msra.mxu0 %v6288
    %7686 = vmatpush.msra.mxu0 %v6256
    %7687 = vmatpush.msra.mxu0 %v6224
    %7688 = vmatpush.msra.mxu0 %v6192
    %7689 = vmatmul.f32.gmra.mxu0 %v5156
    %v7690 = vpop.f32.mrf.mxu0
    %v7691 = vadd.f32 %v7671, %v7690
    %7692 = vdwg.mxu0
    %7693 = vmatpush.msra.mxu0 0.0
    %7694 = vmatpush.msra.mxu0 0.0
    %7695 = vmatpush.msra.mxu0 0.0
    %7696 = vmatpush.msra.mxu0 0.0
    %7697 = vmatpush.msra.mxu0 0.0
    %7698 = vmatpush.msra.mxu0 0.0
    %7699 = vmatpush.msra.mxu0 0.0
    %7700 = vmatpush.msra.mxu0 0.0
    %7701 = vmatpush.msra.mxu0 0.0
    %7702 = vmatpush.msra.mxu0 0.0
    %7703 = vmatpush.msra.mxu0 0.0
    %7704 = vmatpush.msra.mxu0 0.0
    %7705 = vmatpush.msra.mxu0 0.0
    %7706 = vmatpush.msra.mxu0 0.0
    %7707 = vmatpush.msra.mxu0 %v6736
    %7708 = vmatpush.msra.mxu0 %v6704
    %7709 = vmatmul.f32.gmra.mxu0 %v6831
    %v7710 = vpop.f32.mrf.mxu0
    %v7711 = vadd.f32 %v7691, %v7710
    %7712 = vdwg.mxu0
    %7713 = vmatpush.msra.mxu0 %v5649
    %7714 = vmatpush.msra.mxu0 %v5617
    %7715 = vmatpush.msra.mxu0 %v5585
    %7716 = vmatpush.msra.mxu0 %v5553
    %7717 = vmatpush.msra.mxu0 %v5521
    %7718 = vmatpush.msra.mxu0 %v5489
    %7719 = vmatpush.msra.mxu0 %v5457
    %7720 = vmatpush.msra.mxu0 %v5425
    %7721 = vmatpush.msra.mxu0 %v5393
    %7722 = vmatpush.msra.mxu0 %v5361
    %7723 = vmatpush.msra.mxu0 %v5329
    %7724 = vmatpush.msra.mxu0 %v5297
    %7725 = vmatpush.msra.mxu0 %v5265
    %7726 = vmatpush.msra.mxu0 %v5233
    %7727 = vmatpush.msra.mxu0 %v5201
    %7728 = vmatpush.msra.mxu0 %v5169
    %7729 = vmatmul.f32.gmra.mxu0 %v5154
    %v7730 = vpop.f32.mrf.mxu0
    %v7731 = vadd.f32 %v6777, %v7730
    %7732 = vdwg.mxu0
    %7733 = vmatpush.msra.mxu0 %v6161
    %7734 = vmatpush.msra.mxu0 %v6129
    %7735 = vmatpush.msra.mxu0 %v6097
    %7736 = vmatpush.msra.mxu0 %v6065
    %7737 = vmatpush.msra.mxu0 %v6033
    %7738 = vmatpush.msra.mxu0 %v6001
    %7739 = vmatpush.msra.mxu0 %v5969
    %7740 = vmatpush.msra.mxu0 %v5937
    %7741 = vmatpush.msra.mxu0 %v5905
    %7742 = vmatpush.msra.mxu0 %v5873
    %7743 = vmatpush.msra.mxu0 %v5841
    %7744 = vmatpush.msra.mxu0 %v5809
    %7745 = vmatpush.msra.mxu0 %v5777
    %7746 = vmatpush.msra.mxu0 %v5745
    %7747 = vmatpush.msra.mxu0 %v5713
    %7748 = vmatpush.msra.mxu0 %v5681
    %7749 = vmatmul.f32.gmra.mxu0 %v5155
    %v7750 = vpop.f32.mrf.mxu0
    %v7751 = vadd.f32 %v7731, %v7750
    %7752 = vdwg.mxu0
    %7753 = vmatpush.msra.mxu0 %v6673
    %7754 = vmatpush.msra.mxu0 %v6641
    %7755 = vmatpush.msra.mxu0 %v6609
    %7756 = vmatpush.msra.mxu0 %v6577
    %7757 = vmatpush.msra.mxu0 %v6545
    %7758 = vmatpush.msra.mxu0 %v6513
    %7759 = vmatpush.msra.mxu0 %v6481
    %7760 = vmatpush.msra.mxu0 %v6449
    %7761 = vmatpush.msra.mxu0 %v6417
    %7762 = vmatpush.msra.mxu0 %v6385
    %7763 = vmatpush.msra.mxu0 %v6353
    %7764 = vmatpush.msra.mxu0 %v6321
    %7765 = vmatpush.msra.mxu0 %v6289
    %7766 = vmatpush.msra.mxu0 %v6257
    %7767 = vmatpush.msra.mxu0 %v6225
    %7768 = vmatpush.msra.mxu0 %v6193
    %7769 = vmatmul.f32.gmra.mxu0 %v5156
    %v7770 = vpop.f32.mrf.mxu0
    %v7771 = vadd.f32 %v7751, %v7770
    %7772 = vdwg.mxu0
    %7773 = vmatpush.msra.mxu0 0.0
    %7774 = vmatpush.msra.mxu0 0.0
    %7775 = vmatpush.msra.mxu0 0.0
    %7776 = vmatpush.msra.mxu0 0.0
    %7777 = vmatpush.msra.mxu0 0.0
    %7778 = vmatpush.msra.mxu0 0.0
    %7779 = vmatpush.msra.mxu0 0.0
    %7780 = vmatpush.msra.mxu0 0.0
    %7781 = vmatpush.msra.mxu0 0.0
    %7782 = vmatpush.msra.mxu0 0.0
    %7783 = vmatpush.msra.mxu0 0.0
    %7784 = vmatpush.msra.mxu0 0.0
    %7785 = vmatpush.msra.mxu0 0.0
    %7786 = vmatpush.msra.mxu0 0.0
    %7787 = vmatpush.msra.mxu0 %v6737
    %7788 = vmatpush.msra.mxu0 %v6705
    %7789 = vmatmul.f32.gmra.mxu0 %v6831
    %v7790 = vpop.f32.mrf.mxu0
    %v7791 = vadd.f32 %v7771, %v7790
    %7792 = vdwg.mxu0
    %7793 = vmatpush.msra.mxu0 %v5650
    %7794 = vmatpush.msra.mxu0 %v5618
    %7795 = vmatpush.msra.mxu0 %v5586
    %7796 = vmatpush.msra.mxu0 %v5554
    %7797 = vmatpush.msra.mxu0 %v5522
    %7798 = vmatpush.msra.mxu0 %v5490
    %7799 = vmatpush.msra.mxu0 %v5458
    %7800 = vmatpush.msra.mxu0 %v5426
    %7801 = vmatpush.msra.mxu0 %v5394
    %7802 = vmatpush.msra.mxu0 %v5362
    %7803 = vmatpush.msra.mxu0 %v5330
    %7804 = vmatpush.msra.mxu0 %v5298
    %7805 = vmatpush.msra.mxu0 %v5266
    %7806 = vmatpush.msra.mxu0 %v5234
    %7807 = vmatpush.msra.mxu0 %v5202
    %7808 = vmatpush.msra.mxu0 %v5170
    %7809 = vmatmul.f32.gmra.mxu0 %v5154
    %v7810 = vpop.f32.mrf.mxu0
    %v7811 = vadd.f32 %v6778, %v7810
    %7812 = vdwg.mxu0
    %7813 = vmatpush.msra.mxu0 %v6162
    %7814 = vmatpush.msra.mxu0 %v6130
    %7815 = vmatpush.msra.mxu0 %v6098
    %7816 = vmatpush.msra.mxu0 %v6066
    %7817 = vmatpush.msra.mxu0 %v6034
    %7818 = vmatpush.msra.mxu0 %v6002
    %7819 = vmatpush.msra.mxu0 %v5970
    %7820 = vmatpush.msra.mxu0 %v5938
    %7821 = vmatpush.msra.mxu0 %v5906
    %7822 = vmatpush.msra.mxu0 %v5874
    %7823 = vmatpush.msra.mxu0 %v5842
    %7824 = vmatpush.msra.mxu0 %v5810
    %7825 = vmatpush.msra.mxu0 %v5778
    %7826 = vmatpush.msra.mxu0 %v5746
    %7827 = vmatpush.msra.mxu0 %v5714
    %7828 = vmatpush.msra.mxu0 %v5682
    %7829 = vmatmul.f32.gmra.mxu0 %v5155
    %v7830 = vpop.f32.mrf.mxu0
    %v7831 = vadd.f32 %v7811, %v7830
    %7832 = vdwg.mxu0
    %7833 = vmatpush.msra.mxu0 %v6674
    %7834 = vmatpush.msra.mxu0 %v6642
    %7835 = vmatpush.msra.mxu0 %v6610
    %7836 = vmatpush.msra.mxu0 %v6578
    %7837 = vmatpush.msra.mxu0 %v6546
    %7838 = vmatpush.msra.mxu0 %v6514
    %7839 = vmatpush.msra.mxu0 %v6482
    %7840 = vmatpush.msra.mxu0 %v6450
    %7841 = vmatpush.msra.mxu0 %v6418
    %7842 = vmatpush.msra.mxu0 %v6386
    %7843 = vmatpush.msra.mxu0 %v6354
    %7844 = vmatpush.msra.mxu0 %v6322
    %7845 = vmatpush.msra.mxu0 %v6290
    %7846 = vmatpush.msra.mxu0 %v6258
    %7847 = vmatpush.msra.mxu0 %v6226
    %7848 = vmatpush.msra.mxu0 %v6194
    %7849 = vmatmul.f32.gmra.mxu0 %v5156
    %v7850 = vpop.f32.mrf.mxu0
    %v7851 = vadd.f32 %v7831, %v7850
    %7852 = vdwg.mxu0
    %7853 = vmatpush.msra.mxu0 0.0
    %7854 = vmatpush.msra.mxu0 0.0
    %7855 = vmatpush.msra.mxu0 0.0
    %7856 = vmatpush.msra.mxu0 0.0
    %7857 = vmatpush.msra.mxu0 0.0
    %7858 = vmatpush.msra.mxu0 0.0
    %7859 = vmatpush.msra.mxu0 0.0
    %7860 = vmatpush.msra.mxu0 0.0
    %7861 = vmatpush.msra.mxu0 0.0
    %7862 = vmatpush.msra.mxu0 0.0
    %7863 = vmatpush.msra.mxu0 0.0
    %7864 = vmatpush.msra.mxu0 0.0
    %7865 = vmatpush.msra.mxu0 0.0
    %7866 = vmatpush.msra.mxu0 0.0
    %7867 = vmatpush.msra.mxu0 %v6738
    %7868 = vmatpush.msra.mxu0 %v6706
    %7869 = vmatmul.f32.gmra.mxu0 %v6831
    %v7870 = vpop.f32.mrf.mxu0
    %v7871 = vadd.f32 %v7851, %v7870
    %7872 = vdwg.mxu0
    %7873 = vmatpush.msra.mxu0 %v5651
    %7874 = vmatpush.msra.mxu0 %v5619
    %7875 = vmatpush.msra.mxu0 %v5587
    %7876 = vmatpush.msra.mxu0 %v5555
    %7877 = vmatpush.msra.mxu0 %v5523
    %7878 = vmatpush.msra.mxu0 %v5491
    %7879 = vmatpush.msra.mxu0 %v5459
    %7880 = vmatpush.msra.mxu0 %v5427
    %7881 = vmatpush.msra.mxu0 %v5395
    %7882 = vmatpush.msra.mxu0 %v5363
    %7883 = vmatpush.msra.mxu0 %v5331
    %7884 = vmatpush.msra.mxu0 %v5299
    %7885 = vmatpush.msra.mxu0 %v5267
    %7886 = vmatpush.msra.mxu0 %v5235
    %7887 = vmatpush.msra.mxu0 %v5203
    %7888 = vmatpush.msra.mxu0 %v5171
    %7889 = vmatmul.f32.gmra.mxu0 %v5154
    %v7890 = vpop.f32.mrf.mxu0
    %v7891 = vadd.f32 %v6779, %v7890
    %7892 = vdwg.mxu0
    %7893 = vmatpush.msra.mxu0 %v6163
    %7894 = vmatpush.msra.mxu0 %v6131
    %7895 = vmatpush.msra.mxu0 %v6099
    %7896 = vmatpush.msra.mxu0 %v6067
    %7897 = vmatpush.msra.mxu0 %v6035
    %7898 = vmatpush.msra.mxu0 %v6003
    %7899 = vmatpush.msra.mxu0 %v5971
    %7900 = vmatpush.msra.mxu0 %v5939
    %7901 = vmatpush.msra.mxu0 %v5907
    %7902 = vmatpush.msra.mxu0 %v5875
    %7903 = vmatpush.msra.mxu0 %v5843
    %7904 = vmatpush.msra.mxu0 %v5811
    %7905 = vmatpush.msra.mxu0 %v5779
    %7906 = vmatpush.msra.mxu0 %v5747
    %7907 = vmatpush.msra.mxu0 %v5715
    %7908 = vmatpush.msra.mxu0 %v5683
    %7909 = vmatmul.f32.gmra.mxu0 %v5155
    %v7910 = vpop.f32.mrf.mxu0
    %v7911 = vadd.f32 %v7891, %v7910
    %7912 = vdwg.mxu0
    %7913 = vmatpush.msra.mxu0 %v6675
    %7914 = vmatpush.msra.mxu0 %v6643
    %7915 = vmatpush.msra.mxu0 %v6611
    %7916 = vmatpush.msra.mxu0 %v6579
    %7917 = vmatpush.msra.mxu0 %v6547
    %7918 = vmatpush.msra.mxu0 %v6515
    %7919 = vmatpush.msra.mxu0 %v6483
    %7920 = vmatpush.msra.mxu0 %v6451
    %7921 = vmatpush.msra.mxu0 %v6419
    %7922 = vmatpush.msra.mxu0 %v6387
    %7923 = vmatpush.msra.mxu0 %v6355
    %7924 = vmatpush.msra.mxu0 %v6323
    %7925 = vmatpush.msra.mxu0 %v6291
    %7926 = vmatpush.msra.mxu0 %v6259
    %7927 = vmatpush.msra.mxu0 %v6227
    %7928 = vmatpush.msra.mxu0 %v6195
    %7929 = vmatmul.f32.gmra.mxu0 %v5156
    %v7930 = vpop.f32.mrf.mxu0
    %v7931 = vadd.f32 %v7911, %v7930
    %7932 = vdwg.mxu0
    %7933 = vmatpush.msra.mxu0 0.0
    %7934 = vmatpush.msra.mxu0 0.0
    %7935 = vmatpush.msra.mxu0 0.0
    %7936 = vmatpush.msra.mxu0 0.0
    %7937 = vmatpush.msra.mxu0 0.0
    %7938 = vmatpush.msra.mxu0 0.0
    %7939 = vmatpush.msra.mxu0 0.0
    %7940 = vmatpush.msra.mxu0 0.0
    %7941 = vmatpush.msra.mxu0 0.0
    %7942 = vmatpush.msra.mxu0 0.0
    %7943 = vmatpush.msra.mxu0 0.0
    %7944 = vmatpush.msra.mxu0 0.0
    %7945 = vmatpush.msra.mxu0 0.0
    %7946 = vmatpush.msra.mxu0 0.0
    %7947 = vmatpush.msra.mxu0 %v6739
    %7948 = vmatpush.msra.mxu0 %v6707
    %7949 = vmatmul.f32.gmra.mxu0 %v6831
    %v7950 = vpop.f32.mrf.mxu0
    %v7951 = vadd.f32 %v7931, %v7950
    %7952 = vdwg.mxu0
    %7953 = vmatpush.msra.mxu0 %v5652
    %7954 = vmatpush.msra.mxu0 %v5620
    %7955 = vmatpush.msra.mxu0 %v5588
    %7956 = vmatpush.msra.mxu0 %v5556
    %7957 = vmatpush.msra.mxu0 %v5524
    %7958 = vmatpush.msra.mxu0 %v5492
    %7959 = vmatpush.msra.mxu0 %v5460
    %7960 = vmatpush.msra.mxu0 %v5428
    %7961 = vmatpush.msra.mxu0 %v5396
    %7962 = vmatpush.msra.mxu0 %v5364
    %7963 = vmatpush.msra.mxu0 %v5332
    %7964 = vmatpush.msra.mxu0 %v5300
    %7965 = vmatpush.msra.mxu0 %v5268
    %7966 = vmatpush.msra.mxu0 %v5236
    %7967 = vmatpush.msra.mxu0 %v5204
    %7968 = vmatpush.msra.mxu0 %v5172
    %7969 = vmatmul.f32.gmra.mxu0 %v5154
    %v7970 = vpop.f32.mrf.mxu0
    %v7971 = vadd.f32 %v6780, %v7970
    %7972 = vdwg.mxu0
    %7973 = vmatpush.msra.mxu0 %v6164
    %7974 = vmatpush.msra.mxu0 %v6132
    %7975 = vmatpush.msra.mxu0 %v6100
    %7976 = vmatpush.msra.mxu0 %v6068
    %7977 = vmatpush.msra.mxu0 %v6036
    %7978 = vmatpush.msra.mxu0 %v6004
    %7979 = vmatpush.msra.mxu0 %v5972
    %7980 = vmatpush.msra.mxu0 %v5940
    %7981 = vmatpush.msra.mxu0 %v5908
    %7982 = vmatpush.msra.mxu0 %v5876
    %7983 = vmatpush.msra.mxu0 %v5844
    %7984 = vmatpush.msra.mxu0 %v5812
    %7985 = vmatpush.msra.mxu0 %v5780
    %7986 = vmatpush.msra.mxu0 %v5748
    %7987 = vmatpush.msra.mxu0 %v5716
    %7988 = vmatpush.msra.mxu0 %v5684
    %7989 = vmatmul.f32.gmra.mxu0 %v5155
    %v7990 = vpop.f32.mrf.mxu0
    %v7991 = vadd.f32 %v7971, %v7990
    %7992 = vdwg.mxu0
    %7993 = vmatpush.msra.mxu0 %v6676
    %7994 = vmatpush.msra.mxu0 %v6644
    %7995 = vmatpush.msra.mxu0 %v6612
    %7996 = vmatpush.msra.mxu0 %v6580
    %7997 = vmatpush.msra.mxu0 %v6548
    %7998 = vmatpush.msra.mxu0 %v6516
    %7999 = vmatpush.msra.mxu0 %v6484
    %8000 = vmatpush.msra.mxu0 %v6452
    %8001 = vmatpush.msra.mxu0 %v6420
    %8002 = vmatpush.msra.mxu0 %v6388
    %8003 = vmatpush.msra.mxu0 %v6356
    %8004 = vmatpush.msra.mxu0 %v6324
    %8005 = vmatpush.msra.mxu0 %v6292
    %8006 = vmatpush.msra.mxu0 %v6260
    %8007 = vmatpush.msra.mxu0 %v6228
    %8008 = vmatpush.msra.mxu0 %v6196
    %8009 = vmatmul.f32.gmra.mxu0 %v5156
    %v8010 = vpop.f32.mrf.mxu0
    %v8011 = vadd.f32 %v7991, %v8010
    %8012 = vdwg.mxu0
    %8013 = vmatpush.msra.mxu0 0.0
    %8014 = vmatpush.msra.mxu0 0.0
    %8015 = vmatpush.msra.mxu0 0.0
    %8016 = vmatpush.msra.mxu0 0.0
    %8017 = vmatpush.msra.mxu0 0.0
    %8018 = vmatpush.msra.mxu0 0.0
    %8019 = vmatpush.msra.mxu0 0.0
    %8020 = vmatpush.msra.mxu0 0.0
    %8021 = vmatpush.msra.mxu0 0.0
    %8022 = vmatpush.msra.mxu0 0.0
    %8023 = vmatpush.msra.mxu0 0.0
    %8024 = vmatpush.msra.mxu0 0.0
    %8025 = vmatpush.msra.mxu0 0.0
    %8026 = vmatpush.msra.mxu0 0.0
    %8027 = vmatpush.msra.mxu0 %v6740
    %8028 = vmatpush.msra.mxu0 %v6708
    %8029 = vmatmul.f32.gmra.mxu0 %v6831
    %v8030 = vpop.f32.mrf.mxu0
    %v8031 = vadd.f32 %v8011, %v8030
    %8032 = vdwg.mxu0
    %8033 = vmatpush.msra.mxu0 %v5653
    %8034 = vmatpush.msra.mxu0 %v5621
    %8035 = vmatpush.msra.mxu0 %v5589
    %8036 = vmatpush.msra.mxu0 %v5557
    %8037 = vmatpush.msra.mxu0 %v5525
    %8038 = vmatpush.msra.mxu0 %v5493
    %8039 = vmatpush.msra.mxu0 %v5461
    %8040 = vmatpush.msra.mxu0 %v5429
    %8041 = vmatpush.msra.mxu0 %v5397
    %8042 = vmatpush.msra.mxu0 %v5365
    %8043 = vmatpush.msra.mxu0 %v5333
    %8044 = vmatpush.msra.mxu0 %v5301
    %8045 = vmatpush.msra.mxu0 %v5269
    %8046 = vmatpush.msra.mxu0 %v5237
    %8047 = vmatpush.msra.mxu0 %v5205
    %8048 = vmatpush.msra.mxu0 %v5173
    %8049 = vmatmul.f32.gmra.mxu0 %v5154
    %v8050 = vpop.f32.mrf.mxu0
    %v8051 = vadd.f32 %v6781, %v8050
    %8052 = vdwg.mxu0
    %8053 = vmatpush.msra.mxu0 %v6165
    %8054 = vmatpush.msra.mxu0 %v6133
    %8055 = vmatpush.msra.mxu0 %v6101
    %8056 = vmatpush.msra.mxu0 %v6069
    %8057 = vmatpush.msra.mxu0 %v6037
    %8058 = vmatpush.msra.mxu0 %v6005
    %8059 = vmatpush.msra.mxu0 %v5973
    %8060 = vmatpush.msra.mxu0 %v5941
    %8061 = vmatpush.msra.mxu0 %v5909
    %8062 = vmatpush.msra.mxu0 %v5877
    %8063 = vmatpush.msra.mxu0 %v5845
    %8064 = vmatpush.msra.mxu0 %v5813
    %8065 = vmatpush.msra.mxu0 %v5781
    %8066 = vmatpush.msra.mxu0 %v5749
    %8067 = vmatpush.msra.mxu0 %v5717
    %8068 = vmatpush.msra.mxu0 %v5685
    %8069 = vmatmul.f32.gmra.mxu0 %v5155
    %v8070 = vpop.f32.mrf.mxu0
    %v8071 = vadd.f32 %v8051, %v8070
    %8072 = vdwg.mxu0
    %8073 = vmatpush.msra.mxu0 %v6677
    %8074 = vmatpush.msra.mxu0 %v6645
    %8075 = vmatpush.msra.mxu0 %v6613
    %8076 = vmatpush.msra.mxu0 %v6581
    %8077 = vmatpush.msra.mxu0 %v6549
    %8078 = vmatpush.msra.mxu0 %v6517
    %8079 = vmatpush.msra.mxu0 %v6485
    %8080 = vmatpush.msra.mxu0 %v6453
    %8081 = vmatpush.msra.mxu0 %v6421
    %8082 = vmatpush.msra.mxu0 %v6389
    %8083 = vmatpush.msra.mxu0 %v6357
    %8084 = vmatpush.msra.mxu0 %v6325
    %8085 = vmatpush.msra.mxu0 %v6293
    %8086 = vmatpush.msra.mxu0 %v6261
    %8087 = vmatpush.msra.mxu0 %v6229
    %8088 = vmatpush.msra.mxu0 %v6197
    %8089 = vmatmul.f32.gmra.mxu0 %v5156
    %v8090 = vpop.f32.mrf.mxu0
    %v8091 = vadd.f32 %v8071, %v8090
    %8092 = vdwg.mxu0
    %8093 = vmatpush.msra.mxu0 0.0
    %8094 = vmatpush.msra.mxu0 0.0
    %8095 = vmatpush.msra.mxu0 0.0
    %8096 = vmatpush.msra.mxu0 0.0
    %8097 = vmatpush.msra.mxu0 0.0
    %8098 = vmatpush.msra.mxu0 0.0
    %8099 = vmatpush.msra.mxu0 0.0
    %8100 = vmatpush.msra.mxu0 0.0
    %8101 = vmatpush.msra.mxu0 0.0
    %8102 = vmatpush.msra.mxu0 0.0
    %8103 = vmatpush.msra.mxu0 0.0
    %8104 = vmatpush.msra.mxu0 0.0
    %8105 = vmatpush.msra.mxu0 0.0
    %8106 = vmatpush.msra.mxu0 0.0
    %8107 = vmatpush.msra.mxu0 %v6741
    %8108 = vmatpush.msra.mxu0 %v6709
    %8109 = vmatmul.f32.gmra.mxu0 %v6831
    %v8110 = vpop.f32.mrf.mxu0
    %v8111 = vadd.f32 %v8091, %v8110
    %8112 = vdwg.mxu0
    %8113 = vmatpush.msra.mxu0 %v5654
    %8114 = vmatpush.msra.mxu0 %v5622
    %8115 = vmatpush.msra.mxu0 %v5590
    %8116 = vmatpush.msra.mxu0 %v5558
    %8117 = vmatpush.msra.mxu0 %v5526
    %8118 = vmatpush.msra.mxu0 %v5494
    %8119 = vmatpush.msra.mxu0 %v5462
    %8120 = vmatpush.msra.mxu0 %v5430
    %8121 = vmatpush.msra.mxu0 %v5398
    %8122 = vmatpush.msra.mxu0 %v5366
    %8123 = vmatpush.msra.mxu0 %v5334
    %8124 = vmatpush.msra.mxu0 %v5302
    %8125 = vmatpush.msra.mxu0 %v5270
    %8126 = vmatpush.msra.mxu0 %v5238
    %8127 = vmatpush.msra.mxu0 %v5206
    %8128 = vmatpush.msra.mxu0 %v5174
    %8129 = vmatmul.f32.gmra.mxu0 %v5154
    %v8130 = vpop.f32.mrf.mxu0
    %v8131 = vadd.f32 %v6782, %v8130
    %8132 = vdwg.mxu0
    %8133 = vmatpush.msra.mxu0 %v6166
    %8134 = vmatpush.msra.mxu0 %v6134
    %8135 = vmatpush.msra.mxu0 %v6102
    %8136 = vmatpush.msra.mxu0 %v6070
    %8137 = vmatpush.msra.mxu0 %v6038
    %8138 = vmatpush.msra.mxu0 %v6006
    %8139 = vmatpush.msra.mxu0 %v5974
    %8140 = vmatpush.msra.mxu0 %v5942
    %8141 = vmatpush.msra.mxu0 %v5910
    %8142 = vmatpush.msra.mxu0 %v5878
    %8143 = vmatpush.msra.mxu0 %v5846
    %8144 = vmatpush.msra.mxu0 %v5814
    %8145 = vmatpush.msra.mxu0 %v5782
    %8146 = vmatpush.msra.mxu0 %v5750
    %8147 = vmatpush.msra.mxu0 %v5718
    %8148 = vmatpush.msra.mxu0 %v5686
    %8149 = vmatmul.f32.gmra.mxu0 %v5155
    %v8150 = vpop.f32.mrf.mxu0
    %v8151 = vadd.f32 %v8131, %v8150
    %8152 = vdwg.mxu0
    %8153 = vmatpush.msra.mxu0 %v6678
    %8154 = vmatpush.msra.mxu0 %v6646
    %8155 = vmatpush.msra.mxu0 %v6614
    %8156 = vmatpush.msra.mxu0 %v6582
    %8157 = vmatpush.msra.mxu0 %v6550
    %8158 = vmatpush.msra.mxu0 %v6518
    %8159 = vmatpush.msra.mxu0 %v6486
    %8160 = vmatpush.msra.mxu0 %v6454
    %8161 = vmatpush.msra.mxu0 %v6422
    %8162 = vmatpush.msra.mxu0 %v6390
    %8163 = vmatpush.msra.mxu0 %v6358
    %8164 = vmatpush.msra.mxu0 %v6326
    %8165 = vmatpush.msra.mxu0 %v6294
    %8166 = vmatpush.msra.mxu0 %v6262
    %8167 = vmatpush.msra.mxu0 %v6230
    %8168 = vmatpush.msra.mxu0 %v6198
    %8169 = vmatmul.f32.gmra.mxu0 %v5156
    %v8170 = vpop.f32.mrf.mxu0
    %v8171 = vadd.f32 %v8151, %v8170
    %8172 = vdwg.mxu0
    %8173 = vmatpush.msra.mxu0 0.0
    %8174 = vmatpush.msra.mxu0 0.0
    %8175 = vmatpush.msra.mxu0 0.0
    %8176 = vmatpush.msra.mxu0 0.0
    %8177 = vmatpush.msra.mxu0 0.0
    %8178 = vmatpush.msra.mxu0 0.0
    %8179 = vmatpush.msra.mxu0 0.0
    %8180 = vmatpush.msra.mxu0 0.0
    %8181 = vmatpush.msra.mxu0 0.0
    %8182 = vmatpush.msra.mxu0 0.0
    %8183 = vmatpush.msra.mxu0 0.0
    %8184 = vmatpush.msra.mxu0 0.0
    %8185 = vmatpush.msra.mxu0 0.0
    %8186 = vmatpush.msra.mxu0 0.0
    %8187 = vmatpush.msra.mxu0 %v6742
    %8188 = vmatpush.msra.mxu0 %v6710
    %8189 = vmatmul.f32.gmra.mxu0 %v6831
    %v8190 = vpop.f32.mrf.mxu0
    %v8191 = vadd.f32 %v8171, %v8190
    %8192 = vdwg.mxu0
    %8193 = vmatpush.msra.mxu0 %v5655
    %8194 = vmatpush.msra.mxu0 %v5623
    %8195 = vmatpush.msra.mxu0 %v5591
    %8196 = vmatpush.msra.mxu0 %v5559
    %8197 = vmatpush.msra.mxu0 %v5527
    %8198 = vmatpush.msra.mxu0 %v5495
    %8199 = vmatpush.msra.mxu0 %v5463
    %8200 = vmatpush.msra.mxu0 %v5431
    %8201 = vmatpush.msra.mxu0 %v5399
    %8202 = vmatpush.msra.mxu0 %v5367
    %8203 = vmatpush.msra.mxu0 %v5335
    %8204 = vmatpush.msra.mxu0 %v5303
    %8205 = vmatpush.msra.mxu0 %v5271
    %8206 = vmatpush.msra.mxu0 %v5239
    %8207 = vmatpush.msra.mxu0 %v5207
    %8208 = vmatpush.msra.mxu0 %v5175
    %8209 = vmatmul.f32.gmra.mxu0 %v5154
    %v8210 = vpop.f32.mrf.mxu0
    %v8211 = vadd.f32 %v6783, %v8210
    %8212 = vdwg.mxu0
    %8213 = vmatpush.msra.mxu0 %v6167
    %8214 = vmatpush.msra.mxu0 %v6135
    %8215 = vmatpush.msra.mxu0 %v6103
    %8216 = vmatpush.msra.mxu0 %v6071
    %8217 = vmatpush.msra.mxu0 %v6039
    %8218 = vmatpush.msra.mxu0 %v6007
    %8219 = vmatpush.msra.mxu0 %v5975
    %8220 = vmatpush.msra.mxu0 %v5943
    %8221 = vmatpush.msra.mxu0 %v5911
    %8222 = vmatpush.msra.mxu0 %v5879
    %8223 = vmatpush.msra.mxu0 %v5847
    %8224 = vmatpush.msra.mxu0 %v5815
    %8225 = vmatpush.msra.mxu0 %v5783
    %8226 = vmatpush.msra.mxu0 %v5751
    %8227 = vmatpush.msra.mxu0 %v5719
    %8228 = vmatpush.msra.mxu0 %v5687
    %8229 = vmatmul.f32.gmra.mxu0 %v5155
    %v8230 = vpop.f32.mrf.mxu0
    %v8231 = vadd.f32 %v8211, %v8230
    %8232 = vdwg.mxu0
    %8233 = vmatpush.msra.mxu0 %v6679
    %8234 = vmatpush.msra.mxu0 %v6647
    %8235 = vmatpush.msra.mxu0 %v6615
    %8236 = vmatpush.msra.mxu0 %v6583
    %8237 = vmatpush.msra.mxu0 %v6551
    %8238 = vmatpush.msra.mxu0 %v6519
    %8239 = vmatpush.msra.mxu0 %v6487
    %8240 = vmatpush.msra.mxu0 %v6455
    %8241 = vmatpush.msra.mxu0 %v6423
    %8242 = vmatpush.msra.mxu0 %v6391
    %8243 = vmatpush.msra.mxu0 %v6359
    %8244 = vmatpush.msra.mxu0 %v6327
    %8245 = vmatpush.msra.mxu0 %v6295
    %8246 = vmatpush.msra.mxu0 %v6263
    %8247 = vmatpush.msra.mxu0 %v6231
    %8248 = vmatpush.msra.mxu0 %v6199
    %8249 = vmatmul.f32.gmra.mxu0 %v5156
    %v8250 = vpop.f32.mrf.mxu0
    %v8251 = vadd.f32 %v8231, %v8250
    %8252 = vdwg.mxu0
    %8253 = vmatpush.msra.mxu0 0.0
    %8254 = vmatpush.msra.mxu0 0.0
    %8255 = vmatpush.msra.mxu0 0.0
    %8256 = vmatpush.msra.mxu0 0.0
    %8257 = vmatpush.msra.mxu0 0.0
    %8258 = vmatpush.msra.mxu0 0.0
    %8259 = vmatpush.msra.mxu0 0.0
    %8260 = vmatpush.msra.mxu0 0.0
    %8261 = vmatpush.msra.mxu0 0.0
    %8262 = vmatpush.msra.mxu0 0.0
    %8263 = vmatpush.msra.mxu0 0.0
    %8264 = vmatpush.msra.mxu0 0.0
    %8265 = vmatpush.msra.mxu0 0.0
    %8266 = vmatpush.msra.mxu0 0.0
    %8267 = vmatpush.msra.mxu0 %v6743
    %8268 = vmatpush.msra.mxu0 %v6711
    %8269 = vmatmul.f32.gmra.mxu0 %v6831
    %v8270 = vpop.f32.mrf.mxu0
    %v8271 = vadd.f32 %v8251, %v8270
    %8272 = vdwg.mxu0
    %8273 = vmatpush.msra.mxu0 %v5656
    %8274 = vmatpush.msra.mxu0 %v5624
    %8275 = vmatpush.msra.mxu0 %v5592
    %8276 = vmatpush.msra.mxu0 %v5560
    %8277 = vmatpush.msra.mxu0 %v5528
    %8278 = vmatpush.msra.mxu0 %v5496
    %8279 = vmatpush.msra.mxu0 %v5464
    %8280 = vmatpush.msra.mxu0 %v5432
    %8281 = vmatpush.msra.mxu0 %v5400
    %8282 = vmatpush.msra.mxu0 %v5368
    %8283 = vmatpush.msra.mxu0 %v5336
    %8284 = vmatpush.msra.mxu0 %v5304
    %8285 = vmatpush.msra.mxu0 %v5272
    %8286 = vmatpush.msra.mxu0 %v5240
    %8287 = vmatpush.msra.mxu0 %v5208
    %8288 = vmatpush.msra.mxu0 %v5176
    %8289 = vmatmul.f32.gmra.mxu0 %v5154
    %v8290 = vpop.f32.mrf.mxu0
    %v8291 = vadd.f32 %v6784, %v8290
    %8292 = vdwg.mxu0
    %8293 = vmatpush.msra.mxu0 %v6168
    %8294 = vmatpush.msra.mxu0 %v6136
    %8295 = vmatpush.msra.mxu0 %v6104
    %8296 = vmatpush.msra.mxu0 %v6072
    %8297 = vmatpush.msra.mxu0 %v6040
    %8298 = vmatpush.msra.mxu0 %v6008
    %8299 = vmatpush.msra.mxu0 %v5976
    %8300 = vmatpush.msra.mxu0 %v5944
    %8301 = vmatpush.msra.mxu0 %v5912
    %8302 = vmatpush.msra.mxu0 %v5880
    %8303 = vmatpush.msra.mxu0 %v5848
    %8304 = vmatpush.msra.mxu0 %v5816
    %8305 = vmatpush.msra.mxu0 %v5784
    %8306 = vmatpush.msra.mxu0 %v5752
    %8307 = vmatpush.msra.mxu0 %v5720
    %8308 = vmatpush.msra.mxu0 %v5688
    %8309 = vmatmul.f32.gmra.mxu0 %v5155
    %v8310 = vpop.f32.mrf.mxu0
    %v8311 = vadd.f32 %v8291, %v8310
    %8312 = vdwg.mxu0
    %8313 = vmatpush.msra.mxu0 %v6680
    %8314 = vmatpush.msra.mxu0 %v6648
    %8315 = vmatpush.msra.mxu0 %v6616
    %8316 = vmatpush.msra.mxu0 %v6584
    %8317 = vmatpush.msra.mxu0 %v6552
    %8318 = vmatpush.msra.mxu0 %v6520
    %8319 = vmatpush.msra.mxu0 %v6488
    %8320 = vmatpush.msra.mxu0 %v6456
    %8321 = vmatpush.msra.mxu0 %v6424
    %8322 = vmatpush.msra.mxu0 %v6392
    %8323 = vmatpush.msra.mxu0 %v6360
    %8324 = vmatpush.msra.mxu0 %v6328
    %8325 = vmatpush.msra.mxu0 %v6296
    %8326 = vmatpush.msra.mxu0 %v6264
    %8327 = vmatpush.msra.mxu0 %v6232
    %8328 = vmatpush.msra.mxu0 %v6200
    %8329 = vmatmul.f32.gmra.mxu0 %v5156
    %v8330 = vpop.f32.mrf.mxu0
    %v8331 = vadd.f32 %v8311, %v8330
    %8332 = vdwg.mxu0
    %8333 = vmatpush.msra.mxu0 0.0
    %8334 = vmatpush.msra.mxu0 0.0
    %8335 = vmatpush.msra.mxu0 0.0
    %8336 = vmatpush.msra.mxu0 0.0
    %8337 = vmatpush.msra.mxu0 0.0
    %8338 = vmatpush.msra.mxu0 0.0
    %8339 = vmatpush.msra.mxu0 0.0
    %8340 = vmatpush.msra.mxu0 0.0
    %8341 = vmatpush.msra.mxu0 0.0
    %8342 = vmatpush.msra.mxu0 0.0
    %8343 = vmatpush.msra.mxu0 0.0
    %8344 = vmatpush.msra.mxu0 0.0
    %8345 = vmatpush.msra.mxu0 0.0
    %8346 = vmatpush.msra.mxu0 0.0
    %8347 = vmatpush.msra.mxu0 %v6744
    %8348 = vmatpush.msra.mxu0 %v6712
    %8349 = vmatmul.f32.gmra.mxu0 %v6831
    %v8350 = vpop.f32.mrf.mxu0
    %v8351 = vadd.f32 %v8331, %v8350
    %8352 = vdwg.mxu0
    %8353 = vmatpush.msra.mxu0 %v5657
    %8354 = vmatpush.msra.mxu0 %v5625
    %8355 = vmatpush.msra.mxu0 %v5593
    %8356 = vmatpush.msra.mxu0 %v5561
    %8357 = vmatpush.msra.mxu0 %v5529
    %8358 = vmatpush.msra.mxu0 %v5497
    %8359 = vmatpush.msra.mxu0 %v5465
    %8360 = vmatpush.msra.mxu0 %v5433
    %8361 = vmatpush.msra.mxu0 %v5401
    %8362 = vmatpush.msra.mxu0 %v5369
    %8363 = vmatpush.msra.mxu0 %v5337
    %8364 = vmatpush.msra.mxu0 %v5305
    %8365 = vmatpush.msra.mxu0 %v5273
    %8366 = vmatpush.msra.mxu0 %v5241
    %8367 = vmatpush.msra.mxu0 %v5209
    %8368 = vmatpush.msra.mxu0 %v5177
    %8369 = vmatmul.f32.gmra.mxu0 %v5154
    %v8370 = vpop.f32.mrf.mxu0
    %v8371 = vadd.f32 %v6785, %v8370
    %8372 = vdwg.mxu0
    %8373 = vmatpush.msra.mxu0 %v6169
    %8374 = vmatpush.msra.mxu0 %v6137
    %8375 = vmatpush.msra.mxu0 %v6105
    %8376 = vmatpush.msra.mxu0 %v6073
    %8377 = vmatpush.msra.mxu0 %v6041
    %8378 = vmatpush.msra.mxu0 %v6009
    %8379 = vmatpush.msra.mxu0 %v5977
    %8380 = vmatpush.msra.mxu0 %v5945
    %8381 = vmatpush.msra.mxu0 %v5913
    %8382 = vmatpush.msra.mxu0 %v5881
    %8383 = vmatpush.msra.mxu0 %v5849
    %8384 = vmatpush.msra.mxu0 %v5817
    %8385 = vmatpush.msra.mxu0 %v5785
    %8386 = vmatpush.msra.mxu0 %v5753
    %8387 = vmatpush.msra.mxu0 %v5721
    %8388 = vmatpush.msra.mxu0 %v5689
    %8389 = vmatmul.f32.gmra.mxu0 %v5155
    %v8390 = vpop.f32.mrf.mxu0
    %v8391 = vadd.f32 %v8371, %v8390
    %8392 = vdwg.mxu0
    %8393 = vmatpush.msra.mxu0 %v6681
    %8394 = vmatpush.msra.mxu0 %v6649
    %8395 = vmatpush.msra.mxu0 %v6617
    %8396 = vmatpush.msra.mxu0 %v6585
    %8397 = vmatpush.msra.mxu0 %v6553
    %8398 = vmatpush.msra.mxu0 %v6521
    %8399 = vmatpush.msra.mxu0 %v6489
    %8400 = vmatpush.msra.mxu0 %v6457
    %8401 = vmatpush.msra.mxu0 %v6425
    %8402 = vmatpush.msra.mxu0 %v6393
    %8403 = vmatpush.msra.mxu0 %v6361
    %8404 = vmatpush.msra.mxu0 %v6329
    %8405 = vmatpush.msra.mxu0 %v6297
    %8406 = vmatpush.msra.mxu0 %v6265
    %8407 = vmatpush.msra.mxu0 %v6233
    %8408 = vmatpush.msra.mxu0 %v6201
    %8409 = vmatmul.f32.gmra.mxu0 %v5156
    %v8410 = vpop.f32.mrf.mxu0
    %v8411 = vadd.f32 %v8391, %v8410
    %8412 = vdwg.mxu0
    %8413 = vmatpush.msra.mxu0 0.0
    %8414 = vmatpush.msra.mxu0 0.0
    %8415 = vmatpush.msra.mxu0 0.0
    %8416 = vmatpush.msra.mxu0 0.0
    %8417 = vmatpush.msra.mxu0 0.0
    %8418 = vmatpush.msra.mxu0 0.0
    %8419 = vmatpush.msra.mxu0 0.0
    %8420 = vmatpush.msra.mxu0 0.0
    %8421 = vmatpush.msra.mxu0 0.0
    %8422 = vmatpush.msra.mxu0 0.0
    %8423 = vmatpush.msra.mxu0 0.0
    %8424 = vmatpush.msra.mxu0 0.0
    %8425 = vmatpush.msra.mxu0 0.0
    %8426 = vmatpush.msra.mxu0 0.0
    %8427 = vmatpush.msra.mxu0 %v6745
    %8428 = vmatpush.msra.mxu0 %v6713
    %8429 = vmatmul.f32.gmra.mxu0 %v6831
    %v8430 = vpop.f32.mrf.mxu0
    %v8431 = vadd.f32 %v8411, %v8430
    %8432 = vdwg.mxu0
    %8433 = vmatpush.msra.mxu0 %v5658
    %8434 = vmatpush.msra.mxu0 %v5626
    %8435 = vmatpush.msra.mxu0 %v5594
    %8436 = vmatpush.msra.mxu0 %v5562
    %8437 = vmatpush.msra.mxu0 %v5530
    %8438 = vmatpush.msra.mxu0 %v5498
    %8439 = vmatpush.msra.mxu0 %v5466
    %8440 = vmatpush.msra.mxu0 %v5434
    %8441 = vmatpush.msra.mxu0 %v5402
    %8442 = vmatpush.msra.mxu0 %v5370
    %8443 = vmatpush.msra.mxu0 %v5338
    %8444 = vmatpush.msra.mxu0 %v5306
    %8445 = vmatpush.msra.mxu0 %v5274
    %8446 = vmatpush.msra.mxu0 %v5242
    %8447 = vmatpush.msra.mxu0 %v5210
    %8448 = vmatpush.msra.mxu0 %v5178
    %8449 = vmatmul.f32.gmra.mxu0 %v5154
    %v8450 = vpop.f32.mrf.mxu0
    %v8451 = vadd.f32 %v6786, %v8450
    %8452 = vdwg.mxu0
    %8453 = vmatpush.msra.mxu0 %v6170
    %8454 = vmatpush.msra.mxu0 %v6138
    %8455 = vmatpush.msra.mxu0 %v6106
    %8456 = vmatpush.msra.mxu0 %v6074
    %8457 = vmatpush.msra.mxu0 %v6042
    %8458 = vmatpush.msra.mxu0 %v6010
    %8459 = vmatpush.msra.mxu0 %v5978
    %8460 = vmatpush.msra.mxu0 %v5946
    %8461 = vmatpush.msra.mxu0 %v5914
    %8462 = vmatpush.msra.mxu0 %v5882
    %8463 = vmatpush.msra.mxu0 %v5850
    %8464 = vmatpush.msra.mxu0 %v5818
    %8465 = vmatpush.msra.mxu0 %v5786
    %8466 = vmatpush.msra.mxu0 %v5754
    %8467 = vmatpush.msra.mxu0 %v5722
    %8468 = vmatpush.msra.mxu0 %v5690
    %8469 = vmatmul.f32.gmra.mxu0 %v5155
    %v8470 = vpop.f32.mrf.mxu0
    %v8471 = vadd.f32 %v8451, %v8470
    %8472 = vdwg.mxu0
    %8473 = vmatpush.msra.mxu0 %v6682
    %8474 = vmatpush.msra.mxu0 %v6650
    %8475 = vmatpush.msra.mxu0 %v6618
    %8476 = vmatpush.msra.mxu0 %v6586
    %8477 = vmatpush.msra.mxu0 %v6554
    %8478 = vmatpush.msra.mxu0 %v6522
    %8479 = vmatpush.msra.mxu0 %v6490
    %8480 = vmatpush.msra.mxu0 %v6458
    %8481 = vmatpush.msra.mxu0 %v6426
    %8482 = vmatpush.msra.mxu0 %v6394
    %8483 = vmatpush.msra.mxu0 %v6362
    %8484 = vmatpush.msra.mxu0 %v6330
    %8485 = vmatpush.msra.mxu0 %v6298
    %8486 = vmatpush.msra.mxu0 %v6266
    %8487 = vmatpush.msra.mxu0 %v6234
    %8488 = vmatpush.msra.mxu0 %v6202
    %8489 = vmatmul.f32.gmra.mxu0 %v5156
    %v8490 = vpop.f32.mrf.mxu0
    %v8491 = vadd.f32 %v8471, %v8490
    %8492 = vdwg.mxu0
    %8493 = vmatpush.msra.mxu0 0.0
    %8494 = vmatpush.msra.mxu0 0.0
    %8495 = vmatpush.msra.mxu0 0.0
    %8496 = vmatpush.msra.mxu0 0.0
    %8497 = vmatpush.msra.mxu0 0.0
    %8498 = vmatpush.msra.mxu0 0.0
    %8499 = vmatpush.msra.mxu0 0.0
    %8500 = vmatpush.msra.mxu0 0.0
    %8501 = vmatpush.msra.mxu0 0.0
    %8502 = vmatpush.msra.mxu0 0.0
    %8503 = vmatpush.msra.mxu0 0.0
    %8504 = vmatpush.msra.mxu0 0.0
    %8505 = vmatpush.msra.mxu0 0.0
    %8506 = vmatpush.msra.mxu0 0.0
    %8507 = vmatpush.msra.mxu0 %v6746
    %8508 = vmatpush.msra.mxu0 %v6714
    %8509 = vmatmul.f32.gmra.mxu0 %v6831
    %v8510 = vpop.f32.mrf.mxu0
    %v8511 = vadd.f32 %v8491, %v8510
    %8512 = vdwg.mxu0
    %8513 = vmatpush.msra.mxu0 %v5659
    %8514 = vmatpush.msra.mxu0 %v5627
    %8515 = vmatpush.msra.mxu0 %v5595
    %8516 = vmatpush.msra.mxu0 %v5563
    %8517 = vmatpush.msra.mxu0 %v5531
    %8518 = vmatpush.msra.mxu0 %v5499
    %8519 = vmatpush.msra.mxu0 %v5467
    %8520 = vmatpush.msra.mxu0 %v5435
    %8521 = vmatpush.msra.mxu0 %v5403
    %8522 = vmatpush.msra.mxu0 %v5371
    %8523 = vmatpush.msra.mxu0 %v5339
    %8524 = vmatpush.msra.mxu0 %v5307
    %8525 = vmatpush.msra.mxu0 %v5275
    %8526 = vmatpush.msra.mxu0 %v5243
    %8527 = vmatpush.msra.mxu0 %v5211
    %8528 = vmatpush.msra.mxu0 %v5179
    %8529 = vmatmul.f32.gmra.mxu0 %v5154
    %v8530 = vpop.f32.mrf.mxu0
    %v8531 = vadd.f32 %v6787, %v8530
    %8532 = vdwg.mxu0
    %8533 = vmatpush.msra.mxu0 %v6171
    %8534 = vmatpush.msra.mxu0 %v6139
    %8535 = vmatpush.msra.mxu0 %v6107
    %8536 = vmatpush.msra.mxu0 %v6075
    %8537 = vmatpush.msra.mxu0 %v6043
    %8538 = vmatpush.msra.mxu0 %v6011
    %8539 = vmatpush.msra.mxu0 %v5979
    %8540 = vmatpush.msra.mxu0 %v5947
    %8541 = vmatpush.msra.mxu0 %v5915
    %8542 = vmatpush.msra.mxu0 %v5883
    %8543 = vmatpush.msra.mxu0 %v5851
    %8544 = vmatpush.msra.mxu0 %v5819
    %8545 = vmatpush.msra.mxu0 %v5787
    %8546 = vmatpush.msra.mxu0 %v5755
    %8547 = vmatpush.msra.mxu0 %v5723
    %8548 = vmatpush.msra.mxu0 %v5691
    %8549 = vmatmul.f32.gmra.mxu0 %v5155
    %v8550 = vpop.f32.mrf.mxu0
    %v8551 = vadd.f32 %v8531, %v8550
    %8552 = vdwg.mxu0
    %8553 = vmatpush.msra.mxu0 %v6683
    %8554 = vmatpush.msra.mxu0 %v6651
    %8555 = vmatpush.msra.mxu0 %v6619
    %8556 = vmatpush.msra.mxu0 %v6587
    %8557 = vmatpush.msra.mxu0 %v6555
    %8558 = vmatpush.msra.mxu0 %v6523
    %8559 = vmatpush.msra.mxu0 %v6491
    %8560 = vmatpush.msra.mxu0 %v6459
    %8561 = vmatpush.msra.mxu0 %v6427
    %8562 = vmatpush.msra.mxu0 %v6395
    %8563 = vmatpush.msra.mxu0 %v6363
    %8564 = vmatpush.msra.mxu0 %v6331
    %8565 = vmatpush.msra.mxu0 %v6299
    %8566 = vmatpush.msra.mxu0 %v6267
    %8567 = vmatpush.msra.mxu0 %v6235
    %8568 = vmatpush.msra.mxu0 %v6203
    %8569 = vmatmul.f32.gmra.mxu0 %v5156
    %v8570 = vpop.f32.mrf.mxu0
    %v8571 = vadd.f32 %v8551, %v8570
    %8572 = vdwg.mxu0
    %8573 = vmatpush.msra.mxu0 0.0
    %8574 = vmatpush.msra.mxu0 0.0
    %8575 = vmatpush.msra.mxu0 0.0
    %8576 = vmatpush.msra.mxu0 0.0
    %8577 = vmatpush.msra.mxu0 0.0
    %8578 = vmatpush.msra.mxu0 0.0
    %8579 = vmatpush.msra.mxu0 0.0
    %8580 = vmatpush.msra.mxu0 0.0
    %8581 = vmatpush.msra.mxu0 0.0
    %8582 = vmatpush.msra.mxu0 0.0
    %8583 = vmatpush.msra.mxu0 0.0
    %8584 = vmatpush.msra.mxu0 0.0
    %8585 = vmatpush.msra.mxu0 0.0
    %8586 = vmatpush.msra.mxu0 0.0
    %8587 = vmatpush.msra.mxu0 %v6747
    %8588 = vmatpush.msra.mxu0 %v6715
    %8589 = vmatmul.f32.gmra.mxu0 %v6831
    %v8590 = vpop.f32.mrf.mxu0
    %v8591 = vadd.f32 %v8571, %v8590
    %8592 = vdwg.mxu0
    %8593 = vmatpush.msra.mxu0 %v5660
    %8594 = vmatpush.msra.mxu0 %v5628
    %8595 = vmatpush.msra.mxu0 %v5596
    %8596 = vmatpush.msra.mxu0 %v5564
    %8597 = vmatpush.msra.mxu0 %v5532
    %8598 = vmatpush.msra.mxu0 %v5500
    %8599 = vmatpush.msra.mxu0 %v5468
    %8600 = vmatpush.msra.mxu0 %v5436
    %8601 = vmatpush.msra.mxu0 %v5404
    %8602 = vmatpush.msra.mxu0 %v5372
    %8603 = vmatpush.msra.mxu0 %v5340
    %8604 = vmatpush.msra.mxu0 %v5308
    %8605 = vmatpush.msra.mxu0 %v5276
    %8606 = vmatpush.msra.mxu0 %v5244
    %8607 = vmatpush.msra.mxu0 %v5212
    %8608 = vmatpush.msra.mxu0 %v5180
    %8609 = vmatmul.f32.gmra.mxu0 %v5154
    %v8610 = vpop.f32.mrf.mxu0
    %v8611 = vadd.f32 %v6788, %v8610
    %8612 = vdwg.mxu0
    %8613 = vmatpush.msra.mxu0 %v6172
    %8614 = vmatpush.msra.mxu0 %v6140
    %8615 = vmatpush.msra.mxu0 %v6108
    %8616 = vmatpush.msra.mxu0 %v6076
    %8617 = vmatpush.msra.mxu0 %v6044
    %8618 = vmatpush.msra.mxu0 %v6012
    %8619 = vmatpush.msra.mxu0 %v5980
    %8620 = vmatpush.msra.mxu0 %v5948
    %8621 = vmatpush.msra.mxu0 %v5916
    %8622 = vmatpush.msra.mxu0 %v5884
    %8623 = vmatpush.msra.mxu0 %v5852
    %8624 = vmatpush.msra.mxu0 %v5820
    %8625 = vmatpush.msra.mxu0 %v5788
    %8626 = vmatpush.msra.mxu0 %v5756
    %8627 = vmatpush.msra.mxu0 %v5724
    %8628 = vmatpush.msra.mxu0 %v5692
    %8629 = vmatmul.f32.gmra.mxu0 %v5155
    %v8630 = vpop.f32.mrf.mxu0
    %v8631 = vadd.f32 %v8611, %v8630
    %8632 = vdwg.mxu0
    %8633 = vmatpush.msra.mxu0 %v6684
    %8634 = vmatpush.msra.mxu0 %v6652
    %8635 = vmatpush.msra.mxu0 %v6620
    %8636 = vmatpush.msra.mxu0 %v6588
    %8637 = vmatpush.msra.mxu0 %v6556
    %8638 = vmatpush.msra.mxu0 %v6524
    %8639 = vmatpush.msra.mxu0 %v6492
    %8640 = vmatpush.msra.mxu0 %v6460
    %8641 = vmatpush.msra.mxu0 %v6428
    %8642 = vmatpush.msra.mxu0 %v6396
    %8643 = vmatpush.msra.mxu0 %v6364
    %8644 = vmatpush.msra.mxu0 %v6332
    %8645 = vmatpush.msra.mxu0 %v6300
    %8646 = vmatpush.msra.mxu0 %v6268
    %8647 = vmatpush.msra.mxu0 %v6236
    %8648 = vmatpush.msra.mxu0 %v6204
    %8649 = vmatmul.f32.gmra.mxu0 %v5156
    %v8650 = vpop.f32.mrf.mxu0
    %v8651 = vadd.f32 %v8631, %v8650
    %8652 = vdwg.mxu0
    %8653 = vmatpush.msra.mxu0 0.0
    %8654 = vmatpush.msra.mxu0 0.0
    %8655 = vmatpush.msra.mxu0 0.0
    %8656 = vmatpush.msra.mxu0 0.0
    %8657 = vmatpush.msra.mxu0 0.0
    %8658 = vmatpush.msra.mxu0 0.0
    %8659 = vmatpush.msra.mxu0 0.0
    %8660 = vmatpush.msra.mxu0 0.0
    %8661 = vmatpush.msra.mxu0 0.0
    %8662 = vmatpush.msra.mxu0 0.0
    %8663 = vmatpush.msra.mxu0 0.0
    %8664 = vmatpush.msra.mxu0 0.0
    %8665 = vmatpush.msra.mxu0 0.0
    %8666 = vmatpush.msra.mxu0 0.0
    %8667 = vmatpush.msra.mxu0 %v6748
    %8668 = vmatpush.msra.mxu0 %v6716
    %8669 = vmatmul.f32.gmra.mxu0 %v6831
    %v8670 = vpop.f32.mrf.mxu0
    %v8671 = vadd.f32 %v8651, %v8670
    %8672 = vdwg.mxu0
    %8673 = vmatpush.msra.mxu0 %v5661
    %8674 = vmatpush.msra.mxu0 %v5629
    %8675 = vmatpush.msra.mxu0 %v5597
    %8676 = vmatpush.msra.mxu0 %v5565
    %8677 = vmatpush.msra.mxu0 %v5533
    %8678 = vmatpush.msra.mxu0 %v5501
    %8679 = vmatpush.msra.mxu0 %v5469
    %8680 = vmatpush.msra.mxu0 %v5437
    %8681 = vmatpush.msra.mxu0 %v5405
    %8682 = vmatpush.msra.mxu0 %v5373
    %8683 = vmatpush.msra.mxu0 %v5341
    %8684 = vmatpush.msra.mxu0 %v5309
    %8685 = vmatpush.msra.mxu0 %v5277
    %8686 = vmatpush.msra.mxu0 %v5245
    %8687 = vmatpush.msra.mxu0 %v5213
    %8688 = vmatpush.msra.mxu0 %v5181
    %8689 = vmatmul.f32.gmra.mxu0 %v5154
    %v8690 = vpop.f32.mrf.mxu0
    %v8691 = vadd.f32 %v6789, %v8690
    %8692 = vdwg.mxu0
    %8693 = vmatpush.msra.mxu0 %v6173
    %8694 = vmatpush.msra.mxu0 %v6141
    %8695 = vmatpush.msra.mxu0 %v6109
    %8696 = vmatpush.msra.mxu0 %v6077
    %8697 = vmatpush.msra.mxu0 %v6045
    %8698 = vmatpush.msra.mxu0 %v6013
    %8699 = vmatpush.msra.mxu0 %v5981
    %8700 = vmatpush.msra.mxu0 %v5949
    %8701 = vmatpush.msra.mxu0 %v5917
    %8702 = vmatpush.msra.mxu0 %v5885
    %8703 = vmatpush.msra.mxu0 %v5853
    %8704 = vmatpush.msra.mxu0 %v5821
    %8705 = vmatpush.msra.mxu0 %v5789
    %8706 = vmatpush.msra.mxu0 %v5757
    %8707 = vmatpush.msra.mxu0 %v5725
    %8708 = vmatpush.msra.mxu0 %v5693
    %8709 = vmatmul.f32.gmra.mxu0 %v5155
    %v8710 = vpop.f32.mrf.mxu0
    %v8711 = vadd.f32 %v8691, %v8710
    %8712 = vdwg.mxu0
    %8713 = vmatpush.msra.mxu0 %v6685
    %8714 = vmatpush.msra.mxu0 %v6653
    %8715 = vmatpush.msra.mxu0 %v6621
    %8716 = vmatpush.msra.mxu0 %v6589
    %8717 = vmatpush.msra.mxu0 %v6557
    %8718 = vmatpush.msra.mxu0 %v6525
    %8719 = vmatpush.msra.mxu0 %v6493
    %8720 = vmatpush.msra.mxu0 %v6461
    %8721 = vmatpush.msra.mxu0 %v6429
    %8722 = vmatpush.msra.mxu0 %v6397
    %8723 = vmatpush.msra.mxu0 %v6365
    %8724 = vmatpush.msra.mxu0 %v6333
    %8725 = vmatpush.msra.mxu0 %v6301
    %8726 = vmatpush.msra.mxu0 %v6269
    %8727 = vmatpush.msra.mxu0 %v6237
    %8728 = vmatpush.msra.mxu0 %v6205
    %8729 = vmatmul.f32.gmra.mxu0 %v5156
    %v8730 = vpop.f32.mrf.mxu0
    %v8731 = vadd.f32 %v8711, %v8730
    %8732 = vdwg.mxu0
    %8733 = vmatpush.msra.mxu0 0.0
    %8734 = vmatpush.msra.mxu0 0.0
    %8735 = vmatpush.msra.mxu0 0.0
    %8736 = vmatpush.msra.mxu0 0.0
    %8737 = vmatpush.msra.mxu0 0.0
    %8738 = vmatpush.msra.mxu0 0.0
    %8739 = vmatpush.msra.mxu0 0.0
    %8740 = vmatpush.msra.mxu0 0.0
    %8741 = vmatpush.msra.mxu0 0.0
    %8742 = vmatpush.msra.mxu0 0.0
    %8743 = vmatpush.msra.mxu0 0.0
    %8744 = vmatpush.msra.mxu0 0.0
    %8745 = vmatpush.msra.mxu0 0.0
    %8746 = vmatpush.msra.mxu0 0.0
    %8747 = vmatpush.msra.mxu0 %v6749
    %8748 = vmatpush.msra.mxu0 %v6717
    %8749 = vmatmul.f32.gmra.mxu0 %v6831
    %v8750 = vpop.f32.mrf.mxu0
    %v8751 = vadd.f32 %v8731, %v8750
    %8752 = vdwg.mxu0
    %8753 = vmatpush.msra.mxu0 %v5662
    %8754 = vmatpush.msra.mxu0 %v5630
    %8755 = vmatpush.msra.mxu0 %v5598
    %8756 = vmatpush.msra.mxu0 %v5566
    %8757 = vmatpush.msra.mxu0 %v5534
    %8758 = vmatpush.msra.mxu0 %v5502
    %8759 = vmatpush.msra.mxu0 %v5470
    %8760 = vmatpush.msra.mxu0 %v5438
    %8761 = vmatpush.msra.mxu0 %v5406
    %8762 = vmatpush.msra.mxu0 %v5374
    %8763 = vmatpush.msra.mxu0 %v5342
    %8764 = vmatpush.msra.mxu0 %v5310
    %8765 = vmatpush.msra.mxu0 %v5278
    %8766 = vmatpush.msra.mxu0 %v5246
    %8767 = vmatpush.msra.mxu0 %v5214
    %8768 = vmatpush.msra.mxu0 %v5182
    %8769 = vmatmul.f32.gmra.mxu0 %v5154
    %v8770 = vpop.f32.mrf.mxu0
    %v8771 = vadd.f32 %v6790, %v8770
    %8772 = vdwg.mxu0
    %8773 = vmatpush.msra.mxu0 %v6174
    %8774 = vmatpush.msra.mxu0 %v6142
    %8775 = vmatpush.msra.mxu0 %v6110
    %8776 = vmatpush.msra.mxu0 %v6078
    %8777 = vmatpush.msra.mxu0 %v6046
    %8778 = vmatpush.msra.mxu0 %v6014
    %8779 = vmatpush.msra.mxu0 %v5982
    %8780 = vmatpush.msra.mxu0 %v5950
    %8781 = vmatpush.msra.mxu0 %v5918
    %8782 = vmatpush.msra.mxu0 %v5886
    %8783 = vmatpush.msra.mxu0 %v5854
    %8784 = vmatpush.msra.mxu0 %v5822
    %8785 = vmatpush.msra.mxu0 %v5790
    %8786 = vmatpush.msra.mxu0 %v5758
    %8787 = vmatpush.msra.mxu0 %v5726
    %8788 = vmatpush.msra.mxu0 %v5694
    %8789 = vmatmul.f32.gmra.mxu0 %v5155
    %v8790 = vpop.f32.mrf.mxu0
    %v8791 = vadd.f32 %v8771, %v8790
    %8792 = vdwg.mxu0
    %8793 = vmatpush.msra.mxu0 %v6686
    %8794 = vmatpush.msra.mxu0 %v6654
    %8795 = vmatpush.msra.mxu0 %v6622
    %8796 = vmatpush.msra.mxu0 %v6590
    %8797 = vmatpush.msra.mxu0 %v6558
    %8798 = vmatpush.msra.mxu0 %v6526
    %8799 = vmatpush.msra.mxu0 %v6494
    %8800 = vmatpush.msra.mxu0 %v6462
    %8801 = vmatpush.msra.mxu0 %v6430
    %8802 = vmatpush.msra.mxu0 %v6398
    %8803 = vmatpush.msra.mxu0 %v6366
    %8804 = vmatpush.msra.mxu0 %v6334
    %8805 = vmatpush.msra.mxu0 %v6302
    %8806 = vmatpush.msra.mxu0 %v6270
    %8807 = vmatpush.msra.mxu0 %v6238
    %8808 = vmatpush.msra.mxu0 %v6206
    %8809 = vmatmul.f32.gmra.mxu0 %v5156
    %v8810 = vpop.f32.mrf.mxu0
    %v8811 = vadd.f32 %v8791, %v8810
    %8812 = vdwg.mxu0
    %8813 = vmatpush.msra.mxu0 0.0
    %8814 = vmatpush.msra.mxu0 0.0
    %8815 = vmatpush.msra.mxu0 0.0
    %8816 = vmatpush.msra.mxu0 0.0
    %8817 = vmatpush.msra.mxu0 0.0
    %8818 = vmatpush.msra.mxu0 0.0
    %8819 = vmatpush.msra.mxu0 0.0
    %8820 = vmatpush.msra.mxu0 0.0
    %8821 = vmatpush.msra.mxu0 0.0
    %8822 = vmatpush.msra.mxu0 0.0
    %8823 = vmatpush.msra.mxu0 0.0
    %8824 = vmatpush.msra.mxu0 0.0
    %8825 = vmatpush.msra.mxu0 0.0
    %8826 = vmatpush.msra.mxu0 0.0
    %8827 = vmatpush.msra.mxu0 %v6750
    %8828 = vmatpush.msra.mxu0 %v6718
    %8829 = vmatmul.f32.gmra.mxu0 %v6831
    %v8830 = vpop.f32.mrf.mxu0
    %v8831 = vadd.f32 %v8811, %v8830
    %8832 = vdwg.mxu0
    %8833 = vmatpush.msra.mxu0 %v5663
    %8834 = vmatpush.msra.mxu0 %v5631
    %8835 = vmatpush.msra.mxu0 %v5599
    %8836 = vmatpush.msra.mxu0 %v5567
    %8837 = vmatpush.msra.mxu0 %v5535
    %8838 = vmatpush.msra.mxu0 %v5503
    %8839 = vmatpush.msra.mxu0 %v5471
    %8840 = vmatpush.msra.mxu0 %v5439
    %8841 = vmatpush.msra.mxu0 %v5407
    %8842 = vmatpush.msra.mxu0 %v5375
    %8843 = vmatpush.msra.mxu0 %v5343
    %8844 = vmatpush.msra.mxu0 %v5311
    %8845 = vmatpush.msra.mxu0 %v5279
    %8846 = vmatpush.msra.mxu0 %v5247
    %8847 = vmatpush.msra.mxu0 %v5215
    %8848 = vmatpush.msra.mxu0 %v5183
    %8849 = vmatmul.f32.gmra.mxu0 %v5154
    %v8850 = vpop.f32.mrf.mxu0
    %v8851 = vadd.f32 %v6791, %v8850
    %8852 = vdwg.mxu0
    %8853 = vmatpush.msra.mxu0 %v6175
    %8854 = vmatpush.msra.mxu0 %v6143
    %8855 = vmatpush.msra.mxu0 %v6111
    %8856 = vmatpush.msra.mxu0 %v6079
    %8857 = vmatpush.msra.mxu0 %v6047
    %8858 = vmatpush.msra.mxu0 %v6015
    %8859 = vmatpush.msra.mxu0 %v5983
    %8860 = vmatpush.msra.mxu0 %v5951
    %8861 = vmatpush.msra.mxu0 %v5919
    %8862 = vmatpush.msra.mxu0 %v5887
    %8863 = vmatpush.msra.mxu0 %v5855
    %8864 = vmatpush.msra.mxu0 %v5823
    %8865 = vmatpush.msra.mxu0 %v5791
    %8866 = vmatpush.msra.mxu0 %v5759
    %8867 = vmatpush.msra.mxu0 %v5727
    %8868 = vmatpush.msra.mxu0 %v5695
    %8869 = vmatmul.f32.gmra.mxu0 %v5155
    %v8870 = vpop.f32.mrf.mxu0
    %v8871 = vadd.f32 %v8851, %v8870
    %8872 = vdwg.mxu0
    %8873 = vmatpush.msra.mxu0 %v6687
    %8874 = vmatpush.msra.mxu0 %v6655
    %8875 = vmatpush.msra.mxu0 %v6623
    %8876 = vmatpush.msra.mxu0 %v6591
    %8877 = vmatpush.msra.mxu0 %v6559
    %8878 = vmatpush.msra.mxu0 %v6527
    %8879 = vmatpush.msra.mxu0 %v6495
    %8880 = vmatpush.msra.mxu0 %v6463
    %8881 = vmatpush.msra.mxu0 %v6431
    %8882 = vmatpush.msra.mxu0 %v6399
    %8883 = vmatpush.msra.mxu0 %v6367
    %8884 = vmatpush.msra.mxu0 %v6335
    %8885 = vmatpush.msra.mxu0 %v6303
    %8886 = vmatpush.msra.mxu0 %v6271
    %8887 = vmatpush.msra.mxu0 %v6239
    %8888 = vmatpush.msra.mxu0 %v6207
    %8889 = vmatmul.f32.gmra.mxu0 %v5156
    %v8890 = vpop.f32.mrf.mxu0
    %v8891 = vadd.f32 %v8871, %v8890
    %8892 = vdwg.mxu0
    %8893 = vmatpush.msra.mxu0 0.0
    %8894 = vmatpush.msra.mxu0 0.0
    %8895 = vmatpush.msra.mxu0 0.0
    %8896 = vmatpush.msra.mxu0 0.0
    %8897 = vmatpush.msra.mxu0 0.0
    %8898 = vmatpush.msra.mxu0 0.0
    %8899 = vmatpush.msra.mxu0 0.0
    %8900 = vmatpush.msra.mxu0 0.0
    %8901 = vmatpush.msra.mxu0 0.0
    %8902 = vmatpush.msra.mxu0 0.0
    %8903 = vmatpush.msra.mxu0 0.0
    %8904 = vmatpush.msra.mxu0 0.0
    %8905 = vmatpush.msra.mxu0 0.0
    %8906 = vmatpush.msra.mxu0 0.0
    %8907 = vmatpush.msra.mxu0 %v6751
    %8908 = vmatpush.msra.mxu0 %v6719
    %8909 = vmatmul.f32.gmra.mxu0 %v6831
    %v8910 = vpop.f32.mrf.mxu0
    %v8911 = vadd.f32 %v8891, %v8910
    %8912 = vdwg.mxu0
    %8913 = vmatpush.msra.mxu0 %v5664
    %8914 = vmatpush.msra.mxu0 %v5632
    %8915 = vmatpush.msra.mxu0 %v5600
    %8916 = vmatpush.msra.mxu0 %v5568
    %8917 = vmatpush.msra.mxu0 %v5536
    %8918 = vmatpush.msra.mxu0 %v5504
    %8919 = vmatpush.msra.mxu0 %v5472
    %8920 = vmatpush.msra.mxu0 %v5440
    %8921 = vmatpush.msra.mxu0 %v5408
    %8922 = vmatpush.msra.mxu0 %v5376
    %8923 = vmatpush.msra.mxu0 %v5344
    %8924 = vmatpush.msra.mxu0 %v5312
    %8925 = vmatpush.msra.mxu0 %v5280
    %8926 = vmatpush.msra.mxu0 %v5248
    %8927 = vmatpush.msra.mxu0 %v5216
    %8928 = vmatpush.msra.mxu0 %v5184
    %8929 = vmatmul.f32.gmra.mxu0 %v5154
    %v8930 = vpop.f32.mrf.mxu0
    %v8931 = vadd.f32 %v6792, %v8930
    %8932 = vdwg.mxu0
    %8933 = vmatpush.msra.mxu0 %v6176
    %8934 = vmatpush.msra.mxu0 %v6144
    %8935 = vmatpush.msra.mxu0 %v6112
    %8936 = vmatpush.msra.mxu0 %v6080
    %8937 = vmatpush.msra.mxu0 %v6048
    %8938 = vmatpush.msra.mxu0 %v6016
    %8939 = vmatpush.msra.mxu0 %v5984
    %8940 = vmatpush.msra.mxu0 %v5952
    %8941 = vmatpush.msra.mxu0 %v5920
    %8942 = vmatpush.msra.mxu0 %v5888
    %8943 = vmatpush.msra.mxu0 %v5856
    %8944 = vmatpush.msra.mxu0 %v5824
    %8945 = vmatpush.msra.mxu0 %v5792
    %8946 = vmatpush.msra.mxu0 %v5760
    %8947 = vmatpush.msra.mxu0 %v5728
    %8948 = vmatpush.msra.mxu0 %v5696
    %8949 = vmatmul.f32.gmra.mxu0 %v5155
    %v8950 = vpop.f32.mrf.mxu0
    %v8951 = vadd.f32 %v8931, %v8950
    %8952 = vdwg.mxu0
    %8953 = vmatpush.msra.mxu0 %v6688
    %8954 = vmatpush.msra.mxu0 %v6656
    %8955 = vmatpush.msra.mxu0 %v6624
    %8956 = vmatpush.msra.mxu0 %v6592
    %8957 = vmatpush.msra.mxu0 %v6560
    %8958 = vmatpush.msra.mxu0 %v6528
    %8959 = vmatpush.msra.mxu0 %v6496
    %8960 = vmatpush.msra.mxu0 %v6464
    %8961 = vmatpush.msra.mxu0 %v6432
    %8962 = vmatpush.msra.mxu0 %v6400
    %8963 = vmatpush.msra.mxu0 %v6368
    %8964 = vmatpush.msra.mxu0 %v6336
    %8965 = vmatpush.msra.mxu0 %v6304
    %8966 = vmatpush.msra.mxu0 %v6272
    %8967 = vmatpush.msra.mxu0 %v6240
    %8968 = vmatpush.msra.mxu0 %v6208
    %8969 = vmatmul.f32.gmra.mxu0 %v5156
    %v8970 = vpop.f32.mrf.mxu0
    %v8971 = vadd.f32 %v8951, %v8970
    %8972 = vdwg.mxu0
    %8973 = vmatpush.msra.mxu0 0.0
    %8974 = vmatpush.msra.mxu0 0.0
    %8975 = vmatpush.msra.mxu0 0.0
    %8976 = vmatpush.msra.mxu0 0.0
    %8977 = vmatpush.msra.mxu0 0.0
    %8978 = vmatpush.msra.mxu0 0.0
    %8979 = vmatpush.msra.mxu0 0.0
    %8980 = vmatpush.msra.mxu0 0.0
    %8981 = vmatpush.msra.mxu0 0.0
    %8982 = vmatpush.msra.mxu0 0.0
    %8983 = vmatpush.msra.mxu0 0.0
    %8984 = vmatpush.msra.mxu0 0.0
    %8985 = vmatpush.msra.mxu0 0.0
    %8986 = vmatpush.msra.mxu0 0.0
    %8987 = vmatpush.msra.mxu0 %v6752
    %8988 = vmatpush.msra.mxu0 %v6720
    %8989 = vmatmul.f32.gmra.mxu0 %v6831
    %v8990 = vpop.f32.mrf.mxu0
    %v8991 = vadd.f32 %v8971, %v8990
    %8992 = vdwg.mxu0
    %8993 = vmatpush.msra.mxu0 %v5665
    %8994 = vmatpush.msra.mxu0 %v5633
    %8995 = vmatpush.msra.mxu0 %v5601
    %8996 = vmatpush.msra.mxu0 %v5569
    %8997 = vmatpush.msra.mxu0 %v5537
    %8998 = vmatpush.msra.mxu0 %v5505
    %8999 = vmatpush.msra.mxu0 %v5473
    %9000 = vmatpush.msra.mxu0 %v5441
    %9001 = vmatpush.msra.mxu0 %v5409
    %9002 = vmatpush.msra.mxu0 %v5377
    %9003 = vmatpush.msra.mxu0 %v5345
    %9004 = vmatpush.msra.mxu0 %v5313
    %9005 = vmatpush.msra.mxu0 %v5281
    %9006 = vmatpush.msra.mxu0 %v5249
    %9007 = vmatpush.msra.mxu0 %v5217
    %9008 = vmatpush.msra.mxu0 %v5185
    %9009 = vmatmul.f32.gmra.mxu0 %v5154
    %v9010 = vpop.f32.mrf.mxu0
    %v9011 = vadd.f32 %v6793, %v9010
    %9012 = vdwg.mxu0
    %9013 = vmatpush.msra.mxu0 %v6177
    %9014 = vmatpush.msra.mxu0 %v6145
    %9015 = vmatpush.msra.mxu0 %v6113
    %9016 = vmatpush.msra.mxu0 %v6081
    %9017 = vmatpush.msra.mxu0 %v6049
    %9018 = vmatpush.msra.mxu0 %v6017
    %9019 = vmatpush.msra.mxu0 %v5985
    %9020 = vmatpush.msra.mxu0 %v5953
    %9021 = vmatpush.msra.mxu0 %v5921
    %9022 = vmatpush.msra.mxu0 %v5889
    %9023 = vmatpush.msra.mxu0 %v5857
    %9024 = vmatpush.msra.mxu0 %v5825
    %9025 = vmatpush.msra.mxu0 %v5793
    %9026 = vmatpush.msra.mxu0 %v5761
    %9027 = vmatpush.msra.mxu0 %v5729
    %9028 = vmatpush.msra.mxu0 %v5697
    %9029 = vmatmul.f32.gmra.mxu0 %v5155
    %v9030 = vpop.f32.mrf.mxu0
    %v9031 = vadd.f32 %v9011, %v9030
    %9032 = vdwg.mxu0
    %9033 = vmatpush.msra.mxu0 %v6689
    %9034 = vmatpush.msra.mxu0 %v6657
    %9035 = vmatpush.msra.mxu0 %v6625
    %9036 = vmatpush.msra.mxu0 %v6593
    %9037 = vmatpush.msra.mxu0 %v6561
    %9038 = vmatpush.msra.mxu0 %v6529
    %9039 = vmatpush.msra.mxu0 %v6497
    %9040 = vmatpush.msra.mxu0 %v6465
    %9041 = vmatpush.msra.mxu0 %v6433
    %9042 = vmatpush.msra.mxu0 %v6401
    %9043 = vmatpush.msra.mxu0 %v6369
    %9044 = vmatpush.msra.mxu0 %v6337
    %9045 = vmatpush.msra.mxu0 %v6305
    %9046 = vmatpush.msra.mxu0 %v6273
    %9047 = vmatpush.msra.mxu0 %v6241
    %9048 = vmatpush.msra.mxu0 %v6209
    %9049 = vmatmul.f32.gmra.mxu0 %v5156
    %v9050 = vpop.f32.mrf.mxu0
    %v9051 = vadd.f32 %v9031, %v9050
    %9052 = vdwg.mxu0
    %9053 = vmatpush.msra.mxu0 0.0
    %9054 = vmatpush.msra.mxu0 0.0
    %9055 = vmatpush.msra.mxu0 0.0
    %9056 = vmatpush.msra.mxu0 0.0
    %9057 = vmatpush.msra.mxu0 0.0
    %9058 = vmatpush.msra.mxu0 0.0
    %9059 = vmatpush.msra.mxu0 0.0
    %9060 = vmatpush.msra.mxu0 0.0
    %9061 = vmatpush.msra.mxu0 0.0
    %9062 = vmatpush.msra.mxu0 0.0
    %9063 = vmatpush.msra.mxu0 0.0
    %9064 = vmatpush.msra.mxu0 0.0
    %9065 = vmatpush.msra.mxu0 0.0
    %9066 = vmatpush.msra.mxu0 0.0
    %9067 = vmatpush.msra.mxu0 %v6753
    %9068 = vmatpush.msra.mxu0 %v6721
    %9069 = vmatmul.f32.gmra.mxu0 %v6831
    %v9070 = vpop.f32.mrf.mxu0
    %v9071 = vadd.f32 %v9051, %v9070
    %9072 = vdwg.mxu0
    %9073 = vmatpush.msra.mxu0 %v5666
    %9074 = vmatpush.msra.mxu0 %v5634
    %9075 = vmatpush.msra.mxu0 %v5602
    %9076 = vmatpush.msra.mxu0 %v5570
    %9077 = vmatpush.msra.mxu0 %v5538
    %9078 = vmatpush.msra.mxu0 %v5506
    %9079 = vmatpush.msra.mxu0 %v5474
    %9080 = vmatpush.msra.mxu0 %v5442
    %9081 = vmatpush.msra.mxu0 %v5410
    %9082 = vmatpush.msra.mxu0 %v5378
    %9083 = vmatpush.msra.mxu0 %v5346
    %9084 = vmatpush.msra.mxu0 %v5314
    %9085 = vmatpush.msra.mxu0 %v5282
    %9086 = vmatpush.msra.mxu0 %v5250
    %9087 = vmatpush.msra.mxu0 %v5218
    %9088 = vmatpush.msra.mxu0 %v5186
    %9089 = vmatmul.f32.gmra.mxu0 %v5154
    %v9090 = vpop.f32.mrf.mxu0
    %v9091 = vadd.f32 %v6794, %v9090
    %9092 = vdwg.mxu0
    %9093 = vmatpush.msra.mxu0 %v6178
    %9094 = vmatpush.msra.mxu0 %v6146
    %9095 = vmatpush.msra.mxu0 %v6114
    %9096 = vmatpush.msra.mxu0 %v6082
    %9097 = vmatpush.msra.mxu0 %v6050
    %9098 = vmatpush.msra.mxu0 %v6018
    %9099 = vmatpush.msra.mxu0 %v5986
    %9100 = vmatpush.msra.mxu0 %v5954
    %9101 = vmatpush.msra.mxu0 %v5922
    %9102 = vmatpush.msra.mxu0 %v5890
    %9103 = vmatpush.msra.mxu0 %v5858
    %9104 = vmatpush.msra.mxu0 %v5826
    %9105 = vmatpush.msra.mxu0 %v5794
    %9106 = vmatpush.msra.mxu0 %v5762
    %9107 = vmatpush.msra.mxu0 %v5730
    %9108 = vmatpush.msra.mxu0 %v5698
    %9109 = vmatmul.f32.gmra.mxu0 %v5155
    %v9110 = vpop.f32.mrf.mxu0
    %v9111 = vadd.f32 %v9091, %v9110
    %9112 = vdwg.mxu0
    %9113 = vmatpush.msra.mxu0 %v6690
    %9114 = vmatpush.msra.mxu0 %v6658
    %9115 = vmatpush.msra.mxu0 %v6626
    %9116 = vmatpush.msra.mxu0 %v6594
    %9117 = vmatpush.msra.mxu0 %v6562
    %9118 = vmatpush.msra.mxu0 %v6530
    %9119 = vmatpush.msra.mxu0 %v6498
    %9120 = vmatpush.msra.mxu0 %v6466
    %9121 = vmatpush.msra.mxu0 %v6434
    %9122 = vmatpush.msra.mxu0 %v6402
    %9123 = vmatpush.msra.mxu0 %v6370
    %9124 = vmatpush.msra.mxu0 %v6338
    %9125 = vmatpush.msra.mxu0 %v6306
    %9126 = vmatpush.msra.mxu0 %v6274
    %9127 = vmatpush.msra.mxu0 %v6242
    %9128 = vmatpush.msra.mxu0 %v6210
    %9129 = vmatmul.f32.gmra.mxu0 %v5156
    %v9130 = vpop.f32.mrf.mxu0
    %v9131 = vadd.f32 %v9111, %v9130
    %9132 = vdwg.mxu0
    %9133 = vmatpush.msra.mxu0 0.0
    %9134 = vmatpush.msra.mxu0 0.0
    %9135 = vmatpush.msra.mxu0 0.0
    %9136 = vmatpush.msra.mxu0 0.0
    %9137 = vmatpush.msra.mxu0 0.0
    %9138 = vmatpush.msra.mxu0 0.0
    %9139 = vmatpush.msra.mxu0 0.0
    %9140 = vmatpush.msra.mxu0 0.0
    %9141 = vmatpush.msra.mxu0 0.0
    %9142 = vmatpush.msra.mxu0 0.0
    %9143 = vmatpush.msra.mxu0 0.0
    %9144 = vmatpush.msra.mxu0 0.0
    %9145 = vmatpush.msra.mxu0 0.0
    %9146 = vmatpush.msra.mxu0 0.0
    %9147 = vmatpush.msra.mxu0 %v6754
    %9148 = vmatpush.msra.mxu0 %v6722
    %9149 = vmatmul.f32.gmra.mxu0 %v6831
    %v9150 = vpop.f32.mrf.mxu0
    %v9151 = vadd.f32 %v9131, %v9150
    %9152 = vdwg.mxu0
    %9153 = vmatpush.msra.mxu0 %v5667
    %9154 = vmatpush.msra.mxu0 %v5635
    %9155 = vmatpush.msra.mxu0 %v5603
    %9156 = vmatpush.msra.mxu0 %v5571
    %9157 = vmatpush.msra.mxu0 %v5539
    %9158 = vmatpush.msra.mxu0 %v5507
    %9159 = vmatpush.msra.mxu0 %v5475
    %9160 = vmatpush.msra.mxu0 %v5443
    %9161 = vmatpush.msra.mxu0 %v5411
    %9162 = vmatpush.msra.mxu0 %v5379
    %9163 = vmatpush.msra.mxu0 %v5347
    %9164 = vmatpush.msra.mxu0 %v5315
    %9165 = vmatpush.msra.mxu0 %v5283
    %9166 = vmatpush.msra.mxu0 %v5251
    %9167 = vmatpush.msra.mxu0 %v5219
    %9168 = vmatpush.msra.mxu0 %v5187
    %9169 = vmatmul.f32.gmra.mxu0 %v5154
    %v9170 = vpop.f32.mrf.mxu0
    %v9171 = vadd.f32 %v6795, %v9170
    %9172 = vdwg.mxu0
    %9173 = vmatpush.msra.mxu0 %v6179
    %9174 = vmatpush.msra.mxu0 %v6147
    %9175 = vmatpush.msra.mxu0 %v6115
    %9176 = vmatpush.msra.mxu0 %v6083
    %9177 = vmatpush.msra.mxu0 %v6051
    %9178 = vmatpush.msra.mxu0 %v6019
    %9179 = vmatpush.msra.mxu0 %v5987
    %9180 = vmatpush.msra.mxu0 %v5955
    %9181 = vmatpush.msra.mxu0 %v5923
    %9182 = vmatpush.msra.mxu0 %v5891
    %9183 = vmatpush.msra.mxu0 %v5859
    %9184 = vmatpush.msra.mxu0 %v5827
    %9185 = vmatpush.msra.mxu0 %v5795
    %9186 = vmatpush.msra.mxu0 %v5763
    %9187 = vmatpush.msra.mxu0 %v5731
    %9188 = vmatpush.msra.mxu0 %v5699
    %9189 = vmatmul.f32.gmra.mxu0 %v5155
    %v9190 = vpop.f32.mrf.mxu0
    %v9191 = vadd.f32 %v9171, %v9190
    %9192 = vdwg.mxu0
    %9193 = vmatpush.msra.mxu0 %v6691
    %9194 = vmatpush.msra.mxu0 %v6659
    %9195 = vmatpush.msra.mxu0 %v6627
    %9196 = vmatpush.msra.mxu0 %v6595
    %9197 = vmatpush.msra.mxu0 %v6563
    %9198 = vmatpush.msra.mxu0 %v6531
    %9199 = vmatpush.msra.mxu0 %v6499
    %9200 = vmatpush.msra.mxu0 %v6467
    %9201 = vmatpush.msra.mxu0 %v6435
    %9202 = vmatpush.msra.mxu0 %v6403
    %9203 = vmatpush.msra.mxu0 %v6371
    %9204 = vmatpush.msra.mxu0 %v6339
    %9205 = vmatpush.msra.mxu0 %v6307
    %9206 = vmatpush.msra.mxu0 %v6275
    %9207 = vmatpush.msra.mxu0 %v6243
    %9208 = vmatpush.msra.mxu0 %v6211
    %9209 = vmatmul.f32.gmra.mxu0 %v5156
    %v9210 = vpop.f32.mrf.mxu0
    %v9211 = vadd.f32 %v9191, %v9210
    %9212 = vdwg.mxu0
    %9213 = vmatpush.msra.mxu0 0.0
    %9214 = vmatpush.msra.mxu0 0.0
    %9215 = vmatpush.msra.mxu0 0.0
    %9216 = vmatpush.msra.mxu0 0.0
    %9217 = vmatpush.msra.mxu0 0.0
    %9218 = vmatpush.msra.mxu0 0.0
    %9219 = vmatpush.msra.mxu0 0.0
    %9220 = vmatpush.msra.mxu0 0.0
    %9221 = vmatpush.msra.mxu0 0.0
    %9222 = vmatpush.msra.mxu0 0.0
    %9223 = vmatpush.msra.mxu0 0.0
    %9224 = vmatpush.msra.mxu0 0.0
    %9225 = vmatpush.msra.mxu0 0.0
    %9226 = vmatpush.msra.mxu0 0.0
    %9227 = vmatpush.msra.mxu0 %v6755
    %9228 = vmatpush.msra.mxu0 %v6723
    %9229 = vmatmul.f32.gmra.mxu0 %v6831
    %v9230 = vpop.f32.mrf.mxu0
    %v9231 = vadd.f32 %v9211, %v9230
    %9232 = vdwg.mxu0
    %9233 = vmatpush.msra.mxu0 %v5668
    %9234 = vmatpush.msra.mxu0 %v5636
    %9235 = vmatpush.msra.mxu0 %v5604
    %9236 = vmatpush.msra.mxu0 %v5572
    %9237 = vmatpush.msra.mxu0 %v5540
    %9238 = vmatpush.msra.mxu0 %v5508
    %9239 = vmatpush.msra.mxu0 %v5476
    %9240 = vmatpush.msra.mxu0 %v5444
    %9241 = vmatpush.msra.mxu0 %v5412
    %9242 = vmatpush.msra.mxu0 %v5380
    %9243 = vmatpush.msra.mxu0 %v5348
    %9244 = vmatpush.msra.mxu0 %v5316
    %9245 = vmatpush.msra.mxu0 %v5284
    %9246 = vmatpush.msra.mxu0 %v5252
    %9247 = vmatpush.msra.mxu0 %v5220
    %9248 = vmatpush.msra.mxu0 %v5188
    %9249 = vmatmul.f32.gmra.mxu0 %v5154
    %v9250 = vpop.f32.mrf.mxu0
    %v9251 = vadd.f32 %v6796, %v9250
    %9252 = vdwg.mxu0
    %9253 = vmatpush.msra.mxu0 %v6180
    %9254 = vmatpush.msra.mxu0 %v6148
    %9255 = vmatpush.msra.mxu0 %v6116
    %9256 = vmatpush.msra.mxu0 %v6084
    %9257 = vmatpush.msra.mxu0 %v6052
    %9258 = vmatpush.msra.mxu0 %v6020
    %9259 = vmatpush.msra.mxu0 %v5988
    %9260 = vmatpush.msra.mxu0 %v5956
    %9261 = vmatpush.msra.mxu0 %v5924
    %9262 = vmatpush.msra.mxu0 %v5892
    %9263 = vmatpush.msra.mxu0 %v5860
    %9264 = vmatpush.msra.mxu0 %v5828
    %9265 = vmatpush.msra.mxu0 %v5796
    %9266 = vmatpush.msra.mxu0 %v5764
    %9267 = vmatpush.msra.mxu0 %v5732
    %9268 = vmatpush.msra.mxu0 %v5700
    %9269 = vmatmul.f32.gmra.mxu0 %v5155
    %v9270 = vpop.f32.mrf.mxu0
    %v9271 = vadd.f32 %v9251, %v9270
    %9272 = vdwg.mxu0
    %9273 = vmatpush.msra.mxu0 %v6692
    %9274 = vmatpush.msra.mxu0 %v6660
    %9275 = vmatpush.msra.mxu0 %v6628
    %9276 = vmatpush.msra.mxu0 %v6596
    %9277 = vmatpush.msra.mxu0 %v6564
    %9278 = vmatpush.msra.mxu0 %v6532
    %9279 = vmatpush.msra.mxu0 %v6500
    %9280 = vmatpush.msra.mxu0 %v6468
    %9281 = vmatpush.msra.mxu0 %v6436
    %9282 = vmatpush.msra.mxu0 %v6404
    %9283 = vmatpush.msra.mxu0 %v6372
    %9284 = vmatpush.msra.mxu0 %v6340
    %9285 = vmatpush.msra.mxu0 %v6308
    %9286 = vmatpush.msra.mxu0 %v6276
    %9287 = vmatpush.msra.mxu0 %v6244
    %9288 = vmatpush.msra.mxu0 %v6212
    %9289 = vmatmul.f32.gmra.mxu0 %v5156
    %v9290 = vpop.f32.mrf.mxu0
    %v9291 = vadd.f32 %v9271, %v9290
    %9292 = vdwg.mxu0
    %9293 = vmatpush.msra.mxu0 0.0
    %9294 = vmatpush.msra.mxu0 0.0
    %9295 = vmatpush.msra.mxu0 0.0
    %9296 = vmatpush.msra.mxu0 0.0
    %9297 = vmatpush.msra.mxu0 0.0
    %9298 = vmatpush.msra.mxu0 0.0
    %9299 = vmatpush.msra.mxu0 0.0
    %9300 = vmatpush.msra.mxu0 0.0
    %9301 = vmatpush.msra.mxu0 0.0
    %9302 = vmatpush.msra.mxu0 0.0
    %9303 = vmatpush.msra.mxu0 0.0
    %9304 = vmatpush.msra.mxu0 0.0
    %9305 = vmatpush.msra.mxu0 0.0
    %9306 = vmatpush.msra.mxu0 0.0
    %9307 = vmatpush.msra.mxu0 %v6756
    %9308 = vmatpush.msra.mxu0 %v6724
    %9309 = vmatmul.f32.gmra.mxu0 %v6831
    %v9310 = vpop.f32.mrf.mxu0
    %v9311 = vadd.f32 %v9291, %v9310
    %9312 = vdwg.mxu0
    %9313 = vmatpush.msra.mxu0 %v5669
    %9314 = vmatpush.msra.mxu0 %v5637
    %9315 = vmatpush.msra.mxu0 %v5605
    %9316 = vmatpush.msra.mxu0 %v5573
    %9317 = vmatpush.msra.mxu0 %v5541
    %9318 = vmatpush.msra.mxu0 %v5509
    %9319 = vmatpush.msra.mxu0 %v5477
    %9320 = vmatpush.msra.mxu0 %v5445
    %9321 = vmatpush.msra.mxu0 %v5413
    %9322 = vmatpush.msra.mxu0 %v5381
    %9323 = vmatpush.msra.mxu0 %v5349
    %9324 = vmatpush.msra.mxu0 %v5317
    %9325 = vmatpush.msra.mxu0 %v5285
    %9326 = vmatpush.msra.mxu0 %v5253
    %9327 = vmatpush.msra.mxu0 %v5221
    %9328 = vmatpush.msra.mxu0 %v5189
    %9329 = vmatmul.f32.gmra.mxu0 %v5154
    %v9330 = vpop.f32.mrf.mxu0
    %v9331 = vadd.f32 %v6797, %v9330
    %9332 = vdwg.mxu0
    %9333 = vmatpush.msra.mxu0 %v6181
    %9334 = vmatpush.msra.mxu0 %v6149
    %9335 = vmatpush.msra.mxu0 %v6117
    %9336 = vmatpush.msra.mxu0 %v6085
    %9337 = vmatpush.msra.mxu0 %v6053
    %9338 = vmatpush.msra.mxu0 %v6021
    %9339 = vmatpush.msra.mxu0 %v5989
    %9340 = vmatpush.msra.mxu0 %v5957
    %9341 = vmatpush.msra.mxu0 %v5925
    %9342 = vmatpush.msra.mxu0 %v5893
    %9343 = vmatpush.msra.mxu0 %v5861
    %9344 = vmatpush.msra.mxu0 %v5829
    %9345 = vmatpush.msra.mxu0 %v5797
    %9346 = vmatpush.msra.mxu0 %v5765
    %9347 = vmatpush.msra.mxu0 %v5733
    %9348 = vmatpush.msra.mxu0 %v5701
    %9349 = vmatmul.f32.gmra.mxu0 %v5155
    %v9350 = vpop.f32.mrf.mxu0
    %v9351 = vadd.f32 %v9331, %v9350
    %9352 = vdwg.mxu0
    %9353 = vmatpush.msra.mxu0 %v6693
    %9354 = vmatpush.msra.mxu0 %v6661
    %9355 = vmatpush.msra.mxu0 %v6629
    %9356 = vmatpush.msra.mxu0 %v6597
    %9357 = vmatpush.msra.mxu0 %v6565
    %9358 = vmatpush.msra.mxu0 %v6533
    %9359 = vmatpush.msra.mxu0 %v6501
    %9360 = vmatpush.msra.mxu0 %v6469
    %9361 = vmatpush.msra.mxu0 %v6437
    %9362 = vmatpush.msra.mxu0 %v6405
    %9363 = vmatpush.msra.mxu0 %v6373
    %9364 = vmatpush.msra.mxu0 %v6341
    %9365 = vmatpush.msra.mxu0 %v6309
    %9366 = vmatpush.msra.mxu0 %v6277
    %9367 = vmatpush.msra.mxu0 %v6245
    %9368 = vmatpush.msra.mxu0 %v6213
    %9369 = vmatmul.f32.gmra.mxu0 %v5156
    %v9370 = vpop.f32.mrf.mxu0
    %v9371 = vadd.f32 %v9351, %v9370
    %9372 = vdwg.mxu0
    %9373 = vmatpush.msra.mxu0 0.0
    %9374 = vmatpush.msra.mxu0 0.0
    %9375 = vmatpush.msra.mxu0 0.0
    %9376 = vmatpush.msra.mxu0 0.0
    %9377 = vmatpush.msra.mxu0 0.0
    %9378 = vmatpush.msra.mxu0 0.0
    %9379 = vmatpush.msra.mxu0 0.0
    %9380 = vmatpush.msra.mxu0 0.0
    %9381 = vmatpush.msra.mxu0 0.0
    %9382 = vmatpush.msra.mxu0 0.0
    %9383 = vmatpush.msra.mxu0 0.0
    %9384 = vmatpush.msra.mxu0 0.0
    %9385 = vmatpush.msra.mxu0 0.0
    %9386 = vmatpush.msra.mxu0 0.0
    %9387 = vmatpush.msra.mxu0 %v6757
    %9388 = vmatpush.msra.mxu0 %v6725
    %9389 = vmatmul.f32.gmra.mxu0 %v6831
    %v9390 = vpop.f32.mrf.mxu0
    %v9391 = vadd.f32 %v9371, %v9390
    %9392 = vdwg.mxu0
    %v9393 = vxor.u32 %v6911, 2147483648
    %v9394 = vxor.u32 %v6991, 2147483648
    %v9395 = vxor.u32 %v7071, 2147483648
    %v9396 = vxor.u32 %v7151, 2147483648
    %v9397 = vxor.u32 %v7231, 2147483648
    %v9398 = vxor.u32 %v7311, 2147483648
    %v9399 = vxor.u32 %v7391, 2147483648
    %v9400 = vxor.u32 %v7471, 2147483648
    %v9401 = vxor.u32 %v7551, 2147483648
    %v9402 = vxor.u32 %v7631, 2147483648
    %v9403 = vxor.u32 %v7711, 2147483648
    %v9404 = vxor.u32 %v7791, 2147483648
    %v9405 = vxor.u32 %v7871, 2147483648
    %v9406 = vxor.u32 %v7951, 2147483648
    %v9407 = vxor.u32 %v8031, 2147483648
    %v9408 = vxor.u32 %v8111, 2147483648
    %v9409 = vxor.u32 %v8191, 2147483648
    %v9410 = vxor.u32 %v8271, 2147483648
    %v9411 = vxor.u32 %v8351, 2147483648
    %v9412 = vxor.u32 %v8431, 2147483648
    %v9413 = vxor.u32 %v8511, 2147483648
    %v9414 = vxor.u32 %v8591, 2147483648
    %v9415 = vxor.u32 %v8671, 2147483648
    %v9416 = vxor.u32 %v8751, 2147483648
    %v9417 = vxor.u32 %v8831, 2147483648
    %v9418 = vxor.u32 %v8911, 2147483648
    %v9419 = vxor.u32 %v8991, 2147483648
    %v9420 = vxor.u32 %v9071, 2147483648
    %v9421 = vxor.u32 %v9151, 2147483648
    %v9422 = vxor.u32 %v9231, 2147483648
    %v9423 = vxor.u32 %v9311, 2147483648
    %v9424 = vxor.u32 %v9391, 2147483648
    %v9425 = vmul.f32 %v9393, 1.442695
    %v9426 = vpow.pop %v9425
    %v9427 = vmul.f32 %v9394, 1.442695
    %v9428 = vpow.pop %v9427
    %v9429 = vmul.f32 %v9395, 1.442695
    %v9430 = vpow.pop %v9429
    %v9431 = vmul.f32 %v9396, 1.442695
    %v9432 = vpow.pop %v9431
    %v9433 = vmul.f32 %v9397, 1.442695
    %v9434 = vpow.pop %v9433
    %v9435 = vmul.f32 %v9398, 1.442695
    %v9436 = vpow.pop %v9435
    %v9437 = vmul.f32 %v9399, 1.442695
    %v9438 = vpow.pop %v9437
    %v9439 = vmul.f32 %v9400, 1.442695
    %v9440 = vpow.pop %v9439
    %v9441 = vmul.f32 %v9401, 1.442695
    %v9442 = vpow.pop %v9441
    %v9443 = vmul.f32 %v9402, 1.442695
    %v9444 = vpow.pop %v9443
    %v9445 = vmul.f32 %v9403, 1.442695
    %v9446 = vpow.pop %v9445
    %v9447 = vmul.f32 %v9404, 1.442695
    %v9448 = vpow.pop %v9447
    %v9449 = vmul.f32 %v9405, 1.442695
    %v9450 = vpow.pop %v9449
    %v9451 = vmul.f32 %v9406, 1.442695
    %v9452 = vpow.pop %v9451
    %v9453 = vmul.f32 %v9407, 1.442695
    %v9454 = vpow.pop %v9453
    %v9455 = vmul.f32 %v9408, 1.442695
    %v9456 = vpow.pop %v9455
    %v9457 = vmul.f32 %v9409, 1.442695
    %v9458 = vpow.pop %v9457
    %v9459 = vmul.f32 %v9410, 1.442695
    %v9460 = vpow.pop %v9459
    %v9461 = vmul.f32 %v9411, 1.442695
    %v9462 = vpow.pop %v9461
    %v9463 = vmul.f32 %v9412, 1.442695
    %v9464 = vpow.pop %v9463
    %v9465 = vmul.f32 %v9413, 1.442695
    %v9466 = vpow.pop %v9465
    %v9467 = vmul.f32 %v9414, 1.442695
    %v9468 = vpow.pop %v9467
    %v9469 = vmul.f32 %v9415, 1.442695
    %v9470 = vpow.pop %v9469
    %v9471 = vmul.f32 %v9416, 1.442695
    %v9472 = vpow.pop %v9471
    %v9473 = vmul.f32 %v9417, 1.442695
    %v9474 = vpow.pop %v9473
    %v9475 = vmul.f32 %v9418, 1.442695
    %v9476 = vpow.pop %v9475
    %v9477 = vmul.f32 %v9419, 1.442695
    %v9478 = vpow.pop %v9477
    %v9479 = vmul.f32 %v9420, 1.442695
    %v9480 = vpow.pop %v9479
    %v9481 = vmul.f32 %v9421, 1.442695
    %v9482 = vpow.pop %v9481
    %v9483 = vmul.f32 %v9422, 1.442695
    %v9484 = vpow.pop %v9483
    %v9485 = vmul.f32 %v9423, 1.442695
    %v9486 = vpow.pop %v9485
    %v9487 = vmul.f32 %v9424, 1.442695
    %v9488 = vpow.pop %v9487
    %v9489 = vadd.f32 %v9426, 1.0
    %v9490 = vadd.f32 %v9428, 1.0
    %v9491 = vadd.f32 %v9430, 1.0
    %v9492 = vadd.f32 %v9432, 1.0
    %v9493 = vadd.f32 %v9434, 1.0
    %v9494 = vadd.f32 %v9436, 1.0
    %v9495 = vadd.f32 %v9438, 1.0
    %v9496 = vadd.f32 %v9440, 1.0
    %v9497 = vadd.f32 %v9442, 1.0
    %v9498 = vadd.f32 %v9444, 1.0
    %v9499 = vadd.f32 %v9446, 1.0
    %v9500 = vadd.f32 %v9448, 1.0
    %v9501 = vadd.f32 %v9450, 1.0
    %v9502 = vadd.f32 %v9452, 1.0
    %v9503 = vadd.f32 %v9454, 1.0
    %v9504 = vadd.f32 %v9456, 1.0
    %v9505 = vadd.f32 %v9458, 1.0
    %v9506 = vadd.f32 %v9460, 1.0
    %v9507 = vadd.f32 %v9462, 1.0
    %v9508 = vadd.f32 %v9464, 1.0
    %v9509 = vadd.f32 %v9466, 1.0
    %v9510 = vadd.f32 %v9468, 1.0
    %v9511 = vadd.f32 %v9470, 1.0
    %v9512 = vadd.f32 %v9472, 1.0
    %v9513 = vadd.f32 %v9474, 1.0
    %v9514 = vadd.f32 %v9476, 1.0
    %v9515 = vadd.f32 %v9478, 1.0
    %v9516 = vadd.f32 %v9480, 1.0
    %v9517 = vadd.f32 %v9482, 1.0
    %v9518 = vadd.f32 %v9484, 1.0
    %v9519 = vadd.f32 %v9486, 1.0
    %v9520 = vadd.f32 %v9488, 1.0
    %v9521 = vrcp.pop %v9489
    %v9522 = vmul.f32 %v9489, %v9521
    %v9523 = vsub.f32 1.0, %v9522
    %v9524 = vmul.f32 %v9521, %v9523
    %v9525 = vadd.f32 %v9521, %v9524
    %vm9526 = vweird.f32 %v9489
    %vm9527 = vweird.f32 %v9521
    %vm9528 = vmor %vm9526, %vm9527
    %v9529 = vsel %vm9528, %v9521, %v9525
    %v9530 = vand.u32 2147483647, %v9489
    %vm9531 = vcmp.eq.f32.partialorder %v9530, 8.507059e+37
    %v9532 = vand.u32 %v9489, 2147483648
    %v9533 = vor.u32 1.1754944e-38, %v9532
    %v9534 = vsel %vm9531, %v9533, %v9529
    %v9535 = vmul.f32 1.0, %v9534
    %v9536 = vrcp.pop %v9490
    %v9537 = vmul.f32 %v9490, %v9536
    %v9538 = vsub.f32 1.0, %v9537
    %v9539 = vmul.f32 %v9536, %v9538
    %v9540 = vadd.f32 %v9536, %v9539
    %vm9541 = vweird.f32 %v9490
    %vm9542 = vweird.f32 %v9536
    %vm9543 = vmor %vm9541, %vm9542
    %v9544 = vsel %vm9543, %v9536, %v9540
    %v9545 = vand.u32 2147483647, %v9490
    %vm9546 = vcmp.eq.f32.partialorder %v9545, 8.507059e+37
    %v9547 = vand.u32 %v9490, 2147483648
    %v9548 = vor.u32 1.1754944e-38, %v9547
    %v9549 = vsel %vm9546, %v9548, %v9544
    %v9550 = vmul.f32 1.0, %v9549
    %v9551 = vrcp.pop %v9491
    %v9552 = vmul.f32 %v9491, %v9551
    %v9553 = vsub.f32 1.0, %v9552
    %v9554 = vmul.f32 %v9551, %v9553
    %v9555 = vadd.f32 %v9551, %v9554
    %vm9556 = vweird.f32 %v9491
    %vm9557 = vweird.f32 %v9551
    %vm9558 = vmor %vm9556, %vm9557
    %v9559 = vsel %vm9558, %v9551, %v9555
    %v9560 = vand.u32 2147483647, %v9491
    %vm9561 = vcmp.eq.f32.partialorder %v9560, 8.507059e+37
    %v9562 = vand.u32 %v9491, 2147483648
    %v9563 = vor.u32 1.1754944e-38, %v9562
    %v9564 = vsel %vm9561, %v9563, %v9559
    %v9565 = vmul.f32 1.0, %v9564
    %v9566 = vrcp.pop %v9492
    %v9567 = vmul.f32 %v9492, %v9566
    %v9568 = vsub.f32 1.0, %v9567
    %v9569 = vmul.f32 %v9566, %v9568
    %v9570 = vadd.f32 %v9566, %v9569
    %vm9571 = vweird.f32 %v9492
    %vm9572 = vweird.f32 %v9566
    %vm9573 = vmor %vm9571, %vm9572
    %v9574 = vsel %vm9573, %v9566, %v9570
    %v9575 = vand.u32 2147483647, %v9492
    %vm9576 = vcmp.eq.f32.partialorder %v9575, 8.507059e+37
    %v9577 = vand.u32 %v9492, 2147483648
    %v9578 = vor.u32 1.1754944e-38, %v9577
    %v9579 = vsel %vm9576, %v9578, %v9574
    %v9580 = vmul.f32 1.0, %v9579
    %v9581 = vrcp.pop %v9493
    %v9582 = vmul.f32 %v9493, %v9581
    %v9583 = vsub.f32 1.0, %v9582
    %v9584 = vmul.f32 %v9581, %v9583
    %v9585 = vadd.f32 %v9581, %v9584
    %vm9586 = vweird.f32 %v9493
    %vm9587 = vweird.f32 %v9581
    %vm9588 = vmor %vm9586, %vm9587
    %v9589 = vsel %vm9588, %v9581, %v9585
    %v9590 = vand.u32 2147483647, %v9493
    %vm9591 = vcmp.eq.f32.partialorder %v9590, 8.507059e+37
    %v9592 = vand.u32 %v9493, 2147483648
    %v9593 = vor.u32 1.1754944e-38, %v9592
    %v9594 = vsel %vm9591, %v9593, %v9589
    %v9595 = vmul.f32 1.0, %v9594
    %v9596 = vrcp.pop %v9494
    %v9597 = vmul.f32 %v9494, %v9596
    %v9598 = vsub.f32 1.0, %v9597
    %v9599 = vmul.f32 %v9596, %v9598
    %v9600 = vadd.f32 %v9596, %v9599
    %vm9601 = vweird.f32 %v9494
    %vm9602 = vweird.f32 %v9596
    %vm9603 = vmor %vm9601, %vm9602
    %v9604 = vsel %vm9603, %v9596, %v9600
    %v9605 = vand.u32 2147483647, %v9494
    %vm9606 = vcmp.eq.f32.partialorder %v9605, 8.507059e+37
    %v9607 = vand.u32 %v9494, 2147483648
    %v9608 = vor.u32 1.1754944e-38, %v9607
    %v9609 = vsel %vm9606, %v9608, %v9604
    %v9610 = vmul.f32 1.0, %v9609
    %v9611 = vrcp.pop %v9495
    %v9612 = vmul.f32 %v9495, %v9611
    %v9613 = vsub.f32 1.0, %v9612
    %v9614 = vmul.f32 %v9611, %v9613
    %v9615 = vadd.f32 %v9611, %v9614
    %vm9616 = vweird.f32 %v9495
    %vm9617 = vweird.f32 %v9611
    %vm9618 = vmor %vm9616, %vm9617
    %v9619 = vsel %vm9618, %v9611, %v9615
    %v9620 = vand.u32 2147483647, %v9495
    %vm9621 = vcmp.eq.f32.partialorder %v9620, 8.507059e+37
    %v9622 = vand.u32 %v9495, 2147483648
    %v9623 = vor.u32 1.1754944e-38, %v9622
    %v9624 = vsel %vm9621, %v9623, %v9619
    %v9625 = vmul.f32 1.0, %v9624
    %v9626 = vrcp.pop %v9496
    %v9627 = vmul.f32 %v9496, %v9626
    %v9628 = vsub.f32 1.0, %v9627
    %v9629 = vmul.f32 %v9626, %v9628
    %v9630 = vadd.f32 %v9626, %v9629
    %vm9631 = vweird.f32 %v9496
    %vm9632 = vweird.f32 %v9626
    %vm9633 = vmor %vm9631, %vm9632
    %v9634 = vsel %vm9633, %v9626, %v9630
    %v9635 = vand.u32 2147483647, %v9496
    %vm9636 = vcmp.eq.f32.partialorder %v9635, 8.507059e+37
    %v9637 = vand.u32 %v9496, 2147483648
    %v9638 = vor.u32 1.1754944e-38, %v9637
    %v9639 = vsel %vm9636, %v9638, %v9634
    %v9640 = vmul.f32 1.0, %v9639
    %v9641 = vrcp.pop %v9497
    %v9642 = vmul.f32 %v9497, %v9641
    %v9643 = vsub.f32 1.0, %v9642
    %v9644 = vmul.f32 %v9641, %v9643
    %v9645 = vadd.f32 %v9641, %v9644
    %vm9646 = vweird.f32 %v9497
    %vm9647 = vweird.f32 %v9641
    %vm9648 = vmor %vm9646, %vm9647
    %v9649 = vsel %vm9648, %v9641, %v9645
    %v9650 = vand.u32 2147483647, %v9497
    %vm9651 = vcmp.eq.f32.partialorder %v9650, 8.507059e+37
    %v9652 = vand.u32 %v9497, 2147483648
    %v9653 = vor.u32 1.1754944e-38, %v9652
    %v9654 = vsel %vm9651, %v9653, %v9649
    %v9655 = vmul.f32 1.0, %v9654
    %v9656 = vrcp.pop %v9498
    %v9657 = vmul.f32 %v9498, %v9656
    %v9658 = vsub.f32 1.0, %v9657
    %v9659 = vmul.f32 %v9656, %v9658
    %v9660 = vadd.f32 %v9656, %v9659
    %vm9661 = vweird.f32 %v9498
    %vm9662 = vweird.f32 %v9656
    %vm9663 = vmor %vm9661, %vm9662
    %v9664 = vsel %vm9663, %v9656, %v9660
    %v9665 = vand.u32 2147483647, %v9498
    %vm9666 = vcmp.eq.f32.partialorder %v9665, 8.507059e+37
    %v9667 = vand.u32 %v9498, 2147483648
    %v9668 = vor.u32 1.1754944e-38, %v9667
    %v9669 = vsel %vm9666, %v9668, %v9664
    %v9670 = vmul.f32 1.0, %v9669
    %v9671 = vrcp.pop %v9499
    %v9672 = vmul.f32 %v9499, %v9671
    %v9673 = vsub.f32 1.0, %v9672
    %v9674 = vmul.f32 %v9671, %v9673
    %v9675 = vadd.f32 %v9671, %v9674
    %vm9676 = vweird.f32 %v9499
    %vm9677 = vweird.f32 %v9671
    %vm9678 = vmor %vm9676, %vm9677
    %v9679 = vsel %vm9678, %v9671, %v9675
    %v9680 = vand.u32 2147483647, %v9499
    %vm9681 = vcmp.eq.f32.partialorder %v9680, 8.507059e+37
    %v9682 = vand.u32 %v9499, 2147483648
    %v9683 = vor.u32 1.1754944e-38, %v9682
    %v9684 = vsel %vm9681, %v9683, %v9679
    %v9685 = vmul.f32 1.0, %v9684
    %v9686 = vrcp.pop %v9500
    %v9687 = vmul.f32 %v9500, %v9686
    %v9688 = vsub.f32 1.0, %v9687
    %v9689 = vmul.f32 %v9686, %v9688
    %v9690 = vadd.f32 %v9686, %v9689
    %vm9691 = vweird.f32 %v9500
    %vm9692 = vweird.f32 %v9686
    %vm9693 = vmor %vm9691, %vm9692
    %v9694 = vsel %vm9693, %v9686, %v9690
    %v9695 = vand.u32 2147483647, %v9500
    %vm9696 = vcmp.eq.f32.partialorder %v9695, 8.507059e+37
    %v9697 = vand.u32 %v9500, 2147483648
    %v9698 = vor.u32 1.1754944e-38, %v9697
    %v9699 = vsel %vm9696, %v9698, %v9694
    %v9700 = vmul.f32 1.0, %v9699
    %v9701 = vrcp.pop %v9501
    %v9702 = vmul.f32 %v9501, %v9701
    %v9703 = vsub.f32 1.0, %v9702
    %v9704 = vmul.f32 %v9701, %v9703
    %v9705 = vadd.f32 %v9701, %v9704
    %vm9706 = vweird.f32 %v9501
    %vm9707 = vweird.f32 %v9701
    %vm9708 = vmor %vm9706, %vm9707
    %v9709 = vsel %vm9708, %v9701, %v9705
    %v9710 = vand.u32 2147483647, %v9501
    %vm9711 = vcmp.eq.f32.partialorder %v9710, 8.507059e+37
    %v9712 = vand.u32 %v9501, 2147483648
    %v9713 = vor.u32 1.1754944e-38, %v9712
    %v9714 = vsel %vm9711, %v9713, %v9709
    %v9715 = vmul.f32 1.0, %v9714
    %v9716 = vrcp.pop %v9502
    %v9717 = vmul.f32 %v9502, %v9716
    %v9718 = vsub.f32 1.0, %v9717
    %v9719 = vmul.f32 %v9716, %v9718
    %v9720 = vadd.f32 %v9716, %v9719
    %vm9721 = vweird.f32 %v9502
    %vm9722 = vweird.f32 %v9716
    %vm9723 = vmor %vm9721, %vm9722
    %v9724 = vsel %vm9723, %v9716, %v9720
    %v9725 = vand.u32 2147483647, %v9502
    %vm9726 = vcmp.eq.f32.partialorder %v9725, 8.507059e+37
    %v9727 = vand.u32 %v9502, 2147483648
    %v9728 = vor.u32 1.1754944e-38, %v9727
    %v9729 = vsel %vm9726, %v9728, %v9724
    %v9730 = vmul.f32 1.0, %v9729
    %v9731 = vrcp.pop %v9503
    %v9732 = vmul.f32 %v9503, %v9731
    %v9733 = vsub.f32 1.0, %v9732
    %v9734 = vmul.f32 %v9731, %v9733
    %v9735 = vadd.f32 %v9731, %v9734
    %vm9736 = vweird.f32 %v9503
    %vm9737 = vweird.f32 %v9731
    %vm9738 = vmor %vm9736, %vm9737
    %v9739 = vsel %vm9738, %v9731, %v9735
    %v9740 = vand.u32 2147483647, %v9503
    %vm9741 = vcmp.eq.f32.partialorder %v9740, 8.507059e+37
    %v9742 = vand.u32 %v9503, 2147483648
    %v9743 = vor.u32 1.1754944e-38, %v9742
    %v9744 = vsel %vm9741, %v9743, %v9739
    %v9745 = vmul.f32 1.0, %v9744
    %v9746 = vrcp.pop %v9504
    %v9747 = vmul.f32 %v9504, %v9746
    %v9748 = vsub.f32 1.0, %v9747
    %v9749 = vmul.f32 %v9746, %v9748
    %v9750 = vadd.f32 %v9746, %v9749
    %vm9751 = vweird.f32 %v9504
    %vm9752 = vweird.f32 %v9746
    %vm9753 = vmor %vm9751, %vm9752
    %v9754 = vsel %vm9753, %v9746, %v9750
    %v9755 = vand.u32 2147483647, %v9504
    %vm9756 = vcmp.eq.f32.partialorder %v9755, 8.507059e+37
    %v9757 = vand.u32 %v9504, 2147483648
    %v9758 = vor.u32 1.1754944e-38, %v9757
    %v9759 = vsel %vm9756, %v9758, %v9754
    %v9760 = vmul.f32 1.0, %v9759
    %v9761 = vrcp.pop %v9505
    %v9762 = vmul.f32 %v9505, %v9761
    %v9763 = vsub.f32 1.0, %v9762
    %v9764 = vmul.f32 %v9761, %v9763
    %v9765 = vadd.f32 %v9761, %v9764
    %vm9766 = vweird.f32 %v9505
    %vm9767 = vweird.f32 %v9761
    %vm9768 = vmor %vm9766, %vm9767
    %v9769 = vsel %vm9768, %v9761, %v9765
    %v9770 = vand.u32 2147483647, %v9505
    %vm9771 = vcmp.eq.f32.partialorder %v9770, 8.507059e+37
    %v9772 = vand.u32 %v9505, 2147483648
    %v9773 = vor.u32 1.1754944e-38, %v9772
    %v9774 = vsel %vm9771, %v9773, %v9769
    %v9775 = vmul.f32 1.0, %v9774
    %v9776 = vrcp.pop %v9506
    %v9777 = vmul.f32 %v9506, %v9776
    %v9778 = vsub.f32 1.0, %v9777
    %v9779 = vmul.f32 %v9776, %v9778
    %v9780 = vadd.f32 %v9776, %v9779
    %vm9781 = vweird.f32 %v9506
    %vm9782 = vweird.f32 %v9776
    %vm9783 = vmor %vm9781, %vm9782
    %v9784 = vsel %vm9783, %v9776, %v9780
    %v9785 = vand.u32 2147483647, %v9506
    %vm9786 = vcmp.eq.f32.partialorder %v9785, 8.507059e+37
    %v9787 = vand.u32 %v9506, 2147483648
    %v9788 = vor.u32 1.1754944e-38, %v9787
    %v9789 = vsel %vm9786, %v9788, %v9784
    %v9790 = vmul.f32 1.0, %v9789
    %v9791 = vrcp.pop %v9507
    %v9792 = vmul.f32 %v9507, %v9791
    %v9793 = vsub.f32 1.0, %v9792
    %v9794 = vmul.f32 %v9791, %v9793
    %v9795 = vadd.f32 %v9791, %v9794
    %vm9796 = vweird.f32 %v9507
    %vm9797 = vweird.f32 %v9791
    %vm9798 = vmor %vm9796, %vm9797
    %v9799 = vsel %vm9798, %v9791, %v9795
    %v9800 = vand.u32 2147483647, %v9507
    %vm9801 = vcmp.eq.f32.partialorder %v9800, 8.507059e+37
    %v9802 = vand.u32 %v9507, 2147483648
    %v9803 = vor.u32 1.1754944e-38, %v9802
    %v9804 = vsel %vm9801, %v9803, %v9799
    %v9805 = vmul.f32 1.0, %v9804
    %v9806 = vrcp.pop %v9508
    %v9807 = vmul.f32 %v9508, %v9806
    %v9808 = vsub.f32 1.0, %v9807
    %v9809 = vmul.f32 %v9806, %v9808
    %v9810 = vadd.f32 %v9806, %v9809
    %vm9811 = vweird.f32 %v9508
    %vm9812 = vweird.f32 %v9806
    %vm9813 = vmor %vm9811, %vm9812
    %v9814 = vsel %vm9813, %v9806, %v9810
    %v9815 = vand.u32 2147483647, %v9508
    %vm9816 = vcmp.eq.f32.partialorder %v9815, 8.507059e+37
    %v9817 = vand.u32 %v9508, 2147483648
    %v9818 = vor.u32 1.1754944e-38, %v9817
    %v9819 = vsel %vm9816, %v9818, %v9814
    %v9820 = vmul.f32 1.0, %v9819
    %v9821 = vrcp.pop %v9509
    %v9822 = vmul.f32 %v9509, %v9821
    %v9823 = vsub.f32 1.0, %v9822
    %v9824 = vmul.f32 %v9821, %v9823
    %v9825 = vadd.f32 %v9821, %v9824
    %vm9826 = vweird.f32 %v9509
    %vm9827 = vweird.f32 %v9821
    %vm9828 = vmor %vm9826, %vm9827
    %v9829 = vsel %vm9828, %v9821, %v9825
    %v9830 = vand.u32 2147483647, %v9509
    %vm9831 = vcmp.eq.f32.partialorder %v9830, 8.507059e+37
    %v9832 = vand.u32 %v9509, 2147483648
    %v9833 = vor.u32 1.1754944e-38, %v9832
    %v9834 = vsel %vm9831, %v9833, %v9829
    %v9835 = vmul.f32 1.0, %v9834
    %v9836 = vrcp.pop %v9510
    %v9837 = vmul.f32 %v9510, %v9836
    %v9838 = vsub.f32 1.0, %v9837
    %v9839 = vmul.f32 %v9836, %v9838
    %v9840 = vadd.f32 %v9836, %v9839
    %vm9841 = vweird.f32 %v9510
    %vm9842 = vweird.f32 %v9836
    %vm9843 = vmor %vm9841, %vm9842
    %v9844 = vsel %vm9843, %v9836, %v9840
    %v9845 = vand.u32 2147483647, %v9510
    %vm9846 = vcmp.eq.f32.partialorder %v9845, 8.507059e+37
    %v9847 = vand.u32 %v9510, 2147483648
    %v9848 = vor.u32 1.1754944e-38, %v9847
    %v9849 = vsel %vm9846, %v9848, %v9844
    %v9850 = vmul.f32 1.0, %v9849
    %v9851 = vrcp.pop %v9511
    %v9852 = vmul.f32 %v9511, %v9851
    %v9853 = vsub.f32 1.0, %v9852
    %v9854 = vmul.f32 %v9851, %v9853
    %v9855 = vadd.f32 %v9851, %v9854
    %vm9856 = vweird.f32 %v9511
    %vm9857 = vweird.f32 %v9851
    %vm9858 = vmor %vm9856, %vm9857
    %v9859 = vsel %vm9858, %v9851, %v9855
    %v9860 = vand.u32 2147483647, %v9511
    %vm9861 = vcmp.eq.f32.partialorder %v9860, 8.507059e+37
    %v9862 = vand.u32 %v9511, 2147483648
    %v9863 = vor.u32 1.1754944e-38, %v9862
    %v9864 = vsel %vm9861, %v9863, %v9859
    %v9865 = vmul.f32 1.0, %v9864
    %v9866 = vrcp.pop %v9512
    %v9867 = vmul.f32 %v9512, %v9866
    %v9868 = vsub.f32 1.0, %v9867
    %v9869 = vmul.f32 %v9866, %v9868
    %v9870 = vadd.f32 %v9866, %v9869
    %vm9871 = vweird.f32 %v9512
    %vm9872 = vweird.f32 %v9866
    %vm9873 = vmor %vm9871, %vm9872
    %v9874 = vsel %vm9873, %v9866, %v9870
    %v9875 = vand.u32 2147483647, %v9512
    %vm9876 = vcmp.eq.f32.partialorder %v9875, 8.507059e+37
    %v9877 = vand.u32 %v9512, 2147483648
    %v9878 = vor.u32 1.1754944e-38, %v9877
    %v9879 = vsel %vm9876, %v9878, %v9874
    %v9880 = vmul.f32 1.0, %v9879
    %v9881 = vrcp.pop %v9513
    %v9882 = vmul.f32 %v9513, %v9881
    %v9883 = vsub.f32 1.0, %v9882
    %v9884 = vmul.f32 %v9881, %v9883
    %v9885 = vadd.f32 %v9881, %v9884
    %vm9886 = vweird.f32 %v9513
    %vm9887 = vweird.f32 %v9881
    %vm9888 = vmor %vm9886, %vm9887
    %v9889 = vsel %vm9888, %v9881, %v9885
    %v9890 = vand.u32 2147483647, %v9513
    %vm9891 = vcmp.eq.f32.partialorder %v9890, 8.507059e+37
    %v9892 = vand.u32 %v9513, 2147483648
    %v9893 = vor.u32 1.1754944e-38, %v9892
    %v9894 = vsel %vm9891, %v9893, %v9889
    %v9895 = vmul.f32 1.0, %v9894
    %v9896 = vrcp.pop %v9514
    %v9897 = vmul.f32 %v9514, %v9896
    %v9898 = vsub.f32 1.0, %v9897
    %v9899 = vmul.f32 %v9896, %v9898
    %v9900 = vadd.f32 %v9896, %v9899
    %vm9901 = vweird.f32 %v9514
    %vm9902 = vweird.f32 %v9896
    %vm9903 = vmor %vm9901, %vm9902
    %v9904 = vsel %vm9903, %v9896, %v9900
    %v9905 = vand.u32 2147483647, %v9514
    %vm9906 = vcmp.eq.f32.partialorder %v9905, 8.507059e+37
    %v9907 = vand.u32 %v9514, 2147483648
    %v9908 = vor.u32 1.1754944e-38, %v9907
    %v9909 = vsel %vm9906, %v9908, %v9904
    %v9910 = vmul.f32 1.0, %v9909
    %v9911 = vrcp.pop %v9515
    %v9912 = vmul.f32 %v9515, %v9911
    %v9913 = vsub.f32 1.0, %v9912
    %v9914 = vmul.f32 %v9911, %v9913
    %v9915 = vadd.f32 %v9911, %v9914
    %vm9916 = vweird.f32 %v9515
    %vm9917 = vweird.f32 %v9911
    %vm9918 = vmor %vm9916, %vm9917
    %v9919 = vsel %vm9918, %v9911, %v9915
    %v9920 = vand.u32 2147483647, %v9515
    %vm9921 = vcmp.eq.f32.partialorder %v9920, 8.507059e+37
    %v9922 = vand.u32 %v9515, 2147483648
    %v9923 = vor.u32 1.1754944e-38, %v9922
    %v9924 = vsel %vm9921, %v9923, %v9919
    %v9925 = vmul.f32 1.0, %v9924
    %v9926 = vrcp.pop %v9516
    %v9927 = vmul.f32 %v9516, %v9926
    %v9928 = vsub.f32 1.0, %v9927
    %v9929 = vmul.f32 %v9926, %v9928
    %v9930 = vadd.f32 %v9926, %v9929
    %vm9931 = vweird.f32 %v9516
    %vm9932 = vweird.f32 %v9926
    %vm9933 = vmor %vm9931, %vm9932
    %v9934 = vsel %vm9933, %v9926, %v9930
    %v9935 = vand.u32 2147483647, %v9516
    %vm9936 = vcmp.eq.f32.partialorder %v9935, 8.507059e+37
    %v9937 = vand.u32 %v9516, 2147483648
    %v9938 = vor.u32 1.1754944e-38, %v9937
    %v9939 = vsel %vm9936, %v9938, %v9934
    %v9940 = vmul.f32 1.0, %v9939
    %v9941 = vrcp.pop %v9517
    %v9942 = vmul.f32 %v9517, %v9941
    %v9943 = vsub.f32 1.0, %v9942
    %v9944 = vmul.f32 %v9941, %v9943
    %v9945 = vadd.f32 %v9941, %v9944
    %vm9946 = vweird.f32 %v9517
    %vm9947 = vweird.f32 %v9941
    %vm9948 = vmor %vm9946, %vm9947
    %v9949 = vsel %vm9948, %v9941, %v9945
    %v9950 = vand.u32 2147483647, %v9517
    %vm9951 = vcmp.eq.f32.partialorder %v9950, 8.507059e+37
    %v9952 = vand.u32 %v9517, 2147483648
    %v9953 = vor.u32 1.1754944e-38, %v9952
    %v9954 = vsel %vm9951, %v9953, %v9949
    %v9955 = vmul.f32 1.0, %v9954
    %v9956 = vrcp.pop %v9518
    %v9957 = vmul.f32 %v9518, %v9956
    %v9958 = vsub.f32 1.0, %v9957
    %v9959 = vmul.f32 %v9956, %v9958
    %v9960 = vadd.f32 %v9956, %v9959
    %vm9961 = vweird.f32 %v9518
    %vm9962 = vweird.f32 %v9956
    %vm9963 = vmor %vm9961, %vm9962
    %v9964 = vsel %vm9963, %v9956, %v9960
    %v9965 = vand.u32 2147483647, %v9518
    %vm9966 = vcmp.eq.f32.partialorder %v9965, 8.507059e+37
    %v9967 = vand.u32 %v9518, 2147483648
    %v9968 = vor.u32 1.1754944e-38, %v9967
    %v9969 = vsel %vm9966, %v9968, %v9964
    %v9970 = vmul.f32 1.0, %v9969
    %v9971 = vrcp.pop %v9519
    %v9972 = vmul.f32 %v9519, %v9971
    %v9973 = vsub.f32 1.0, %v9972
    %v9974 = vmul.f32 %v9971, %v9973
    %v9975 = vadd.f32 %v9971, %v9974
    %vm9976 = vweird.f32 %v9519
    %vm9977 = vweird.f32 %v9971
    %vm9978 = vmor %vm9976, %vm9977
    %v9979 = vsel %vm9978, %v9971, %v9975
    %v9980 = vand.u32 2147483647, %v9519
    %vm9981 = vcmp.eq.f32.partialorder %v9980, 8.507059e+37
    %v9982 = vand.u32 %v9519, 2147483648
    %v9983 = vor.u32 1.1754944e-38, %v9982
    %v9984 = vsel %vm9981, %v9983, %v9979
    %v9985 = vmul.f32 1.0, %v9984
    %v9986 = vrcp.pop %v9520
    %v9987 = vmul.f32 %v9520, %v9986
    %v9988 = vsub.f32 1.0, %v9987
    %v9989 = vmul.f32 %v9986, %v9988
    %v9990 = vadd.f32 %v9986, %v9989
    %vm9991 = vweird.f32 %v9520
    %vm9992 = vweird.f32 %v9986
    %vm9993 = vmor %vm9991, %vm9992
    %v9994 = vsel %vm9993, %v9986, %v9990
    %v9995 = vand.u32 2147483647, %v9520
    %vm9996 = vcmp.eq.f32.partialorder %v9995, 8.507059e+37
    %v9997 = vand.u32 %v9520, 2147483648
    %v9998 = vor.u32 1.1754944e-38, %v9997
    %v9999 = vsel %vm9996, %v9998, %v9994
    %v10000 = vmul.f32 1.0, %v9999
    %v10033 = vrot.slane %v9550, 6
    %v10034 = vrot.slane %v9565, 4
    %v10035 = vrot.slane %v9580, 2
    %v10036 = vrot.slane %v9610, 6
    %v10037 = vrot.slane %v9625, 4
    %v10038 = vrot.slane %v9640, 2
    %v10039 = vrot.slane %v9670, 6
    %v10040 = vrot.slane %v9685, 4
    %v10041 = vrot.slane %v9700, 2
    %v10042 = vrot.slane %v9730, 6
    %v10043 = vrot.slane %v9745, 4
    %v10044 = vrot.slane %v9760, 2
    %v10045 = vrot.slane %v9790, 6
    %v10046 = vrot.slane %v9805, 4
    %v10047 = vrot.slane %v9820, 2
    %v10048 = vrot.slane %v9850, 6
    %v10049 = vrot.slane %v9865, 4
    %v10050 = vrot.slane %v9880, 2
    %v10051 = vrot.slane %v9910, 6
    %v10052 = vrot.slane %v9925, 4
    %v10053 = vrot.slane %v9940, 2
    %v10054 = vrot.slane %v9970, 6
    %v10055 = vrot.slane %v9985, 4
    %v10056 = vrot.slane %v10000, 2
    %vm10057 = vcmask 1041408
    %v10058 = vsel %vm10057, %v9535, %v10033
    %vm10059 = vcmask 1045508
    %v10060 = vsel %vm10059, %v10034, %v10035
    %v10061 = vsel %vm5061, %v10058, %v10060
    %v10062 = vsel %vm10057, %v9595, %v10036
    %v10063 = vsel %vm10059, %v10037, %v10038
    %v10064 = vsel %vm5061, %v10062, %v10063
    %v10065 = vsel %vm10057, %v9655, %v10039
    %v10066 = vsel %vm10059, %v10040, %v10041
    %v10067 = vsel %vm5061, %v10065, %v10066
    %v10068 = vsel %vm10057, %v9715, %v10042
    %v10069 = vsel %vm10059, %v10043, %v10044
    %v10070 = vsel %vm5061, %v10068, %v10069
    %v10071 = vsel %vm10057, %v9775, %v10045
    %v10072 = vsel %vm10059, %v10046, %v10047
    %v10073 = vsel %vm5061, %v10071, %v10072
    %v10074 = vsel %vm10057, %v9835, %v10048
    %v10075 = vsel %vm10059, %v10049, %v10050
    %v10076 = vsel %vm5061, %v10074, %v10075
    %v10077 = vsel %vm10057, %v9895, %v10051
    %v10078 = vsel %vm10059, %v10052, %v10053
    %v10079 = vsel %vm5061, %v10077, %v10078
    %v10080 = vsel %vm10057, %v9955, %v10054
    %v10081 = vsel %vm10059, %v10055, %v10056
    %v10082 = vsel %vm5061, %v10080, %v10081
    %10091 = vst [vmem:[#allocation2] sm:$0xff] %v10061
    %10092 = vst [vmem:[#allocation2 + $0x8] sm:$0xff] %v10064
    %10093 = vst [vmem:[#allocation2 + $0x10] sm:$0xff] %v10067
    %10094 = vst [vmem:[#allocation2 + $0x18] sm:$0xff] %v10070
    %10095 = vst [vmem:[#allocation2 + $0x20] sm:$0xff] %v10073
    %10096 = vst [vmem:[#allocation2 + $0x28] sm:$0xff] %v10076
    %10097 = vst [vmem:[#allocation2 + $0x30] sm:$0xff] %v10079
    %10098 = vst [vmem:[#allocation2 + $0x38] sm:$0xff] %v10082
    %vm10099 = vcmask 156672
    %10100 = vst.msk [vmem:[#allocation4] sm:$0x3] %vm10099, %v4893
    %10101 = vst.msk [vmem:[#allocation6] sm:$0x3] %vm10099, %v5027
    // Predicated region
    $region50: #{vae_forward.1} parent=1 // pred_check
      _
    $region51: #{vae_forward.1} parent=1 // pred_check_branch
      %10103 = sbr.rel (0) target = $region53
    $region52: #{vae_forward.1} parent=1 // pred_region
      %10105 = vsyncadd [#allocation3], 0
      %s10107 = sshll.u32 [#allocation2], 4
      %s10108 = int_to_ptr.vmem [resolvable:$true] %s10107
      %s10109 = sshll.u32 %s12, 4
      %s10110 = int_to_ptr.hbm [resolvable:$true] %s10109
      %10112 = dma.vmem_to_hbm [thread:$0]  %s10108, 1024, %s10110, [#allocation3]
    $region53: #{vae_forward.1} parent=1 // pred_fallthru
      _
    // Predicated region
    $region54: #{vae_forward.1} parent=1 // pred_check
      _
    $region55: #{vae_forward.1} parent=1 // pred_check_branch
      %10114 = sbr.rel (0) target = $region57
    $region56: #{vae_forward.1} parent=1 // pred_region
      %10116 = vsyncadd [#allocation5], 0
      %s10118 = sshll.u32 [#allocation4], 4
      %s10119 = int_to_ptr.vmem [resolvable:$true] %s10118
      %s10120 = sshll.u32 %s13, 4
      %s10121 = int_to_ptr.hbm [resolvable:$true] %s10120
      %10123 = dma.vmem_to_hbm [thread:$0]  %s10119, 32, %s10121, [#allocation5]
    $region57: #{vae_forward.1} parent=1 // pred_fallthru
      _
    // Predicated region
    $region58: #{vae_forward.1} parent=1 // pred_check
      _
    $region59: #{vae_forward.1} parent=1 // pred_check_branch
      %10125 = sbr.rel (0) target = $region61
    $region60: #{vae_forward.1} parent=1 // pred_region
      %10127 = vsyncadd [#allocation5], 0
      %s10129 = sshll.u32 [#allocation6], 4
      %s10130 = int_to_ptr.vmem [resolvable:$true] %s10129
      %s10131 = sshll.u32 %s14, 4
      %s10132 = int_to_ptr.hbm [resolvable:$true] %s10131
      %10134 = dma.vmem_to_hbm [thread:$0]  %s10130, 32, %s10132, [#allocation5]
    $region61: #{vae_forward.1} parent=1 // pred_fallthru
      _
    // Predicated region
    $region62: #{vae_forward.1} parent=1 // pred_check
      _
    $region63: #{vae_forward.1} parent=1 // pred_check_branch
      %10136 = sbr.rel (0) target = $region65
    $region64: #{vae_forward.1} parent=1 // pred_region
      %10138 = dma.done [#allocation3], 1024
    $region65: #{vae_forward.1} parent=1 // pred_fallthru
      _
    // Predicated region
    $region66: #{vae_forward.1} parent=1 // pred_check
      _
    $region67: #{vae_forward.1} parent=1 // pred_check_branch
      %10140 = sbr.rel (0) target = $region69
    $region68: #{vae_forward.1} parent=1 // pred_region
      %10142 = dma.done [#allocation5], 32
    $region69: #{vae_forward.1} parent=1 // pred_fallthru
      _
    // Predicated region
    $region70: #{vae_forward.1} parent=1 // pred_check
      _
    $region71: #{vae_forward.1} parent=1 // pred_check_branch
      %10144 = sbr.rel (0) target = $region73
    $region72: #{vae_forward.1} parent=1 // pred_region
      %10146 = dma.done [#allocation5], 32
    $region73: #{vae_forward.1} parent=1 // pred_fallthru
      _
    %10147 = vsyncpa [#allocation3], 1
    %10148 = vsyncpa [#allocation5], 1

</llo_original>
